<compile_context>
chip_gen: v7x
topology: tpu7x:2x2x1
jax: 0.10.0
libtpu: 0.0.40
codegen_flags: <defaults>
</compile_context>

<pallas_src>
import functools

import jax
import jax.numpy as jnp
from jax import lax
from jax.experimental import pallas as pl
from jax.experimental.pallas import tpu as pltpu

EPS = 1e-5

# Matmul-operand dtype.  Weights are stored in this dtype and activations are
# cast to it right before each MXU dot; accumulation is always f32, the
# bias/ReLU/mask epilogue is f32, and the x passthrough stays exact f32.
COMPUTE_DTYPE = jnp.bfloat16
# Output dtype.  Keep f32 to match the PyTorch module exactly; set to bf16 if
# the consumer accepts it (halves the largest HBM stream, but the passthrough
# x channels then get rounded).
OUT_DTYPE = jnp.float32


# ---------------------------------------------------------------------------
# Fused DenseBlock kernel
# ---------------------------------------------------------------------------
def _dense_block_kernel(xp_ref,                 # (Hp, W+4, Cin)  padded image (VMEM-resident)
                        w12a_ref, b12a_ref,     # (Cin, 2*Ci), (1, 2*Ci)   fused cb1_a|cb2_a
                        w1b_ref, b1b_ref,       # (9*Ci, G), (1, G)
                        w2b_ref, b2b_ref,       # (9*Ci, G), (1, G)
                        w2c_ref, b2c_ref,       # (9*G,  G), (1, G)
                        o_ref,                  # (TH, W*(Cin+2*G))
                        *, H, W, TH, compute_dtype):
    Cin = xp_ref.shape[-1]
    Ci = w12a_ref.shape[-1] // 2
    G = w1b_ref.shape[-1]
    Ctot = Cin + 2 * G
    t = pl.program_id(1)                        # row-tile index

    # ---- (TH+4)-row halo window sliced from the VMEM-resident padded image
    row0 = t * TH
    if TH % 8 == 0:
        row0 = pl.multiple_of(row0, 8)
    xwin = xp_ref[pl.ds(row0, TH + 4), :, :]    # (TH+4, W+4, Cin) f32

    def vmask(halo):
        # 1.0 where a (TH+2h, W+2h) window pixel lies inside the real image.
        # Multiplying an intermediate by this reproduces PyTorch's zero conv
        # padding for the *next* 3x3 conv (conv+BN+ReLU of a zero pixel is NOT
        # zero after BN, so it must be zeroed explicitly).
        R, S = TH + 2 * halo, W + 2 * halo
        r = lax.broadcasted_iota(jnp.int32, (R, S), 0)
        c = lax.broadcasted_iota(jnp.int32, (R, S), 1)
        ir = t * TH + r - halo                  # image row of window pixel
        ic = c - halo                           # image col of window pixel
        ok = (ir >= 0) & (ir < H) & (ic >= 0) & (ic < W)
        return ok.astype(jnp.float32)[:, :, None]

    def im2col3(a, R, S):
        # (R+2, S+2, C) -> (R*S, 9*C) tap matrix, (kh, kw, cin) ordering.
        # The whole 3x3 conv then becomes ONE MXU matmul with K = 9*C.
        C = a.shape[-1]
        taps = [a[di:di + R, dj:dj + S, :] for di in range(3) for dj in range(3)]
        return jnp.concatenate(taps, axis=-1).reshape(R * S, 9 * C)

    def mxu(a2d, w_ref, b_ref):
        y = jnp.dot(a2d.astype(compute_dtype), w_ref[...],
                    preferred_element_type=jnp.float32)
        return jnp.maximum(y + b_ref[...], 0.0)

    # ---- fused 1x1 (cb1_a | cb2_a) over the full halo window --------------
    R2, S2 = TH + 4, W + 4
    a12 = mxu(xwin.reshape(R2 * S2, Cin), w12a_ref, b12a_ref)   # (R2*S2, 2Ci) f32
    a12 = a12.reshape(R2, S2, 2 * Ci) * vmask(2)

    a1 = a12[1:TH + 3, 1:W + 3, :Ci].astype(compute_dtype)      # (TH+2, W+2, Ci)
    a2 = a12[:, :, Ci:].astype(compute_dtype)                   # (TH+4, W+4, Ci)

    # ---- branch 1: cb1_b (3x3) --------------------------------------------
    b1 = mxu(im2col3(a1, TH, W), w1b_ref, b1b_ref).reshape(TH, W, G)

    # ---- branch 2: cb2_b (3x3) -> cb2_c (3x3) ------------------------------
    b2 = mxu(im2col3(a2, TH + 2, W + 2), w2b_ref, b2b_ref)
    b2 = (b2.reshape(TH + 2, W + 2, G) * vmask(1)).astype(compute_dtype)
    c2 = mxu(im2col3(b2, TH, W), w2c_ref, b2c_ref).reshape(TH, W, G)

    # ---- concat [x, b1, c2] and store as one lane-dense (TH, W*Ctot) slab --
    x_core = xwin[2:TH + 2, 2:W + 2, :].astype(jnp.float32)     # exact f32 passthrough
    out = jnp.concatenate([x_core, b1, c2], axis=-1)            # (TH, W, Ctot) f32
    o_ref[...] = out.reshape(TH, W * Ctot).astype(o_ref.dtype)


# ---------------------------------------------------------------------------
# Wrapper: BN folding, weight fusion, grid / BlockSpecs
# ---------------------------------------------------------------------------
def _fold_bn(w_oihw, gamma, beta, mean, var):
    scale = gamma / jnp.sqrt(var + EPS)
    return w_oihw * scale[:, None, None, None], beta - mean * scale


def _as_matmul(w_oihw):
    # (O, I, kh, kw) -> (kh*kw*I, O), matching the kernel's (di, dj, cin) taps.
    o, i, kh, kw = w_oihw.shape
    return jnp.transpose(w_oihw, (2, 3, 1, 0)).reshape(kh * kw * i, o)


def _pick_tile_h(H, W, target_rows=4096):
    # Whole image per step when small enough; otherwise a multiple-of-8 row
    # tile.  Bigger tiles amortize the ~0.35us/step pipeline overhead
    # (v5e/v6e: 128 MiB VMEM); shrink target_rows on v7x (64 MiB) if needed.
    if H * W <= target_rows:
        return H
    return min(H, max(8, (target_rows // max(W, 1)) // 8 * 8))


@functools.partial(jax.jit, static_argnames=("tile_h",))
def dense_block_forward(x_nchw, params, tile_h=None):
    x = jnp.transpose(x_nchw, (0, 2, 3, 1)).astype(jnp.float32)   # NCHW -> NHWC
    B, H, W, Cin = x.shape

    # BN folding + weight reshapes; fuse the two 1x1 convs along N.
    def fold(name):
        w, b = _fold_bn(*params[name])
        return _as_matmul(w), b.reshape(1, -1)

    w1a, b1a = fold("cb1_a")
    w2a, b2a = fold("cb2_a")
    w1b, b1b = fold("cb1_b")
    w2b, b2b = fold("cb2_b")
    w2c, b2c = fold("cb2_c")

    w12a = jnp.concatenate([w1a, w2a], axis=1).astype(COMPUTE_DTYPE)
    b12a = jnp.concatenate([b1a, b2a], axis=1).astype(jnp.float32)
    weights = [w12a, b12a,
               w1b.astype(COMPUTE_DTYPE), b1b.astype(jnp.float32),
               w2b.astype(COMPUTE_DTYPE), b2b.astype(jnp.float32),
               w2c.astype(COMPUTE_DTYPE), b2c.astype(jnp.float32)]

    Ci = w1a.shape[1]
    G = w1b.shape[1]
    Ctot = Cin + 2 * G

    TH = tile_h if tile_h is not None else _pick_tile_h(H, W)
    assert TH == H or TH % 8 == 0, "row tile must be a multiple of 8 or H"
    nT = -(-H // TH)
    Hp = nT * TH + 4

    # Single cheap zero-pad (2-px spatial halo + bottom alignment).  The padded
    # image is the only extra HBM traffic; it stays VMEM-resident across the
    # row-tile axis, so there is no overlapping-window duplication in HBM.
    xp = jnp.pad(x, ((0, 0), (2, Hp - 2 - H), (2, 2), (0, 0)))

    kernel = functools.partial(_dense_block_kernel, H=H, W=W, TH=TH,
                               compute_dtype=COMPUTE_DTYPE)

    in_specs = [pl.BlockSpec((None, Hp, W + 4, Cin), lambda b, t: (b, 0, 0, 0))]
    for wgt in weights:                                   # weights stay resident
        in_specs.append(pl.BlockSpec(wgt.shape, lambda b, t: (0, 0)))

    out_spec = pl.BlockSpec((None, TH, W * Ctot), lambda b, t: (b, t, 0))

    flops = 2 * B * (nT * (TH + 4) * (W + 4) * Cin * 2 * Ci
                     + H * W * 9 * Ci * G
                     + nT * (TH + 2) * (W + 2) * 9 * Ci * G
                     + H * W * 9 * G * G)
    bytes_accessed = (xp.size * xp.dtype.itemsize
                      + sum(a.size * a.dtype.itemsize for a in weights)
                      + B * H * W * Ctot * jnp.dtype(OUT_DTYPE).itemsize)

    out = pl.pallas_call(
        kernel,
        out_shape=jax.ShapeDtypeStruct((B, H, W * Ctot), OUT_DTYPE),
        grid=(B, nT),
        in_specs=in_specs,
        out_specs=out_spec,
        compiler_params=pltpu.CompilerParams(
            dimension_semantics=("parallel", "arbitrary"),
            vmem_limit_bytes=48 * 1024 * 1024),
        cost_estimate=pl.CostEstimate(flops=flops, transcendentals=0,
                                      bytes_accessed=bytes_accessed),
    )(xp, *weights)

    out = out.reshape(B, H, W, Ctot)
    return jnp.transpose(out, (0, 3, 1, 2))               # NHWC -> NCHW


# ---------------------------------------------------------------------------
# Pure-JAX reference (for correctness check) and parameter init
# ---------------------------------------------------------------------------
def _conv_bn_relu_ref(x_nhwc, p, *, stride, pad):
    w, gamma, beta, mean, var = p
    y = lax.conv_general_dilated(
        x_nhwc, w, window_strides=(stride, stride),
        padding=((pad, pad), (pad, pad)),
        dimension_numbers=("NHWC", "OIHW", "NHWC"))
    scale = gamma / jnp.sqrt(var + EPS)
    return jnp.maximum(y * scale + (beta - mean * scale), 0.0)


def dense_block_ref(x_nchw, params):
    x = jnp.transpose(x_nchw, (0, 2, 3, 1))
    a1 = _conv_bn_relu_ref(x, params["cb1_a"], stride=1, pad=0)
    b1 = _conv_bn_relu_ref(a1, params["cb1_b"], stride=1, pad=1)
    a2 = _conv_bn_relu_ref(x, params["cb2_a"], stride=1, pad=0)
    b2 = _conv_bn_relu_ref(a2, params["cb2_b"], stride=1, pad=1)
    c2 = _conv_bn_relu_ref(b2, params["cb2_c"], stride=1, pad=1)
    return jnp.transpose(jnp.concatenate([x, b1, c2], axis=-1), (0, 3, 1, 2))


def init_dense_block_params(key, inp, inter_channel, growth_rate):
    def conv_bn(k, cout, cin, ksz):
        kw_, kg, kb, km, kv = jax.random.split(k, 5)
        return (0.1 * jax.random.normal(kw_, (cout, cin, ksz, ksz), jnp.float32),
                1.0 + 0.1 * jax.random.normal(kg, (cout,), jnp.float32),
                0.1 * jax.random.normal(kb, (cout,), jnp.float32),
                0.1 * jax.random.normal(km, (cout,), jnp.float32),
                jnp.abs(jax.random.normal(kv, (cout,), jnp.float32)) + 0.5)

    k1a, k1b, k2a, k2b, k2c = jax.random.split(key, 5)
    return {
        "cb1_a": conv_bn(k1a, inter_channel, inp, 1),
        "cb1_b": conv_bn(k1b, growth_rate, inter_channel, 3),
        "cb2_a": conv_bn(k2a, inter_channel, inp, 1),
        "cb2_b": conv_bn(k2b, growth_rate, inter_channel, 3),
        "cb2_c": conv_bn(k2c, growth_rate, growth_rate, 3),
    }


def _max_norm_err(a, b):
    a = a.astype(jnp.float32)
    b = b.astype(jnp.float32)
    return float(jnp.max(jnp.abs(a - b) / (1.0 + jnp.abs(b))))


if __name__ == "__main__":
    key = jax.random.PRNGKey(0)
    kx, kp, kx2 = jax.random.split(key, 3)

    B, Cin, H, W = 2, 32, 16, 16
    inter_channel, growth_rate = 16, 16
    x = jax.random.normal(kx, (B, Cin, H, W), jnp.float32)        # NCHW like torch
    params = init_dense_block_params(kp, Cin, inter_channel, growth_rate)

    # bf16 matmul operands (f32 accumulation) -> ~1% relative error through
    # three stacked convs; exact to ~1e-3 with COMPUTE_DTYPE = float32.
    tol = 1e-3 if COMPUTE_DTYPE == jnp.float32 else 5e-2

    out = jax.block_until_ready(dense_block_forward(x, params))
    assert out.shape == (B, Cin + 2 * growth_rate, H, W), out.shape
    assert out.dtype == OUT_DTYPE
    ref = jax.block_until_ready(dense_block_ref(x, params))
    err = _max_norm_err(out, ref)
    assert err < tol, f"max normalized error vs reference: {err}"

    # Second config: forced row tile that does NOT divide H -> exercises the
    # interior halo path, the row-tile residency and the masked boundary
    # output block (H=20, TH=8 -> 3 tiles, last one overhangs).
    B2, H2, W2 = 1, 20, 12
    x2 = jax.random.normal(kx2, (B2, Cin, H2, W2), jnp.float32)
    out2 = jax.block_until_ready(dense_block_forward(x2, params, tile_h=8))
    ref2 = jax.block_until_ready(dense_block_ref(x2, params))
    err2 = _max_norm_err(out2, ref2)
    assert err2 < tol, f"max normalized error vs reference (tiled): {err2}"

    print("KERNEL_OK")
</pallas_src>

<mosaic_0001>
module attributes {stable_mosaic.version = 11 : i64} {
  func.func @_dense_block_kernel(%arg0: i32, %arg1: i32, %arg2: memref<1x20x20x32xf32, #tpu.memory_space<vmem>>, %arg3: memref<32x32xbf16, #tpu.memory_space<vmem>>, %arg4: memref<1x32xf32, #tpu.memory_space<vmem>>, %arg5: memref<144x16xbf16, #tpu.memory_space<vmem>>, %arg6: memref<1x16xf32, #tpu.memory_space<vmem>>, %arg7: memref<144x16xbf16, #tpu.memory_space<vmem>>, %arg8: memref<1x16xf32, #tpu.memory_space<vmem>>, %arg9: memref<144x16xbf16, #tpu.memory_space<vmem>>, %arg10: memref<1x16xf32, #tpu.memory_space<vmem>>, %arg11: memref<1x16x1024xf32, #tpu.memory_space<vmem>>) attributes {dimension_semantics = [#tpu.dimension_semantics<parallel>, #tpu.dimension_semantics<arbitrary>], iteration_bounds = array<i64: 2, 1>, scalar_prefetch = 0 : i64, scratch_operands = 0 : i64, tpu.core_type = #tpu.core_type<tc>, window_params = [{transform_indices = @transform_0, window_bounds = array<i64: 1, 20, 20, 32>}, {pipeline_mode = #tpu.pipeline_mode<synchronous>, transform_indices = @transform_1, window_bounds = array<i64: 32, 32>}, {pipeline_mode = #tpu.pipeline_mode<synchronous>, transform_indices = @transform_2, window_bounds = array<i64: 1, 32>}, {pipeline_mode = #tpu.pipeline_mode<synchronous>, transform_indices = @transform_3, window_bounds = array<i64: 144, 16>}, {pipeline_mode = #tpu.pipeline_mode<synchronous>, transform_indices = @transform_4, window_bounds = array<i64: 1, 16>}, {pipeline_mode = #tpu.pipeline_mode<synchronous>, transform_indices = @transform_5, window_bounds = array<i64: 144, 16>}, {pipeline_mode = #tpu.pipeline_mode<synchronous>, transform_indices = @transform_6, window_bounds = array<i64: 1, 16>}, {pipeline_mode = #tpu.pipeline_mode<synchronous>, transform_indices = @transform_7, window_bounds = array<i64: 144, 16>}, {pipeline_mode = #tpu.pipeline_mode<synchronous>, transform_indices = @transform_8, window_bounds = array<i64: 1, 16>}, {transform_indices = @transform_9, window_bounds = array<i64: 1, 16, 1024>}]} {
    %c16_i32 = arith.constant 16 : i32
    %0 = arith.muli %arg1, %c16_i32 : i32
    %1 = tpu.assume_multiple %0, 8 : i32
    %c0 = arith.constant 0 : index
    %2 = arith.index_cast %1 : i32 to index
    %c0_0 = arith.constant 0 : index
    %c0_1 = arith.constant 0 : index
    %3 = vector.load %arg2[%c0, %2, %c0_0, %c0_1] : memref<1x20x20x32xf32, #tpu.memory_space<vmem>>, vector<1x20x20x32xf32>
    %4 = vector.shape_cast %3 : vector<1x20x20x32xf32> to vector<20x20x32xf32>
    %5 = vector.shape_cast %4 : vector<20x20x32xf32> to vector<400x32xf32>
    %6 = arith.truncf %5 : vector<400x32xf32> to vector<400x32xbf16>
    %c0_2 = arith.constant 0 : index
    %c0_3 = arith.constant 0 : index
    %7 = vector.load %arg3[%c0_2, %c0_3] : memref<32x32xbf16, #tpu.memory_space<vmem>>, vector<32x32xbf16>
    %cst = arith.constant dense<0.000000e+00> : vector<400x32xf32>
    %8 = tpu.matmul %6, %7, %cst {dimension_numbers = #tpu.dot_dimension_numbers<[1], [0], [0], [1], [0, 0, 1, 1], [], []>} : vector<400x32xbf16>, vector<32x32xbf16>, vector<400x32xf32> -> vector<400x32xf32>
    %c0_4 = arith.constant 0 : index
    %c0_5 = arith.constant 0 : index
    %9 = vector.load %arg4[%c0_4, %c0_5] : memref<1x32xf32, #tpu.memory_space<vmem>>, vector<1x32xf32>
    %10 = vector.broadcast %9 : vector<1x32xf32> to vector<400x32xf32>
    %11 = arith.addf %8, %10 : vector<400x32xf32>
    %cst_6 = arith.constant 0.000000e+00 : f32
    %12 = vector.broadcast %cst_6 : f32 to vector<400x32xf32>
    %13 = arith.maximumf %11, %12 : vector<400x32xf32>
    %14 = vector.shape_cast %13 : vector<400x32xf32> to vector<20x20x32xf32>
    %15 = tpu.iota {dimensions = array<i32: 0>} : vector<20x20xi32>
    %16 = tpu.iota {dimensions = array<i32: 1>} : vector<20x20xi32>
    %c16_i32_7 = arith.constant 16 : i32
    %17 = arith.muli %arg1, %c16_i32_7 : i32
    %18 = vector.broadcast %17 : i32 to vector<20x20xi32>
    %19 = arith.addi %18, %15 : vector<20x20xi32>
    %c2_i32 = arith.constant 2 : i32
    %20 = vector.broadcast %c2_i32 : i32 to vector<20x20xi32>
    %21 = arith.subi %19, %20 : vector<20x20xi32>
    %c2_i32_8 = arith.constant 2 : i32
    %22 = vector.broadcast %c2_i32_8 : i32 to vector<20x20xi32>
    %23 = arith.subi %16, %22 : vector<20x20xi32>
    %c0_i32 = arith.constant 0 : i32
    %24 = vector.broadcast %c0_i32 : i32 to vector<20x20xi32>
    %25 = arith.cmpi sge, %21, %24 : vector<20x20xi32>
    %c16_i32_9 = arith.constant 16 : i32
    %26 = vector.broadcast %c16_i32_9 : i32 to vector<20x20xi32>
    %27 = arith.cmpi slt, %21, %26 : vector<20x20xi32>
    %28 = arith.andi %25, %27 : vector<20x20xi1>
    %c0_i32_10 = arith.constant 0 : i32
    %29 = vector.broadcast %c0_i32_10 : i32 to vector<20x20xi32>
    %30 = arith.cmpi sge, %23, %29 : vector<20x20xi32>
    %31 = arith.andi %28, %30 : vector<20x20xi1>
    %c16_i32_11 = arith.constant 16 : i32
    %32 = vector.broadcast %c16_i32_11 : i32 to vector<20x20xi32>
    %33 = arith.cmpi slt, %23, %32 : vector<20x20xi32>
    %34 = arith.andi %31, %33 : vector<20x20xi1>
    %35 = arith.extui %34 : vector<20x20xi1> to vector<20x20xi32>
    %36 = arith.sitofp %35 : vector<20x20xi32> to vector<20x20xf32>
    %37 = vector.shape_cast %36 : vector<20x20xf32> to vector<20x20x1xf32>
    %38 = vector.broadcast %37 : vector<20x20x1xf32> to vector<20x20x32xf32>
    %39 = arith.mulf %14, %38 : vector<20x20x32xf32>
    %40 = vector.extract_strided_slice %39 {offsets = [1, 1, 0], sizes = [18, 18, 16], strides = [1, 1, 1]} : vector<20x20x32xf32> to vector<18x18x16xf32>
    %41 = arith.truncf %40 : vector<18x18x16xf32> to vector<18x18x16xbf16>
    %42 = vector.extract_strided_slice %39 {offsets = [0, 0, 16], sizes = [20, 20, 16], strides = [1, 1, 1]} : vector<20x20x32xf32> to vector<20x20x16xf32>
    %43 = arith.truncf %42 : vector<20x20x16xf32> to vector<20x20x16xbf16>
    %44 = vector.extract_strided_slice %41 {offsets = [0, 0, 0], sizes = [16, 16, 16], strides = [1, 1, 1]} : vector<18x18x16xbf16> to vector<16x16x16xbf16>
    %45 = vector.extract_strided_slice %41 {offsets = [0, 1, 0], sizes = [16, 16, 16], strides = [1, 1, 1]} : vector<18x18x16xbf16> to vector<16x16x16xbf16>
    %46 = vector.extract_strided_slice %41 {offsets = [0, 2, 0], sizes = [16, 16, 16], strides = [1, 1, 1]} : vector<18x18x16xbf16> to vector<16x16x16xbf16>
    %47 = vector.extract_strided_slice %41 {offsets = [1, 0, 0], sizes = [16, 16, 16], strides = [1, 1, 1]} : vector<18x18x16xbf16> to vector<16x16x16xbf16>
    %48 = vector.extract_strided_slice %41 {offsets = [1, 1, 0], sizes = [16, 16, 16], strides = [1, 1, 1]} : vector<18x18x16xbf16> to vector<16x16x16xbf16>
    %49 = vector.extract_strided_slice %41 {offsets = [1, 2, 0], sizes = [16, 16, 16], strides = [1, 1, 1]} : vector<18x18x16xbf16> to vector<16x16x16xbf16>
    %50 = vector.extract_strided_slice %41 {offsets = [2, 0, 0], sizes = [16, 16, 16], strides = [1, 1, 1]} : vector<18x18x16xbf16> to vector<16x16x16xbf16>
    %51 = vector.extract_strided_slice %41 {offsets = [2, 1, 0], sizes = [16, 16, 16], strides = [1, 1, 1]} : vector<18x18x16xbf16> to vector<16x16x16xbf16>
    %52 = vector.extract_strided_slice %41 {offsets = [2, 2, 0], sizes = [16, 16, 16], strides = [1, 1, 1]} : vector<18x18x16xbf16> to vector<16x16x16xbf16>
    %53 = tpu.concatenate %44, %45, %46, %47, %48, %49, %50, %51, %52 in 2 : vector<16x16x16xbf16>, vector<16x16x16xbf16>, vector<16x16x16xbf16>, vector<16x16x16xbf16>, vector<16x16x16xbf16>, vector<16x16x16xbf16>, vector<16x16x16xbf16>, vector<16x16x16xbf16>, vector<16x16x16xbf16> -> vector<16x16x144xbf16>
    %54 = vector.shape_cast %53 : vector<16x16x144xbf16> to vector<256x144xbf16>
    %c0_12 = arith.constant 0 : index
    %c0_13 = arith.constant 0 : index
    %55 = vector.load %arg5[%c0_12, %c0_13] : memref<144x16xbf16, #tpu.memory_space<vmem>>, vector<144x16xbf16>
    %cst_14 = arith.constant dense<0.000000e+00> : vector<256x16xf32>
    %56 = tpu.matmul %54, %55, %cst_14 {dimension_numbers = #tpu.dot_dimension_numbers<[1], [0], [0], [1], [0, 0, 1, 1], [], []>} : vector<256x144xbf16>, vector<144x16xbf16>, vector<256x16xf32> -> vector<256x16xf32>
    %c0_15 = arith.constant 0 : index
    %c0_16 = arith.constant 0 : index
    %57 = vector.load %arg6[%c0_15, %c0_16] : memref<1x16xf32, #tpu.memory_space<vmem>>, vector<1x16xf32>
    %58 = vector.broadcast %57 : vector<1x16xf32> to vector<256x16xf32>
    %59 = arith.addf %56, %58 : vector<256x16xf32>
    %cst_17 = arith.constant 0.000000e+00 : f32
    %60 = vector.broadcast %cst_17 : f32 to vector<256x16xf32>
    %61 = arith.maximumf %59, %60 : vector<256x16xf32>
    %62 = vector.shape_cast %61 : vector<256x16xf32> to vector<16x16x16xf32>
    %63 = vector.extract_strided_slice %43 {offsets = [0, 0, 0], sizes = [18, 18, 16], strides = [1, 1, 1]} : vector<20x20x16xbf16> to vector<18x18x16xbf16>
    %64 = vector.extract_strided_slice %43 {offsets = [0, 1, 0], sizes = [18, 18, 16], strides = [1, 1, 1]} : vector<20x20x16xbf16> to vector<18x18x16xbf16>
    %65 = vector.extract_strided_slice %43 {offsets = [0, 2, 0], sizes = [18, 18, 16], strides = [1, 1, 1]} : vector<20x20x16xbf16> to vector<18x18x16xbf16>
    %66 = vector.extract_strided_slice %43 {offsets = [1, 0, 0], sizes = [18, 18, 16], strides = [1, 1, 1]} : vector<20x20x16xbf16> to vector<18x18x16xbf16>
    %67 = vector.extract_strided_slice %43 {offsets = [1, 1, 0], sizes = [18, 18, 16], strides = [1, 1, 1]} : vector<20x20x16xbf16> to vector<18x18x16xbf16>
    %68 = vector.extract_strided_slice %43 {offsets = [1, 2, 0], sizes = [18, 18, 16], strides = [1, 1, 1]} : vector<20x20x16xbf16> to vector<18x18x16xbf16>
    %69 = vector.extract_strided_slice %43 {offsets = [2, 0, 0], sizes = [18, 18, 16], strides = [1, 1, 1]} : vector<20x20x16xbf16> to vector<18x18x16xbf16>
    %70 = vector.extract_strided_slice %43 {offsets = [2, 1, 0], sizes = [18, 18, 16], strides = [1, 1, 1]} : vector<20x20x16xbf16> to vector<18x18x16xbf16>
    %71 = vector.extract_strided_slice %43 {offsets = [2, 2, 0], sizes = [18, 18, 16], strides = [1, 1, 1]} : vector<20x20x16xbf16> to vector<18x18x16xbf16>
    %72 = tpu.concatenate %63, %64, %65, %66, %67, %68, %69, %70, %71 in 2 : vector<18x18x16xbf16>, vector<18x18x16xbf16>, vector<18x18x16xbf16>, vector<18x18x16xbf16>, vector<18x18x16xbf16>, vector<18x18x16xbf16>, vector<18x18x16xbf16>, vector<18x18x16xbf16>, vector<18x18x16xbf16> -> vector<18x18x144xbf16>
    %73 = vector.shape_cast %72 : vector<18x18x144xbf16> to vector<324x144xbf16>
    %c0_18 = arith.constant 0 : index
    %c0_19 = arith.constant 0 : index
    %74 = vector.load %arg7[%c0_18, %c0_19] : memref<144x16xbf16, #tpu.memory_space<vmem>>, vector<144x16xbf16>
    %cst_20 = arith.constant dense<0.000000e+00> : vector<324x16xf32>
    %75 = tpu.matmul %73, %74, %cst_20 {dimension_numbers = #tpu.dot_dimension_numbers<[1], [0], [0], [1], [0, 0, 1, 1], [], []>} : vector<324x144xbf16>, vector<144x16xbf16>, vector<324x16xf32> -> vector<324x16xf32>
    %c0_21 = arith.constant 0 : index
    %c0_22 = arith.constant 0 : index
    %76 = vector.load %arg8[%c0_21, %c0_22] : memref<1x16xf32, #tpu.memory_space<vmem>>, vector<1x16xf32>
    %77 = vector.broadcast %76 : vector<1x16xf32> to vector<324x16xf32>
    %78 = arith.addf %75, %77 : vector<324x16xf32>
    %cst_23 = arith.constant 0.000000e+00 : f32
    %79 = vector.broadcast %cst_23 : f32 to vector<324x16xf32>
    %80 = arith.maximumf %78, %79 : vector<324x16xf32>
    %81 = vector.shape_cast %80 : vector<324x16xf32> to vector<18x18x16xf32>
    %82 = tpu.iota {dimensions = array<i32: 0>} : vector<18x18xi32>
    %83 = tpu.iota {dimensions = array<i32: 1>} : vector<18x18xi32>
    %c16_i32_24 = arith.constant 16 : i32
    %84 = arith.muli %arg1, %c16_i32_24 : i32
    %85 = vector.broadcast %84 : i32 to vector<18x18xi32>
    %86 = arith.addi %85, %82 : vector<18x18xi32>
    %c1_i32 = arith.constant 1 : i32
    %87 = vector.broadcast %c1_i32 : i32 to vector<18x18xi32>
    %88 = arith.subi %86, %87 : vector<18x18xi32>
    %c1_i32_25 = arith.constant 1 : i32
    %89 = vector.broadcast %c1_i32_25 : i32 to vector<18x18xi32>
    %90 = arith.subi %83, %89 : vector<18x18xi32>
    %c0_i32_26 = arith.constant 0 : i32
    %91 = vector.broadcast %c0_i32_26 : i32 to vector<18x18xi32>
    %92 = arith.cmpi sge, %88, %91 : vector<18x18xi32>
    %c16_i32_27 = arith.constant 16 : i32
    %93 = vector.broadcast %c16_i32_27 : i32 to vector<18x18xi32>
    %94 = arith.cmpi slt, %88, %93 : vector<18x18xi32>
    %95 = arith.andi %92, %94 : vector<18x18xi1>
    %c0_i32_28 = arith.constant 0 : i32
    %96 = vector.broadcast %c0_i32_28 : i32 to vector<18x18xi32>
    %97 = arith.cmpi sge, %90, %96 : vector<18x18xi32>
    %98 = arith.andi %95, %97 : vector<18x18xi1>
    %c16_i32_29 = arith.constant 16 : i32
    %99 = vector.broadcast %c16_i32_29 : i32 to vector<18x18xi32>
    %100 = arith.cmpi slt, %90, %99 : vector<18x18xi32>
    %101 = arith.andi %98, %100 : vector<18x18xi1>
    %102 = arith.extui %101 : vector<18x18xi1> to vector<18x18xi32>
    %103 = arith.sitofp %102 : vector<18x18xi32> to vector<18x18xf32>
    %104 = vector.shape_cast %103 : vector<18x18xf32> to vector<18x18x1xf32>
    %105 = vector.broadcast %104 : vector<18x18x1xf32> to vector<18x18x16xf32>
    %106 = arith.mulf %81, %105 : vector<18x18x16xf32>
    %107 = arith.truncf %106 : vector<18x18x16xf32> to vector<18x18x16xbf16>
    %108 = vector.extract_strided_slice %107 {offsets = [0, 0, 0], sizes = [16, 16, 16], strides = [1, 1, 1]} : vector<18x18x16xbf16> to vector<16x16x16xbf16>
    %109 = vector.extract_strided_slice %107 {offsets = [0, 1, 0], sizes = [16, 16, 16], strides = [1, 1, 1]} : vector<18x18x16xbf16> to vector<16x16x16xbf16>
    %110 = vector.extract_strided_slice %107 {offsets = [0, 2, 0], sizes = [16, 16, 16], strides = [1, 1, 1]} : vector<18x18x16xbf16> to vector<16x16x16xbf16>
    %111 = vector.extract_strided_slice %107 {offsets = [1, 0, 0], sizes = [16, 16, 16], strides = [1, 1, 1]} : vector<18x18x16xbf16> to vector<16x16x16xbf16>
    %112 = vector.extract_strided_slice %107 {offsets = [1, 1, 0], sizes = [16, 16, 16], strides = [1, 1, 1]} : vector<18x18x16xbf16> to vector<16x16x16xbf16>
    %113 = vector.extract_strided_slice %107 {offsets = [1, 2, 0], sizes = [16, 16, 16], strides = [1, 1, 1]} : vector<18x18x16xbf16> to vector<16x16x16xbf16>
    %114 = vector.extract_strided_slice %107 {offsets = [2, 0, 0], sizes = [16, 16, 16], strides = [1, 1, 1]} : vector<18x18x16xbf16> to vector<16x16x16xbf16>
    %115 = vector.extract_strided_slice %107 {offsets = [2, 1, 0], sizes = [16, 16, 16], strides = [1, 1, 1]} : vector<18x18x16xbf16> to vector<16x16x16xbf16>
    %116 = vector.extract_strided_slice %107 {offsets = [2, 2, 0], sizes = [16, 16, 16], strides = [1, 1, 1]} : vector<18x18x16xbf16> to vector<16x16x16xbf16>
    %117 = tpu.concatenate %108, %109, %110, %111, %112, %113, %114, %115, %116 in 2 : vector<16x16x16xbf16>, vector<16x16x16xbf16>, vector<16x16x16xbf16>, vector<16x16x16xbf16>, vector<16x16x16xbf16>, vector<16x16x16xbf16>, vector<16x16x16xbf16>, vector<16x16x16xbf16>, vector<16x16x16xbf16> -> vector<16x16x144xbf16>
    %118 = vector.shape_cast %117 : vector<16x16x144xbf16> to vector<256x144xbf16>
    %c0_30 = arith.constant 0 : index
    %c0_31 = arith.constant 0 : index
    %119 = vector.load %arg9[%c0_30, %c0_31] : memref<144x16xbf16, #tpu.memory_space<vmem>>, vector<144x16xbf16>
    %cst_32 = arith.constant dense<0.000000e+00> : vector<256x16xf32>
    %120 = tpu.matmul %118, %119, %cst_32 {dimension_numbers = #tpu.dot_dimension_numbers<[1], [0], [0], [1], [0, 0, 1, 1], [], []>} : vector<256x144xbf16>, vector<144x16xbf16>, vector<256x16xf32> -> vector<256x16xf32>
    %c0_33 = arith.constant 0 : index
    %c0_34 = arith.constant 0 : index
    %121 = vector.load %arg10[%c0_33, %c0_34] : memref<1x16xf32, #tpu.memory_space<vmem>>, vector<1x16xf32>
    %122 = vector.broadcast %121 : vector<1x16xf32> to vector<256x16xf32>
    %123 = arith.addf %120, %122 : vector<256x16xf32>
    %cst_35 = arith.constant 0.000000e+00 : f32
    %124 = vector.broadcast %cst_35 : f32 to vector<256x16xf32>
    %125 = arith.maximumf %123, %124 : vector<256x16xf32>
    %126 = vector.shape_cast %125 : vector<256x16xf32> to vector<16x16x16xf32>
    %127 = vector.extract_strided_slice %4 {offsets = [2, 2, 0], sizes = [16, 16, 32], strides = [1, 1, 1]} : vector<20x20x32xf32> to vector<16x16x32xf32>
    %128 = tpu.concatenate %127, %62, %126 in 2 : vector<16x16x32xf32>, vector<16x16x16xf32>, vector<16x16x16xf32> -> vector<16x16x64xf32>
    %129 = vector.shape_cast %128 : vector<16x16x64xf32> to vector<16x1024xf32>
    %c0_36 = arith.constant 0 : index
    %c0_37 = arith.constant 0 : index
    %c0_38 = arith.constant 0 : index
    %130 = vector.load %arg11[%c0_36, %c0_37, %c0_38] : memref<1x16x1024xf32, #tpu.memory_space<vmem>>, vector<1x16x1024xf32>
    %131 = vector.shape_cast %130 : vector<1x16x1024xf32> to vector<16x1024xf32>
    %132 = vector.shape_cast %129 : vector<16x1024xf32> to vector<1x16x1024xf32>
    tpu.vector_store %arg11[%c0_36, %c0_37, %c0_38], %132 {strides = array<i32>} : memref<1x16x1024xf32, #tpu.memory_space<vmem>>, vector<1x16x1024xf32>,
    return
  }
  func.func @transform_0(%arg0: i32, %arg1: i32) -> (i32, i32, i32, i32) {
    %c0_i32 = arith.constant 0 : i32
    %c0_i32_0 = arith.constant 0 : i32
    %c0_i32_1 = arith.constant 0 : i32
    %c0_i32_2 = arith.constant 0 : i32
    return %arg0, %c0_i32, %c0_i32_0, %c0_i32_1 : i32, i32, i32, i32
  }
  func.func @transform_1(%arg0: i32, %arg1: i32) -> (i32, i32) {
    %c0_i32 = arith.constant 0 : i32
    %c0_i32_0 = arith.constant 0 : i32
    %c0_i32_1 = arith.constant 0 : i32
    return %c0_i32, %c0_i32_0 : i32, i32
  }
  func.func @transform_2(%arg0: i32, %arg1: i32) -> (i32, i32) {
    %c0_i32 = arith.constant 0 : i32
    %c0_i32_0 = arith.constant 0 : i32
    %c0_i32_1 = arith.constant 0 : i32
    return %c0_i32, %c0_i32_0 : i32, i32
  }
  func.func @transform_3(%arg0: i32, %arg1: i32) -> (i32, i32) {
    %c0_i32 = arith.constant 0 : i32
    %c0_i32_0 = arith.constant 0 : i32
    %c0_i32_1 = arith.constant 0 : i32
    return %c0_i32, %c0_i32_0 : i32, i32
  }
  func.func @transform_4(%arg0: i32, %arg1: i32) -> (i32, i32) {
    %c0_i32 = arith.constant 0 : i32
    %c0_i32_0 = arith.constant 0 : i32
    %c0_i32_1 = arith.constant 0 : i32
    return %c0_i32, %c0_i32_0 : i32, i32
  }
  func.func @transform_5(%arg0: i32, %arg1: i32) -> (i32, i32) {
    %c0_i32 = arith.constant 0 : i32
    %c0_i32_0 = arith.constant 0 : i32
    %c0_i32_1 = arith.constant 0 : i32
    return %c0_i32, %c0_i32_0 : i32, i32
  }
  func.func @transform_6(%arg0: i32, %arg1: i32) -> (i32, i32) {
    %c0_i32 = arith.constant 0 : i32
    %c0_i32_0 = arith.constant 0 : i32
    %c0_i32_1 = arith.constant 0 : i32
    return %c0_i32, %c0_i32_0 : i32, i32
  }
  func.func @transform_7(%arg0: i32, %arg1: i32) -> (i32, i32) {
    %c0_i32 = arith.constant 0 : i32
    %c0_i32_0 = arith.constant 0 : i32
    %c0_i32_1 = arith.constant 0 : i32
    return %c0_i32, %c0_i32_0 : i32, i32
  }
  func.func @transform_8(%arg0: i32, %arg1: i32) -> (i32, i32) {
    %c0_i32 = arith.constant 0 : i32
    %c0_i32_0 = arith.constant 0 : i32
    %c0_i32_1 = arith.constant 0 : i32
    return %c0_i32, %c0_i32_0 : i32, i32
  }
  func.func @transform_9(%arg0: i32, %arg1: i32) -> (i32, i32, i32) {
    %c0_i32 = arith.constant 0 : i32
    %c0_i32_0 = arith.constant 0 : i32
    return %arg0, %arg1, %c0_i32 : i32, i32, i32
  }
}

</mosaic_0001>

<llo_original>
// kernel: dense_block_forward.1
$region0: #{dense_block_forward.1}
  #allocation0 [shape = 'u32[]', space=smem, size = 0x4, offset = 0x4, fixed_abs, tag = 'smem constant byte address 0x4 - core index']
  #allocation1 [shape = 'u32[144,128]{1,0:T(1,128)}', space=vmem, size = 0x12000, scoped, tag = 'internal scratch']
  %s0 = inlined_call_operand.vmem [shape: f32[2,20,20,32], index: 0, kind: input, shape index: {}]
  %s1 = inlined_call_operand.vmem [shape: bf16[32,32], index: 1, kind: input, shape index: {}]
  %s2 = inlined_call_operand.vmem [shape: f32[1,32], index: 2, kind: input, shape index: {}]
  %s3 = inlined_call_operand.vmem [shape: bf16[144,16], index: 3, kind: input, shape index: {}]
  %s4 = inlined_call_operand.vmem [shape: f32[1,16], index: 4, kind: input, shape index: {}]
  %s5 = inlined_call_operand.vmem [shape: bf16[144,16], index: 5, kind: input, shape index: {}]
  %s6 = inlined_call_operand.vmem [shape: f32[1,16], index: 6, kind: input, shape index: {}]
  %s7 = inlined_call_operand.vmem [shape: bf16[144,16], index: 7, kind: input, shape index: {}]
  %s8 = inlined_call_operand.vmem [shape: f32[1,16], index: 8, kind: input, shape index: {}]
  %s9 = inlined_call_operand.vmem [shape: f32[2,16,1024], index: 9, kind: output, shape index: {}]
  %s10 = sld [smem:[#allocation0]]
  $region69: #{dense_block_forward.1} parent=0
    _
  %s12 = ssub.s32 1, %s10
  %s13 = scalar_select 0, %s12, %s10
  loop: start=0, step=1, limit=4
  $region2: #{dense_block_forward.1} parent=0 // loop_pre_header
    _
  $region3: #{dense_block_forward.1} parent=0 // loop_header
    %s15 = sphi 0, %s19
    %p16 = scmp.ge.s32.totalorder %s15, 4
    %s22 = sphi 0, %s34
    %s23 = sphi 0, %s30
    %s24 = sphi 0, %s22
    %s25 = sphi 0, %s23
    %s26 = sphi 0, %s24
    %s27 = sphi 0, %s25
    %s37 = sphi 0, %s39
    %s40 = sphi 0, %s37
    %s41 = sphi 0, %s40
    %s57 = sphi 0, %s41
    %s61 = sphi 0, %s61
    %s63 = sphi 0, %s61
    %s64 = sphi 0, %s63
    %s78 = sphi 0, %s64
    %s82 = sphi 0, %s82
    %s84 = sphi 0, %s82
    %s85 = sphi 0, %s84
    %s99 = sphi 0, %s85
    %s103 = sphi 0, %s103
    %s105 = sphi 0, %s103
    %s106 = sphi 0, %s105
    %s120 = sphi 0, %s106
    %s124 = sphi 0, %s124
    %s126 = sphi 0, %s124
    %s127 = sphi 0, %s126
    %s141 = sphi 0, %s127
    %s145 = sphi 0, %s145
    %s147 = sphi 0, %s145
    %s148 = sphi 0, %s147
    %s162 = sphi 0, %s148
    %s166 = sphi 0, %s166
    %s168 = sphi 0, %s166
    %s169 = sphi 0, %s168
    %s183 = sphi 0, %s169
    %s187 = sphi 0, %s187
    %s189 = sphi 0, %s187
    %s190 = sphi 0, %s189
    %s204 = sphi 0, %s190
    %s208 = sphi 0, %s208
    %s210 = sphi 0, %s208
    %s211 = sphi 0, %s210
    %s225 = sphi 0, %s211
    %s233 = sphi 0, %s235
    %s236 = sphi 0, %s233
    %s237 = sphi 0, %s236
    %s253 = sphi 0, %s237
  $region4: #{dense_block_forward.1} parent=0 // loop_header_branch
    %18 = sbr.rel (%p16) target = $region8
  $region5: #{dense_block_forward.1} parent=0 // loop_body
    %s20 = ssub.s32 %s15, 1
    %s21 = ssub.s32 %s15, 2
    %s28 = sadd.s32 1, %s23
    %p29 = scmp.ge.s32.totalorder %s28, 1
    %s30 = scalar_select %p29, 0, %s28
    %s31 = sadd.s32 1, %s22
    %s32 = scalar_select %p29, %s31, %s22
    %p33 = scmp.ge.s32.totalorder %s32, 2
    %s34 = scalar_select %p33, 0, %s32
    %s35 = ssub.s32 %s22, %s34
    %p36 = scmp.eq.s32.totalorder %s35, 0
    %s38 = sadd.s32 %s37, 1
    %s39 = scalar_select %p36, %s37, %s38
    %p42 = pneg %p36
    %p43 = scmp.eq.s32.totalorder %s15, 1
    %p44 = por %p42, %p43
    %p45 = scmp.ne.s32.totalorder %s37, %s40
    %p46 = scmp.eq.s32.totalorder %s15, 0
    %p47 = por %p45, %p46
    %p48 = scmp.ne.s32.totalorder %s37, %s40
    %p49 = scmp.eq.s32.totalorder %s20, 1
    %p50 = por %p48, %p49
    %p51 = scmp.ne.s32.totalorder %s40, %s41
    %p52 = scmp.eq.s32.totalorder %s20, 0
    %p53 = por %p51, %p52
    %p54 = scmp.ne.s32.totalorder %s40, %s41
    %p55 = scmp.eq.s32.totalorder %s21, 1
    %p56 = por %p54, %p55
    %p58 = scmp.ne.s32.totalorder %s41, %s57
    %p59 = scmp.eq.s32.totalorder %s21, 0
    %p60 = por %p58, %p59
    %s62 = sadd.s32 %s61, 1
    %p65 = scmp.eq.s32.totalorder %s15, 1
    %p66 = scmp.ne.s32.totalorder %s61, %s63
    %p67 = scmp.eq.s32.totalorder %s15, 0
    %p68 = por %p66, %p67
    %p69 = scmp.ne.s32.totalorder %s61, %s63
    %p70 = scmp.eq.s32.totalorder %s20, 1
    %p71 = por %p69, %p70
    %p72 = scmp.ne.s32.totalorder %s63, %s64
    %p73 = scmp.eq.s32.totalorder %s20, 0
    %p74 = por %p72, %p73
    %p75 = scmp.ne.s32.totalorder %s63, %s64
    %p76 = scmp.eq.s32.totalorder %s21, 1
    %p77 = por %p75, %p76
    %p79 = scmp.ne.s32.totalorder %s64, %s78
    %p80 = scmp.eq.s32.totalorder %s21, 0
    %p81 = por %p79, %p80
    %s83 = sadd.s32 %s82, 1
    %p86 = scmp.eq.s32.totalorder %s15, 1
    %p87 = scmp.ne.s32.totalorder %s82, %s84
    %p88 = scmp.eq.s32.totalorder %s15, 0
    %p89 = por %p87, %p88
    %p90 = scmp.ne.s32.totalorder %s82, %s84
    %p91 = scmp.eq.s32.totalorder %s20, 1
    %p92 = por %p90, %p91
    %p93 = scmp.ne.s32.totalorder %s84, %s85
    %p94 = scmp.eq.s32.totalorder %s20, 0
    %p95 = por %p93, %p94
    %p96 = scmp.ne.s32.totalorder %s84, %s85
    %p97 = scmp.eq.s32.totalorder %s21, 1
    %p98 = por %p96, %p97
    %p100 = scmp.ne.s32.totalorder %s85, %s99
    %p101 = scmp.eq.s32.totalorder %s21, 0
    %p102 = por %p100, %p101
    %s104 = sadd.s32 %s103, 1
    %p107 = scmp.eq.s32.totalorder %s15, 1
    %p108 = scmp.ne.s32.totalorder %s103, %s105
    %p109 = scmp.eq.s32.totalorder %s15, 0
    %p110 = por %p108, %p109
    %p111 = scmp.ne.s32.totalorder %s103, %s105
    %p112 = scmp.eq.s32.totalorder %s20, 1
    %p113 = por %p111, %p112
    %p114 = scmp.ne.s32.totalorder %s105, %s106
    %p115 = scmp.eq.s32.totalorder %s20, 0
    %p116 = por %p114, %p115
    %p117 = scmp.ne.s32.totalorder %s105, %s106
    %p118 = scmp.eq.s32.totalorder %s21, 1
    %p119 = por %p117, %p118
    %p121 = scmp.ne.s32.totalorder %s106, %s120
    %p122 = scmp.eq.s32.totalorder %s21, 0
    %p123 = por %p121, %p122
    %s125 = sadd.s32 %s124, 1
    %p128 = scmp.eq.s32.totalorder %s15, 1
    %p129 = scmp.ne.s32.totalorder %s124, %s126
    %p130 = scmp.eq.s32.totalorder %s15, 0
    %p131 = por %p129, %p130
    %p132 = scmp.ne.s32.totalorder %s124, %s126
    %p133 = scmp.eq.s32.totalorder %s20, 1
    %p134 = por %p132, %p133
    %p135 = scmp.ne.s32.totalorder %s126, %s127
    %p136 = scmp.eq.s32.totalorder %s20, 0
    %p137 = por %p135, %p136
    %p138 = scmp.ne.s32.totalorder %s126, %s127
    %p139 = scmp.eq.s32.totalorder %s21, 1
    %p140 = por %p138, %p139
    %p142 = scmp.ne.s32.totalorder %s127, %s141
    %p143 = scmp.eq.s32.totalorder %s21, 0
    %p144 = por %p142, %p143
    %s146 = sadd.s32 %s145, 1
    %p149 = scmp.eq.s32.totalorder %s15, 1
    %p150 = scmp.ne.s32.totalorder %s145, %s147
    %p151 = scmp.eq.s32.totalorder %s15, 0
    %p152 = por %p150, %p151
    %p153 = scmp.ne.s32.totalorder %s145, %s147
    %p154 = scmp.eq.s32.totalorder %s20, 1
    %p155 = por %p153, %p154
    %p156 = scmp.ne.s32.totalorder %s147, %s148
    %p157 = scmp.eq.s32.totalorder %s20, 0
    %p158 = por %p156, %p157
    %p159 = scmp.ne.s32.totalorder %s147, %s148
    %p160 = scmp.eq.s32.totalorder %s21, 1
    %p161 = por %p159, %p160
    %p163 = scmp.ne.s32.totalorder %s148, %s162
    %p164 = scmp.eq.s32.totalorder %s21, 0
    %p165 = por %p163, %p164
    %s167 = sadd.s32 %s166, 1
    %p170 = scmp.eq.s32.totalorder %s15, 1
    %p171 = scmp.ne.s32.totalorder %s166, %s168
    %p172 = scmp.eq.s32.totalorder %s15, 0
    %p173 = por %p171, %p172
    %p174 = scmp.ne.s32.totalorder %s166, %s168
    %p175 = scmp.eq.s32.totalorder %s20, 1
    %p176 = por %p174, %p175
    %p177 = scmp.ne.s32.totalorder %s168, %s169
    %p178 = scmp.eq.s32.totalorder %s20, 0
    %p179 = por %p177, %p178
    %p180 = scmp.ne.s32.totalorder %s168, %s169
    %p181 = scmp.eq.s32.totalorder %s21, 1
    %p182 = por %p180, %p181
    %p184 = scmp.ne.s32.totalorder %s169, %s183
    %p185 = scmp.eq.s32.totalorder %s21, 0
    %p186 = por %p184, %p185
    %s188 = sadd.s32 %s187, 1
    %p191 = scmp.eq.s32.totalorder %s15, 1
    %p192 = scmp.ne.s32.totalorder %s187, %s189
    %p193 = scmp.eq.s32.totalorder %s15, 0
    %p194 = por %p192, %p193
    %p195 = scmp.ne.s32.totalorder %s187, %s189
    %p196 = scmp.eq.s32.totalorder %s20, 1
    %p197 = por %p195, %p196
    %p198 = scmp.ne.s32.totalorder %s189, %s190
    %p199 = scmp.eq.s32.totalorder %s20, 0
    %p200 = por %p198, %p199
    %p201 = scmp.ne.s32.totalorder %s189, %s190
    %p202 = scmp.eq.s32.totalorder %s21, 1
    %p203 = por %p201, %p202
    %p205 = scmp.ne.s32.totalorder %s190, %s204
    %p206 = scmp.eq.s32.totalorder %s21, 0
    %p207 = por %p205, %p206
    %s209 = sadd.s32 %s208, 1
    %p212 = scmp.eq.s32.totalorder %s15, 1
    %p213 = scmp.ne.s32.totalorder %s208, %s210
    %p214 = scmp.eq.s32.totalorder %s15, 0
    %p215 = por %p213, %p214
    %p216 = scmp.ne.s32.totalorder %s208, %s210
    %p217 = scmp.eq.s32.totalorder %s20, 1
    %p218 = por %p216, %p217
    %p219 = scmp.ne.s32.totalorder %s210, %s211
    %p220 = scmp.eq.s32.totalorder %s20, 0
    %p221 = por %p219, %p220
    %p222 = scmp.ne.s32.totalorder %s210, %s211
    %p223 = scmp.eq.s32.totalorder %s21, 1
    %p224 = por %p222, %p223
    %p226 = scmp.ne.s32.totalorder %s211, %s225
    %p227 = scmp.eq.s32.totalorder %s21, 0
    %p228 = por %p226, %p227
    %s229 = ssub.s32 %s22, %s34
    %s230 = ssub.s32 %s23, %s30
    %s231 = sor.u32 %s229, %s230
    %p232 = scmp.eq.s32.totalorder %s231, 0
    %s234 = sadd.s32 %s233, 1
    %s235 = scalar_select %p232, %s233, %s234
    %p238 = pneg %p232
    %p239 = scmp.eq.s32.totalorder %s15, 1
    %p240 = por %p238, %p239
    %p241 = scmp.ne.s32.totalorder %s233, %s236
    %p242 = scmp.eq.s32.totalorder %s15, 0
    %p243 = por %p241, %p242
    %p244 = scmp.ne.s32.totalorder %s233, %s236
    %p245 = scmp.eq.s32.totalorder %s20, 1
    %p246 = por %p244, %p245
    %p247 = scmp.ne.s32.totalorder %s236, %s237
    %p248 = scmp.eq.s32.totalorder %s20, 0
    %p249 = por %p247, %p248
    %p250 = scmp.ne.s32.totalorder %s236, %s237
    %p251 = scmp.eq.s32.totalorder %s21, 1
    %p252 = por %p250, %p251
    %p254 = scmp.ne.s32.totalorder %s237, %s253
    %p255 = scmp.eq.s32.totalorder %s21, 0
    %p256 = por %p254, %p255
    %p257 = scmp.le.s32.totalorder 1, %s15
    %p258 = scmp.lt.s32.totalorder %s15, 3
    %p259 = pnand %p257, %p258
    %p260 = pneg %p259
    // Predicated region
    $region9: #{dense_block_forward.1} parent=5 // pred_check
      _
    $region10: #{dense_block_forward.1} parent=5 // pred_check_branch
      %262 = sbr.rel (%p259) target = $region12
    $region11: #{dense_block_forward.1} parent=5 // pred_region
      %s263 = ssub.s32 %s15, 1
      // Predicated region
      $region13: #{dense_block_forward.1} parent=11 // pred_check
        %p264 = pneg %p74
      $region14: #{dense_block_forward.1} parent=11 // pred_check_branch
        %266 = sbr.rel (%p264) target = $region16
      $region15: #{dense_block_forward.1} parent=11 // pred_region
        _
      $region16: #{dense_block_forward.1} parent=11 // pred_fallthru
        _
      // Predicated region
      $region17: #{dense_block_forward.1} parent=11 // pred_check
        %p267 = pneg %p95
      $region18: #{dense_block_forward.1} parent=11 // pred_check_branch
        %269 = sbr.rel (%p267) target = $region20
      $region19: #{dense_block_forward.1} parent=11 // pred_region
        _
      $region20: #{dense_block_forward.1} parent=11 // pred_fallthru
        _
      // Predicated region
      $region21: #{dense_block_forward.1} parent=11 // pred_check
        %p270 = pneg %p116
      $region22: #{dense_block_forward.1} parent=11 // pred_check_branch
        %272 = sbr.rel (%p270) target = $region24
      $region23: #{dense_block_forward.1} parent=11 // pred_region
        _
      $region24: #{dense_block_forward.1} parent=11 // pred_fallthru
        _
      // Predicated region
      $region25: #{dense_block_forward.1} parent=11 // pred_check
        %p273 = pneg %p137
      $region26: #{dense_block_forward.1} parent=11 // pred_check_branch
        %275 = sbr.rel (%p273) target = $region28
      $region27: #{dense_block_forward.1} parent=11 // pred_region
        _
      $region28: #{dense_block_forward.1} parent=11 // pred_fallthru
        _
      // Predicated region
      $region29: #{dense_block_forward.1} parent=11 // pred_check
        %p276 = pneg %p158
      $region30: #{dense_block_forward.1} parent=11 // pred_check_branch
        %278 = sbr.rel (%p276) target = $region32
      $region31: #{dense_block_forward.1} parent=11 // pred_region
        _
      $region32: #{dense_block_forward.1} parent=11 // pred_fallthru
        _
      // Predicated region
      $region33: #{dense_block_forward.1} parent=11 // pred_check
        %p279 = pneg %p179
      $region34: #{dense_block_forward.1} parent=11 // pred_check_branch
        %281 = sbr.rel (%p279) target = $region36
      $region35: #{dense_block_forward.1} parent=11 // pred_region
        _
      $region36: #{dense_block_forward.1} parent=11 // pred_fallthru
        _
      // Predicated region
      $region37: #{dense_block_forward.1} parent=11 // pred_check
        %p282 = pneg %p200
      $region38: #{dense_block_forward.1} parent=11 // pred_check_branch
        %284 = sbr.rel (%p282) target = $region40
      $region39: #{dense_block_forward.1} parent=11 // pred_region
        _
      $region40: #{dense_block_forward.1} parent=11 // pred_fallthru
        _
      // Predicated region
      $region41: #{dense_block_forward.1} parent=11 // pred_check
        %p285 = pneg %p221
      $region42: #{dense_block_forward.1} parent=11 // pred_check_branch
        %287 = sbr.rel (%p285) target = $region44
      $region43: #{dense_block_forward.1} parent=11 // pred_region
        _
      $region44: #{dense_block_forward.1} parent=11 // pred_fallthru
        _
    $region12: #{dense_block_forward.1} parent=5 // pred_fallthru
      _
    %p288 = scmp.lt.s32.totalorder %s15, 2
    // Predicated region
    $region45: #{dense_block_forward.1} parent=5 // pred_check
      %p289 = pneg %p288
    $region46: #{dense_block_forward.1} parent=5 // pred_check_branch
      %291 = sbr.rel (%p289) target = $region48
    $region47: #{dense_block_forward.1} parent=5 // pred_region
      // Predicated region
      $region49: #{dense_block_forward.1} parent=47 // pred_check
        %p292 = pneg %p47
      $region50: #{dense_block_forward.1} parent=47 // pred_check_branch
        %294 = sbr.rel (%p292) target = $region52
      $region51: #{dense_block_forward.1} parent=47 // pred_region
        %p295 = scmp.lt.s32.totalorder %s22, 1
        %s296 = scalar_select %p295, %s22, 1
        %s297 = smul.addr %s296, 60
        %s298 = smul.addr %s297, 8
        %s299 = scalar_lea.vmem %s0, %s298
      $region52: #{dense_block_forward.1} parent=47 // pred_fallthru
        _
    $region48: #{dense_block_forward.1} parent=5 // pred_fallthru
      _
    %p300 = scmp.le.s32.totalorder 1, %s15
    %p301 = scmp.lt.s32.totalorder %s15, 3
    %p302 = pnand %p300, %p301
    %p303 = pneg %p302
    // Predicated region
    $region53: #{dense_block_forward.1} parent=5 // pred_check
      _
    $region54: #{dense_block_forward.1} parent=5 // pred_check_branch
      %305 = sbr.rel (%p302) target = $region56
    $region55: #{dense_block_forward.1} parent=5 // pred_region
      %s306 = ssub.s32 %s15, 1
      %p307 = scmp.lt.s32.totalorder %s24, 1
      %s308 = scalar_select %p307, %s24, 1
      %s309 = smul.addr %s308, 60
      %s310 = smul.addr %s309, 8
      %s311 = scalar_lea.vmem %s0, %s310
      %p312 = pneg %p53
      %p313 = pneg %p50
      %p314 = pneg %p74
      %p315 = pneg %p71
      %p316 = pneg %p95
      %p317 = pneg %p92
      %p318 = pneg %p116
      %p319 = pneg %p113
      %p320 = pneg %p137
      %p321 = pneg %p134
      %p322 = pneg %p158
      %p323 = pneg %p155
      %p324 = pneg %p179
      %p325 = pneg %p176
      %p326 = pneg %p200
      %p327 = pneg %p197
      %p328 = pneg %p221
      %p329 = pneg %p218
      %p330 = pneg %p249
      %p331 = pneg %p246
      %s332 = smul.u32 2, %s25
      %p333 = scmp.lt.s32.totalorder %s24, 1
      %s334 = scalar_select %p333, %s24, 1
      %p335 = scmp.lt.s32.totalorder %s332, 1
      %s336 = scalar_select %p335, %s332, 1
      %s337 = smul.addr %s336, 8
      %s338 = smul.addr %s334, 16
      %s339 = sadd.s32 %s337, %s338
      %s340 = smul.addr %s339, 8
      %s341 = scalar_lea.vmem %s9, %s340
      %p342 = scmp.lt.s32.totalorder %s24, 1
      %s343 = scalar_select %p342, %s24, 1
      %s344 = smul.addr %s343, 60
      %s345 = smul.addr %s344, 8
      %s346 = scalar_lea.vmem %s0, %s345
      %s347 = smul.u32 2, %s25
      %p348 = scmp.lt.s32.totalorder %s24, 1
      %s349 = scalar_select %p348, %s24, 1
      %p350 = scmp.lt.s32.totalorder %s347, 1
      %s351 = scalar_select %p350, %s347, 1
      %s352 = smul.addr %s351, 8
      %s353 = smul.addr %s349, 16
      %s354 = sadd.s32 %s352, %s353
      %s355 = smul.addr %s354, 8
      %s356 = scalar_lea.vmem %s9, %s355
      %s357 = smul.u32 2, %s25
      %s359 = smul.u32 %s25, 16
      %s360 = smul.u32 %s359, 24
      %s361 = scalar_lea.vmem %s346, %s360
      %v362 = vld [vmem:[%s361] sm:$0xff]
      %v363 = vld [vmem:[%s361 + $0x8] sm:$0xff]
      %v364 = vld [vmem:[%s361 + $0x10] sm:$0xf]
      %v365 = vld [vmem:[%s361 + $0x18] sm:$0xff]
      %v366 = vld [vmem:[%s361 + $0x20] sm:$0xff]
      %v367 = vld [vmem:[%s361 + $0x28] sm:$0xf]
      %v368 = vld [vmem:[%s361 + $0x30] sm:$0xff]
      %v369 = vld [vmem:[%s361 + $0x38] sm:$0xff]
      %v370 = vld [vmem:[%s361 + $0x40] sm:$0xf]
      %v371 = vld [vmem:[%s361 + $0x48] sm:$0xff]
      %v372 = vld [vmem:[%s361 + $0x50] sm:$0xff]
      %v373 = vld [vmem:[%s361 + $0x58] sm:$0xf]
      %v374 = vld [vmem:[%s361 + $0x60] sm:$0xff]
      %v375 = vld [vmem:[%s361 + $0x68] sm:$0xff]
      %v376 = vld [vmem:[%s361 + $0x70] sm:$0xf]
      %v377 = vld [vmem:[%s361 + $0x78] sm:$0xff]
      %v378 = vld [vmem:[%s361 + $0x80] sm:$0xff]
      %v379 = vld [vmem:[%s361 + $0x88] sm:$0xf]
      %v380 = vld [vmem:[%s361 + $0x90] sm:$0xff]
      %v381 = vld [vmem:[%s361 + $0x98] sm:$0xff]
      %v382 = vld [vmem:[%s361 + $0xa0] sm:$0xf]
      %v383 = vld [vmem:[%s361 + $0xa8] sm:$0xff]
      %v384 = vld [vmem:[%s361 + $0xb0] sm:$0xff]
      %v385 = vld [vmem:[%s361 + $0xb8] sm:$0xf]
      %v386 = vld [vmem:[%s361 + $0xc0] sm:$0xff]
      %v387 = vld [vmem:[%s361 + $0xc8] sm:$0xff]
      %v388 = vld [vmem:[%s361 + $0xd0] sm:$0xf]
      %v389 = vld [vmem:[%s361 + $0xd8] sm:$0xff]
      %v390 = vld [vmem:[%s361 + $0xe0] sm:$0xff]
      %v391 = vld [vmem:[%s361 + $0xe8] sm:$0xf]
      %v392 = vld [vmem:[%s361 + $0xf0] sm:$0xff]
      %v393 = vld [vmem:[%s361 + $0xf8] sm:$0xff]
      %v394 = vld [vmem:[%s361 + $0x100] sm:$0xf]
      %v395 = vld [vmem:[%s361 + $0x108] sm:$0xff]
      %v396 = vld [vmem:[%s361 + $0x110] sm:$0xff]
      %v397 = vld [vmem:[%s361 + $0x118] sm:$0xf]
      %v398 = vld [vmem:[%s361 + $0x120] sm:$0xff]
      %v399 = vld [vmem:[%s361 + $0x128] sm:$0xff]
      %v400 = vld [vmem:[%s361 + $0x130] sm:$0xf]
      %v401 = vld [vmem:[%s361 + $0x138] sm:$0xff]
      %v402 = vld [vmem:[%s361 + $0x140] sm:$0xff]
      %v403 = vld [vmem:[%s361 + $0x148] sm:$0xf]
      %v404 = vld [vmem:[%s361 + $0x150] sm:$0xff]
      %v405 = vld [vmem:[%s361 + $0x158] sm:$0xff]
      %v406 = vld [vmem:[%s361 + $0x160] sm:$0xf]
      %v407 = vld [vmem:[%s361 + $0x168] sm:$0xff]
      %v408 = vld [vmem:[%s361 + $0x170] sm:$0xff]
      %v409 = vld [vmem:[%s361 + $0x178] sm:$0xf]
      %v410 = vld [vmem:[%s361 + $0x180] sm:$0xff]
      %v411 = vld [vmem:[%s361 + $0x188] sm:$0xff]
      %v412 = vld [vmem:[%s361 + $0x190] sm:$0xf]
      %v413 = vld [vmem:[%s361 + $0x198] sm:$0xff]
      %v414 = vld [vmem:[%s361 + $0x1a0] sm:$0xff]
      %v415 = vld [vmem:[%s361 + $0x1a8] sm:$0xf]
      %v416 = vld [vmem:[%s361 + $0x1b0] sm:$0xff]
      %v417 = vld [vmem:[%s361 + $0x1b8] sm:$0xff]
      %v418 = vld [vmem:[%s361 + $0x1c0] sm:$0xf]
      %v419 = vld [vmem:[%s361 + $0x1c8] sm:$0xff]
      %v420 = vld [vmem:[%s361 + $0x1d0] sm:$0xff]
      %v421 = vld [vmem:[%s361 + $0x1d8] sm:$0xf]
      %v482 = vcombine.high %v362, %v362
      %v483 = vcombine.high %v363, %v363
      %v484 = vcombine.high %v365, %v365
      %v485 = vcombine.high %v366, %v366
      %v486 = vcombine.high %v368, %v368
      %v487 = vcombine.high %v369, %v369
      %v488 = vcombine.high %v371, %v371
      %v489 = vcombine.high %v372, %v372
      %v490 = vcombine.high %v374, %v374
      %v491 = vcombine.high %v375, %v375
      %v492 = vcombine.high %v377, %v377
      %v493 = vcombine.high %v378, %v378
      %v494 = vcombine.high %v380, %v380
      %v495 = vcombine.high %v381, %v381
      %v496 = vcombine.high %v383, %v383
      %v497 = vcombine.high %v384, %v384
      %v498 = vcombine.high %v386, %v386
      %v499 = vcombine.high %v387, %v387
      %v500 = vcombine.high %v389, %v389
      %v501 = vcombine.high %v390, %v390
      %v502 = vcombine.high %v392, %v392
      %v503 = vcombine.high %v393, %v393
      %v504 = vcombine.high %v395, %v395
      %v505 = vcombine.high %v396, %v396
      %v506 = vcombine.high %v398, %v398
      %v507 = vcombine.high %v399, %v399
      %v508 = vcombine.high %v401, %v401
      %v509 = vcombine.high %v402, %v402
      %v510 = vcombine.high %v404, %v404
      %v511 = vcombine.high %v405, %v405
      %v512 = vcombine.high %v407, %v407
      %v513 = vcombine.high %v408, %v408
      %v514 = vcombine.high %v410, %v410
      %v515 = vcombine.high %v411, %v411
      %v516 = vcombine.high %v413, %v413
      %v517 = vcombine.high %v414, %v414
      %v518 = vcombine.high %v416, %v416
      %v519 = vcombine.high %v417, %v417
      %v520 = vcombine.high %v419, %v419
      %v521 = vcombine.high %v420, %v420
      %v522 = vcombine.low %v362, %v482
      %v523 = vcombine.low %v363, %v483
      %v524 = vcombine.low %v364, %v365
      %v525 = vcombine.low %v484, %v366
      %v526 = vcombine.low %v485, %v367
      %v527 = vcombine.low %v368, %v486
      %v528 = vcombine.low %v369, %v487
      %v529 = vcombine.low %v370, %v371
      %v530 = vcombine.low %v488, %v372
      %v531 = vcombine.low %v489, %v373
      %v532 = vcombine.low %v374, %v490
      %v533 = vcombine.low %v375, %v491
      %v534 = vcombine.low %v376, %v377
      %v535 = vcombine.low %v492, %v378
      %v536 = vcombine.low %v493, %v379
      %v537 = vcombine.low %v380, %v494
      %v538 = vcombine.low %v381, %v495
      %v539 = vcombine.low %v382, %v383
      %v540 = vcombine.low %v496, %v384
      %v541 = vcombine.low %v497, %v385
      %v542 = vcombine.low %v386, %v498
      %v543 = vcombine.low %v387, %v499
      %v544 = vcombine.low %v388, %v389
      %v545 = vcombine.low %v500, %v390
      %v546 = vcombine.low %v501, %v391
      %v547 = vcombine.low %v392, %v502
      %v548 = vcombine.low %v393, %v503
      %v549 = vcombine.low %v394, %v395
      %v550 = vcombine.low %v504, %v396
      %v551 = vcombine.low %v505, %v397
      %v552 = vcombine.low %v398, %v506
      %v553 = vcombine.low %v399, %v507
      %v554 = vcombine.low %v400, %v401
      %v555 = vcombine.low %v508, %v402
      %v556 = vcombine.low %v509, %v403
      %v557 = vcombine.low %v404, %v510
      %v558 = vcombine.low %v405, %v511
      %v559 = vcombine.low %v406, %v407
      %v560 = vcombine.low %v512, %v408
      %v561 = vcombine.low %v513, %v409
      %v562 = vcombine.low %v410, %v514
      %v563 = vcombine.low %v411, %v515
      %v564 = vcombine.low %v412, %v413
      %v565 = vcombine.low %v516, %v414
      %v566 = vcombine.low %v517, %v415
      %v567 = vcombine.low %v416, %v518
      %v568 = vcombine.low %v417, %v519
      %v569 = vcombine.low %v418, %v419
      %v570 = vcombine.low %v520, %v420
      %v571 = vcombine.low %v521, %v421
      %v622 = vpack.c.bf16 %v523, %v522
      %v623 = vpack.c.bf16 %v525, %v524
      %v624 = vpack.c.bf16 %v527, %v526
      %v625 = vpack.c.bf16 %v529, %v528
      %v626 = vpack.c.bf16 %v531, %v530
      %v627 = vpack.c.bf16 %v533, %v532
      %v628 = vpack.c.bf16 %v535, %v534
      %v629 = vpack.c.bf16 %v537, %v536
      %v630 = vpack.c.bf16 %v539, %v538
      %v631 = vpack.c.bf16 %v541, %v540
      %v632 = vpack.c.bf16 %v543, %v542
      %v633 = vpack.c.bf16 %v545, %v544
      %v634 = vpack.c.bf16 %v547, %v546
      %v635 = vpack.c.bf16 %v549, %v548
      %v636 = vpack.c.bf16 %v551, %v550
      %v637 = vpack.c.bf16 %v553, %v552
      %v638 = vpack.c.bf16 %v555, %v554
      %v639 = vpack.c.bf16 %v557, %v556
      %v640 = vpack.c.bf16 %v559, %v558
      %v641 = vpack.c.bf16 %v561, %v560
      %v642 = vpack.c.bf16 %v563, %v562
      %v643 = vpack.c.bf16 %v565, %v564
      %v644 = vpack.c.bf16 %v567, %v566
      %v645 = vpack.c.bf16 %v569, %v568
      %v646 = vpack.c.bf16 %v571, %v570
      %v647 = vld [vmem:[%s1] sm:$0xf]
      %v648 = vld [vmem:[%s1 + $0x4] sm:$0xf]
      %v649 = vld [vmem:[%s1 + $0x8] sm:$0xf]
      %v650 = vld [vmem:[%s1 + $0xc] sm:$0xf]
      %v651 = vld [vmem:[%s2] sm:$0x1]
      %v653 = vlaneseq
      %v654 = vshrl.u32 %v653, 7
      %v655 = vsub.s32 0, %v654
      %v656 = vrot.slane %v651, %v655
      %v662 = vunpack.c.l.b16 %v647
      %v663 = vunpack.c.l.b16 %v648
      %v664 = vunpack.c.l.b16 %v649
      %v665 = vunpack.c.l.b16 %v650
      %v666 = vpack.c.b16 %v663, %v662
      %v667 = vpack.c.b16 %v665, %v664
      %vm670 = vcmask 261120
      %v672 = vsel %vm670, %v622, 0
      %v675 = vsel %vm670, %v623, 0
      %v678 = vsel %vm670, %v624, 0
      %v681 = vsel %vm670, %v625, 0
      %v684 = vsel %vm670, %v626, 0
      %v687 = vsel %vm670, %v627, 0
      %v690 = vsel %vm670, %v628, 0
      %v693 = vsel %vm670, %v629, 0
      %v696 = vsel %vm670, %v630, 0
      %v699 = vsel %vm670, %v631, 0
      %v702 = vsel %vm670, %v632, 0
      %v705 = vsel %vm670, %v633, 0
      %v708 = vsel %vm670, %v634, 0
      %v711 = vsel %vm670, %v635, 0
      %v714 = vsel %vm670, %v636, 0
      %v717 = vsel %vm670, %v637, 0
      %v720 = vsel %vm670, %v638, 0
      %v723 = vsel %vm670, %v639, 0
      %v726 = vsel %vm670, %v640, 0
      %v729 = vsel %vm670, %v641, 0
      %v732 = vsel %vm670, %v642, 0
      %v735 = vsel %vm670, %v643, 0
      %v738 = vsel %vm670, %v644, 0
      %v741 = vsel %vm670, %v645, 0
      %v744 = vsel %vm670, %v646, 0
      %746 = vmatprep.subr.bf16.mxu0 0
      %747 = vmatpush1.bf16.msra.mxu0 %v666
      %748 = vmatprep.subr.bf16.mxu0 0
      %749 = vmatpush1.bf16.msra.mxu0 %v667
      %750 = vmatprep.subr.bf16.mxu0 0
      %751 = vmatpush1.bf16.msra.mxu0 0
      %752 = vmatprep.subr.bf16.mxu0 0
      %753 = vmatpush1.bf16.msra.mxu0 0
      %754 = vmatprep.subr.bf16.mxu0 0
      %755 = vmatpush1.bf16.msra.mxu0 0
      %756 = vmatprep.subr.bf16.mxu0 0
      %757 = vmatpush1.bf16.msra.mxu0 0
      %758 = vmatprep.subr.bf16.mxu0 0
      %759 = vmatpush1.bf16.msra.mxu0 0
      %760 = vmatprep.subr.bf16.mxu0 0
      %761 = vmatpush1.bf16.msra.mxu0 0
      %762 = vmatprep.subr.bf16.mxu0 0
      %763 = vmatpush1.bf16.msra.mxu0 0
      %764 = vmatprep.subr.bf16.mxu0 0
      %765 = vmatpush1.bf16.msra.mxu0 0
      %766 = vmatprep.subr.bf16.mxu0 0
      %767 = vmatpush1.bf16.msra.mxu0 0
      %768 = vmatprep.subr.bf16.mxu0 0
      %769 = vmatpush1.bf16.msra.mxu0 0
      %770 = vmatprep.subr.bf16.mxu0 0
      %771 = vmatpush1.bf16.msra.mxu0 0
      %772 = vmatprep.subr.bf16.mxu0 0
      %773 = vmatpush1.bf16.msra.mxu0 0
      %774 = vmatprep.subr.bf16.mxu0 0
      %775 = vmatpush1.bf16.msra.mxu0 0
      %776 = vmatprep.subr.bf16.mxu0 0
      %777 = vmatpush1.bf16.msra.mxu0 0
      %778 = vmatprep.mubr.bf16.mxu0 0
      %779 = vmatmul.mubr.bf16.gmra.mrb[0].mxu0 %v672
      %v780 = vpop.f32.mrb[0].mxu0
      %v781 = vadd.f32 %v656, %v780
      %v782 = vpop.f32.mrb[0].mxu0
      %v783 = vpop.f32.mrb[0].mxu0
      %v784 = vadd.f32 %v656, %v783
      %v785 = vpop.f32.mrb[0].mxu0
      %786 = vmatprep.mubr.bf16.mxu0 0
      %787 = vmatmul.mubr.bf16.gmra.mrb[0].mxu0 %v675
      %v788 = vpop.f32.mrb[0].mxu0
      %v789 = vadd.f32 %v656, %v788
      %v790 = vpop.f32.mrb[0].mxu0
      %v791 = vpop.f32.mrb[0].mxu0
      %v792 = vadd.f32 %v656, %v791
      %v793 = vpop.f32.mrb[0].mxu0
      %794 = vmatprep.mubr.bf16.mxu0 0
      %795 = vmatmul.mubr.bf16.gmra.mrb[0].mxu0 %v678
      %v796 = vpop.f32.mrb[0].mxu0
      %v797 = vadd.f32 %v656, %v796
      %v798 = vpop.f32.mrb[0].mxu0
      %v799 = vpop.f32.mrb[0].mxu0
      %v800 = vadd.f32 %v656, %v799
      %v801 = vpop.f32.mrb[0].mxu0
      %802 = vmatprep.mubr.bf16.mxu0 0
      %803 = vmatmul.mubr.bf16.gmra.mrb[0].mxu0 %v681
      %v804 = vpop.f32.mrb[0].mxu0
      %v805 = vadd.f32 %v656, %v804
      %v806 = vpop.f32.mrb[0].mxu0
      %v807 = vpop.f32.mrb[0].mxu0
      %v808 = vadd.f32 %v656, %v807
      %v809 = vpop.f32.mrb[0].mxu0
      %810 = vmatprep.mubr.bf16.mxu0 0
      %811 = vmatmul.mubr.bf16.gmra.mrb[0].mxu0 %v684
      %v812 = vpop.f32.mrb[0].mxu0
      %v813 = vadd.f32 %v656, %v812
      %v814 = vpop.f32.mrb[0].mxu0
      %v815 = vpop.f32.mrb[0].mxu0
      %v816 = vadd.f32 %v656, %v815
      %v817 = vpop.f32.mrb[0].mxu0
      %818 = vmatprep.mubr.bf16.mxu0 0
      %819 = vmatmul.mubr.bf16.gmra.mrb[0].mxu0 %v687
      %v820 = vpop.f32.mrb[0].mxu0
      %v821 = vadd.f32 %v656, %v820
      %v822 = vpop.f32.mrb[0].mxu0
      %v823 = vpop.f32.mrb[0].mxu0
      %v824 = vadd.f32 %v656, %v823
      %v825 = vpop.f32.mrb[0].mxu0
      %826 = vmatprep.mubr.bf16.mxu0 0
      %827 = vmatmul.mubr.bf16.gmra.mrb[0].mxu0 %v690
      %v828 = vpop.f32.mrb[0].mxu0
      %v829 = vadd.f32 %v656, %v828
      %v830 = vpop.f32.mrb[0].mxu0
      %v831 = vpop.f32.mrb[0].mxu0
      %v832 = vadd.f32 %v656, %v831
      %v833 = vpop.f32.mrb[0].mxu0
      %834 = vmatprep.mubr.bf16.mxu0 0
      %835 = vmatmul.mubr.bf16.gmra.mrb[0].mxu0 %v693
      %v836 = vpop.f32.mrb[0].mxu0
      %v837 = vadd.f32 %v656, %v836
      %v838 = vpop.f32.mrb[0].mxu0
      %v839 = vpop.f32.mrb[0].mxu0
      %v840 = vadd.f32 %v656, %v839
      %v841 = vpop.f32.mrb[0].mxu0
      %842 = vmatprep.mubr.bf16.mxu0 0
      %843 = vmatmul.mubr.bf16.gmra.mrb[0].mxu0 %v696
      %v844 = vpop.f32.mrb[0].mxu0
      %v845 = vadd.f32 %v656, %v844
      %v846 = vpop.f32.mrb[0].mxu0
      %v847 = vpop.f32.mrb[0].mxu0
      %v848 = vadd.f32 %v656, %v847
      %v849 = vpop.f32.mrb[0].mxu0
      %850 = vmatprep.mubr.bf16.mxu0 0
      %851 = vmatmul.mubr.bf16.gmra.mrb[0].mxu0 %v699
      %v852 = vpop.f32.mrb[0].mxu0
      %v853 = vadd.f32 %v656, %v852
      %v854 = vpop.f32.mrb[0].mxu0
      %v855 = vpop.f32.mrb[0].mxu0
      %v856 = vadd.f32 %v656, %v855
      %v857 = vpop.f32.mrb[0].mxu0
      %858 = vmatprep.mubr.bf16.mxu0 0
      %859 = vmatmul.mubr.bf16.gmra.mrb[0].mxu0 %v702
      %v860 = vpop.f32.mrb[0].mxu0
      %v861 = vadd.f32 %v656, %v860
      %v862 = vpop.f32.mrb[0].mxu0
      %v863 = vpop.f32.mrb[0].mxu0
      %v864 = vadd.f32 %v656, %v863
      %v865 = vpop.f32.mrb[0].mxu0
      %866 = vmatprep.mubr.bf16.mxu0 0
      %867 = vmatmul.mubr.bf16.gmra.mrb[0].mxu0 %v705
      %v868 = vpop.f32.mrb[0].mxu0
      %v869 = vadd.f32 %v656, %v868
      %v870 = vpop.f32.mrb[0].mxu0
      %v871 = vpop.f32.mrb[0].mxu0
      %v872 = vadd.f32 %v656, %v871
      %v873 = vpop.f32.mrb[0].mxu0
      %874 = vmatprep.mubr.bf16.mxu0 0
      %875 = vmatmul.mubr.bf16.gmra.mrb[0].mxu0 %v708
      %v876 = vpop.f32.mrb[0].mxu0
      %v877 = vadd.f32 %v656, %v876
      %v878 = vpop.f32.mrb[0].mxu0
      %v879 = vpop.f32.mrb[0].mxu0
      %v880 = vadd.f32 %v656, %v879
      %v881 = vpop.f32.mrb[0].mxu0
      %882 = vmatprep.mubr.bf16.mxu0 0
      %883 = vmatmul.mubr.bf16.gmra.mrb[0].mxu0 %v711
      %v884 = vpop.f32.mrb[0].mxu0
      %v885 = vadd.f32 %v656, %v884
      %v886 = vpop.f32.mrb[0].mxu0
      %v887 = vpop.f32.mrb[0].mxu0
      %v888 = vadd.f32 %v656, %v887
      %v889 = vpop.f32.mrb[0].mxu0
      %890 = vmatprep.mubr.bf16.mxu0 0
      %891 = vmatmul.mubr.bf16.gmra.mrb[0].mxu0 %v714
      %v892 = vpop.f32.mrb[0].mxu0
      %v893 = vadd.f32 %v656, %v892
      %v894 = vpop.f32.mrb[0].mxu0
      %v895 = vpop.f32.mrb[0].mxu0
      %v896 = vadd.f32 %v656, %v895
      %v897 = vpop.f32.mrb[0].mxu0
      %898 = vmatprep.mubr.bf16.mxu0 0
      %899 = vmatmul.mubr.bf16.gmra.mrb[0].mxu0 %v717
      %v900 = vpop.f32.mrb[0].mxu0
      %v901 = vadd.f32 %v656, %v900
      %v902 = vpop.f32.mrb[0].mxu0
      %v903 = vpop.f32.mrb[0].mxu0
      %v904 = vadd.f32 %v656, %v903
      %v905 = vpop.f32.mrb[0].mxu0
      %906 = vmatprep.mubr.bf16.mxu0 0
      %907 = vmatmul.mubr.bf16.gmra.mrb[0].mxu0 %v720
      %v908 = vpop.f32.mrb[0].mxu0
      %v909 = vadd.f32 %v656, %v908
      %v910 = vpop.f32.mrb[0].mxu0
      %v911 = vpop.f32.mrb[0].mxu0
      %v912 = vadd.f32 %v656, %v911
      %v913 = vpop.f32.mrb[0].mxu0
      %914 = vmatprep.mubr.bf16.mxu0 0
      %915 = vmatmul.mubr.bf16.gmra.mrb[0].mxu0 %v723
      %v916 = vpop.f32.mrb[0].mxu0
      %v917 = vadd.f32 %v656, %v916
      %v918 = vpop.f32.mrb[0].mxu0
      %v919 = vpop.f32.mrb[0].mxu0
      %v920 = vadd.f32 %v656, %v919
      %v921 = vpop.f32.mrb[0].mxu0
      %922 = vmatprep.mubr.bf16.mxu0 0
      %923 = vmatmul.mubr.bf16.gmra.mrb[0].mxu0 %v726
      %v924 = vpop.f32.mrb[0].mxu0
      %v925 = vadd.f32 %v656, %v924
      %v926 = vpop.f32.mrb[0].mxu0
      %v927 = vpop.f32.mrb[0].mxu0
      %v928 = vadd.f32 %v656, %v927
      %v929 = vpop.f32.mrb[0].mxu0
      %930 = vmatprep.mubr.bf16.mxu0 0
      %931 = vmatmul.mubr.bf16.gmra.mrb[0].mxu0 %v729
      %v932 = vpop.f32.mrb[0].mxu0
      %v933 = vadd.f32 %v656, %v932
      %v934 = vpop.f32.mrb[0].mxu0
      %v935 = vpop.f32.mrb[0].mxu0
      %v936 = vadd.f32 %v656, %v935
      %v937 = vpop.f32.mrb[0].mxu0
      %938 = vmatprep.mubr.bf16.mxu0 0
      %939 = vmatmul.mubr.bf16.gmra.mrb[0].mxu0 %v732
      %v940 = vpop.f32.mrb[0].mxu0
      %v941 = vadd.f32 %v656, %v940
      %v942 = vpop.f32.mrb[0].mxu0
      %v943 = vpop.f32.mrb[0].mxu0
      %v944 = vadd.f32 %v656, %v943
      %v945 = vpop.f32.mrb[0].mxu0
      %946 = vmatprep.mubr.bf16.mxu0 0
      %947 = vmatmul.mubr.bf16.gmra.mrb[0].mxu0 %v735
      %v948 = vpop.f32.mrb[0].mxu0
      %v949 = vadd.f32 %v656, %v948
      %v950 = vpop.f32.mrb[0].mxu0
      %v951 = vpop.f32.mrb[0].mxu0
      %v952 = vadd.f32 %v656, %v951
      %v953 = vpop.f32.mrb[0].mxu0
      %954 = vmatprep.mubr.bf16.mxu0 0
      %955 = vmatmul.mubr.bf16.gmra.mrb[0].mxu0 %v738
      %v956 = vpop.f32.mrb[0].mxu0
      %v957 = vadd.f32 %v656, %v956
      %v958 = vpop.f32.mrb[0].mxu0
      %v959 = vpop.f32.mrb[0].mxu0
      %v960 = vadd.f32 %v656, %v959
      %v961 = vpop.f32.mrb[0].mxu0
      %962 = vmatprep.mubr.bf16.mxu0 0
      %963 = vmatmul.mubr.bf16.gmra.mrb[0].mxu0 %v741
      %v964 = vpop.f32.mrb[0].mxu0
      %v965 = vadd.f32 %v656, %v964
      %v966 = vpop.f32.mrb[0].mxu0
      %v967 = vpop.f32.mrb[0].mxu0
      %v968 = vadd.f32 %v656, %v967
      %v969 = vpop.f32.mrb[0].mxu0
      %970 = vmatprep.mubr.bf16.mxu0 0
      %971 = vmatmul.mubr.bf16.gmra.mrb[0].mxu0 %v744
      %v972 = vpop.f32.mrb[0].mxu0
      %v973 = vadd.f32 %v656, %v972
      %v974 = vpop.f32.mrb[0].mxu0
      %v975 = vpop.f32.mrb[0].mxu0
      %v976 = vadd.f32 %v656, %v975
      %v977 = vpop.f32.mrb[0].mxu0
      %978 = vdwg.mxu0
      %v979 = vmax.f32 %v781, 0.0
      %v980 = vmax.f32 %v784, 0.0
      %v981 = vmax.f32 %v789, 0.0
      %v982 = vmax.f32 %v792, 0.0
      %v983 = vmax.f32 %v797, 0.0
      %v984 = vmax.f32 %v800, 0.0
      %v985 = vmax.f32 %v805, 0.0
      %v986 = vmax.f32 %v808, 0.0
      %v987 = vmax.f32 %v813, 0.0
      %v988 = vmax.f32 %v816, 0.0
      %v989 = vmax.f32 %v821, 0.0
      %v990 = vmax.f32 %v824, 0.0
      %v991 = vmax.f32 %v829, 0.0
      %v992 = vmax.f32 %v832, 0.0
      %v993 = vmax.f32 %v837, 0.0
      %v994 = vmax.f32 %v840, 0.0
      %v995 = vmax.f32 %v845, 0.0
      %v996 = vmax.f32 %v848, 0.0
      %v997 = vmax.f32 %v853, 0.0
      %v998 = vmax.f32 %v856, 0.0
      %v999 = vmax.f32 %v861, 0.0
      %v1000 = vmax.f32 %v864, 0.0
      %v1001 = vmax.f32 %v869, 0.0
      %v1002 = vmax.f32 %v872, 0.0
      %v1003 = vmax.f32 %v877, 0.0
      %v1004 = vmax.f32 %v880, 0.0
      %v1005 = vmax.f32 %v885, 0.0
      %v1006 = vmax.f32 %v888, 0.0
      %v1007 = vmax.f32 %v893, 0.0
      %v1008 = vmax.f32 %v896, 0.0
      %v1009 = vmax.f32 %v901, 0.0
      %v1010 = vmax.f32 %v904, 0.0
      %v1011 = vmax.f32 %v909, 0.0
      %v1012 = vmax.f32 %v912, 0.0
      %v1013 = vmax.f32 %v917, 0.0
      %v1014 = vmax.f32 %v920, 0.0
      %v1015 = vmax.f32 %v925, 0.0
      %v1016 = vmax.f32 %v928, 0.0
      %v1017 = vmax.f32 %v933, 0.0
      %v1018 = vmax.f32 %v936, 0.0
      %v1019 = vmax.f32 %v941, 0.0
      %v1020 = vmax.f32 %v944, 0.0
      %v1021 = vmax.f32 %v949, 0.0
      %v1022 = vmax.f32 %v952, 0.0
      %v1023 = vmax.f32 %v957, 0.0
      %v1024 = vmax.f32 %v960, 0.0
      %v1025 = vmax.f32 %v965, 0.0
      %v1026 = vmax.f32 %v968, 0.0
      %v1027 = vmax.f32 %v973, 0.0
      %v1028 = vmax.f32 %v976, 0.0
      %v1079 = vcombine.high %v979, %v979
      %v1080 = vcombine.high %v980, %v980
      %v1081 = vcombine.high %v981, %v981
      %v1082 = vcombine.high %v982, %v982
      %v1083 = vcombine.high %v983, %v983
      %v1084 = vcombine.high %v984, %v984
      %v1085 = vcombine.high %v985, %v985
      %v1086 = vcombine.high %v986, %v986
      %v1087 = vcombine.high %v987, %v987
      %v1088 = vcombine.high %v988, %v988
      %v1089 = vcombine.high %v989, %v989
      %v1090 = vcombine.high %v990, %v990
      %v1091 = vcombine.high %v991, %v991
      %v1092 = vcombine.high %v992, %v992
      %v1093 = vcombine.high %v993, %v993
      %v1094 = vcombine.high %v994, %v994
      %v1095 = vcombine.high %v995, %v995
      %v1096 = vcombine.high %v996, %v996
      %v1097 = vcombine.high %v997, %v997
      %v1098 = vcombine.high %v998, %v998
      %v1099 = vcombine.high %v999, %v999
      %v1100 = vcombine.high %v1000, %v1000
      %v1101 = vcombine.high %v1001, %v1001
      %v1102 = vcombine.high %v1002, %v1002
      %v1103 = vcombine.high %v1003, %v1003
      %v1104 = vcombine.high %v1004, %v1004
      %v1105 = vcombine.high %v1005, %v1005
      %v1106 = vcombine.high %v1006, %v1006
      %v1107 = vcombine.high %v1007, %v1007
      %v1108 = vcombine.high %v1008, %v1008
      %v1109 = vcombine.high %v1009, %v1009
      %v1110 = vcombine.high %v1010, %v1010
      %v1111 = vcombine.high %v1011, %v1011
      %v1112 = vcombine.high %v1012, %v1012
      %v1113 = vcombine.high %v1013, %v1013
      %v1114 = vcombine.high %v1014, %v1014
      %v1115 = vcombine.high %v1015, %v1015
      %v1116 = vcombine.high %v1016, %v1016
      %v1117 = vcombine.high %v1017, %v1017
      %v1118 = vcombine.high %v1018, %v1018
      %v1119 = vcombine.high %v1019, %v1019
      %v1120 = vcombine.high %v1020, %v1020
      %v1121 = vcombine.high %v1021, %v1021
      %v1122 = vcombine.high %v1022, %v1022
      %v1123 = vcombine.high %v1023, %v1023
      %v1124 = vcombine.high %v1024, %v1024
      %v1125 = vcombine.high %v1025, %v1025
      %v1126 = vcombine.high %v1026, %v1026
      %v1127 = vcombine.high %v1027, %v1027
      %v1128 = vcombine.high %v1028, %v1028
      %v1179 = vlaneseq
      %v1180 = vshrl.u32 %v1179, 7
      %v1181 = vadd.s32 %v1180, 8
      %v1182 = vadd.s32 %v1180, 16
      %v1183 = vlaneseq
      %v1184 = vand.u32 %v1183, 127
      %v1185 = vstv %s359
      %v1186 = vadd.s32 %v1185, %v1180
      %v1187 = vadd.s32 %v1185, %v1181
      %v1188 = vadd.s32 %v1185, %v1182
      %v1189 = vsub.s32 %v1186, 2
      %v1190 = vsub.s32 %v1187, 2
      %v1191 = vsub.s32 %v1188, 2
      %v1192 = vsub.s32 %v1184, 2
      %vm1193 = vcmp.ge.s32.totalorder %v1189, 0
      %vm1194 = vcmp.ge.s32.totalorder %v1190, 0
      %vm1195 = vcmp.ge.s32.totalorder %v1191, 0
      %vm1196 = vcmp.lt.s32.totalorder %v1189, 16
      %vm1197 = vcmp.lt.s32.totalorder %v1190, 16
      %vm1198 = vcmp.lt.s32.totalorder %v1191, 16
      %vm1199 = vmand %vm1193, %vm1196
      %vm1200 = vmand %vm1194, %vm1197
      %vm1201 = vmand %vm1195, %vm1198
      %vm1202 = vcmp.ge.s32.totalorder %v1192, 0
      %vm1203 = vmand %vm1199, %vm1202
      %vm1204 = vmand %vm1200, %vm1202
      %vm1205 = vmand %vm1201, %vm1202
      %vm1206 = vcmp.lt.s32.totalorder %v1192, 16
      %vm1207 = vmand %vm1203, %vm1206
      %vm1208 = vmand %vm1204, %vm1206
      %vm1209 = vmand %vm1205, %vm1206
      %v1210 = vsel %vm1207, 1, 0
      %v1211 = vsel %vm1208, 1, 0
      %v1212 = vsel %vm1209, 1, 0
      %v1213 = vcvt.s32.f32 %v1210
      %v1214 = vcvt.s32.f32 %v1211
      %v1215 = vcvt.s32.f32 %v1212
      %v1216 = vlaneseq
      %v1217 = vshrl.u32 %v1216, 7
      %v1218 = vsub.s32 0, %v1217
      %v1219 = vrot.slane %v1213, %v1218
      %1221 = vbcast.lane.b32.xlu0 %v1219, 256
      %v1222 = vpop.permute.xlu0 %1221
      %s1224 = sor.u32 256, 8
      %1225 = vbcast.lane.b32.xlu0 %v1219, %s1224
      %v1226 = vpop.permute.xlu0 %1225
      %s1228 = sor.u32 256, 16
      %1229 = vbcast.lane.b32.xlu0 %v1219, %s1228
      %v1230 = vpop.permute.xlu0 %1229
      %v1231 = vlaneseq
      %v1232 = vshrl.u32 %v1231, 7
      %v1233 = vsub.s32 1, %v1232
      %v1234 = vrot.slane %v1213, %v1233
      %1236 = vbcast.lane.b32.xlu0 %v1234, 256
      %v1237 = vpop.permute.xlu0 %1236
      %s1239 = sor.u32 256, 8
      %1240 = vbcast.lane.b32.xlu0 %v1234, %s1239
      %v1241 = vpop.permute.xlu0 %1240
      %s1243 = sor.u32 256, 16
      %1244 = vbcast.lane.b32.xlu0 %v1234, %s1243
      %v1245 = vpop.permute.xlu0 %1244
      %v1246 = vlaneseq
      %v1247 = vshrl.u32 %v1246, 7
      %v1248 = vsub.s32 2, %v1247
      %v1249 = vrot.slane %v1213, %v1248
      %1251 = vbcast.lane.b32.xlu0 %v1249, 256
      %v1252 = vpop.permute.xlu0 %1251
      %s1254 = sor.u32 256, 8
      %1255 = vbcast.lane.b32.xlu0 %v1249, %s1254
      %v1256 = vpop.permute.xlu0 %1255
      %s1258 = sor.u32 256, 16
      %1259 = vbcast.lane.b32.xlu0 %v1249, %s1258
      %v1260 = vpop.permute.xlu0 %1259
      %v1261 = vlaneseq
      %v1262 = vshrl.u32 %v1261, 7
      %v1263 = vsub.s32 3, %v1262
      %v1264 = vrot.slane %v1213, %v1263
      %1266 = vbcast.lane.b32.xlu0 %v1264, 256
      %v1267 = vpop.permute.xlu0 %1266
      %s1269 = sor.u32 256, 8
      %1270 = vbcast.lane.b32.xlu0 %v1264, %s1269
      %v1271 = vpop.permute.xlu0 %1270
      %s1273 = sor.u32 256, 16
      %1274 = vbcast.lane.b32.xlu0 %v1264, %s1273
      %v1275 = vpop.permute.xlu0 %1274
      %v1276 = vlaneseq
      %v1277 = vshrl.u32 %v1276, 7
      %v1278 = vsub.s32 4, %v1277
      %v1279 = vrot.slane %v1213, %v1278
      %1281 = vbcast.lane.b32.xlu0 %v1279, 256
      %v1282 = vpop.permute.xlu0 %1281
      %s1284 = sor.u32 256, 8
      %1285 = vbcast.lane.b32.xlu0 %v1279, %s1284
      %v1286 = vpop.permute.xlu0 %1285
      %s1288 = sor.u32 256, 16
      %1289 = vbcast.lane.b32.xlu0 %v1279, %s1288
      %v1290 = vpop.permute.xlu0 %1289
      %v1291 = vlaneseq
      %v1292 = vshrl.u32 %v1291, 7
      %v1293 = vsub.s32 5, %v1292
      %v1294 = vrot.slane %v1213, %v1293
      %1296 = vbcast.lane.b32.xlu0 %v1294, 256
      %v1297 = vpop.permute.xlu0 %1296
      %s1299 = sor.u32 256, 8
      %1300 = vbcast.lane.b32.xlu0 %v1294, %s1299
      %v1301 = vpop.permute.xlu0 %1300
      %s1303 = sor.u32 256, 16
      %1304 = vbcast.lane.b32.xlu0 %v1294, %s1303
      %v1305 = vpop.permute.xlu0 %1304
      %v1306 = vlaneseq
      %v1307 = vshrl.u32 %v1306, 7
      %v1308 = vsub.s32 6, %v1307
      %v1309 = vrot.slane %v1213, %v1308
      %1311 = vbcast.lane.b32.xlu0 %v1309, 256
      %v1312 = vpop.permute.xlu0 %1311
      %s1314 = sor.u32 256, 8
      %1315 = vbcast.lane.b32.xlu0 %v1309, %s1314
      %v1316 = vpop.permute.xlu0 %1315
      %s1318 = sor.u32 256, 16
      %1319 = vbcast.lane.b32.xlu0 %v1309, %s1318
      %v1320 = vpop.permute.xlu0 %1319
      %v1321 = vlaneseq
      %v1322 = vshrl.u32 %v1321, 7
      %v1323 = vsub.s32 7, %v1322
      %v1324 = vrot.slane %v1213, %v1323
      %1326 = vbcast.lane.b32.xlu0 %v1324, 256
      %v1327 = vpop.permute.xlu0 %1326
      %s1329 = sor.u32 256, 8
      %1330 = vbcast.lane.b32.xlu0 %v1324, %s1329
      %v1331 = vpop.permute.xlu0 %1330
      %s1333 = sor.u32 256, 16
      %1334 = vbcast.lane.b32.xlu0 %v1324, %s1333
      %v1335 = vpop.permute.xlu0 %1334
      %v1336 = vlaneseq
      %v1337 = vshrl.u32 %v1336, 7
      %v1338 = vsub.s32 0, %v1337
      %v1339 = vrot.slane %v1214, %v1338
      %1341 = vbcast.lane.b32.xlu0 %v1339, 256
      %v1342 = vpop.permute.xlu0 %1341
      %s1344 = sor.u32 256, 8
      %1345 = vbcast.lane.b32.xlu0 %v1339, %s1344
      %v1346 = vpop.permute.xlu0 %1345
      %s1348 = sor.u32 256, 16
      %1349 = vbcast.lane.b32.xlu0 %v1339, %s1348
      %v1350 = vpop.permute.xlu0 %1349
      %v1351 = vlaneseq
      %v1352 = vshrl.u32 %v1351, 7
      %v1353 = vsub.s32 1, %v1352
      %v1354 = vrot.slane %v1214, %v1353
      %1356 = vbcast.lane.b32.xlu0 %v1354, 256
      %v1357 = vpop.permute.xlu0 %1356
      %s1359 = sor.u32 256, 8
      %1360 = vbcast.lane.b32.xlu0 %v1354, %s1359
      %v1361 = vpop.permute.xlu0 %1360
      %s1363 = sor.u32 256, 16
      %1364 = vbcast.lane.b32.xlu0 %v1354, %s1363
      %v1365 = vpop.permute.xlu0 %1364
      %v1366 = vlaneseq
      %v1367 = vshrl.u32 %v1366, 7
      %v1368 = vsub.s32 2, %v1367
      %v1369 = vrot.slane %v1214, %v1368
      %1371 = vbcast.lane.b32.xlu0 %v1369, 256
      %v1372 = vpop.permute.xlu0 %1371
      %s1374 = sor.u32 256, 8
      %1375 = vbcast.lane.b32.xlu0 %v1369, %s1374
      %v1376 = vpop.permute.xlu0 %1375
      %s1378 = sor.u32 256, 16
      %1379 = vbcast.lane.b32.xlu0 %v1369, %s1378
      %v1380 = vpop.permute.xlu0 %1379
      %v1381 = vlaneseq
      %v1382 = vshrl.u32 %v1381, 7
      %v1383 = vsub.s32 3, %v1382
      %v1384 = vrot.slane %v1214, %v1383
      %1386 = vbcast.lane.b32.xlu0 %v1384, 256
      %v1387 = vpop.permute.xlu0 %1386
      %s1389 = sor.u32 256, 8
      %1390 = vbcast.lane.b32.xlu0 %v1384, %s1389
      %v1391 = vpop.permute.xlu0 %1390
      %s1393 = sor.u32 256, 16
      %1394 = vbcast.lane.b32.xlu0 %v1384, %s1393
      %v1395 = vpop.permute.xlu0 %1394
      %v1396 = vlaneseq
      %v1397 = vshrl.u32 %v1396, 7
      %v1398 = vsub.s32 4, %v1397
      %v1399 = vrot.slane %v1214, %v1398
      %1401 = vbcast.lane.b32.xlu0 %v1399, 256
      %v1402 = vpop.permute.xlu0 %1401
      %s1404 = sor.u32 256, 8
      %1405 = vbcast.lane.b32.xlu0 %v1399, %s1404
      %v1406 = vpop.permute.xlu0 %1405
      %s1408 = sor.u32 256, 16
      %1409 = vbcast.lane.b32.xlu0 %v1399, %s1408
      %v1410 = vpop.permute.xlu0 %1409
      %v1411 = vlaneseq
      %v1412 = vshrl.u32 %v1411, 7
      %v1413 = vsub.s32 5, %v1412
      %v1414 = vrot.slane %v1214, %v1413
      %1416 = vbcast.lane.b32.xlu0 %v1414, 256
      %v1417 = vpop.permute.xlu0 %1416
      %s1419 = sor.u32 256, 8
      %1420 = vbcast.lane.b32.xlu0 %v1414, %s1419
      %v1421 = vpop.permute.xlu0 %1420
      %s1423 = sor.u32 256, 16
      %1424 = vbcast.lane.b32.xlu0 %v1414, %s1423
      %v1425 = vpop.permute.xlu0 %1424
      %v1426 = vlaneseq
      %v1427 = vshrl.u32 %v1426, 7
      %v1428 = vsub.s32 6, %v1427
      %v1429 = vrot.slane %v1214, %v1428
      %1431 = vbcast.lane.b32.xlu0 %v1429, 256
      %v1432 = vpop.permute.xlu0 %1431
      %s1434 = sor.u32 256, 8
      %1435 = vbcast.lane.b32.xlu0 %v1429, %s1434
      %v1436 = vpop.permute.xlu0 %1435
      %s1438 = sor.u32 256, 16
      %1439 = vbcast.lane.b32.xlu0 %v1429, %s1438
      %v1440 = vpop.permute.xlu0 %1439
      %v1441 = vlaneseq
      %v1442 = vshrl.u32 %v1441, 7
      %v1443 = vsub.s32 7, %v1442
      %v1444 = vrot.slane %v1214, %v1443
      %1446 = vbcast.lane.b32.xlu0 %v1444, 256
      %v1447 = vpop.permute.xlu0 %1446
      %s1449 = sor.u32 256, 8
      %1450 = vbcast.lane.b32.xlu0 %v1444, %s1449
      %v1451 = vpop.permute.xlu0 %1450
      %s1453 = sor.u32 256, 16
      %1454 = vbcast.lane.b32.xlu0 %v1444, %s1453
      %v1455 = vpop.permute.xlu0 %1454
      %v1456 = vlaneseq
      %v1457 = vshrl.u32 %v1456, 7
      %v1458 = vsub.s32 0, %v1457
      %v1459 = vrot.slane %v1215, %v1458
      %1461 = vbcast.lane.b32.xlu0 %v1459, 256
      %v1462 = vpop.permute.xlu0 %1461
      %s1464 = sor.u32 256, 8
      %1465 = vbcast.lane.b32.xlu0 %v1459, %s1464
      %v1466 = vpop.permute.xlu0 %1465
      %s1468 = sor.u32 256, 16
      %1469 = vbcast.lane.b32.xlu0 %v1459, %s1468
      %v1470 = vpop.permute.xlu0 %1469
      %v1471 = vlaneseq
      %v1472 = vshrl.u32 %v1471, 7
      %v1473 = vsub.s32 1, %v1472
      %v1474 = vrot.slane %v1215, %v1473
      %1476 = vbcast.lane.b32.xlu0 %v1474, 256
      %v1477 = vpop.permute.xlu0 %1476
      %s1479 = sor.u32 256, 8
      %1480 = vbcast.lane.b32.xlu0 %v1474, %s1479
      %v1481 = vpop.permute.xlu0 %1480
      %s1483 = sor.u32 256, 16
      %1484 = vbcast.lane.b32.xlu0 %v1474, %s1483
      %v1485 = vpop.permute.xlu0 %1484
      %v1486 = vlaneseq
      %v1487 = vshrl.u32 %v1486, 7
      %v1488 = vsub.s32 2, %v1487
      %v1489 = vrot.slane %v1215, %v1488
      %1491 = vbcast.lane.b32.xlu0 %v1489, 256
      %v1492 = vpop.permute.xlu0 %1491
      %s1494 = sor.u32 256, 8
      %1495 = vbcast.lane.b32.xlu0 %v1489, %s1494
      %v1496 = vpop.permute.xlu0 %1495
      %s1498 = sor.u32 256, 16
      %1499 = vbcast.lane.b32.xlu0 %v1489, %s1498
      %v1500 = vpop.permute.xlu0 %1499
      %v1501 = vlaneseq
      %v1502 = vshrl.u32 %v1501, 7
      %v1503 = vsub.s32 3, %v1502
      %v1504 = vrot.slane %v1215, %v1503
      %1506 = vbcast.lane.b32.xlu0 %v1504, 256
      %v1507 = vpop.permute.xlu0 %1506
      %s1509 = sor.u32 256, 8
      %1510 = vbcast.lane.b32.xlu0 %v1504, %s1509
      %v1511 = vpop.permute.xlu0 %1510
      %s1513 = sor.u32 256, 16
      %1514 = vbcast.lane.b32.xlu0 %v1504, %s1513
      %v1515 = vpop.permute.xlu0 %1514
      %v1577 = vunpack.c.l.s4 839922192
      %v1578 = vunpack.c.0.s8 %v1577
      %v1579 = vlaneseq
      %v1580 = vshrl.u32 %v1579, 7
      %v1581 = vsub.s32 %v1578, %v1580
      %v1582 = vrot.slane %v1222, %v1581
      %v1584 = vunpack.c.l.s4 1985246804
      %v1585 = vunpack.c.0.s8 %v1584
      %v1586 = vlaneseq
      %v1587 = vshrl.u32 %v1586, 7
      %v1588 = vsub.s32 %v1585, %v1587
      %v1589 = vrot.slane %v1222, %v1588
      %v1591 = vunpack.c.l.s4 839922192
      %v1592 = vunpack.c.0.s8 %v1591
      %v1593 = vlaneseq
      %v1594 = vshrl.u32 %v1593, 7
      %v1595 = vsub.s32 %v1592, %v1594
      %v1596 = vrot.slane %v1226, %v1595
      %v1598 = vunpack.c.l.s4 1985246804
      %v1599 = vunpack.c.0.s8 %v1598
      %v1600 = vlaneseq
      %v1601 = vshrl.u32 %v1600, 7
      %v1602 = vsub.s32 %v1599, %v1601
      %v1603 = vrot.slane %v1226, %v1602
      %v1605 = vunpack.c.l.s4 839922192
      %v1606 = vunpack.c.0.s8 %v1605
      %v1607 = vlaneseq
      %v1608 = vshrl.u32 %v1607, 7
      %v1609 = vsub.s32 %v1606, %v1608
      %v1610 = vrot.slane %v1230, %v1609
      %v1612 = vunpack.c.l.s4 839922192
      %v1613 = vunpack.c.0.s8 %v1612
      %v1614 = vlaneseq
      %v1615 = vshrl.u32 %v1614, 7
      %v1616 = vsub.s32 %v1613, %v1615
      %v1617 = vrot.slane %v1237, %v1616
      %v1619 = vunpack.c.l.s4 1985246804
      %v1620 = vunpack.c.0.s8 %v1619
      %v1621 = vlaneseq
      %v1622 = vshrl.u32 %v1621, 7
      %v1623 = vsub.s32 %v1620, %v1622
      %v1624 = vrot.slane %v1237, %v1623
      %v1626 = vunpack.c.l.s4 839922192
      %v1627 = vunpack.c.0.s8 %v1626
      %v1628 = vlaneseq
      %v1629 = vshrl.u32 %v1628, 7
      %v1630 = vsub.s32 %v1627, %v1629
      %v1631 = vrot.slane %v1241, %v1630
      %v1633 = vunpack.c.l.s4 1985246804
      %v1634 = vunpack.c.0.s8 %v1633
      %v1635 = vlaneseq
      %v1636 = vshrl.u32 %v1635, 7
      %v1637 = vsub.s32 %v1634, %v1636
      %v1638 = vrot.slane %v1241, %v1637
      %v1640 = vunpack.c.l.s4 839922192
      %v1641 = vunpack.c.0.s8 %v1640
      %v1642 = vlaneseq
      %v1643 = vshrl.u32 %v1642, 7
      %v1644 = vsub.s32 %v1641, %v1643
      %v1645 = vrot.slane %v1245, %v1644
      %v1647 = vunpack.c.l.s4 839922192
      %v1648 = vunpack.c.0.s8 %v1647
      %v1649 = vlaneseq
      %v1650 = vshrl.u32 %v1649, 7
      %v1651 = vsub.s32 %v1648, %v1650
      %v1652 = vrot.slane %v1252, %v1651
      %v1654 = vunpack.c.l.s4 1985246804
      %v1655 = vunpack.c.0.s8 %v1654
      %v1656 = vlaneseq
      %v1657 = vshrl.u32 %v1656, 7
      %v1658 = vsub.s32 %v1655, %v1657
      %v1659 = vrot.slane %v1252, %v1658
      %v1661 = vunpack.c.l.s4 839922192
      %v1662 = vunpack.c.0.s8 %v1661
      %v1663 = vlaneseq
      %v1664 = vshrl.u32 %v1663, 7
      %v1665 = vsub.s32 %v1662, %v1664
      %v1666 = vrot.slane %v1256, %v1665
      %v1668 = vunpack.c.l.s4 1985246804
      %v1669 = vunpack.c.0.s8 %v1668
      %v1670 = vlaneseq
      %v1671 = vshrl.u32 %v1670, 7
      %v1672 = vsub.s32 %v1669, %v1671
      %v1673 = vrot.slane %v1256, %v1672
      %v1675 = vunpack.c.l.s4 839922192
      %v1676 = vunpack.c.0.s8 %v1675
      %v1677 = vlaneseq
      %v1678 = vshrl.u32 %v1677, 7
      %v1679 = vsub.s32 %v1676, %v1678
      %v1680 = vrot.slane %v1260, %v1679
      %v1682 = vunpack.c.l.s4 839922192
      %v1683 = vunpack.c.0.s8 %v1682
      %v1684 = vlaneseq
      %v1685 = vshrl.u32 %v1684, 7
      %v1686 = vsub.s32 %v1683, %v1685
      %v1687 = vrot.slane %v1267, %v1686
      %v1689 = vunpack.c.l.s4 1985246804
      %v1690 = vunpack.c.0.s8 %v1689
      %v1691 = vlaneseq
      %v1692 = vshrl.u32 %v1691, 7
      %v1693 = vsub.s32 %v1690, %v1692
      %v1694 = vrot.slane %v1267, %v1693
      %v1696 = vunpack.c.l.s4 839922192
      %v1697 = vunpack.c.0.s8 %v1696
      %v1698 = vlaneseq
      %v1699 = vshrl.u32 %v1698, 7
      %v1700 = vsub.s32 %v1697, %v1699
      %v1701 = vrot.slane %v1271, %v1700
      %v1703 = vunpack.c.l.s4 1985246804
      %v1704 = vunpack.c.0.s8 %v1703
      %v1705 = vlaneseq
      %v1706 = vshrl.u32 %v1705, 7
      %v1707 = vsub.s32 %v1704, %v1706
      %v1708 = vrot.slane %v1271, %v1707
      %v1710 = vunpack.c.l.s4 839922192
      %v1711 = vunpack.c.0.s8 %v1710
      %v1712 = vlaneseq
      %v1713 = vshrl.u32 %v1712, 7
      %v1714 = vsub.s32 %v1711, %v1713
      %v1715 = vrot.slane %v1275, %v1714
      %v1717 = vunpack.c.l.s4 839922192
      %v1718 = vunpack.c.0.s8 %v1717
      %v1719 = vlaneseq
      %v1720 = vshrl.u32 %v1719, 7
      %v1721 = vsub.s32 %v1718, %v1720
      %v1722 = vrot.slane %v1282, %v1721
      %v1724 = vunpack.c.l.s4 1985246804
      %v1725 = vunpack.c.0.s8 %v1724
      %v1726 = vlaneseq
      %v1727 = vshrl.u32 %v1726, 7
      %v1728 = vsub.s32 %v1725, %v1727
      %v1729 = vrot.slane %v1282, %v1728
      %v1731 = vunpack.c.l.s4 839922192
      %v1732 = vunpack.c.0.s8 %v1731
      %v1733 = vlaneseq
      %v1734 = vshrl.u32 %v1733, 7
      %v1735 = vsub.s32 %v1732, %v1734
      %v1736 = vrot.slane %v1286, %v1735
      %v1738 = vunpack.c.l.s4 1985246804
      %v1739 = vunpack.c.0.s8 %v1738
      %v1740 = vlaneseq
      %v1741 = vshrl.u32 %v1740, 7
      %v1742 = vsub.s32 %v1739, %v1741
      %v1743 = vrot.slane %v1286, %v1742
      %v1745 = vunpack.c.l.s4 839922192
      %v1746 = vunpack.c.0.s8 %v1745
      %v1747 = vlaneseq
      %v1748 = vshrl.u32 %v1747, 7
      %v1749 = vsub.s32 %v1746, %v1748
      %v1750 = vrot.slane %v1290, %v1749
      %v1752 = vunpack.c.l.s4 839922192
      %v1753 = vunpack.c.0.s8 %v1752
      %v1754 = vlaneseq
      %v1755 = vshrl.u32 %v1754, 7
      %v1756 = vsub.s32 %v1753, %v1755
      %v1757 = vrot.slane %v1297, %v1756
      %v1759 = vunpack.c.l.s4 1985246804
      %v1760 = vunpack.c.0.s8 %v1759
      %v1761 = vlaneseq
      %v1762 = vshrl.u32 %v1761, 7
      %v1763 = vsub.s32 %v1760, %v1762
      %v1764 = vrot.slane %v1297, %v1763
      %v1766 = vunpack.c.l.s4 839922192
      %v1767 = vunpack.c.0.s8 %v1766
      %v1768 = vlaneseq
      %v1769 = vshrl.u32 %v1768, 7
      %v1770 = vsub.s32 %v1767, %v1769
      %v1771 = vrot.slane %v1301, %v1770
      %v1773 = vunpack.c.l.s4 1985246804
      %v1774 = vunpack.c.0.s8 %v1773
      %v1775 = vlaneseq
      %v1776 = vshrl.u32 %v1775, 7
      %v1777 = vsub.s32 %v1774, %v1776
      %v1778 = vrot.slane %v1301, %v1777
      %v1780 = vunpack.c.l.s4 839922192
      %v1781 = vunpack.c.0.s8 %v1780
      %v1782 = vlaneseq
      %v1783 = vshrl.u32 %v1782, 7
      %v1784 = vsub.s32 %v1781, %v1783
      %v1785 = vrot.slane %v1305, %v1784
      %v1787 = vunpack.c.l.s4 839922192
      %v1788 = vunpack.c.0.s8 %v1787
      %v1789 = vlaneseq
      %v1790 = vshrl.u32 %v1789, 7
      %v1791 = vsub.s32 %v1788, %v1790
      %v1792 = vrot.slane %v1312, %v1791
      %v1794 = vunpack.c.l.s4 1985246804
      %v1795 = vunpack.c.0.s8 %v1794
      %v1796 = vlaneseq
      %v1797 = vshrl.u32 %v1796, 7
      %v1798 = vsub.s32 %v1795, %v1797
      %v1799 = vrot.slane %v1312, %v1798
      %v1801 = vunpack.c.l.s4 839922192
      %v1802 = vunpack.c.0.s8 %v1801
      %v1803 = vlaneseq
      %v1804 = vshrl.u32 %v1803, 7
      %v1805 = vsub.s32 %v1802, %v1804
      %v1806 = vrot.slane %v1316, %v1805
      %v1808 = vunpack.c.l.s4 1985246804
      %v1809 = vunpack.c.0.s8 %v1808
      %v1810 = vlaneseq
      %v1811 = vshrl.u32 %v1810, 7
      %v1812 = vsub.s32 %v1809, %v1811
      %v1813 = vrot.slane %v1316, %v1812
      %v1815 = vunpack.c.l.s4 839922192
      %v1816 = vunpack.c.0.s8 %v1815
      %v1817 = vlaneseq
      %v1818 = vshrl.u32 %v1817, 7
      %v1819 = vsub.s32 %v1816, %v1818
      %v1820 = vrot.slane %v1320, %v1819
      %v1822 = vunpack.c.l.s4 839922192
      %v1823 = vunpack.c.0.s8 %v1822
      %v1824 = vlaneseq
      %v1825 = vshrl.u32 %v1824, 7
      %v1826 = vsub.s32 %v1823, %v1825
      %v1827 = vrot.slane %v1327, %v1826
      %v1829 = vunpack.c.l.s4 1985246804
      %v1830 = vunpack.c.0.s8 %v1829
      %v1831 = vlaneseq
      %v1832 = vshrl.u32 %v1831, 7
      %v1833 = vsub.s32 %v1830, %v1832
      %v1834 = vrot.slane %v1327, %v1833
      %v1836 = vunpack.c.l.s4 839922192
      %v1837 = vunpack.c.0.s8 %v1836
      %v1838 = vlaneseq
      %v1839 = vshrl.u32 %v1838, 7
      %v1840 = vsub.s32 %v1837, %v1839
      %v1841 = vrot.slane %v1331, %v1840
      %v1843 = vunpack.c.l.s4 1985246804
      %v1844 = vunpack.c.0.s8 %v1843
      %v1845 = vlaneseq
      %v1846 = vshrl.u32 %v1845, 7
      %v1847 = vsub.s32 %v1844, %v1846
      %v1848 = vrot.slane %v1331, %v1847
      %v1850 = vunpack.c.l.s4 839922192
      %v1851 = vunpack.c.0.s8 %v1850
      %v1852 = vlaneseq
      %v1853 = vshrl.u32 %v1852, 7
      %v1854 = vsub.s32 %v1851, %v1853
      %v1855 = vrot.slane %v1335, %v1854
      %v1857 = vunpack.c.l.s4 839922192
      %v1858 = vunpack.c.0.s8 %v1857
      %v1859 = vlaneseq
      %v1860 = vshrl.u32 %v1859, 7
      %v1861 = vsub.s32 %v1858, %v1860
      %v1862 = vrot.slane %v1342, %v1861
      %v1864 = vunpack.c.l.s4 1985246804
      %v1865 = vunpack.c.0.s8 %v1864
      %v1866 = vlaneseq
      %v1867 = vshrl.u32 %v1866, 7
      %v1868 = vsub.s32 %v1865, %v1867
      %v1869 = vrot.slane %v1342, %v1868
      %v1871 = vunpack.c.l.s4 839922192
      %v1872 = vunpack.c.0.s8 %v1871
      %v1873 = vlaneseq
      %v1874 = vshrl.u32 %v1873, 7
      %v1875 = vsub.s32 %v1872, %v1874
      %v1876 = vrot.slane %v1346, %v1875
      %v1878 = vunpack.c.l.s4 1985246804
      %v1879 = vunpack.c.0.s8 %v1878
      %v1880 = vlaneseq
      %v1881 = vshrl.u32 %v1880, 7
      %v1882 = vsub.s32 %v1879, %v1881
      %v1883 = vrot.slane %v1346, %v1882
      %v1885 = vunpack.c.l.s4 839922192
      %v1886 = vunpack.c.0.s8 %v1885
      %v1887 = vlaneseq
      %v1888 = vshrl.u32 %v1887, 7
      %v1889 = vsub.s32 %v1886, %v1888
      %v1890 = vrot.slane %v1350, %v1889
      %v1892 = vunpack.c.l.s4 839922192
      %v1893 = vunpack.c.0.s8 %v1892
      %v1894 = vlaneseq
      %v1895 = vshrl.u32 %v1894, 7
      %v1896 = vsub.s32 %v1893, %v1895
      %v1897 = vrot.slane %v1357, %v1896
      %v1899 = vunpack.c.l.s4 1985246804
      %v1900 = vunpack.c.0.s8 %v1899
      %v1901 = vlaneseq
      %v1902 = vshrl.u32 %v1901, 7
      %v1903 = vsub.s32 %v1900, %v1902
      %v1904 = vrot.slane %v1357, %v1903
      %v1906 = vunpack.c.l.s4 839922192
      %v1907 = vunpack.c.0.s8 %v1906
      %v1908 = vlaneseq
      %v1909 = vshrl.u32 %v1908, 7
      %v1910 = vsub.s32 %v1907, %v1909
      %v1911 = vrot.slane %v1361, %v1910
      %v1913 = vunpack.c.l.s4 1985246804
      %v1914 = vunpack.c.0.s8 %v1913
      %v1915 = vlaneseq
      %v1916 = vshrl.u32 %v1915, 7
      %v1917 = vsub.s32 %v1914, %v1916
      %v1918 = vrot.slane %v1361, %v1917
      %v1920 = vunpack.c.l.s4 839922192
      %v1921 = vunpack.c.0.s8 %v1920
      %v1922 = vlaneseq
      %v1923 = vshrl.u32 %v1922, 7
      %v1924 = vsub.s32 %v1921, %v1923
      %v1925 = vrot.slane %v1365, %v1924
      %v1927 = vunpack.c.l.s4 839922192
      %v1928 = vunpack.c.0.s8 %v1927
      %v1929 = vlaneseq
      %v1930 = vshrl.u32 %v1929, 7
      %v1931 = vsub.s32 %v1928, %v1930
      %v1932 = vrot.slane %v1372, %v1931
      %v1934 = vunpack.c.l.s4 1985246804
      %v1935 = vunpack.c.0.s8 %v1934
      %v1936 = vlaneseq
      %v1937 = vshrl.u32 %v1936, 7
      %v1938 = vsub.s32 %v1935, %v1937
      %v1939 = vrot.slane %v1372, %v1938
      %v1941 = vunpack.c.l.s4 839922192
      %v1942 = vunpack.c.0.s8 %v1941
      %v1943 = vlaneseq
      %v1944 = vshrl.u32 %v1943, 7
      %v1945 = vsub.s32 %v1942, %v1944
      %v1946 = vrot.slane %v1376, %v1945
      %v1948 = vunpack.c.l.s4 1985246804
      %v1949 = vunpack.c.0.s8 %v1948
      %v1950 = vlaneseq
      %v1951 = vshrl.u32 %v1950, 7
      %v1952 = vsub.s32 %v1949, %v1951
      %v1953 = vrot.slane %v1376, %v1952
      %v1955 = vunpack.c.l.s4 839922192
      %v1956 = vunpack.c.0.s8 %v1955
      %v1957 = vlaneseq
      %v1958 = vshrl.u32 %v1957, 7
      %v1959 = vsub.s32 %v1956, %v1958
      %v1960 = vrot.slane %v1380, %v1959
      %v1962 = vunpack.c.l.s4 839922192
      %v1963 = vunpack.c.0.s8 %v1962
      %v1964 = vlaneseq
      %v1965 = vshrl.u32 %v1964, 7
      %v1966 = vsub.s32 %v1963, %v1965
      %v1967 = vrot.slane %v1387, %v1966
      %v1969 = vunpack.c.l.s4 1985246804
      %v1970 = vunpack.c.0.s8 %v1969
      %v1971 = vlaneseq
      %v1972 = vshrl.u32 %v1971, 7
      %v1973 = vsub.s32 %v1970, %v1972
      %v1974 = vrot.slane %v1387, %v1973
      %v1976 = vunpack.c.l.s4 839922192
      %v1977 = vunpack.c.0.s8 %v1976
      %v1978 = vlaneseq
      %v1979 = vshrl.u32 %v1978, 7
      %v1980 = vsub.s32 %v1977, %v1979
      %v1981 = vrot.slane %v1391, %v1980
      %v1983 = vunpack.c.l.s4 1985246804
      %v1984 = vunpack.c.0.s8 %v1983
      %v1985 = vlaneseq
      %v1986 = vshrl.u32 %v1985, 7
      %v1987 = vsub.s32 %v1984, %v1986
      %v1988 = vrot.slane %v1391, %v1987
      %v1990 = vunpack.c.l.s4 839922192
      %v1991 = vunpack.c.0.s8 %v1990
      %v1992 = vlaneseq
      %v1993 = vshrl.u32 %v1992, 7
      %v1994 = vsub.s32 %v1991, %v1993
      %v1995 = vrot.slane %v1395, %v1994
      %v1997 = vunpack.c.l.s4 839922192
      %v1998 = vunpack.c.0.s8 %v1997
      %v1999 = vlaneseq
      %v2000 = vshrl.u32 %v1999, 7
      %v2001 = vsub.s32 %v1998, %v2000
      %v2002 = vrot.slane %v1402, %v2001
      %v2004 = vunpack.c.l.s4 1985246804
      %v2005 = vunpack.c.0.s8 %v2004
      %v2006 = vlaneseq
      %v2007 = vshrl.u32 %v2006, 7
      %v2008 = vsub.s32 %v2005, %v2007
      %v2009 = vrot.slane %v1402, %v2008
      %v2011 = vunpack.c.l.s4 839922192
      %v2012 = vunpack.c.0.s8 %v2011
      %v2013 = vlaneseq
      %v2014 = vshrl.u32 %v2013, 7
      %v2015 = vsub.s32 %v2012, %v2014
      %v2016 = vrot.slane %v1406, %v2015
      %v2018 = vunpack.c.l.s4 1985246804
      %v2019 = vunpack.c.0.s8 %v2018
      %v2020 = vlaneseq
      %v2021 = vshrl.u32 %v2020, 7
      %v2022 = vsub.s32 %v2019, %v2021
      %v2023 = vrot.slane %v1406, %v2022
      %v2025 = vunpack.c.l.s4 839922192
      %v2026 = vunpack.c.0.s8 %v2025
      %v2027 = vlaneseq
      %v2028 = vshrl.u32 %v2027, 7
      %v2029 = vsub.s32 %v2026, %v2028
      %v2030 = vrot.slane %v1410, %v2029
      %v2032 = vunpack.c.l.s4 839922192
      %v2033 = vunpack.c.0.s8 %v2032
      %v2034 = vlaneseq
      %v2035 = vshrl.u32 %v2034, 7
      %v2036 = vsub.s32 %v2033, %v2035
      %v2037 = vrot.slane %v1417, %v2036
      %v2039 = vunpack.c.l.s4 1985246804
      %v2040 = vunpack.c.0.s8 %v2039
      %v2041 = vlaneseq
      %v2042 = vshrl.u32 %v2041, 7
      %v2043 = vsub.s32 %v2040, %v2042
      %v2044 = vrot.slane %v1417, %v2043
      %v2046 = vunpack.c.l.s4 839922192
      %v2047 = vunpack.c.0.s8 %v2046
      %v2048 = vlaneseq
      %v2049 = vshrl.u32 %v2048, 7
      %v2050 = vsub.s32 %v2047, %v2049
      %v2051 = vrot.slane %v1421, %v2050
      %v2053 = vunpack.c.l.s4 1985246804
      %v2054 = vunpack.c.0.s8 %v2053
      %v2055 = vlaneseq
      %v2056 = vshrl.u32 %v2055, 7
      %v2057 = vsub.s32 %v2054, %v2056
      %v2058 = vrot.slane %v1421, %v2057
      %v2060 = vunpack.c.l.s4 839922192
      %v2061 = vunpack.c.0.s8 %v2060
      %v2062 = vlaneseq
      %v2063 = vshrl.u32 %v2062, 7
      %v2064 = vsub.s32 %v2061, %v2063
      %v2065 = vrot.slane %v1425, %v2064
      %v2067 = vunpack.c.l.s4 839922192
      %v2068 = vunpack.c.0.s8 %v2067
      %v2069 = vlaneseq
      %v2070 = vshrl.u32 %v2069, 7
      %v2071 = vsub.s32 %v2068, %v2070
      %v2072 = vrot.slane %v1432, %v2071
      %v2074 = vunpack.c.l.s4 1985246804
      %v2075 = vunpack.c.0.s8 %v2074
      %v2076 = vlaneseq
      %v2077 = vshrl.u32 %v2076, 7
      %v2078 = vsub.s32 %v2075, %v2077
      %v2079 = vrot.slane %v1432, %v2078
      %v2081 = vunpack.c.l.s4 839922192
      %v2082 = vunpack.c.0.s8 %v2081
      %v2083 = vlaneseq
      %v2084 = vshrl.u32 %v2083, 7
      %v2085 = vsub.s32 %v2082, %v2084
      %v2086 = vrot.slane %v1436, %v2085
      %v2088 = vunpack.c.l.s4 1985246804
      %v2089 = vunpack.c.0.s8 %v2088
      %v2090 = vlaneseq
      %v2091 = vshrl.u32 %v2090, 7
      %v2092 = vsub.s32 %v2089, %v2091
      %v2093 = vrot.slane %v1436, %v2092
      %v2095 = vunpack.c.l.s4 839922192
      %v2096 = vunpack.c.0.s8 %v2095
      %v2097 = vlaneseq
      %v2098 = vshrl.u32 %v2097, 7
      %v2099 = vsub.s32 %v2096, %v2098
      %v2100 = vrot.slane %v1440, %v2099
      %v2102 = vunpack.c.l.s4 839922192
      %v2103 = vunpack.c.0.s8 %v2102
      %v2104 = vlaneseq
      %v2105 = vshrl.u32 %v2104, 7
      %v2106 = vsub.s32 %v2103, %v2105
      %v2107 = vrot.slane %v1447, %v2106
      %v2109 = vunpack.c.l.s4 1985246804
      %v2110 = vunpack.c.0.s8 %v2109
      %v2111 = vlaneseq
      %v2112 = vshrl.u32 %v2111, 7
      %v2113 = vsub.s32 %v2110, %v2112
      %v2114 = vrot.slane %v1447, %v2113
      %v2116 = vunpack.c.l.s4 839922192
      %v2117 = vunpack.c.0.s8 %v2116
      %v2118 = vlaneseq
      %v2119 = vshrl.u32 %v2118, 7
      %v2120 = vsub.s32 %v2117, %v2119
      %v2121 = vrot.slane %v1451, %v2120
      %v2123 = vunpack.c.l.s4 1985246804
      %v2124 = vunpack.c.0.s8 %v2123
      %v2125 = vlaneseq
      %v2126 = vshrl.u32 %v2125, 7
      %v2127 = vsub.s32 %v2124, %v2126
      %v2128 = vrot.slane %v1451, %v2127
      %v2130 = vunpack.c.l.s4 839922192
      %v2131 = vunpack.c.0.s8 %v2130
      %v2132 = vlaneseq
      %v2133 = vshrl.u32 %v2132, 7
      %v2134 = vsub.s32 %v2131, %v2133
      %v2135 = vrot.slane %v1455, %v2134
      %v2137 = vunpack.c.l.s4 839922192
      %v2138 = vunpack.c.0.s8 %v2137
      %v2139 = vlaneseq
      %v2140 = vshrl.u32 %v2139, 7
      %v2141 = vsub.s32 %v2138, %v2140
      %v2142 = vrot.slane %v1462, %v2141
      %v2144 = vunpack.c.l.s4 1985246804
      %v2145 = vunpack.c.0.s8 %v2144
      %v2146 = vlaneseq
      %v2147 = vshrl.u32 %v2146, 7
      %v2148 = vsub.s32 %v2145, %v2147
      %v2149 = vrot.slane %v1462, %v2148
      %v2151 = vunpack.c.l.s4 839922192
      %v2152 = vunpack.c.0.s8 %v2151
      %v2153 = vlaneseq
      %v2154 = vshrl.u32 %v2153, 7
      %v2155 = vsub.s32 %v2152, %v2154
      %v2156 = vrot.slane %v1466, %v2155
      %v2158 = vunpack.c.l.s4 1985246804
      %v2159 = vunpack.c.0.s8 %v2158
      %v2160 = vlaneseq
      %v2161 = vshrl.u32 %v2160, 7
      %v2162 = vsub.s32 %v2159, %v2161
      %v2163 = vrot.slane %v1466, %v2162
      %v2165 = vunpack.c.l.s4 839922192
      %v2166 = vunpack.c.0.s8 %v2165
      %v2167 = vlaneseq
      %v2168 = vshrl.u32 %v2167, 7
      %v2169 = vsub.s32 %v2166, %v2168
      %v2170 = vrot.slane %v1470, %v2169
      %v2172 = vunpack.c.l.s4 839922192
      %v2173 = vunpack.c.0.s8 %v2172
      %v2174 = vlaneseq
      %v2175 = vshrl.u32 %v2174, 7
      %v2176 = vsub.s32 %v2173, %v2175
      %v2177 = vrot.slane %v1477, %v2176
      %v2179 = vunpack.c.l.s4 1985246804
      %v2180 = vunpack.c.0.s8 %v2179
      %v2181 = vlaneseq
      %v2182 = vshrl.u32 %v2181, 7
      %v2183 = vsub.s32 %v2180, %v2182
      %v2184 = vrot.slane %v1477, %v2183
      %v2186 = vunpack.c.l.s4 839922192
      %v2187 = vunpack.c.0.s8 %v2186
      %v2188 = vlaneseq
      %v2189 = vshrl.u32 %v2188, 7
      %v2190 = vsub.s32 %v2187, %v2189
      %v2191 = vrot.slane %v1481, %v2190
      %v2193 = vunpack.c.l.s4 1985246804
      %v2194 = vunpack.c.0.s8 %v2193
      %v2195 = vlaneseq
      %v2196 = vshrl.u32 %v2195, 7
      %v2197 = vsub.s32 %v2194, %v2196
      %v2198 = vrot.slane %v1481, %v2197
      %v2200 = vunpack.c.l.s4 839922192
      %v2201 = vunpack.c.0.s8 %v2200
      %v2202 = vlaneseq
      %v2203 = vshrl.u32 %v2202, 7
      %v2204 = vsub.s32 %v2201, %v2203
      %v2205 = vrot.slane %v1485, %v2204
      %v2207 = vunpack.c.l.s4 839922192
      %v2208 = vunpack.c.0.s8 %v2207
      %v2209 = vlaneseq
      %v2210 = vshrl.u32 %v2209, 7
      %v2211 = vsub.s32 %v2208, %v2210
      %v2212 = vrot.slane %v1492, %v2211
      %v2214 = vunpack.c.l.s4 1985246804
      %v2215 = vunpack.c.0.s8 %v2214
      %v2216 = vlaneseq
      %v2217 = vshrl.u32 %v2216, 7
      %v2218 = vsub.s32 %v2215, %v2217
      %v2219 = vrot.slane %v1492, %v2218
      %v2221 = vunpack.c.l.s4 839922192
      %v2222 = vunpack.c.0.s8 %v2221
      %v2223 = vlaneseq
      %v2224 = vshrl.u32 %v2223, 7
      %v2225 = vsub.s32 %v2222, %v2224
      %v2226 = vrot.slane %v1496, %v2225
      %v2228 = vunpack.c.l.s4 1985246804
      %v2229 = vunpack.c.0.s8 %v2228
      %v2230 = vlaneseq
      %v2231 = vshrl.u32 %v2230, 7
      %v2232 = vsub.s32 %v2229, %v2231
      %v2233 = vrot.slane %v1496, %v2232
      %v2235 = vunpack.c.l.s4 839922192
      %v2236 = vunpack.c.0.s8 %v2235
      %v2237 = vlaneseq
      %v2238 = vshrl.u32 %v2237, 7
      %v2239 = vsub.s32 %v2236, %v2238
      %v2240 = vrot.slane %v1500, %v2239
      %v2242 = vunpack.c.l.s4 839922192
      %v2243 = vunpack.c.0.s8 %v2242
      %v2244 = vlaneseq
      %v2245 = vshrl.u32 %v2244, 7
      %v2246 = vsub.s32 %v2243, %v2245
      %v2247 = vrot.slane %v1507, %v2246
      %v2249 = vunpack.c.l.s4 1985246804
      %v2250 = vunpack.c.0.s8 %v2249
      %v2251 = vlaneseq
      %v2252 = vshrl.u32 %v2251, 7
      %v2253 = vsub.s32 %v2250, %v2252
      %v2254 = vrot.slane %v1507, %v2253
      %v2256 = vunpack.c.l.s4 839922192
      %v2257 = vunpack.c.0.s8 %v2256
      %v2258 = vlaneseq
      %v2259 = vshrl.u32 %v2258, 7
      %v2260 = vsub.s32 %v2257, %v2259
      %v2261 = vrot.slane %v1511, %v2260
      %v2263 = vunpack.c.l.s4 1985246804
      %v2264 = vunpack.c.0.s8 %v2263
      %v2265 = vlaneseq
      %v2266 = vshrl.u32 %v2265, 7
      %v2267 = vsub.s32 %v2264, %v2266
      %v2268 = vrot.slane %v1511, %v2267
      %v2270 = vunpack.c.l.s4 839922192
      %v2271 = vunpack.c.0.s8 %v2270
      %v2272 = vlaneseq
      %v2273 = vshrl.u32 %v2272, 7
      %v2274 = vsub.s32 %v2271, %v2273
      %v2275 = vrot.slane %v1515, %v2274
      %v2376 = vmul.f32 %v979, %v1582
      %v2377 = vmul.f32 %v1079, %v1589
      %v2378 = vmul.f32 %v980, %v1596
      %v2379 = vmul.f32 %v1080, %v1603
      %v2380 = vmul.f32 %v981, %v1610
      %v2381 = vmul.f32 %v1081, %v1617
      %v2382 = vmul.f32 %v982, %v1624
      %v2383 = vmul.f32 %v1082, %v1631
      %v2384 = vmul.f32 %v983, %v1638
      %v2385 = vmul.f32 %v1083, %v1645
      %v2386 = vmul.f32 %v984, %v1652
      %v2387 = vmul.f32 %v1084, %v1659
      %v2388 = vmul.f32 %v985, %v1666
      %v2389 = vmul.f32 %v1085, %v1673
      %v2390 = vmul.f32 %v986, %v1680
      %v2391 = vmul.f32 %v1086, %v1687
      %v2392 = vmul.f32 %v987, %v1694
      %v2393 = vmul.f32 %v1087, %v1701
      %v2394 = vmul.f32 %v988, %v1708
      %v2395 = vmul.f32 %v1088, %v1715
      %v2396 = vmul.f32 %v989, %v1722
      %v2397 = vmul.f32 %v1089, %v1729
      %v2398 = vmul.f32 %v990, %v1736
      %v2399 = vmul.f32 %v1090, %v1743
      %v2400 = vmul.f32 %v991, %v1750
      %v2401 = vmul.f32 %v1091, %v1757
      %v2402 = vmul.f32 %v992, %v1764
      %v2403 = vmul.f32 %v1092, %v1771
      %v2404 = vmul.f32 %v993, %v1778
      %v2405 = vmul.f32 %v1093, %v1785
      %v2406 = vmul.f32 %v994, %v1792
      %v2407 = vmul.f32 %v1094, %v1799
      %v2408 = vmul.f32 %v995, %v1806
      %v2409 = vmul.f32 %v1095, %v1813
      %v2410 = vmul.f32 %v996, %v1820
      %v2411 = vmul.f32 %v1096, %v1827
      %v2412 = vmul.f32 %v997, %v1834
      %v2413 = vmul.f32 %v1097, %v1841
      %v2414 = vmul.f32 %v998, %v1848
      %v2415 = vmul.f32 %v1098, %v1855
      %v2416 = vmul.f32 %v999, %v1862
      %v2417 = vmul.f32 %v1099, %v1869
      %v2418 = vmul.f32 %v1000, %v1876
      %v2419 = vmul.f32 %v1100, %v1883
      %v2420 = vmul.f32 %v1001, %v1890
      %v2421 = vmul.f32 %v1101, %v1897
      %v2422 = vmul.f32 %v1002, %v1904
      %v2423 = vmul.f32 %v1102, %v1911
      %v2424 = vmul.f32 %v1003, %v1918
      %v2425 = vmul.f32 %v1103, %v1925
      %v2426 = vmul.f32 %v1004, %v1932
      %v2427 = vmul.f32 %v1104, %v1939
      %v2428 = vmul.f32 %v1005, %v1946
      %v2429 = vmul.f32 %v1105, %v1953
      %v2430 = vmul.f32 %v1006, %v1960
      %v2431 = vmul.f32 %v1106, %v1967
      %v2432 = vmul.f32 %v1007, %v1974
      %v2433 = vmul.f32 %v1107, %v1981
      %v2434 = vmul.f32 %v1008, %v1988
      %v2435 = vmul.f32 %v1108, %v1995
      %v2436 = vmul.f32 %v1009, %v2002
      %v2437 = vmul.f32 %v1109, %v2009
      %v2438 = vmul.f32 %v1010, %v2016
      %v2439 = vmul.f32 %v1110, %v2023
      %v2440 = vmul.f32 %v1011, %v2030
      %v2441 = vmul.f32 %v1111, %v2037
      %v2442 = vmul.f32 %v1012, %v2044
      %v2443 = vmul.f32 %v1112, %v2051
      %v2444 = vmul.f32 %v1013, %v2058
      %v2445 = vmul.f32 %v1113, %v2065
      %v2446 = vmul.f32 %v1014, %v2072
      %v2447 = vmul.f32 %v1114, %v2079
      %v2448 = vmul.f32 %v1015, %v2086
      %v2449 = vmul.f32 %v1115, %v2093
      %v2450 = vmul.f32 %v1016, %v2100
      %v2451 = vmul.f32 %v1116, %v2107
      %v2452 = vmul.f32 %v1017, %v2114
      %v2453 = vmul.f32 %v1117, %v2121
      %v2454 = vmul.f32 %v1018, %v2128
      %v2455 = vmul.f32 %v1118, %v2135
      %v2456 = vmul.f32 %v1019, %v2142
      %v2457 = vmul.f32 %v1119, %v2149
      %v2458 = vmul.f32 %v1020, %v2156
      %v2459 = vmul.f32 %v1120, %v2163
      %v2460 = vmul.f32 %v1021, %v2170
      %v2461 = vmul.f32 %v1121, %v2177
      %v2462 = vmul.f32 %v1022, %v2184
      %v2463 = vmul.f32 %v1122, %v2191
      %v2464 = vmul.f32 %v1023, %v2198
      %v2465 = vmul.f32 %v1123, %v2205
      %v2466 = vmul.f32 %v1024, %v2212
      %v2467 = vmul.f32 %v1124, %v2219
      %v2468 = vmul.f32 %v1025, %v2226
      %v2469 = vmul.f32 %v1125, %v2233
      %v2470 = vmul.f32 %v1026, %v2240
      %v2471 = vmul.f32 %v1126, %v2247
      %v2472 = vmul.f32 %v1027, %v2254
      %v2473 = vmul.f32 %v1127, %v2261
      %v2474 = vmul.f32 %v1028, %v2268
      %v2475 = vmul.f32 %v1128, %v2275
      %v2548 = vcombine.low %v2381, %v2382
      %v2549 = vcombine.low %v2383, %v2384
      %v2550 = vcombine.low %v2386, %v2387
      %v2551 = vcombine.low %v2388, %v2389
      %v2552 = vcombine.low %v2391, %v2392
      %v2553 = vcombine.low %v2393, %v2394
      %v2554 = vcombine.low %v2396, %v2397
      %v2555 = vcombine.low %v2398, %v2399
      %v2556 = vcombine.low %v2401, %v2402
      %v2557 = vcombine.low %v2403, %v2404
      %v2558 = vcombine.low %v2406, %v2407
      %v2559 = vcombine.low %v2408, %v2409
      %v2560 = vcombine.low %v2411, %v2412
      %v2561 = vcombine.low %v2413, %v2414
      %v2562 = vcombine.low %v2416, %v2417
      %v2563 = vcombine.low %v2418, %v2419
      %v2564 = vcombine.low %v2421, %v2422
      %v2565 = vcombine.low %v2423, %v2424
      %v2566 = vcombine.low %v2426, %v2427
      %v2567 = vcombine.low %v2428, %v2429
      %v2568 = vcombine.low %v2431, %v2432
      %v2569 = vcombine.low %v2433, %v2434
      %v2570 = vcombine.low %v2436, %v2437
      %v2571 = vcombine.low %v2438, %v2439
      %v2572 = vcombine.low %v2441, %v2442
      %v2573 = vcombine.low %v2443, %v2444
      %v2574 = vcombine.low %v2446, %v2447
      %v2575 = vcombine.low %v2448, %v2449
      %v2576 = vcombine.low %v2451, %v2452
      %v2577 = vcombine.low %v2453, %v2454
      %v2578 = vcombine.low %v2456, %v2457
      %v2579 = vcombine.low %v2458, %v2459
      %v2580 = vcombine.low %v2461, %v2462
      %v2581 = vcombine.low %v2463, %v2464
      %v2582 = vcombine.low %v2466, %v2467
      %v2583 = vcombine.low %v2468, %v2469
      %v2620 = vpack.c.bf16 %v2549, %v2548
      %v2621 = vpack.c.bf16 %v2385, %v2385
      %v2622 = vpack.c.bf16 %v2551, %v2550
      %v2623 = vpack.c.bf16 %v2390, %v2390
      %v2624 = vpack.c.bf16 %v2553, %v2552
      %v2625 = vpack.c.bf16 %v2395, %v2395
      %v2626 = vpack.c.bf16 %v2555, %v2554
      %v2627 = vpack.c.bf16 %v2400, %v2400
      %v2628 = vpack.c.bf16 %v2557, %v2556
      %v2629 = vpack.c.bf16 %v2405, %v2405
      %v2630 = vpack.c.bf16 %v2559, %v2558
      %v2631 = vpack.c.bf16 %v2410, %v2410
      %v2632 = vpack.c.bf16 %v2561, %v2560
      %v2633 = vpack.c.bf16 %v2415, %v2415
      %v2634 = vpack.c.bf16 %v2563, %v2562
      %v2635 = vpack.c.bf16 %v2420, %v2420
      %v2636 = vpack.c.bf16 %v2565, %v2564
      %v2637 = vpack.c.bf16 %v2425, %v2425
      %v2638 = vpack.c.bf16 %v2567, %v2566
      %v2639 = vpack.c.bf16 %v2430, %v2430
      %v2640 = vpack.c.bf16 %v2569, %v2568
      %v2641 = vpack.c.bf16 %v2435, %v2435
      %v2642 = vpack.c.bf16 %v2571, %v2570
      %v2643 = vpack.c.bf16 %v2440, %v2440
      %v2644 = vpack.c.bf16 %v2573, %v2572
      %v2645 = vpack.c.bf16 %v2445, %v2445
      %v2646 = vpack.c.bf16 %v2575, %v2574
      %v2647 = vpack.c.bf16 %v2450, %v2450
      %v2648 = vpack.c.bf16 %v2577, %v2576
      %v2649 = vpack.c.bf16 %v2455, %v2455
      %v2650 = vpack.c.bf16 %v2579, %v2578
      %v2651 = vpack.c.bf16 %v2460, %v2460
      %v2652 = vpack.c.bf16 %v2581, %v2580
      %v2653 = vpack.c.bf16 %v2465, %v2465
      %v2654 = vpack.c.bf16 %v2583, %v2582
      %v2655 = vpack.c.bf16 %v2470, %v2470
      %v2664 = vcombine.low %v2376, %v2377
      %v2665 = vcombine.low %v2378, %v2379
      %v2666 = vcombine.low %v2471, %v2472
      %v2667 = vcombine.low %v2473, %v2474
      %v2672 = vpack.c.bf16 %v2665, %v2664
      %v2673 = vpack.c.bf16 %v2380, %v2380
      %v2674 = vpack.c.bf16 %v2667, %v2666
      %v2675 = vpack.c.bf16 %v2475, %v2475
      %vm2676 = vsmask.f32 7424
      %v2678 = vshrl.u32 %v2620, 16
      %v2680 = vshll.u32 %v2620, 16
      %v2682 = vrot.slane %v2680, 1
      %v2683 = vor.u32 %v2678, %v2682
      %v2685 = vshll.u32 %v2621, 16
      %v2687 = vrot.slane %v2685, 1
      %v2688 = vsel %vm2676, %v2683, %v2687
      %v2689 = vshrl.u32 %v2621, 16
      %v2692 = vshrl.u32 %v2622, 16
      %v2694 = vshll.u32 %v2622, 16
      %v2696 = vrot.slane %v2694, 1
      %v2697 = vor.u32 %v2692, %v2696
      %v2699 = vshll.u32 %v2623, 16
      %v2701 = vrot.slane %v2699, 1
      %v2702 = vsel %vm2676, %v2697, %v2701
      %v2703 = vshrl.u32 %v2623, 16
      %v2706 = vshrl.u32 %v2624, 16
      %v2708 = vshll.u32 %v2624, 16
      %v2710 = vrot.slane %v2708, 1
      %v2711 = vor.u32 %v2706, %v2710
      %v2713 = vshll.u32 %v2625, 16
      %v2715 = vrot.slane %v2713, 1
      %v2716 = vsel %vm2676, %v2711, %v2715
      %v2717 = vshrl.u32 %v2625, 16
      %v2720 = vshrl.u32 %v2626, 16
      %v2722 = vshll.u32 %v2626, 16
      %v2724 = vrot.slane %v2722, 1
      %v2725 = vor.u32 %v2720, %v2724
      %v2727 = vshll.u32 %v2627, 16
      %v2729 = vrot.slane %v2727, 1
      %v2730 = vsel %vm2676, %v2725, %v2729
      %v2731 = vshrl.u32 %v2627, 16
      %v2734 = vshrl.u32 %v2628, 16
      %v2736 = vshll.u32 %v2628, 16
      %v2738 = vrot.slane %v2736, 1
      %v2739 = vor.u32 %v2734, %v2738
      %v2741 = vshll.u32 %v2629, 16
      %v2743 = vrot.slane %v2741, 1
      %v2744 = vsel %vm2676, %v2739, %v2743
      %v2745 = vshrl.u32 %v2629, 16
      %v2748 = vshrl.u32 %v2630, 16
      %v2750 = vshll.u32 %v2630, 16
      %v2752 = vrot.slane %v2750, 1
      %v2753 = vor.u32 %v2748, %v2752
      %v2755 = vshll.u32 %v2631, 16
      %v2757 = vrot.slane %v2755, 1
      %v2758 = vsel %vm2676, %v2753, %v2757
      %v2759 = vshrl.u32 %v2631, 16
      %v2762 = vshrl.u32 %v2632, 16
      %v2764 = vshll.u32 %v2632, 16
      %v2766 = vrot.slane %v2764, 1
      %v2767 = vor.u32 %v2762, %v2766
      %v2769 = vshll.u32 %v2633, 16
      %v2771 = vrot.slane %v2769, 1
      %v2772 = vsel %vm2676, %v2767, %v2771
      %v2773 = vshrl.u32 %v2633, 16
      %v2776 = vshrl.u32 %v2634, 16
      %v2778 = vshll.u32 %v2634, 16
      %v2780 = vrot.slane %v2778, 1
      %v2781 = vor.u32 %v2776, %v2780
      %v2783 = vshll.u32 %v2635, 16
      %v2785 = vrot.slane %v2783, 1
      %v2786 = vsel %vm2676, %v2781, %v2785
      %v2787 = vshrl.u32 %v2635, 16
      %v2790 = vshrl.u32 %v2636, 16
      %v2792 = vshll.u32 %v2636, 16
      %v2794 = vrot.slane %v2792, 1
      %v2795 = vor.u32 %v2790, %v2794
      %v2797 = vshll.u32 %v2637, 16
      %v2799 = vrot.slane %v2797, 1
      %v2800 = vsel %vm2676, %v2795, %v2799
      %v2801 = vshrl.u32 %v2637, 16
      %v2804 = vshrl.u32 %v2638, 16
      %v2806 = vshll.u32 %v2638, 16
      %v2808 = vrot.slane %v2806, 1
      %v2809 = vor.u32 %v2804, %v2808
      %v2811 = vshll.u32 %v2639, 16
      %v2813 = vrot.slane %v2811, 1
      %v2814 = vsel %vm2676, %v2809, %v2813
      %v2815 = vshrl.u32 %v2639, 16
      %v2818 = vshrl.u32 %v2640, 16
      %v2820 = vshll.u32 %v2640, 16
      %v2822 = vrot.slane %v2820, 1
      %v2823 = vor.u32 %v2818, %v2822
      %v2825 = vshll.u32 %v2641, 16
      %v2827 = vrot.slane %v2825, 1
      %v2828 = vsel %vm2676, %v2823, %v2827
      %v2829 = vshrl.u32 %v2641, 16
      %v2832 = vshrl.u32 %v2642, 16
      %v2834 = vshll.u32 %v2642, 16
      %v2836 = vrot.slane %v2834, 1
      %v2837 = vor.u32 %v2832, %v2836
      %v2839 = vshll.u32 %v2643, 16
      %v2841 = vrot.slane %v2839, 1
      %v2842 = vsel %vm2676, %v2837, %v2841
      %v2843 = vshrl.u32 %v2643, 16
      %v2846 = vshrl.u32 %v2644, 16
      %v2848 = vshll.u32 %v2644, 16
      %v2850 = vrot.slane %v2848, 1
      %v2851 = vor.u32 %v2846, %v2850
      %v2853 = vshll.u32 %v2645, 16
      %v2855 = vrot.slane %v2853, 1
      %v2856 = vsel %vm2676, %v2851, %v2855
      %v2857 = vshrl.u32 %v2645, 16
      %v2860 = vshrl.u32 %v2646, 16
      %v2862 = vshll.u32 %v2646, 16
      %v2864 = vrot.slane %v2862, 1
      %v2865 = vor.u32 %v2860, %v2864
      %v2867 = vshll.u32 %v2647, 16
      %v2869 = vrot.slane %v2867, 1
      %v2870 = vsel %vm2676, %v2865, %v2869
      %v2871 = vshrl.u32 %v2647, 16
      %v2874 = vshrl.u32 %v2648, 16
      %v2876 = vshll.u32 %v2648, 16
      %v2878 = vrot.slane %v2876, 1
      %v2879 = vor.u32 %v2874, %v2878
      %v2881 = vshll.u32 %v2649, 16
      %v2883 = vrot.slane %v2881, 1
      %v2884 = vsel %vm2676, %v2879, %v2883
      %v2885 = vshrl.u32 %v2649, 16
      %v2888 = vshrl.u32 %v2650, 16
      %v2890 = vshll.u32 %v2650, 16
      %v2892 = vrot.slane %v2890, 1
      %v2893 = vor.u32 %v2888, %v2892
      %v2895 = vshll.u32 %v2651, 16
      %v2897 = vrot.slane %v2895, 1
      %v2898 = vsel %vm2676, %v2893, %v2897
      %v2899 = vshrl.u32 %v2651, 16
      %2901 = vrot.lane.b32.xlu0 %v2688, 16
      %v2902 = vpop.permute.xlu0 %2901
      %2903 = vrot.lane.b32.xlu0 %v2689, 16
      %v2904 = vpop.permute.xlu0 %2903
      %2905 = vrot.lane.b32.xlu0 %v2702, 16
      %v2906 = vpop.permute.xlu0 %2905
      %2907 = vrot.lane.b32.xlu0 %v2703, 16
      %v2908 = vpop.permute.xlu0 %2907
      %2909 = vrot.lane.b32.xlu0 %v2716, 16
      %v2910 = vpop.permute.xlu0 %2909
      %2911 = vrot.lane.b32.xlu0 %v2717, 16
      %v2912 = vpop.permute.xlu0 %2911
      %2913 = vrot.lane.b32.xlu0 %v2730, 16
      %v2914 = vpop.permute.xlu0 %2913
      %2915 = vrot.lane.b32.xlu0 %v2731, 16
      %v2916 = vpop.permute.xlu0 %2915
      %2917 = vrot.lane.b32.xlu0 %v2744, 16
      %v2918 = vpop.permute.xlu0 %2917
      %2919 = vrot.lane.b32.xlu0 %v2745, 16
      %v2920 = vpop.permute.xlu0 %2919
      %2921 = vrot.lane.b32.xlu0 %v2758, 16
      %v2922 = vpop.permute.xlu0 %2921
      %2923 = vrot.lane.b32.xlu0 %v2759, 16
      %v2924 = vpop.permute.xlu0 %2923
      %2925 = vrot.lane.b32.xlu0 %v2772, 16
      %v2926 = vpop.permute.xlu0 %2925
      %2927 = vrot.lane.b32.xlu0 %v2773, 16
      %v2928 = vpop.permute.xlu0 %2927
      %2929 = vrot.lane.b32.xlu0 %v2786, 16
      %v2930 = vpop.permute.xlu0 %2929
      %2931 = vrot.lane.b32.xlu0 %v2787, 16
      %v2932 = vpop.permute.xlu0 %2931
      %2933 = vrot.lane.b32.xlu0 %v2800, 16
      %v2934 = vpop.permute.xlu0 %2933
      %2935 = vrot.lane.b32.xlu0 %v2801, 16
      %v2936 = vpop.permute.xlu0 %2935
      %2937 = vrot.lane.b32.xlu0 %v2814, 16
      %v2938 = vpop.permute.xlu0 %2937
      %2939 = vrot.lane.b32.xlu0 %v2815, 16
      %v2940 = vpop.permute.xlu0 %2939
      %2941 = vrot.lane.b32.xlu0 %v2828, 16
      %v2942 = vpop.permute.xlu0 %2941
      %2943 = vrot.lane.b32.xlu0 %v2829, 16
      %v2944 = vpop.permute.xlu0 %2943
      %2945 = vrot.lane.b32.xlu0 %v2842, 16
      %v2946 = vpop.permute.xlu0 %2945
      %2947 = vrot.lane.b32.xlu0 %v2843, 16
      %v2948 = vpop.permute.xlu0 %2947
      %2949 = vrot.lane.b32.xlu0 %v2856, 16
      %v2950 = vpop.permute.xlu0 %2949
      %2951 = vrot.lane.b32.xlu0 %v2857, 16
      %v2952 = vpop.permute.xlu0 %2951
      %2953 = vrot.lane.b32.xlu0 %v2870, 16
      %v2954 = vpop.permute.xlu0 %2953
      %2955 = vrot.lane.b32.xlu0 %v2871, 16
      %v2956 = vpop.permute.xlu0 %2955
      %2957 = vrot.lane.b32.xlu0 %v2884, 16
      %v2958 = vpop.permute.xlu0 %2957
      %2959 = vrot.lane.b32.xlu0 %v2885, 16
      %v2960 = vpop.permute.xlu0 %2959
      %2961 = vrot.lane.b32.xlu0 %v2898, 16
      %v2962 = vpop.permute.xlu0 %2961
      %2963 = vrot.lane.b32.xlu0 %v2899, 16
      %v2964 = vpop.permute.xlu0 %2963
      %vm2997 = vcmask 1046528
      %v2998 = vrot.slane %v2620, 1
      %v2999 = vrot.slane %v2621, 1
      %v3000 = vsel %vm2997, %v2998, %v2999
      %v3001 = vrot.slane %v2622, 1
      %v3002 = vrot.slane %v2623, 1
      %v3003 = vsel %vm2997, %v3001, %v3002
      %v3004 = vrot.slane %v2624, 1
      %v3005 = vrot.slane %v2625, 1
      %v3006 = vsel %vm2997, %v3004, %v3005
      %v3007 = vrot.slane %v2626, 1
      %v3008 = vrot.slane %v2627, 1
      %v3009 = vsel %vm2997, %v3007, %v3008
      %v3010 = vrot.slane %v2628, 1
      %v3011 = vrot.slane %v2629, 1
      %v3012 = vsel %vm2997, %v3010, %v3011
      %v3013 = vrot.slane %v2630, 1
      %v3014 = vrot.slane %v2631, 1
      %v3015 = vsel %vm2997, %v3013, %v3014
      %v3016 = vrot.slane %v2632, 1
      %v3017 = vrot.slane %v2633, 1
      %v3018 = vsel %vm2997, %v3016, %v3017
      %v3019 = vrot.slane %v2634, 1
      %v3020 = vrot.slane %v2635, 1
      %v3021 = vsel %vm2997, %v3019, %v3020
      %v3022 = vrot.slane %v2636, 1
      %v3023 = vrot.slane %v2637, 1
      %v3024 = vsel %vm2997, %v3022, %v3023
      %v3025 = vrot.slane %v2638, 1
      %v3026 = vrot.slane %v2639, 1
      %v3027 = vsel %vm2997, %v3025, %v3026
      %v3028 = vrot.slane %v2640, 1
      %v3029 = vrot.slane %v2641, 1
      %v3030 = vsel %vm2997, %v3028, %v3029
      %v3031 = vrot.slane %v2642, 1
      %v3032 = vrot.slane %v2643, 1
      %v3033 = vsel %vm2997, %v3031, %v3032
      %v3034 = vrot.slane %v2644, 1
      %v3035 = vrot.slane %v2645, 1
      %v3036 = vsel %vm2997, %v3034, %v3035
      %v3037 = vrot.slane %v2646, 1
      %v3038 = vrot.slane %v2647, 1
      %v3039 = vsel %vm2997, %v3037, %v3038
      %v3040 = vrot.slane %v2648, 1
      %v3041 = vrot.slane %v2649, 1
      %v3042 = vsel %vm2997, %v3040, %v3041
      %v3043 = vrot.slane %v2650, 1
      %v3044 = vrot.slane %v2651, 1
      %v3045 = vsel %vm2997, %v3043, %v3044
      %3046 = vrot.lane.b32.xlu0 %v3000, 32
      %v3047 = vpop.permute.xlu0 %3046
      %3048 = vrot.lane.b32.xlu0 %v2999, 32
      %v3049 = vpop.permute.xlu0 %3048
      %3050 = vrot.lane.b32.xlu0 %v3003, 32
      %v3051 = vpop.permute.xlu0 %3050
      %3052 = vrot.lane.b32.xlu0 %v3002, 32
      %v3053 = vpop.permute.xlu0 %3052
      %3054 = vrot.lane.b32.xlu0 %v3006, 32
      %v3055 = vpop.permute.xlu0 %3054
      %3056 = vrot.lane.b32.xlu0 %v3005, 32
      %v3057 = vpop.permute.xlu0 %3056
      %3058 = vrot.lane.b32.xlu0 %v3009, 32
      %v3059 = vpop.permute.xlu0 %3058
      %3060 = vrot.lane.b32.xlu0 %v3008, 32
      %v3061 = vpop.permute.xlu0 %3060
      %3062 = vrot.lane.b32.xlu0 %v3012, 32
      %v3063 = vpop.permute.xlu0 %3062
      %3064 = vrot.lane.b32.xlu0 %v3011, 32
      %v3065 = vpop.permute.xlu0 %3064
      %3066 = vrot.lane.b32.xlu0 %v3015, 32
      %v3067 = vpop.permute.xlu0 %3066
      %3068 = vrot.lane.b32.xlu0 %v3014, 32
      %v3069 = vpop.permute.xlu0 %3068
      %3070 = vrot.lane.b32.xlu0 %v3018, 32
      %v3071 = vpop.permute.xlu0 %3070
      %3072 = vrot.lane.b32.xlu0 %v3017, 32
      %v3073 = vpop.permute.xlu0 %3072
      %3074 = vrot.lane.b32.xlu0 %v3021, 32
      %v3075 = vpop.permute.xlu0 %3074
      %3076 = vrot.lane.b32.xlu0 %v3020, 32
      %v3077 = vpop.permute.xlu0 %3076
      %3078 = vrot.lane.b32.xlu0 %v3024, 32
      %v3079 = vpop.permute.xlu0 %3078
      %3080 = vrot.lane.b32.xlu0 %v3023, 32
      %v3081 = vpop.permute.xlu0 %3080
      %3082 = vrot.lane.b32.xlu0 %v3027, 32
      %v3083 = vpop.permute.xlu0 %3082
      %3084 = vrot.lane.b32.xlu0 %v3026, 32
      %v3085 = vpop.permute.xlu0 %3084
      %3086 = vrot.lane.b32.xlu0 %v3030, 32
      %v3087 = vpop.permute.xlu0 %3086
      %3088 = vrot.lane.b32.xlu0 %v3029, 32
      %v3089 = vpop.permute.xlu0 %3088
      %3090 = vrot.lane.b32.xlu0 %v3033, 32
      %v3091 = vpop.permute.xlu0 %3090
      %3092 = vrot.lane.b32.xlu0 %v3032, 32
      %v3093 = vpop.permute.xlu0 %3092
      %3094 = vrot.lane.b32.xlu0 %v3036, 32
      %v3095 = vpop.permute.xlu0 %3094
      %3096 = vrot.lane.b32.xlu0 %v3035, 32
      %v3097 = vpop.permute.xlu0 %3096
      %3098 = vrot.lane.b32.xlu0 %v3039, 32
      %v3099 = vpop.permute.xlu0 %3098
      %3100 = vrot.lane.b32.xlu0 %v3038, 32
      %v3101 = vpop.permute.xlu0 %3100
      %3102 = vrot.lane.b32.xlu0 %v3042, 32
      %v3103 = vpop.permute.xlu0 %3102
      %3104 = vrot.lane.b32.xlu0 %v3041, 32
      %v3105 = vpop.permute.xlu0 %3104
      %3106 = vrot.lane.b32.xlu0 %v3045, 32
      %v3107 = vpop.permute.xlu0 %3106
      %3108 = vrot.lane.b32.xlu0 %v3044, 32
      %v3109 = vpop.permute.xlu0 %3108
      %3112 = vrot.lane.b32.xlu0 %v2622, 48
      %v3113 = vpop.permute.xlu0 %3112
      %3114 = vrot.lane.b32.xlu0 %v2623, 48
      %v3115 = vpop.permute.xlu0 %3114
      %3116 = vrot.lane.b32.xlu0 %v2624, 48
      %v3117 = vpop.permute.xlu0 %3116
      %3118 = vrot.lane.b32.xlu0 %v2625, 48
      %v3119 = vpop.permute.xlu0 %3118
      %3120 = vrot.lane.b32.xlu0 %v2626, 48
      %v3121 = vpop.permute.xlu0 %3120
      %3122 = vrot.lane.b32.xlu0 %v2627, 48
      %v3123 = vpop.permute.xlu0 %3122
      %3124 = vrot.lane.b32.xlu0 %v2628, 48
      %v3125 = vpop.permute.xlu0 %3124
      %3126 = vrot.lane.b32.xlu0 %v2629, 48
      %v3127 = vpop.permute.xlu0 %3126
      %3128 = vrot.lane.b32.xlu0 %v2630, 48
      %v3129 = vpop.permute.xlu0 %3128
      %3130 = vrot.lane.b32.xlu0 %v2631, 48
      %v3131 = vpop.permute.xlu0 %3130
      %3132 = vrot.lane.b32.xlu0 %v2632, 48
      %v3133 = vpop.permute.xlu0 %3132
      %3134 = vrot.lane.b32.xlu0 %v2633, 48
      %v3135 = vpop.permute.xlu0 %3134
      %3136 = vrot.lane.b32.xlu0 %v2634, 48
      %v3137 = vpop.permute.xlu0 %3136
      %3138 = vrot.lane.b32.xlu0 %v2635, 48
      %v3139 = vpop.permute.xlu0 %3138
      %3140 = vrot.lane.b32.xlu0 %v2636, 48
      %v3141 = vpop.permute.xlu0 %3140
      %3142 = vrot.lane.b32.xlu0 %v2637, 48
      %v3143 = vpop.permute.xlu0 %3142
      %3144 = vrot.lane.b32.xlu0 %v2638, 48
      %v3145 = vpop.permute.xlu0 %3144
      %3146 = vrot.lane.b32.xlu0 %v2639, 48
      %v3147 = vpop.permute.xlu0 %3146
      %3148 = vrot.lane.b32.xlu0 %v2640, 48
      %v3149 = vpop.permute.xlu0 %3148
      %3150 = vrot.lane.b32.xlu0 %v2641, 48
      %v3151 = vpop.permute.xlu0 %3150
      %3152 = vrot.lane.b32.xlu0 %v2642, 48
      %v3153 = vpop.permute.xlu0 %3152
      %3154 = vrot.lane.b32.xlu0 %v2643, 48
      %v3155 = vpop.permute.xlu0 %3154
      %3156 = vrot.lane.b32.xlu0 %v2644, 48
      %v3157 = vpop.permute.xlu0 %3156
      %3158 = vrot.lane.b32.xlu0 %v2645, 48
      %v3159 = vpop.permute.xlu0 %3158
      %3160 = vrot.lane.b32.xlu0 %v2646, 48
      %v3161 = vpop.permute.xlu0 %3160
      %3162 = vrot.lane.b32.xlu0 %v2647, 48
      %v3163 = vpop.permute.xlu0 %3162
      %3164 = vrot.lane.b32.xlu0 %v2648, 48
      %v3165 = vpop.permute.xlu0 %3164
      %3166 = vrot.lane.b32.xlu0 %v2649, 48
      %v3167 = vpop.permute.xlu0 %3166
      %3168 = vrot.lane.b32.xlu0 %v2650, 48
      %v3169 = vpop.permute.xlu0 %3168
      %3170 = vrot.lane.b32.xlu0 %v2651, 48
      %v3171 = vpop.permute.xlu0 %3170
      %3172 = vrot.lane.b32.xlu0 %v2652, 48
      %v3173 = vpop.permute.xlu0 %3172
      %3174 = vrot.lane.b32.xlu0 %v2653, 48
      %v3175 = vpop.permute.xlu0 %3174
      %v3177 = vshrl.u32 %v2652, 16
      %v3179 = vshll.u32 %v2652, 16
      %v3181 = vrot.slane %v3179, 1
      %v3182 = vor.u32 %v3177, %v3181
      %v3184 = vshll.u32 %v2653, 16
      %v3186 = vrot.slane %v3184, 1
      %v3187 = vsel %vm2676, %v3182, %v3186
      %v3188 = vshrl.u32 %v2653, 16
      %3190 = vrot.lane.b32.xlu0 %v2702, 64
      %v3191 = vpop.permute.xlu0 %3190
      %3192 = vrot.lane.b32.xlu0 %v2703, 64
      %v3193 = vpop.permute.xlu0 %3192
      %3194 = vrot.lane.b32.xlu0 %v2716, 64
      %v3195 = vpop.permute.xlu0 %3194
      %3196 = vrot.lane.b32.xlu0 %v2717, 64
      %v3197 = vpop.permute.xlu0 %3196
      %3198 = vrot.lane.b32.xlu0 %v2730, 64
      %v3199 = vpop.permute.xlu0 %3198
      %3200 = vrot.lane.b32.xlu0 %v2731, 64
      %v3201 = vpop.permute.xlu0 %3200
      %3202 = vrot.lane.b32.xlu0 %v2744, 64
      %v3203 = vpop.permute.xlu0 %3202
      %3204 = vrot.lane.b32.xlu0 %v2745, 64
      %v3205 = vpop.permute.xlu0 %3204
      %3206 = vrot.lane.b32.xlu0 %v2758, 64
      %v3207 = vpop.permute.xlu0 %3206
      %3208 = vrot.lane.b32.xlu0 %v2759, 64
      %v3209 = vpop.permute.xlu0 %3208
      %3210 = vrot.lane.b32.xlu0 %v2772, 64
      %v3211 = vpop.permute.xlu0 %3210
      %3212 = vrot.lane.b32.xlu0 %v2773, 64
      %v3213 = vpop.permute.xlu0 %3212
      %3214 = vrot.lane.b32.xlu0 %v2786, 64
      %v3215 = vpop.permute.xlu0 %3214
      %3216 = vrot.lane.b32.xlu0 %v2787, 64
      %v3217 = vpop.permute.xlu0 %3216
      %3218 = vrot.lane.b32.xlu0 %v2800, 64
      %v3219 = vpop.permute.xlu0 %3218
      %3220 = vrot.lane.b32.xlu0 %v2801, 64
      %v3221 = vpop.permute.xlu0 %3220
      %3222 = vrot.lane.b32.xlu0 %v2814, 64
      %v3223 = vpop.permute.xlu0 %3222
      %3224 = vrot.lane.b32.xlu0 %v2815, 64
      %v3225 = vpop.permute.xlu0 %3224
      %3226 = vrot.lane.b32.xlu0 %v2828, 64
      %v3227 = vpop.permute.xlu0 %3226
      %3228 = vrot.lane.b32.xlu0 %v2829, 64
      %v3229 = vpop.permute.xlu0 %3228
      %3230 = vrot.lane.b32.xlu0 %v2842, 64
      %v3231 = vpop.permute.xlu0 %3230
      %3232 = vrot.lane.b32.xlu0 %v2843, 64
      %v3233 = vpop.permute.xlu0 %3232
      %3234 = vrot.lane.b32.xlu0 %v2856, 64
      %v3235 = vpop.permute.xlu0 %3234
      %3236 = vrot.lane.b32.xlu0 %v2857, 64
      %v3237 = vpop.permute.xlu0 %3236
      %3238 = vrot.lane.b32.xlu0 %v2870, 64
      %v3239 = vpop.permute.xlu0 %3238
      %3240 = vrot.lane.b32.xlu0 %v2871, 64
      %v3241 = vpop.permute.xlu0 %3240
      %3242 = vrot.lane.b32.xlu0 %v2884, 64
      %v3243 = vpop.permute.xlu0 %3242
      %3244 = vrot.lane.b32.xlu0 %v2885, 64
      %v3245 = vpop.permute.xlu0 %3244
      %3246 = vrot.lane.b32.xlu0 %v2898, 64
      %v3247 = vpop.permute.xlu0 %3246
      %3248 = vrot.lane.b32.xlu0 %v2899, 64
      %v3249 = vpop.permute.xlu0 %3248
      %3250 = vrot.lane.b32.xlu0 %v3187, 64
      %v3251 = vpop.permute.xlu0 %3250
      %3252 = vrot.lane.b32.xlu0 %v3188, 64
      %v3253 = vpop.permute.xlu0 %3252
      %v3254 = vrot.slane %v2652, 1
      %v3255 = vrot.slane %v2653, 1
      %v3256 = vsel %vm2997, %v3254, %v3255
      %3257 = vrot.lane.b32.xlu0 %v3003, 80
      %v3258 = vpop.permute.xlu0 %3257
      %3259 = vrot.lane.b32.xlu0 %v3002, 80
      %v3260 = vpop.permute.xlu0 %3259
      %3261 = vrot.lane.b32.xlu0 %v3006, 80
      %v3262 = vpop.permute.xlu0 %3261
      %3263 = vrot.lane.b32.xlu0 %v3005, 80
      %v3264 = vpop.permute.xlu0 %3263
      %3265 = vrot.lane.b32.xlu0 %v3009, 80
      %v3266 = vpop.permute.xlu0 %3265
      %3267 = vrot.lane.b32.xlu0 %v3008, 80
      %v3268 = vpop.permute.xlu0 %3267
      %3269 = vrot.lane.b32.xlu0 %v3012, 80
      %v3270 = vpop.permute.xlu0 %3269
      %3271 = vrot.lane.b32.xlu0 %v3011, 80
      %v3272 = vpop.permute.xlu0 %3271
      %3273 = vrot.lane.b32.xlu0 %v3015, 80
      %v3274 = vpop.permute.xlu0 %3273
      %3275 = vrot.lane.b32.xlu0 %v3014, 80
      %v3276 = vpop.permute.xlu0 %3275
      %3277 = vrot.lane.b32.xlu0 %v3018, 80
      %v3278 = vpop.permute.xlu0 %3277
      %3279 = vrot.lane.b32.xlu0 %v3017, 80
      %v3280 = vpop.permute.xlu0 %3279
      %3281 = vrot.lane.b32.xlu0 %v3021, 80
      %v3282 = vpop.permute.xlu0 %3281
      %3283 = vrot.lane.b32.xlu0 %v3020, 80
      %v3284 = vpop.permute.xlu0 %3283
      %3285 = vrot.lane.b32.xlu0 %v3024, 80
      %v3286 = vpop.permute.xlu0 %3285
      %3287 = vrot.lane.b32.xlu0 %v3023, 80
      %v3288 = vpop.permute.xlu0 %3287
      %3289 = vrot.lane.b32.xlu0 %v3027, 80
      %v3290 = vpop.permute.xlu0 %3289
      %3291 = vrot.lane.b32.xlu0 %v3026, 80
      %v3292 = vpop.permute.xlu0 %3291
      %3293 = vrot.lane.b32.xlu0 %v3030, 80
      %v3294 = vpop.permute.xlu0 %3293
      %3295 = vrot.lane.b32.xlu0 %v3029, 80
      %v3296 = vpop.permute.xlu0 %3295
      %3297 = vrot.lane.b32.xlu0 %v3033, 80
      %v3298 = vpop.permute.xlu0 %3297
      %3299 = vrot.lane.b32.xlu0 %v3032, 80
      %v3300 = vpop.permute.xlu0 %3299
      %3301 = vrot.lane.b32.xlu0 %v3036, 80
      %v3302 = vpop.permute.xlu0 %3301
      %3303 = vrot.lane.b32.xlu0 %v3035, 80
      %v3304 = vpop.permute.xlu0 %3303
      %3305 = vrot.lane.b32.xlu0 %v3039, 80
      %v3306 = vpop.permute.xlu0 %3305
      %3307 = vrot.lane.b32.xlu0 %v3038, 80
      %v3308 = vpop.permute.xlu0 %3307
      %3309 = vrot.lane.b32.xlu0 %v3042, 80
      %v3310 = vpop.permute.xlu0 %3309
      %3311 = vrot.lane.b32.xlu0 %v3041, 80
      %v3312 = vpop.permute.xlu0 %3311
      %3313 = vrot.lane.b32.xlu0 %v3045, 80
      %v3314 = vpop.permute.xlu0 %3313
      %3315 = vrot.lane.b32.xlu0 %v3044, 80
      %v3316 = vpop.permute.xlu0 %3315
      %3317 = vrot.lane.b32.xlu0 %v3256, 80
      %v3318 = vpop.permute.xlu0 %3317
      %3319 = vrot.lane.b32.xlu0 %v3255, 80
      %v3320 = vpop.permute.xlu0 %3319
      %3323 = vrot.lane.b32.xlu0 %v2624, 96
      %v3324 = vpop.permute.xlu0 %3323
      %3325 = vrot.lane.b32.xlu0 %v2625, 96
      %v3326 = vpop.permute.xlu0 %3325
      %3327 = vrot.lane.b32.xlu0 %v2626, 96
      %v3328 = vpop.permute.xlu0 %3327
      %3329 = vrot.lane.b32.xlu0 %v2627, 96
      %v3330 = vpop.permute.xlu0 %3329
      %3331 = vrot.lane.b32.xlu0 %v2628, 96
      %v3332 = vpop.permute.xlu0 %3331
      %3333 = vrot.lane.b32.xlu0 %v2629, 96
      %v3334 = vpop.permute.xlu0 %3333
      %3335 = vrot.lane.b32.xlu0 %v2630, 96
      %v3336 = vpop.permute.xlu0 %3335
      %3337 = vrot.lane.b32.xlu0 %v2631, 96
      %v3338 = vpop.permute.xlu0 %3337
      %3339 = vrot.lane.b32.xlu0 %v2632, 96
      %v3340 = vpop.permute.xlu0 %3339
      %3341 = vrot.lane.b32.xlu0 %v2633, 96
      %v3342 = vpop.permute.xlu0 %3341
      %3343 = vrot.lane.b32.xlu0 %v2634, 96
      %v3344 = vpop.permute.xlu0 %3343
      %3345 = vrot.lane.b32.xlu0 %v2635, 96
      %v3346 = vpop.permute.xlu0 %3345
      %3347 = vrot.lane.b32.xlu0 %v2636, 96
      %v3348 = vpop.permute.xlu0 %3347
      %3349 = vrot.lane.b32.xlu0 %v2637, 96
      %v3350 = vpop.permute.xlu0 %3349
      %3351 = vrot.lane.b32.xlu0 %v2638, 96
      %v3352 = vpop.permute.xlu0 %3351
      %3353 = vrot.lane.b32.xlu0 %v2639, 96
      %v3354 = vpop.permute.xlu0 %3353
      %3355 = vrot.lane.b32.xlu0 %v2640, 96
      %v3356 = vpop.permute.xlu0 %3355
      %3357 = vrot.lane.b32.xlu0 %v2641, 96
      %v3358 = vpop.permute.xlu0 %3357
      %3359 = vrot.lane.b32.xlu0 %v2642, 96
      %v3360 = vpop.permute.xlu0 %3359
      %3361 = vrot.lane.b32.xlu0 %v2643, 96
      %v3362 = vpop.permute.xlu0 %3361
      %3363 = vrot.lane.b32.xlu0 %v2644, 96
      %v3364 = vpop.permute.xlu0 %3363
      %3365 = vrot.lane.b32.xlu0 %v2645, 96
      %v3366 = vpop.permute.xlu0 %3365
      %3367 = vrot.lane.b32.xlu0 %v2646, 96
      %v3368 = vpop.permute.xlu0 %3367
      %3369 = vrot.lane.b32.xlu0 %v2647, 96
      %v3370 = vpop.permute.xlu0 %3369
      %3371 = vrot.lane.b32.xlu0 %v2648, 96
      %v3372 = vpop.permute.xlu0 %3371
      %3373 = vrot.lane.b32.xlu0 %v2649, 96
      %v3374 = vpop.permute.xlu0 %3373
      %3375 = vrot.lane.b32.xlu0 %v2650, 96
      %v3376 = vpop.permute.xlu0 %3375
      %3377 = vrot.lane.b32.xlu0 %v2651, 96
      %v3378 = vpop.permute.xlu0 %3377
      %3379 = vrot.lane.b32.xlu0 %v2652, 96
      %v3380 = vpop.permute.xlu0 %3379
      %3381 = vrot.lane.b32.xlu0 %v2653, 96
      %v3382 = vpop.permute.xlu0 %3381
      %3383 = vrot.lane.b32.xlu0 %v2654, 96
      %v3384 = vpop.permute.xlu0 %3383
      %3385 = vrot.lane.b32.xlu0 %v2655, 96
      %v3386 = vpop.permute.xlu0 %3385
      %v3388 = vshrl.u32 %v2654, 16
      %v3390 = vshll.u32 %v2654, 16
      %v3392 = vrot.slane %v3390, 1
      %v3393 = vor.u32 %v3388, %v3392
      %v3395 = vshll.u32 %v2655, 16
      %v3397 = vrot.slane %v3395, 1
      %v3398 = vsel %vm2676, %v3393, %v3397
      %v3399 = vshrl.u32 %v2655, 16
      %3401 = vrot.lane.b32.xlu0 %v2716, 112
      %v3402 = vpop.permute.xlu0 %3401
      %3403 = vrot.lane.b32.xlu0 %v2717, 112
      %v3404 = vpop.permute.xlu0 %3403
      %3405 = vrot.lane.b32.xlu0 %v2730, 112
      %v3406 = vpop.permute.xlu0 %3405
      %3407 = vrot.lane.b32.xlu0 %v2731, 112
      %v3408 = vpop.permute.xlu0 %3407
      %3409 = vrot.lane.b32.xlu0 %v2744, 112
      %v3410 = vpop.permute.xlu0 %3409
      %3411 = vrot.lane.b32.xlu0 %v2745, 112
      %v3412 = vpop.permute.xlu0 %3411
      %3413 = vrot.lane.b32.xlu0 %v2758, 112
      %v3414 = vpop.permute.xlu0 %3413
      %3415 = vrot.lane.b32.xlu0 %v2759, 112
      %v3416 = vpop.permute.xlu0 %3415
      %3417 = vrot.lane.b32.xlu0 %v2772, 112
      %v3418 = vpop.permute.xlu0 %3417
      %3419 = vrot.lane.b32.xlu0 %v2773, 112
      %v3420 = vpop.permute.xlu0 %3419
      %3421 = vrot.lane.b32.xlu0 %v2786, 112
      %v3422 = vpop.permute.xlu0 %3421
      %3423 = vrot.lane.b32.xlu0 %v2787, 112
      %v3424 = vpop.permute.xlu0 %3423
      %3425 = vrot.lane.b32.xlu0 %v2800, 112
      %v3426 = vpop.permute.xlu0 %3425
      %3427 = vrot.lane.b32.xlu0 %v2801, 112
      %v3428 = vpop.permute.xlu0 %3427
      %3429 = vrot.lane.b32.xlu0 %v2814, 112
      %v3430 = vpop.permute.xlu0 %3429
      %3431 = vrot.lane.b32.xlu0 %v2815, 112
      %v3432 = vpop.permute.xlu0 %3431
      %3433 = vrot.lane.b32.xlu0 %v2828, 112
      %v3434 = vpop.permute.xlu0 %3433
      %3435 = vrot.lane.b32.xlu0 %v2829, 112
      %v3436 = vpop.permute.xlu0 %3435
      %3437 = vrot.lane.b32.xlu0 %v2842, 112
      %v3438 = vpop.permute.xlu0 %3437
      %3439 = vrot.lane.b32.xlu0 %v2843, 112
      %v3440 = vpop.permute.xlu0 %3439
      %3441 = vrot.lane.b32.xlu0 %v2856, 112
      %v3442 = vpop.permute.xlu0 %3441
      %3443 = vrot.lane.b32.xlu0 %v2857, 112
      %v3444 = vpop.permute.xlu0 %3443
      %3445 = vrot.lane.b32.xlu0 %v2870, 112
      %v3446 = vpop.permute.xlu0 %3445
      %3447 = vrot.lane.b32.xlu0 %v2871, 112
      %v3448 = vpop.permute.xlu0 %3447
      %3449 = vrot.lane.b32.xlu0 %v2884, 112
      %v3450 = vpop.permute.xlu0 %3449
      %3451 = vrot.lane.b32.xlu0 %v2885, 112
      %v3452 = vpop.permute.xlu0 %3451
      %3453 = vrot.lane.b32.xlu0 %v2898, 112
      %v3454 = vpop.permute.xlu0 %3453
      %3455 = vrot.lane.b32.xlu0 %v2899, 112
      %v3456 = vpop.permute.xlu0 %3455
      %3457 = vrot.lane.b32.xlu0 %v3187, 112
      %v3458 = vpop.permute.xlu0 %3457
      %3459 = vrot.lane.b32.xlu0 %v3188, 112
      %v3460 = vpop.permute.xlu0 %3459
      %3461 = vrot.lane.b32.xlu0 %v3398, 112
      %v3462 = vpop.permute.xlu0 %3461
      %3463 = vrot.lane.b32.xlu0 %v3399, 112
      %v3464 = vpop.permute.xlu0 %3463
      %v3465 = vrot.slane %v2654, 1
      %v3466 = vrot.slane %v2655, 1
      %v3467 = vsel %vm2997, %v3465, %v3466
      %vm3468 = vcmask 130048
      %v3470 = vsel %vm3468, %v2620, %v2902
      %v3472 = vsel %vm3468, %v2621, %v2904
      %v3474 = vsel %vm3468, %v2622, %v2906
      %v3476 = vsel %vm3468, %v2623, %v2908
      %v3478 = vsel %vm3468, %v2624, %v2910
      %v3480 = vsel %vm3468, %v2625, %v2912
      %v3482 = vsel %vm3468, %v2626, %v2914
      %v3484 = vsel %vm3468, %v2627, %v2916
      %v3486 = vsel %vm3468, %v2628, %v2918
      %v3488 = vsel %vm3468, %v2629, %v2920
      %v3490 = vsel %vm3468, %v2630, %v2922
      %v3492 = vsel %vm3468, %v2631, %v2924
      %v3494 = vsel %vm3468, %v2632, %v2926
      %v3496 = vsel %vm3468, %v2633, %v2928
      %v3498 = vsel %vm3468, %v2634, %v2930
      %v3500 = vsel %vm3468, %v2635, %v2932
      %v3502 = vsel %vm3468, %v2636, %v2934
      %v3504 = vsel %vm3468, %v2637, %v2936
      %v3506 = vsel %vm3468, %v2638, %v2938
      %v3508 = vsel %vm3468, %v2639, %v2940
      %v3510 = vsel %vm3468, %v2640, %v2942
      %v3512 = vsel %vm3468, %v2641, %v2944
      %v3514 = vsel %vm3468, %v2642, %v2946
      %v3516 = vsel %vm3468, %v2643, %v2948
      %v3518 = vsel %vm3468, %v2644, %v2950
      %v3520 = vsel %vm3468, %v2645, %v2952
      %v3522 = vsel %vm3468, %v2646, %v2954
      %v3524 = vsel %vm3468, %v2647, %v2956
      %v3526 = vsel %vm3468, %v2648, %v2958
      %v3528 = vsel %vm3468, %v2649, %v2960
      %v3530 = vsel %vm3468, %v2650, %v2962
      %v3532 = vsel %vm3468, %v2651, %v2964
      %v3534 = vsel %vm670, %v3470, %v3047
      %v3536 = vsel %vm670, %v3472, %v3049
      %v3538 = vsel %vm670, %v3474, %v3051
      %v3540 = vsel %vm670, %v3476, %v3053
      %v3542 = vsel %vm670, %v3478, %v3055
      %v3544 = vsel %vm670, %v3480, %v3057
      %v3546 = vsel %vm670, %v3482, %v3059
      %v3548 = vsel %vm670, %v3484, %v3061
      %v3550 = vsel %vm670, %v3486, %v3063
      %v3552 = vsel %vm670, %v3488, %v3065
      %v3554 = vsel %vm670, %v3490, %v3067
      %v3556 = vsel %vm670, %v3492, %v3069
      %v3558 = vsel %vm670, %v3494, %v3071
      %v3560 = vsel %vm670, %v3496, %v3073
      %v3562 = vsel %vm670, %v3498, %v3075
      %v3564 = vsel %vm670, %v3500, %v3077
      %v3566 = vsel %vm670, %v3502, %v3079
      %v3568 = vsel %vm670, %v3504, %v3081
      %v3570 = vsel %vm670, %v3506, %v3083
      %v3572 = vsel %vm670, %v3508, %v3085
      %v3574 = vsel %vm670, %v3510, %v3087
      %v3576 = vsel %vm670, %v3512, %v3089
      %v3578 = vsel %vm670, %v3514, %v3091
      %v3580 = vsel %vm670, %v3516, %v3093
      %v3582 = vsel %vm670, %v3518, %v3095
      %v3584 = vsel %vm670, %v3520, %v3097
      %v3586 = vsel %vm670, %v3522, %v3099
      %v3588 = vsel %vm670, %v3524, %v3101
      %v3590 = vsel %vm670, %v3526, %v3103
      %v3592 = vsel %vm670, %v3528, %v3105
      %v3594 = vsel %vm670, %v3530, %v3107
      %v3596 = vsel %vm670, %v3532, %v3109
      %vm3597 = vcmask 392192
      %v3599 = vsel %vm3597, %v3534, %v3113
      %v3601 = vsel %vm3597, %v3536, %v3115
      %v3603 = vsel %vm3597, %v3538, %v3117
      %v3605 = vsel %vm3597, %v3540, %v3119
      %v3607 = vsel %vm3597, %v3542, %v3121
      %v3609 = vsel %vm3597, %v3544, %v3123
      %v3611 = vsel %vm3597, %v3546, %v3125
      %v3613 = vsel %vm3597, %v3548, %v3127
      %v3615 = vsel %vm3597, %v3550, %v3129
      %v3617 = vsel %vm3597, %v3552, %v3131
      %v3619 = vsel %vm3597, %v3554, %v3133
      %v3621 = vsel %vm3597, %v3556, %v3135
      %v3623 = vsel %vm3597, %v3558, %v3137
      %v3625 = vsel %vm3597, %v3560, %v3139
      %v3627 = vsel %vm3597, %v3562, %v3141
      %v3629 = vsel %vm3597, %v3564, %v3143
      %v3631 = vsel %vm3597, %v3566, %v3145
      %v3633 = vsel %vm3597, %v3568, %v3147
      %v3635 = vsel %vm3597, %v3570, %v3149
      %v3637 = vsel %vm3597, %v3572, %v3151
      %v3639 = vsel %vm3597, %v3574, %v3153
      %v3641 = vsel %vm3597, %v3576, %v3155
      %v3643 = vsel %vm3597, %v3578, %v3157
      %v3645 = vsel %vm3597, %v3580, %v3159
      %v3647 = vsel %vm3597, %v3582, %v3161
      %v3649 = vsel %vm3597, %v3584, %v3163
      %v3651 = vsel %vm3597, %v3586, %v3165
      %v3653 = vsel %vm3597, %v3588, %v3167
      %v3655 = vsel %vm3597, %v3590, %v3169
      %v3657 = vsel %vm3597, %v3592, %v3171
      %v3659 = vsel %vm3597, %v3594, %v3173
      %v3661 = vsel %vm3597, %v3596, %v3175
      %vm3662 = vcmask 523264
      %v3664 = vsel %vm3662, %v3599, %v3191
      %v3666 = vsel %vm3662, %v3601, %v3193
      %v3668 = vsel %vm3662, %v3603, %v3195
      %v3670 = vsel %vm3662, %v3605, %v3197
      %v3672 = vsel %vm3662, %v3607, %v3199
      %v3674 = vsel %vm3662, %v3609, %v3201
      %v3676 = vsel %vm3662, %v3611, %v3203
      %v3678 = vsel %vm3662, %v3613, %v3205
      %v3680 = vsel %vm3662, %v3615, %v3207
      %v3682 = vsel %vm3662, %v3617, %v3209
      %v3684 = vsel %vm3662, %v3619, %v3211
      %v3686 = vsel %vm3662, %v3621, %v3213
      %v3688 = vsel %vm3662, %v3623, %v3215
      %v3690 = vsel %vm3662, %v3625, %v3217
      %v3692 = vsel %vm3662, %v3627, %v3219
      %v3694 = vsel %vm3662, %v3629, %v3221
      %v3696 = vsel %vm3662, %v3631, %v3223
      %v3698 = vsel %vm3662, %v3633, %v3225
      %v3700 = vsel %vm3662, %v3635, %v3227
      %v3702 = vsel %vm3662, %v3637, %v3229
      %v3704 = vsel %vm3662, %v3639, %v3231
      %v3706 = vsel %vm3662, %v3641, %v3233
      %v3708 = vsel %vm3662, %v3643, %v3235
      %v3710 = vsel %vm3662, %v3645, %v3237
      %v3712 = vsel %vm3662, %v3647, %v3239
      %v3714 = vsel %vm3662, %v3649, %v3241
      %v3716 = vsel %vm3662, %v3651, %v3243
      %v3718 = vsel %vm3662, %v3653, %v3245
      %v3720 = vsel %vm3662, %v3655, %v3247
      %v3722 = vsel %vm3662, %v3657, %v3249
      %v3724 = vsel %vm3662, %v3659, %v3251
      %v3726 = vsel %vm3662, %v3661, %v3253
      %vm3727 = vcmask 654336
      %v3729 = vsel %vm3727, %v3664, %v3258
      %v3731 = vsel %vm3727, %v3666, %v3260
      %v3733 = vsel %vm3727, %v3668, %v3262
      %v3735 = vsel %vm3727, %v3670, %v3264
      %v3737 = vsel %vm3727, %v3672, %v3266
      %v3739 = vsel %vm3727, %v3674, %v3268
      %v3741 = vsel %vm3727, %v3676, %v3270
      %v3743 = vsel %vm3727, %v3678, %v3272
      %v3745 = vsel %vm3727, %v3680, %v3274
      %v3747 = vsel %vm3727, %v3682, %v3276
      %v3749 = vsel %vm3727, %v3684, %v3278
      %v3751 = vsel %vm3727, %v3686, %v3280
      %v3753 = vsel %vm3727, %v3688, %v3282
      %v3755 = vsel %vm3727, %v3690, %v3284
      %v3757 = vsel %vm3727, %v3692, %v3286
      %v3759 = vsel %vm3727, %v3694, %v3288
      %v3761 = vsel %vm3727, %v3696, %v3290
      %v3763 = vsel %vm3727, %v3698, %v3292
      %v3765 = vsel %vm3727, %v3700, %v3294
      %v3767 = vsel %vm3727, %v3702, %v3296
      %v3769 = vsel %vm3727, %v3704, %v3298
      %v3771 = vsel %vm3727, %v3706, %v3300
      %v3773 = vsel %vm3727, %v3708, %v3302
      %v3775 = vsel %vm3727, %v3710, %v3304
      %v3777 = vsel %vm3727, %v3712, %v3306
      %v3779 = vsel %vm3727, %v3714, %v3308
      %v3781 = vsel %vm3727, %v3716, %v3310
      %v3783 = vsel %vm3727, %v3718, %v3312
      %v3785 = vsel %vm3727, %v3720, %v3314
      %v3787 = vsel %vm3727, %v3722, %v3316
      %v3789 = vsel %vm3727, %v3724, %v3318
      %v3791 = vsel %vm3727, %v3726, %v3320
      %vm3792 = vcmask 785408
      %v3794 = vsel %vm3792, %v3729, %v3324
      %v3796 = vsel %vm3792, %v3731, %v3326
      %v3798 = vsel %vm3792, %v3733, %v3328
      %v3800 = vsel %vm3792, %v3735, %v3330
      %v3802 = vsel %vm3792, %v3737, %v3332
      %v3804 = vsel %vm3792, %v3739, %v3334
      %v3806 = vsel %vm3792, %v3741, %v3336
      %v3808 = vsel %vm3792, %v3743, %v3338
      %v3810 = vsel %vm3792, %v3745, %v3340
      %v3812 = vsel %vm3792, %v3747, %v3342
      %v3814 = vsel %vm3792, %v3749, %v3344
      %v3816 = vsel %vm3792, %v3751, %v3346
      %v3818 = vsel %vm3792, %v3753, %v3348
      %v3820 = vsel %vm3792, %v3755, %v3350
      %v3822 = vsel %vm3792, %v3757, %v3352
      %v3824 = vsel %vm3792, %v3759, %v3354
      %v3826 = vsel %vm3792, %v3761, %v3356
      %v3828 = vsel %vm3792, %v3763, %v3358
      %v3830 = vsel %vm3792, %v3765, %v3360
      %v3832 = vsel %vm3792, %v3767, %v3362
      %v3834 = vsel %vm3792, %v3769, %v3364
      %v3836 = vsel %vm3792, %v3771, %v3366
      %v3838 = vsel %vm3792, %v3773, %v3368
      %v3840 = vsel %vm3792, %v3775, %v3370
      %v3842 = vsel %vm3792, %v3777, %v3372
      %v3844 = vsel %vm3792, %v3779, %v3374
      %v3846 = vsel %vm3792, %v3781, %v3376
      %v3848 = vsel %vm3792, %v3783, %v3378
      %v3850 = vsel %vm3792, %v3785, %v3380
      %v3852 = vsel %vm3792, %v3787, %v3382
      %v3854 = vsel %vm3792, %v3789, %v3384
      %v3856 = vsel %vm3792, %v3791, %v3386
      %vm3857 = vcmask 916480
      %v3859 = vsel %vm3857, %v3794, %v3402
      %v3861 = vsel %vm3857, %v3796, %v3404
      %v3863 = vsel %vm3857, %v3798, %v3406
      %v3865 = vsel %vm3857, %v3800, %v3408
      %v3867 = vsel %vm3857, %v3802, %v3410
      %v3869 = vsel %vm3857, %v3804, %v3412
      %v3871 = vsel %vm3857, %v3806, %v3414
      %v3873 = vsel %vm3857, %v3808, %v3416
      %v3875 = vsel %vm3857, %v3810, %v3418
      %v3877 = vsel %vm3857, %v3812, %v3420
      %v3879 = vsel %vm3857, %v3814, %v3422
      %v3881 = vsel %vm3857, %v3816, %v3424
      %v3883 = vsel %vm3857, %v3818, %v3426
      %v3885 = vsel %vm3857, %v3820, %v3428
      %v3887 = vsel %vm3857, %v3822, %v3430
      %v3889 = vsel %vm3857, %v3824, %v3432
      %v3891 = vsel %vm3857, %v3826, %v3434
      %v3893 = vsel %vm3857, %v3828, %v3436
      %v3895 = vsel %vm3857, %v3830, %v3438
      %v3897 = vsel %vm3857, %v3832, %v3440
      %v3899 = vsel %vm3857, %v3834, %v3442
      %v3901 = vsel %vm3857, %v3836, %v3444
      %v3903 = vsel %vm3857, %v3838, %v3446
      %v3905 = vsel %vm3857, %v3840, %v3448
      %v3907 = vsel %vm3857, %v3842, %v3450
      %v3909 = vsel %vm3857, %v3844, %v3452
      %v3911 = vsel %vm3857, %v3846, %v3454
      %v3913 = vsel %vm3857, %v3848, %v3456
      %v3915 = vsel %vm3857, %v3850, %v3458
      %v3917 = vsel %vm3857, %v3852, %v3460
      %v3919 = vsel %vm3857, %v3854, %v3462
      %v3921 = vsel %vm3857, %v3856, %v3464
      %v3922 = vshrl.u32 %v3859, 16
      %v3924 = vshll.u32 %v3859, 16
      %v3926 = vrot.slane %v3924, 1
      %v3927 = vor.u32 %v3922, %v3926
      %v3928 = vshll.u32 %v3861, 16
      %v3930 = vrot.slane %v3928, 1
      %v3931 = vsel %vm2676, %v3927, %v3930
      %v3933 = vshrl.u32 %v3006, 16
      %v3935 = vshll.u32 %v3006, 16
      %v3937 = vrot.slane %v3935, 1
      %v3938 = vor.u32 %v3933, %v3937
      %v3940 = vshll.u32 %v3005, 16
      %v3942 = vrot.slane %v3940, 1
      %v3943 = vsel %vm2676, %v3938, %v3942
      %v3944 = vshrl.u32 %v3863, 16
      %v3946 = vshll.u32 %v3863, 16
      %v3948 = vrot.slane %v3946, 1
      %v3949 = vor.u32 %v3944, %v3948
      %v3950 = vshll.u32 %v3865, 16
      %v3952 = vrot.slane %v3950, 1
      %v3953 = vsel %vm2676, %v3949, %v3952
      %v3955 = vshrl.u32 %v3009, 16
      %v3957 = vshll.u32 %v3009, 16
      %v3959 = vrot.slane %v3957, 1
      %v3960 = vor.u32 %v3955, %v3959
      %v3962 = vshll.u32 %v3008, 16
      %v3964 = vrot.slane %v3962, 1
      %v3965 = vsel %vm2676, %v3960, %v3964
      %v3966 = vshrl.u32 %v3867, 16
      %v3968 = vshll.u32 %v3867, 16
      %v3970 = vrot.slane %v3968, 1
      %v3971 = vor.u32 %v3966, %v3970
      %v3972 = vshll.u32 %v3869, 16
      %v3974 = vrot.slane %v3972, 1
      %v3975 = vsel %vm2676, %v3971, %v3974
      %v3977 = vshrl.u32 %v3012, 16
      %v3979 = vshll.u32 %v3012, 16
      %v3981 = vrot.slane %v3979, 1
      %v3982 = vor.u32 %v3977, %v3981
      %v3984 = vshll.u32 %v3011, 16
      %v3986 = vrot.slane %v3984, 1
      %v3987 = vsel %vm2676, %v3982, %v3986
      %v3988 = vshrl.u32 %v3871, 16
      %v3990 = vshll.u32 %v3871, 16
      %v3992 = vrot.slane %v3990, 1
      %v3993 = vor.u32 %v3988, %v3992
      %v3994 = vshll.u32 %v3873, 16
      %v3996 = vrot.slane %v3994, 1
      %v3997 = vsel %vm2676, %v3993, %v3996
      %v3999 = vshrl.u32 %v3015, 16
      %v4001 = vshll.u32 %v3015, 16
      %v4003 = vrot.slane %v4001, 1
      %v4004 = vor.u32 %v3999, %v4003
      %v4006 = vshll.u32 %v3014, 16
      %v4008 = vrot.slane %v4006, 1
      %v4009 = vsel %vm2676, %v4004, %v4008
      %v4010 = vshrl.u32 %v3875, 16
      %v4012 = vshll.u32 %v3875, 16
      %v4014 = vrot.slane %v4012, 1
      %v4015 = vor.u32 %v4010, %v4014
      %v4016 = vshll.u32 %v3877, 16
      %v4018 = vrot.slane %v4016, 1
      %v4019 = vsel %vm2676, %v4015, %v4018
      %v4021 = vshrl.u32 %v3018, 16
      %v4023 = vshll.u32 %v3018, 16
      %v4025 = vrot.slane %v4023, 1
      %v4026 = vor.u32 %v4021, %v4025
      %v4028 = vshll.u32 %v3017, 16
      %v4030 = vrot.slane %v4028, 1
      %v4031 = vsel %vm2676, %v4026, %v4030
      %v4032 = vshrl.u32 %v3879, 16
      %v4034 = vshll.u32 %v3879, 16
      %v4036 = vrot.slane %v4034, 1
      %v4037 = vor.u32 %v4032, %v4036
      %v4038 = vshll.u32 %v3881, 16
      %v4040 = vrot.slane %v4038, 1
      %v4041 = vsel %vm2676, %v4037, %v4040
      %v4043 = vshrl.u32 %v3021, 16
      %v4045 = vshll.u32 %v3021, 16
      %v4047 = vrot.slane %v4045, 1
      %v4048 = vor.u32 %v4043, %v4047
      %v4050 = vshll.u32 %v3020, 16
      %v4052 = vrot.slane %v4050, 1
      %v4053 = vsel %vm2676, %v4048, %v4052
      %v4054 = vshrl.u32 %v3883, 16
      %v4056 = vshll.u32 %v3883, 16
      %v4058 = vrot.slane %v4056, 1
      %v4059 = vor.u32 %v4054, %v4058
      %v4060 = vshll.u32 %v3885, 16
      %v4062 = vrot.slane %v4060, 1
      %v4063 = vsel %vm2676, %v4059, %v4062
      %v4065 = vshrl.u32 %v3024, 16
      %v4067 = vshll.u32 %v3024, 16
      %v4069 = vrot.slane %v4067, 1
      %v4070 = vor.u32 %v4065, %v4069
      %v4072 = vshll.u32 %v3023, 16
      %v4074 = vrot.slane %v4072, 1
      %v4075 = vsel %vm2676, %v4070, %v4074
      %v4076 = vshrl.u32 %v3887, 16
      %v4078 = vshll.u32 %v3887, 16
      %v4080 = vrot.slane %v4078, 1
      %v4081 = vor.u32 %v4076, %v4080
      %v4082 = vshll.u32 %v3889, 16
      %v4084 = vrot.slane %v4082, 1
      %v4085 = vsel %vm2676, %v4081, %v4084
      %v4087 = vshrl.u32 %v3027, 16
      %v4089 = vshll.u32 %v3027, 16
      %v4091 = vrot.slane %v4089, 1
      %v4092 = vor.u32 %v4087, %v4091
      %v4094 = vshll.u32 %v3026, 16
      %v4096 = vrot.slane %v4094, 1
      %v4097 = vsel %vm2676, %v4092, %v4096
      %v4098 = vshrl.u32 %v3891, 16
      %v4100 = vshll.u32 %v3891, 16
      %v4102 = vrot.slane %v4100, 1
      %v4103 = vor.u32 %v4098, %v4102
      %v4104 = vshll.u32 %v3893, 16
      %v4106 = vrot.slane %v4104, 1
      %v4107 = vsel %vm2676, %v4103, %v4106
      %v4109 = vshrl.u32 %v3030, 16
      %v4111 = vshll.u32 %v3030, 16
      %v4113 = vrot.slane %v4111, 1
      %v4114 = vor.u32 %v4109, %v4113
      %v4116 = vshll.u32 %v3029, 16
      %v4118 = vrot.slane %v4116, 1
      %v4119 = vsel %vm2676, %v4114, %v4118
      %v4120 = vshrl.u32 %v3895, 16
      %v4122 = vshll.u32 %v3895, 16
      %v4124 = vrot.slane %v4122, 1
      %v4125 = vor.u32 %v4120, %v4124
      %v4126 = vshll.u32 %v3897, 16
      %v4128 = vrot.slane %v4126, 1
      %v4129 = vsel %vm2676, %v4125, %v4128
      %v4131 = vshrl.u32 %v3033, 16
      %v4133 = vshll.u32 %v3033, 16
      %v4135 = vrot.slane %v4133, 1
      %v4136 = vor.u32 %v4131, %v4135
      %v4138 = vshll.u32 %v3032, 16
      %v4140 = vrot.slane %v4138, 1
      %v4141 = vsel %vm2676, %v4136, %v4140
      %v4142 = vshrl.u32 %v3899, 16
      %v4144 = vshll.u32 %v3899, 16
      %v4146 = vrot.slane %v4144, 1
      %v4147 = vor.u32 %v4142, %v4146
      %v4148 = vshll.u32 %v3901, 16
      %v4150 = vrot.slane %v4148, 1
      %v4151 = vsel %vm2676, %v4147, %v4150
      %v4153 = vshrl.u32 %v3036, 16
      %v4155 = vshll.u32 %v3036, 16
      %v4157 = vrot.slane %v4155, 1
      %v4158 = vor.u32 %v4153, %v4157
      %v4160 = vshll.u32 %v3035, 16
      %v4162 = vrot.slane %v4160, 1
      %v4163 = vsel %vm2676, %v4158, %v4162
      %v4164 = vshrl.u32 %v3903, 16
      %v4166 = vshll.u32 %v3903, 16
      %v4168 = vrot.slane %v4166, 1
      %v4169 = vor.u32 %v4164, %v4168
      %v4170 = vshll.u32 %v3905, 16
      %v4172 = vrot.slane %v4170, 1
      %v4173 = vsel %vm2676, %v4169, %v4172
      %v4175 = vshrl.u32 %v3039, 16
      %v4177 = vshll.u32 %v3039, 16
      %v4179 = vrot.slane %v4177, 1
      %v4180 = vor.u32 %v4175, %v4179
      %v4182 = vshll.u32 %v3038, 16
      %v4184 = vrot.slane %v4182, 1
      %v4185 = vsel %vm2676, %v4180, %v4184
      %v4186 = vshrl.u32 %v3907, 16
      %v4188 = vshll.u32 %v3907, 16
      %v4190 = vrot.slane %v4188, 1
      %v4191 = vor.u32 %v4186, %v4190
      %v4192 = vshll.u32 %v3909, 16
      %v4194 = vrot.slane %v4192, 1
      %v4195 = vsel %vm2676, %v4191, %v4194
      %v4197 = vshrl.u32 %v3042, 16
      %v4199 = vshll.u32 %v3042, 16
      %v4201 = vrot.slane %v4199, 1
      %v4202 = vor.u32 %v4197, %v4201
      %v4204 = vshll.u32 %v3041, 16
      %v4206 = vrot.slane %v4204, 1
      %v4207 = vsel %vm2676, %v4202, %v4206
      %v4208 = vshrl.u32 %v3911, 16
      %v4210 = vshll.u32 %v3911, 16
      %v4212 = vrot.slane %v4210, 1
      %v4213 = vor.u32 %v4208, %v4212
      %v4214 = vshll.u32 %v3913, 16
      %v4216 = vrot.slane %v4214, 1
      %v4217 = vsel %vm2676, %v4213, %v4216
      %v4219 = vshrl.u32 %v3045, 16
      %v4221 = vshll.u32 %v3045, 16
      %v4223 = vrot.slane %v4221, 1
      %v4224 = vor.u32 %v4219, %v4223
      %v4226 = vshll.u32 %v3044, 16
      %v4228 = vrot.slane %v4226, 1
      %v4229 = vsel %vm2676, %v4224, %v4228
      %v4230 = vshrl.u32 %v3915, 16
      %v4232 = vshll.u32 %v3915, 16
      %v4234 = vrot.slane %v4232, 1
      %v4235 = vor.u32 %v4230, %v4234
      %v4236 = vshll.u32 %v3917, 16
      %v4238 = vrot.slane %v4236, 1
      %v4239 = vsel %vm2676, %v4235, %v4238
      %v4241 = vshrl.u32 %v3256, 16
      %v4243 = vshll.u32 %v3256, 16
      %v4245 = vrot.slane %v4243, 1
      %v4246 = vor.u32 %v4241, %v4245
      %v4248 = vshll.u32 %v3255, 16
      %v4250 = vrot.slane %v4248, 1
      %v4251 = vsel %vm2676, %v4246, %v4250
      %v4252 = vshrl.u32 %v3919, 16
      %v4254 = vshll.u32 %v3919, 16
      %v4256 = vrot.slane %v4254, 1
      %v4257 = vor.u32 %v4252, %v4256
      %v4258 = vshll.u32 %v3921, 16
      %v4260 = vrot.slane %v4258, 1
      %v4261 = vsel %vm2676, %v4257, %v4260
      %v4263 = vshrl.u32 %v3467, 16
      %v4265 = vshll.u32 %v3467, 16
      %v4267 = vrot.slane %v4265, 1
      %v4268 = vor.u32 %v4263, %v4267
      %v4270 = vshll.u32 %v3466, 16
      %v4272 = vrot.slane %v4270, 1
      %v4273 = vsel %vm2676, %v4268, %v4272
      %v4290 = vld [vmem:[%s3] sm:$0xf]
      %v4291 = vld [vmem:[%s3 + $0x4] sm:$0xf]
      %v4292 = vld [vmem:[%s3 + $0x8] sm:$0xf]
      %v4293 = vld [vmem:[%s3 + $0xc] sm:$0xf]
      %v4294 = vld [vmem:[%s3 + $0x10] sm:$0xf]
      %v4295 = vld [vmem:[%s3 + $0x14] sm:$0xf]
      %v4296 = vld [vmem:[%s3 + $0x18] sm:$0xf]
      %v4297 = vld [vmem:[%s3 + $0x1c] sm:$0xf]
      %v4298 = vld [vmem:[%s3 + $0x20] sm:$0xf]
      %v4299 = vld [vmem:[%s3 + $0x24] sm:$0xf]
      %v4300 = vld [vmem:[%s3 + $0x28] sm:$0xf]
      %v4301 = vld [vmem:[%s3 + $0x2c] sm:$0xf]
      %v4302 = vld [vmem:[%s3 + $0x30] sm:$0xf]
      %v4303 = vld [vmem:[%s3 + $0x34] sm:$0xf]
      %v4304 = vld [vmem:[%s3 + $0x38] sm:$0xf]
      %v4305 = vld [vmem:[%s3 + $0x3c] sm:$0xf]
      %v4306 = vld [vmem:[%s3 + $0x40] sm:$0xf]
      %v4307 = vld [vmem:[%s3 + $0x44] sm:$0xf]
      %v4308 = vld [vmem:[%s4] sm:$0x1]
      %v4310 = vlaneseq
      %v4311 = vshrl.u32 %v4310, 7
      %v4312 = vsub.s32 0, %v4311
      %v4313 = vrot.slane %v4308, %v4312
      %v4333 = vunpack.c.l.b16 %v4290
      %v4334 = vunpack.c.l.b16 %v4291
      %v4335 = vunpack.c.l.b16 %v4292
      %v4336 = vunpack.c.l.b16 %v4293
      %v4337 = vunpack.c.l.b16 %v4294
      %v4338 = vunpack.c.l.b16 %v4295
      %v4339 = vunpack.c.l.b16 %v4296
      %v4340 = vunpack.c.l.b16 %v4297
      %v4341 = vunpack.c.l.b16 %v4298
      %v4342 = vunpack.c.l.b16 %v4299
      %v4343 = vunpack.c.l.b16 %v4300
      %v4344 = vunpack.c.l.b16 %v4301
      %v4345 = vunpack.c.l.b16 %v4302
      %v4346 = vunpack.c.l.b16 %v4303
      %v4347 = vunpack.c.l.b16 %v4304
      %v4348 = vunpack.c.l.b16 %v4305
      %v4349 = vunpack.c.l.b16 %v4306
      %v4350 = vunpack.c.l.b16 %v4307
      %v4351 = vpack.c.b16 %v4334, %v4333
      %v4352 = vpack.c.b16 %v4336, %v4335
      %v4353 = vpack.c.b16 %v4338, %v4337
      %v4354 = vpack.c.b16 %v4340, %v4339
      %v4355 = vpack.c.b16 %v4342, %v4341
      %v4356 = vpack.c.b16 %v4344, %v4343
      %v4357 = vpack.c.b16 %v4346, %v4345
      %v4358 = vpack.c.b16 %v4348, %v4347
      %v4359 = vpack.c.b16 %v4350, %v4349
      %v4370 = vsel %vm3468, %v3943, 0
      %v4373 = vsel %vm3468, %v3965, 0
      %v4376 = vsel %vm3468, %v3987, 0
      %v4379 = vsel %vm3468, %v4009, 0
      %v4382 = vsel %vm3468, %v4031, 0
      %v4385 = vsel %vm3468, %v4053, 0
      %v4388 = vsel %vm3468, %v4075, 0
      %v4391 = vsel %vm3468, %v4097, 0
      %v4394 = vsel %vm3468, %v4119, 0
      %v4397 = vsel %vm3468, %v4141, 0
      %v4400 = vsel %vm3468, %v4163, 0
      %v4403 = vsel %vm3468, %v4185, 0
      %v4406 = vsel %vm3468, %v4207, 0
      %v4409 = vsel %vm3468, %v4229, 0
      %v4412 = vsel %vm3468, %v4251, 0
      %v4415 = vsel %vm3468, %v4273, 0
      %4417 = vmatprep.subr.bf16.mxu0 0
      %4418 = vmatpush1.bf16.msra.mxu0 %v4351
      %4419 = vmatprep.subr.bf16.mxu0 0
      %4420 = vmatpush1.bf16.msra.mxu0 %v4352
      %4421 = vmatprep.subr.bf16.mxu0 0
      %4422 = vmatpush1.bf16.msra.mxu0 %v4353
      %4423 = vmatprep.subr.bf16.mxu0 0
      %4424 = vmatpush1.bf16.msra.mxu0 %v4354
      %4425 = vmatprep.subr.bf16.mxu0 0
      %4426 = vmatpush1.bf16.msra.mxu0 %v4355
      %4427 = vmatprep.subr.bf16.mxu0 0
      %4428 = vmatpush1.bf16.msra.mxu0 %v4356
      %4429 = vmatprep.subr.bf16.mxu0 0
      %4430 = vmatpush1.bf16.msra.mxu0 %v4357
      %4431 = vmatprep.subr.bf16.mxu0 0
      %4432 = vmatpush1.bf16.msra.mxu0 %v4358
      %4433 = vmatprep.subr.bf16.mxu0 0
      %4434 = vmatpush1.bf16.msra.mxu0 %v4359
      %4435 = vmatprep.subr.bf16.mxu0 0
      %4436 = vmatpush1.bf16.msra.mxu0 0
      %4437 = vmatprep.subr.bf16.mxu0 0
      %4438 = vmatpush1.bf16.msra.mxu0 0
      %4439 = vmatprep.subr.bf16.mxu0 0
      %4440 = vmatpush1.bf16.msra.mxu0 0
      %4441 = vmatprep.subr.bf16.mxu0 0
      %4442 = vmatpush1.bf16.msra.mxu0 0
      %4443 = vmatprep.subr.bf16.mxu0 0
      %4444 = vmatpush1.bf16.msra.mxu0 0
      %4445 = vmatprep.subr.bf16.mxu0 0
      %4446 = vmatpush1.bf16.msra.mxu0 0
      %4447 = vmatprep.subr.bf16.mxu0 0
      %4448 = vmatpush1.bf16.msra.mxu0 0
      %4449 = vmatprep.mubr.bf16.mxu0 %v4370
      %4450 = vmatmul.mubr.bf16.gmra.mrb[0].mxu0 %v3931
      %v4451 = vpop.f32.mrb[0].mxu0
      %v4452 = vadd.f32 %v4313, %v4451
      %v4453 = vpop.f32.mrb[0].mxu0
      %v4454 = vpop.f32.mrb[0].mxu0
      %v4455 = vadd.f32 %v4313, %v4454
      %v4456 = vpop.f32.mrb[0].mxu0
      %4457 = vmatprep.mubr.bf16.mxu0 %v4373
      %4458 = vmatmul.mubr.bf16.gmra.mrb[0].mxu0 %v3953
      %v4459 = vpop.f32.mrb[0].mxu0
      %v4460 = vadd.f32 %v4313, %v4459
      %v4461 = vpop.f32.mrb[0].mxu0
      %v4462 = vpop.f32.mrb[0].mxu0
      %v4463 = vadd.f32 %v4313, %v4462
      %v4464 = vpop.f32.mrb[0].mxu0
      %4465 = vmatprep.mubr.bf16.mxu0 %v4376
      %4466 = vmatmul.mubr.bf16.gmra.mrb[0].mxu0 %v3975
      %v4467 = vpop.f32.mrb[0].mxu0
      %v4468 = vadd.f32 %v4313, %v4467
      %v4469 = vpop.f32.mrb[0].mxu0
      %v4470 = vpop.f32.mrb[0].mxu0
      %v4471 = vadd.f32 %v4313, %v4470
      %v4472 = vpop.f32.mrb[0].mxu0
      %4473 = vmatprep.mubr.bf16.mxu0 %v4379
      %4474 = vmatmul.mubr.bf16.gmra.mrb[0].mxu0 %v3997
      %v4475 = vpop.f32.mrb[0].mxu0
      %v4476 = vadd.f32 %v4313, %v4475
      %v4477 = vpop.f32.mrb[0].mxu0
      %v4478 = vpop.f32.mrb[0].mxu0
      %v4479 = vadd.f32 %v4313, %v4478
      %v4480 = vpop.f32.mrb[0].mxu0
      %4481 = vmatprep.mubr.bf16.mxu0 %v4382
      %4482 = vmatmul.mubr.bf16.gmra.mrb[0].mxu0 %v4019
      %v4483 = vpop.f32.mrb[0].mxu0
      %v4484 = vadd.f32 %v4313, %v4483
      %v4485 = vpop.f32.mrb[0].mxu0
      %v4486 = vpop.f32.mrb[0].mxu0
      %v4487 = vadd.f32 %v4313, %v4486
      %v4488 = vpop.f32.mrb[0].mxu0
      %4489 = vmatprep.mubr.bf16.mxu0 %v4385
      %4490 = vmatmul.mubr.bf16.gmra.mrb[0].mxu0 %v4041
      %v4491 = vpop.f32.mrb[0].mxu0
      %v4492 = vadd.f32 %v4313, %v4491
      %v4493 = vpop.f32.mrb[0].mxu0
      %v4494 = vpop.f32.mrb[0].mxu0
      %v4495 = vadd.f32 %v4313, %v4494
      %v4496 = vpop.f32.mrb[0].mxu0
      %4497 = vmatprep.mubr.bf16.mxu0 %v4388
      %4498 = vmatmul.mubr.bf16.gmra.mrb[0].mxu0 %v4063
      %v4499 = vpop.f32.mrb[0].mxu0
      %v4500 = vadd.f32 %v4313, %v4499
      %v4501 = vpop.f32.mrb[0].mxu0
      %v4502 = vpop.f32.mrb[0].mxu0
      %v4503 = vadd.f32 %v4313, %v4502
      %v4504 = vpop.f32.mrb[0].mxu0
      %4505 = vmatprep.mubr.bf16.mxu0 %v4391
      %4506 = vmatmul.mubr.bf16.gmra.mrb[0].mxu0 %v4085
      %v4507 = vpop.f32.mrb[0].mxu0
      %v4508 = vadd.f32 %v4313, %v4507
      %v4509 = vpop.f32.mrb[0].mxu0
      %v4510 = vpop.f32.mrb[0].mxu0
      %v4511 = vadd.f32 %v4313, %v4510
      %v4512 = vpop.f32.mrb[0].mxu0
      %4513 = vmatprep.mubr.bf16.mxu0 %v4394
      %4514 = vmatmul.mubr.bf16.gmra.mrb[0].mxu0 %v4107
      %v4515 = vpop.f32.mrb[0].mxu0
      %v4516 = vadd.f32 %v4313, %v4515
      %v4517 = vpop.f32.mrb[0].mxu0
      %v4518 = vpop.f32.mrb[0].mxu0
      %v4519 = vadd.f32 %v4313, %v4518
      %v4520 = vpop.f32.mrb[0].mxu0
      %4521 = vmatprep.mubr.bf16.mxu0 %v4397
      %4522 = vmatmul.mubr.bf16.gmra.mrb[0].mxu0 %v4129
      %v4523 = vpop.f32.mrb[0].mxu0
      %v4524 = vadd.f32 %v4313, %v4523
      %v4525 = vpop.f32.mrb[0].mxu0
      %v4526 = vpop.f32.mrb[0].mxu0
      %v4527 = vadd.f32 %v4313, %v4526
      %v4528 = vpop.f32.mrb[0].mxu0
      %4529 = vmatprep.mubr.bf16.mxu0 %v4400
      %4530 = vmatmul.mubr.bf16.gmra.mrb[0].mxu0 %v4151
      %v4531 = vpop.f32.mrb[0].mxu0
      %v4532 = vadd.f32 %v4313, %v4531
      %v4533 = vpop.f32.mrb[0].mxu0
      %v4534 = vpop.f32.mrb[0].mxu0
      %v4535 = vadd.f32 %v4313, %v4534
      %v4536 = vpop.f32.mrb[0].mxu0
      %4537 = vmatprep.mubr.bf16.mxu0 %v4403
      %4538 = vmatmul.mubr.bf16.gmra.mrb[0].mxu0 %v4173
      %v4539 = vpop.f32.mrb[0].mxu0
      %v4540 = vadd.f32 %v4313, %v4539
      %v4541 = vpop.f32.mrb[0].mxu0
      %v4542 = vpop.f32.mrb[0].mxu0
      %v4543 = vadd.f32 %v4313, %v4542
      %v4544 = vpop.f32.mrb[0].mxu0
      %4545 = vmatprep.mubr.bf16.mxu0 %v4406
      %4546 = vmatmul.mubr.bf16.gmra.mrb[0].mxu0 %v4195
      %v4547 = vpop.f32.mrb[0].mxu0
      %v4548 = vadd.f32 %v4313, %v4547
      %v4549 = vpop.f32.mrb[0].mxu0
      %v4550 = vpop.f32.mrb[0].mxu0
      %v4551 = vadd.f32 %v4313, %v4550
      %v4552 = vpop.f32.mrb[0].mxu0
      %4553 = vmatprep.mubr.bf16.mxu0 %v4409
      %4554 = vmatmul.mubr.bf16.gmra.mrb[0].mxu0 %v4217
      %v4555 = vpop.f32.mrb[0].mxu0
      %v4556 = vadd.f32 %v4313, %v4555
      %v4557 = vpop.f32.mrb[0].mxu0
      %v4558 = vpop.f32.mrb[0].mxu0
      %v4559 = vadd.f32 %v4313, %v4558
      %v4560 = vpop.f32.mrb[0].mxu0
      %4561 = vmatprep.mubr.bf16.mxu0 %v4412
      %4562 = vmatmul.mubr.bf16.gmra.mrb[0].mxu0 %v4239
      %v4563 = vpop.f32.mrb[0].mxu0
      %v4564 = vadd.f32 %v4313, %v4563
      %v4565 = vpop.f32.mrb[0].mxu0
      %v4566 = vpop.f32.mrb[0].mxu0
      %v4567 = vadd.f32 %v4313, %v4566
      %v4568 = vpop.f32.mrb[0].mxu0
      %4569 = vmatprep.mubr.bf16.mxu0 %v4415
      %4570 = vmatmul.mubr.bf16.gmra.mrb[0].mxu0 %v4261
      %v4571 = vpop.f32.mrb[0].mxu0
      %v4572 = vadd.f32 %v4313, %v4571
      %v4573 = vpop.f32.mrb[0].mxu0
      %v4574 = vpop.f32.mrb[0].mxu0
      %v4575 = vadd.f32 %v4313, %v4574
      %v4576 = vpop.f32.mrb[0].mxu0
      %4577 = vdwg.mxu0
      %v4578 = vmax.f32 %v4452, 0.0
      %v4579 = vmax.f32 %v4455, 0.0
      %v4580 = vmax.f32 %v4460, 0.0
      %v4581 = vmax.f32 %v4463, 0.0
      %v4582 = vmax.f32 %v4468, 0.0
      %v4583 = vmax.f32 %v4471, 0.0
      %v4584 = vmax.f32 %v4476, 0.0
      %v4585 = vmax.f32 %v4479, 0.0
      %v4586 = vmax.f32 %v4484, 0.0
      %v4587 = vmax.f32 %v4487, 0.0
      %v4588 = vmax.f32 %v4492, 0.0
      %v4589 = vmax.f32 %v4495, 0.0
      %v4590 = vmax.f32 %v4500, 0.0
      %v4591 = vmax.f32 %v4503, 0.0
      %v4592 = vmax.f32 %v4508, 0.0
      %v4593 = vmax.f32 %v4511, 0.0
      %v4594 = vmax.f32 %v4516, 0.0
      %v4595 = vmax.f32 %v4519, 0.0
      %v4596 = vmax.f32 %v4524, 0.0
      %v4597 = vmax.f32 %v4527, 0.0
      %v4598 = vmax.f32 %v4532, 0.0
      %v4599 = vmax.f32 %v4535, 0.0
      %v4600 = vmax.f32 %v4540, 0.0
      %v4601 = vmax.f32 %v4543, 0.0
      %v4602 = vmax.f32 %v4548, 0.0
      %v4603 = vmax.f32 %v4551, 0.0
      %v4604 = vmax.f32 %v4556, 0.0
      %v4605 = vmax.f32 %v4559, 0.0
      %v4606 = vmax.f32 %v4564, 0.0
      %v4607 = vmax.f32 %v4567, 0.0
      %v4608 = vmax.f32 %v4572, 0.0
      %v4609 = vmax.f32 %v4575, 0.0
      %4612 = vrot.lane.b32.xlu0 %v2672, 112
      %v4613 = vpop.permute.xlu0 %4612
      %4614 = vrot.lane.b32.xlu0 %v2673, 112
      %v4615 = vpop.permute.xlu0 %4614
      %4616 = vrot.lane.b32.xlu0 %v2620, 112
      %v4617 = vpop.permute.xlu0 %4616
      %4618 = vrot.lane.b32.xlu0 %v2621, 112
      %v4619 = vpop.permute.xlu0 %4618
      %4620 = vrot.lane.b32.xlu0 %v2622, 112
      %v4621 = vpop.permute.xlu0 %4620
      %4622 = vrot.lane.b32.xlu0 %v2623, 112
      %v4623 = vpop.permute.xlu0 %4622
      %4624 = vrot.lane.b32.xlu0 %v2624, 112
      %v4625 = vpop.permute.xlu0 %4624
      %4626 = vrot.lane.b32.xlu0 %v2625, 112
      %v4627 = vpop.permute.xlu0 %4626
      %4628 = vrot.lane.b32.xlu0 %v2626, 112
      %v4629 = vpop.permute.xlu0 %4628
      %4630 = vrot.lane.b32.xlu0 %v2627, 112
      %v4631 = vpop.permute.xlu0 %4630
      %4632 = vrot.lane.b32.xlu0 %v2628, 112
      %v4633 = vpop.permute.xlu0 %4632
      %4634 = vrot.lane.b32.xlu0 %v2629, 112
      %v4635 = vpop.permute.xlu0 %4634
      %4636 = vrot.lane.b32.xlu0 %v2630, 112
      %v4637 = vpop.permute.xlu0 %4636
      %4638 = vrot.lane.b32.xlu0 %v2631, 112
      %v4639 = vpop.permute.xlu0 %4638
      %4640 = vrot.lane.b32.xlu0 %v2632, 112
      %v4641 = vpop.permute.xlu0 %4640
      %4642 = vrot.lane.b32.xlu0 %v2633, 112
      %v4643 = vpop.permute.xlu0 %4642
      %4644 = vrot.lane.b32.xlu0 %v2634, 112
      %v4645 = vpop.permute.xlu0 %4644
      %4646 = vrot.lane.b32.xlu0 %v2635, 112
      %v4647 = vpop.permute.xlu0 %4646
      %4648 = vrot.lane.b32.xlu0 %v2636, 112
      %v4649 = vpop.permute.xlu0 %4648
      %4650 = vrot.lane.b32.xlu0 %v2637, 112
      %v4651 = vpop.permute.xlu0 %4650
      %4652 = vrot.lane.b32.xlu0 %v2638, 112
      %v4653 = vpop.permute.xlu0 %4652
      %4654 = vrot.lane.b32.xlu0 %v2639, 112
      %v4655 = vpop.permute.xlu0 %4654
      %4656 = vrot.lane.b32.xlu0 %v2640, 112
      %v4657 = vpop.permute.xlu0 %4656
      %4658 = vrot.lane.b32.xlu0 %v2641, 112
      %v4659 = vpop.permute.xlu0 %4658
      %4660 = vrot.lane.b32.xlu0 %v2642, 112
      %v4661 = vpop.permute.xlu0 %4660
      %4662 = vrot.lane.b32.xlu0 %v2643, 112
      %v4663 = vpop.permute.xlu0 %4662
      %4664 = vrot.lane.b32.xlu0 %v2644, 112
      %v4665 = vpop.permute.xlu0 %4664
      %4666 = vrot.lane.b32.xlu0 %v2645, 112
      %v4667 = vpop.permute.xlu0 %4666
      %4668 = vrot.lane.b32.xlu0 %v2646, 112
      %v4669 = vpop.permute.xlu0 %4668
      %4670 = vrot.lane.b32.xlu0 %v2647, 112
      %v4671 = vpop.permute.xlu0 %4670
      %4672 = vrot.lane.b32.xlu0 %v2648, 112
      %v4673 = vpop.permute.xlu0 %4672
      %4674 = vrot.lane.b32.xlu0 %v2649, 112
      %v4675 = vpop.permute.xlu0 %4674
      %4676 = vrot.lane.b32.xlu0 %v2650, 112
      %v4677 = vpop.permute.xlu0 %4676
      %4678 = vrot.lane.b32.xlu0 %v2651, 112
      %v4679 = vpop.permute.xlu0 %4678
      %4680 = vrot.lane.b32.xlu0 %v2652, 112
      %v4681 = vpop.permute.xlu0 %4680
      %4682 = vrot.lane.b32.xlu0 %v2653, 112
      %v4683 = vpop.permute.xlu0 %4682
      %v4685 = vshrl.u32 %v2672, 16
      %v4687 = vshll.u32 %v2672, 16
      %v4689 = vrot.slane %v4687, 1
      %v4690 = vor.u32 %v4685, %v4689
      %v4692 = vshll.u32 %v2673, 16
      %v4694 = vrot.slane %v4692, 1
      %v4695 = vsel %vm2676, %v4690, %v4694
      %v4696 = vshrl.u32 %v2673, 16
      %v4698 = vor.u32 %v4696, %v4694
      %v4699 = vor.u32 %v2689, %v2687
      %v4700 = vor.u32 %v2703, %v2701
      %v4701 = vor.u32 %v2717, %v2715
      %v4702 = vor.u32 %v2731, %v2729
      %v4703 = vor.u32 %v2745, %v2743
      %v4704 = vor.u32 %v2759, %v2757
      %v4705 = vor.u32 %v2773, %v2771
      %v4706 = vor.u32 %v2787, %v2785
      %v4707 = vor.u32 %v2801, %v2799
      %v4708 = vor.u32 %v2815, %v2813
      %v4709 = vor.u32 %v2829, %v2827
      %v4710 = vor.u32 %v2843, %v2841
      %v4711 = vor.u32 %v2857, %v2855
      %v4712 = vor.u32 %v2871, %v2869
      %v4713 = vor.u32 %v2885, %v2883
      %v4714 = vor.u32 %v2899, %v2897
      %v4715 = vor.u32 %v3188, %v3186
      %v4716 = vrot.slane %v2672, 1
      %v4717 = vrot.slane %v2673, 1
      %v4718 = vsel %vm2997, %v4716, %v4717
      %4719 = vrot.lane.b32.xlu0 %v4718, 16
      %v4720 = vpop.permute.xlu0 %4719
      %4721 = vrot.lane.b32.xlu0 %v4717, 16
      %v4722 = vpop.permute.xlu0 %4721
      %4723 = vrot.lane.b32.xlu0 %v3000, 16
      %v4724 = vpop.permute.xlu0 %4723
      %4725 = vrot.lane.b32.xlu0 %v2999, 16
      %v4726 = vpop.permute.xlu0 %4725
      %4727 = vrot.lane.b32.xlu0 %v3003, 16
      %v4728 = vpop.permute.xlu0 %4727
      %4729 = vrot.lane.b32.xlu0 %v3002, 16
      %v4730 = vpop.permute.xlu0 %4729
      %4731 = vrot.lane.b32.xlu0 %v3006, 16
      %v4732 = vpop.permute.xlu0 %4731
      %4733 = vrot.lane.b32.xlu0 %v3005, 16
      %v4734 = vpop.permute.xlu0 %4733
      %4735 = vrot.lane.b32.xlu0 %v3009, 16
      %v4736 = vpop.permute.xlu0 %4735
      %4737 = vrot.lane.b32.xlu0 %v3008, 16
      %v4738 = vpop.permute.xlu0 %4737
      %4739 = vrot.lane.b32.xlu0 %v3012, 16
      %v4740 = vpop.permute.xlu0 %4739
      %4741 = vrot.lane.b32.xlu0 %v3011, 16
      %v4742 = vpop.permute.xlu0 %4741
      %4743 = vrot.lane.b32.xlu0 %v3015, 16
      %v4744 = vpop.permute.xlu0 %4743
      %4745 = vrot.lane.b32.xlu0 %v3014, 16
      %v4746 = vpop.permute.xlu0 %4745
      %4747 = vrot.lane.b32.xlu0 %v3018, 16
      %v4748 = vpop.permute.xlu0 %4747
      %4749 = vrot.lane.b32.xlu0 %v3017, 16
      %v4750 = vpop.permute.xlu0 %4749
      %4751 = vrot.lane.b32.xlu0 %v3021, 16
      %v4752 = vpop.permute.xlu0 %4751
      %4753 = vrot.lane.b32.xlu0 %v3020, 16
      %v4754 = vpop.permute.xlu0 %4753
      %4755 = vrot.lane.b32.xlu0 %v3024, 16
      %v4756 = vpop.permute.xlu0 %4755
      %4757 = vrot.lane.b32.xlu0 %v3023, 16
      %v4758 = vpop.permute.xlu0 %4757
      %4759 = vrot.lane.b32.xlu0 %v3027, 16
      %v4760 = vpop.permute.xlu0 %4759
      %4761 = vrot.lane.b32.xlu0 %v3026, 16
      %v4762 = vpop.permute.xlu0 %4761
      %4763 = vrot.lane.b32.xlu0 %v3030, 16
      %v4764 = vpop.permute.xlu0 %4763
      %4765 = vrot.lane.b32.xlu0 %v3029, 16
      %v4766 = vpop.permute.xlu0 %4765
      %4767 = vrot.lane.b32.xlu0 %v3033, 16
      %v4768 = vpop.permute.xlu0 %4767
      %4769 = vrot.lane.b32.xlu0 %v3032, 16
      %v4770 = vpop.permute.xlu0 %4769
      %4771 = vrot.lane.b32.xlu0 %v3036, 16
      %v4772 = vpop.permute.xlu0 %4771
      %4773 = vrot.lane.b32.xlu0 %v3035, 16
      %v4774 = vpop.permute.xlu0 %4773
      %4775 = vrot.lane.b32.xlu0 %v3039, 16
      %v4776 = vpop.permute.xlu0 %4775
      %4777 = vrot.lane.b32.xlu0 %v3038, 16
      %v4778 = vpop.permute.xlu0 %4777
      %4779 = vrot.lane.b32.xlu0 %v3042, 16
      %v4780 = vpop.permute.xlu0 %4779
      %4781 = vrot.lane.b32.xlu0 %v3041, 16
      %v4782 = vpop.permute.xlu0 %4781
      %4783 = vrot.lane.b32.xlu0 %v3045, 16
      %v4784 = vpop.permute.xlu0 %4783
      %4785 = vrot.lane.b32.xlu0 %v3044, 16
      %v4786 = vpop.permute.xlu0 %4785
      %4787 = vrot.lane.b32.xlu0 %v3256, 16
      %v4788 = vpop.permute.xlu0 %4787
      %4789 = vrot.lane.b32.xlu0 %v3255, 16
      %v4790 = vpop.permute.xlu0 %4789
      %4791 = vrot.lane.b32.xlu0 %v2620, 32
      %v4792 = vpop.permute.xlu0 %4791
      %4793 = vrot.lane.b32.xlu0 %v2621, 32
      %v4794 = vpop.permute.xlu0 %4793
      %4795 = vrot.lane.b32.xlu0 %v2622, 32
      %v4796 = vpop.permute.xlu0 %4795
      %4797 = vrot.lane.b32.xlu0 %v2623, 32
      %v4798 = vpop.permute.xlu0 %4797
      %4799 = vrot.lane.b32.xlu0 %v2624, 32
      %v4800 = vpop.permute.xlu0 %4799
      %4801 = vrot.lane.b32.xlu0 %v2625, 32
      %v4802 = vpop.permute.xlu0 %4801
      %4803 = vrot.lane.b32.xlu0 %v2626, 32
      %v4804 = vpop.permute.xlu0 %4803
      %4805 = vrot.lane.b32.xlu0 %v2627, 32
      %v4806 = vpop.permute.xlu0 %4805
      %4807 = vrot.lane.b32.xlu0 %v2628, 32
      %v4808 = vpop.permute.xlu0 %4807
      %4809 = vrot.lane.b32.xlu0 %v2629, 32
      %v4810 = vpop.permute.xlu0 %4809
      %4811 = vrot.lane.b32.xlu0 %v2630, 32
      %v4812 = vpop.permute.xlu0 %4811
      %4813 = vrot.lane.b32.xlu0 %v2631, 32
      %v4814 = vpop.permute.xlu0 %4813
      %4815 = vrot.lane.b32.xlu0 %v2632, 32
      %v4816 = vpop.permute.xlu0 %4815
      %4817 = vrot.lane.b32.xlu0 %v2633, 32
      %v4818 = vpop.permute.xlu0 %4817
      %4819 = vrot.lane.b32.xlu0 %v2634, 32
      %v4820 = vpop.permute.xlu0 %4819
      %4821 = vrot.lane.b32.xlu0 %v2635, 32
      %v4822 = vpop.permute.xlu0 %4821
      %4823 = vrot.lane.b32.xlu0 %v2636, 32
      %v4824 = vpop.permute.xlu0 %4823
      %4825 = vrot.lane.b32.xlu0 %v2637, 32
      %v4826 = vpop.permute.xlu0 %4825
      %4827 = vrot.lane.b32.xlu0 %v2638, 32
      %v4828 = vpop.permute.xlu0 %4827
      %4829 = vrot.lane.b32.xlu0 %v2639, 32
      %v4830 = vpop.permute.xlu0 %4829
      %4831 = vrot.lane.b32.xlu0 %v2640, 32
      %v4832 = vpop.permute.xlu0 %4831
      %4833 = vrot.lane.b32.xlu0 %v2641, 32
      %v4834 = vpop.permute.xlu0 %4833
      %4835 = vrot.lane.b32.xlu0 %v2642, 32
      %v4836 = vpop.permute.xlu0 %4835
      %4837 = vrot.lane.b32.xlu0 %v2643, 32
      %v4838 = vpop.permute.xlu0 %4837
      %4839 = vrot.lane.b32.xlu0 %v2644, 32
      %v4840 = vpop.permute.xlu0 %4839
      %4841 = vrot.lane.b32.xlu0 %v2645, 32
      %v4842 = vpop.permute.xlu0 %4841
      %4843 = vrot.lane.b32.xlu0 %v2646, 32
      %v4844 = vpop.permute.xlu0 %4843
      %4845 = vrot.lane.b32.xlu0 %v2647, 32
      %v4846 = vpop.permute.xlu0 %4845
      %4847 = vrot.lane.b32.xlu0 %v2648, 32
      %v4848 = vpop.permute.xlu0 %4847
      %4849 = vrot.lane.b32.xlu0 %v2649, 32
      %v4850 = vpop.permute.xlu0 %4849
      %4851 = vrot.lane.b32.xlu0 %v2650, 32
      %v4852 = vpop.permute.xlu0 %4851
      %4853 = vrot.lane.b32.xlu0 %v2651, 32
      %v4854 = vpop.permute.xlu0 %4853
      %4855 = vrot.lane.b32.xlu0 %v2652, 32
      %v4856 = vpop.permute.xlu0 %4855
      %4857 = vrot.lane.b32.xlu0 %v2653, 32
      %v4858 = vpop.permute.xlu0 %4857
      %4859 = vrot.lane.b32.xlu0 %v2654, 32
      %v4860 = vpop.permute.xlu0 %4859
      %4861 = vrot.lane.b32.xlu0 %v2655, 32
      %v4862 = vpop.permute.xlu0 %4861
      %v4863 = vor.u32 %v3399, %v3397
      %4864 = vrot.lane.b32.xlu0 %v2688, 48
      %v4865 = vpop.permute.xlu0 %4864
      %4866 = vrot.lane.b32.xlu0 %v4699, 48
      %v4867 = vpop.permute.xlu0 %4866
      %4868 = vrot.lane.b32.xlu0 %v2702, 48
      %v4869 = vpop.permute.xlu0 %4868
      %4870 = vrot.lane.b32.xlu0 %v4700, 48
      %v4871 = vpop.permute.xlu0 %4870
      %4872 = vrot.lane.b32.xlu0 %v2716, 48
      %v4873 = vpop.permute.xlu0 %4872
      %4874 = vrot.lane.b32.xlu0 %v4701, 48
      %v4875 = vpop.permute.xlu0 %4874
      %4876 = vrot.lane.b32.xlu0 %v2730, 48
      %v4877 = vpop.permute.xlu0 %4876
      %4878 = vrot.lane.b32.xlu0 %v4702, 48
      %v4879 = vpop.permute.xlu0 %4878
      %4880 = vrot.lane.b32.xlu0 %v2744, 48
      %v4881 = vpop.permute.xlu0 %4880
      %4882 = vrot.lane.b32.xlu0 %v4703, 48
      %v4883 = vpop.permute.xlu0 %4882
      %4884 = vrot.lane.b32.xlu0 %v2758, 48
      %v4885 = vpop.permute.xlu0 %4884
      %4886 = vrot.lane.b32.xlu0 %v4704, 48
      %v4887 = vpop.permute.xlu0 %4886
      %4888 = vrot.lane.b32.xlu0 %v2772, 48
      %v4889 = vpop.permute.xlu0 %4888
      %4890 = vrot.lane.b32.xlu0 %v4705, 48
      %v4891 = vpop.permute.xlu0 %4890
      %4892 = vrot.lane.b32.xlu0 %v2786, 48
      %v4893 = vpop.permute.xlu0 %4892
      %4894 = vrot.lane.b32.xlu0 %v4706, 48
      %v4895 = vpop.permute.xlu0 %4894
      %4896 = vrot.lane.b32.xlu0 %v2800, 48
      %v4897 = vpop.permute.xlu0 %4896
      %4898 = vrot.lane.b32.xlu0 %v4707, 48
      %v4899 = vpop.permute.xlu0 %4898
      %4900 = vrot.lane.b32.xlu0 %v2814, 48
      %v4901 = vpop.permute.xlu0 %4900
      %4902 = vrot.lane.b32.xlu0 %v4708, 48
      %v4903 = vpop.permute.xlu0 %4902
      %4904 = vrot.lane.b32.xlu0 %v2828, 48
      %v4905 = vpop.permute.xlu0 %4904
      %4906 = vrot.lane.b32.xlu0 %v4709, 48
      %v4907 = vpop.permute.xlu0 %4906
      %4908 = vrot.lane.b32.xlu0 %v2842, 48
      %v4909 = vpop.permute.xlu0 %4908
      %4910 = vrot.lane.b32.xlu0 %v4710, 48
      %v4911 = vpop.permute.xlu0 %4910
      %4912 = vrot.lane.b32.xlu0 %v2856, 48
      %v4913 = vpop.permute.xlu0 %4912
      %4914 = vrot.lane.b32.xlu0 %v4711, 48
      %v4915 = vpop.permute.xlu0 %4914
      %4916 = vrot.lane.b32.xlu0 %v2870, 48
      %v4917 = vpop.permute.xlu0 %4916
      %4918 = vrot.lane.b32.xlu0 %v4712, 48
      %v4919 = vpop.permute.xlu0 %4918
      %4920 = vrot.lane.b32.xlu0 %v2884, 48
      %v4921 = vpop.permute.xlu0 %4920
      %4922 = vrot.lane.b32.xlu0 %v4713, 48
      %v4923 = vpop.permute.xlu0 %4922
      %4924 = vrot.lane.b32.xlu0 %v2898, 48
      %v4925 = vpop.permute.xlu0 %4924
      %4926 = vrot.lane.b32.xlu0 %v4714, 48
      %v4927 = vpop.permute.xlu0 %4926
      %4928 = vrot.lane.b32.xlu0 %v3187, 48
      %v4929 = vpop.permute.xlu0 %4928
      %4930 = vrot.lane.b32.xlu0 %v4715, 48
      %v4931 = vpop.permute.xlu0 %4930
      %4932 = vrot.lane.b32.xlu0 %v3398, 48
      %v4933 = vpop.permute.xlu0 %4932
      %4934 = vrot.lane.b32.xlu0 %v4863, 48
      %v4935 = vpop.permute.xlu0 %4934
      %4936 = vrot.lane.b32.xlu0 %v3000, 64
      %v4937 = vpop.permute.xlu0 %4936
      %4938 = vrot.lane.b32.xlu0 %v2999, 64
      %v4939 = vpop.permute.xlu0 %4938
      %4940 = vrot.lane.b32.xlu0 %v3003, 64
      %v4941 = vpop.permute.xlu0 %4940
      %4942 = vrot.lane.b32.xlu0 %v3002, 64
      %v4943 = vpop.permute.xlu0 %4942
      %4944 = vrot.lane.b32.xlu0 %v3006, 64
      %v4945 = vpop.permute.xlu0 %4944
      %4946 = vrot.lane.b32.xlu0 %v3005, 64
      %v4947 = vpop.permute.xlu0 %4946
      %4948 = vrot.lane.b32.xlu0 %v3009, 64
      %v4949 = vpop.permute.xlu0 %4948
      %4950 = vrot.lane.b32.xlu0 %v3008, 64
      %v4951 = vpop.permute.xlu0 %4950
      %4952 = vrot.lane.b32.xlu0 %v3012, 64
      %v4953 = vpop.permute.xlu0 %4952
      %4954 = vrot.lane.b32.xlu0 %v3011, 64
      %v4955 = vpop.permute.xlu0 %4954
      %4956 = vrot.lane.b32.xlu0 %v3015, 64
      %v4957 = vpop.permute.xlu0 %4956
      %4958 = vrot.lane.b32.xlu0 %v3014, 64
      %v4959 = vpop.permute.xlu0 %4958
      %4960 = vrot.lane.b32.xlu0 %v3018, 64
      %v4961 = vpop.permute.xlu0 %4960
      %4962 = vrot.lane.b32.xlu0 %v3017, 64
      %v4963 = vpop.permute.xlu0 %4962
      %4964 = vrot.lane.b32.xlu0 %v3021, 64
      %v4965 = vpop.permute.xlu0 %4964
      %4966 = vrot.lane.b32.xlu0 %v3020, 64
      %v4967 = vpop.permute.xlu0 %4966
      %4968 = vrot.lane.b32.xlu0 %v3024, 64
      %v4969 = vpop.permute.xlu0 %4968
      %4970 = vrot.lane.b32.xlu0 %v3023, 64
      %v4971 = vpop.permute.xlu0 %4970
      %4972 = vrot.lane.b32.xlu0 %v3027, 64
      %v4973 = vpop.permute.xlu0 %4972
      %4974 = vrot.lane.b32.xlu0 %v3026, 64
      %v4975 = vpop.permute.xlu0 %4974
      %4976 = vrot.lane.b32.xlu0 %v3030, 64
      %v4977 = vpop.permute.xlu0 %4976
      %4978 = vrot.lane.b32.xlu0 %v3029, 64
      %v4979 = vpop.permute.xlu0 %4978
      %4980 = vrot.lane.b32.xlu0 %v3033, 64
      %v4981 = vpop.permute.xlu0 %4980
      %4982 = vrot.lane.b32.xlu0 %v3032, 64
      %v4983 = vpop.permute.xlu0 %4982
      %4984 = vrot.lane.b32.xlu0 %v3036, 64
      %v4985 = vpop.permute.xlu0 %4984
      %4986 = vrot.lane.b32.xlu0 %v3035, 64
      %v4987 = vpop.permute.xlu0 %4986
      %4988 = vrot.lane.b32.xlu0 %v3039, 64
      %v4989 = vpop.permute.xlu0 %4988
      %4990 = vrot.lane.b32.xlu0 %v3038, 64
      %v4991 = vpop.permute.xlu0 %4990
      %4992 = vrot.lane.b32.xlu0 %v3042, 64
      %v4993 = vpop.permute.xlu0 %4992
      %4994 = vrot.lane.b32.xlu0 %v3041, 64
      %v4995 = vpop.permute.xlu0 %4994
      %4996 = vrot.lane.b32.xlu0 %v3045, 64
      %v4997 = vpop.permute.xlu0 %4996
      %4998 = vrot.lane.b32.xlu0 %v3044, 64
      %v4999 = vpop.permute.xlu0 %4998
      %5000 = vrot.lane.b32.xlu0 %v3256, 64
      %v5001 = vpop.permute.xlu0 %5000
      %5002 = vrot.lane.b32.xlu0 %v3255, 64
      %v5003 = vpop.permute.xlu0 %5002
      %5004 = vrot.lane.b32.xlu0 %v3467, 64
      %v5005 = vpop.permute.xlu0 %5004
      %5006 = vrot.lane.b32.xlu0 %v3466, 64
      %v5007 = vpop.permute.xlu0 %5006
      %5010 = vrot.lane.b32.xlu0 %v2622, 80
      %v5011 = vpop.permute.xlu0 %5010
      %5012 = vrot.lane.b32.xlu0 %v2623, 80
      %v5013 = vpop.permute.xlu0 %5012
      %5014 = vrot.lane.b32.xlu0 %v2624, 80
      %v5015 = vpop.permute.xlu0 %5014
      %5016 = vrot.lane.b32.xlu0 %v2625, 80
      %v5017 = vpop.permute.xlu0 %5016
      %5018 = vrot.lane.b32.xlu0 %v2626, 80
      %v5019 = vpop.permute.xlu0 %5018
      %5020 = vrot.lane.b32.xlu0 %v2627, 80
      %v5021 = vpop.permute.xlu0 %5020
      %5022 = vrot.lane.b32.xlu0 %v2628, 80
      %v5023 = vpop.permute.xlu0 %5022
      %5024 = vrot.lane.b32.xlu0 %v2629, 80
      %v5025 = vpop.permute.xlu0 %5024
      %5026 = vrot.lane.b32.xlu0 %v2630, 80
      %v5027 = vpop.permute.xlu0 %5026
      %5028 = vrot.lane.b32.xlu0 %v2631, 80
      %v5029 = vpop.permute.xlu0 %5028
      %5030 = vrot.lane.b32.xlu0 %v2632, 80
      %v5031 = vpop.permute.xlu0 %5030
      %5032 = vrot.lane.b32.xlu0 %v2633, 80
      %v5033 = vpop.permute.xlu0 %5032
      %5034 = vrot.lane.b32.xlu0 %v2634, 80
      %v5035 = vpop.permute.xlu0 %5034
      %5036 = vrot.lane.b32.xlu0 %v2635, 80
      %v5037 = vpop.permute.xlu0 %5036
      %5038 = vrot.lane.b32.xlu0 %v2636, 80
      %v5039 = vpop.permute.xlu0 %5038
      %5040 = vrot.lane.b32.xlu0 %v2637, 80
      %v5041 = vpop.permute.xlu0 %5040
      %5042 = vrot.lane.b32.xlu0 %v2638, 80
      %v5043 = vpop.permute.xlu0 %5042
      %5044 = vrot.lane.b32.xlu0 %v2639, 80
      %v5045 = vpop.permute.xlu0 %5044
      %5046 = vrot.lane.b32.xlu0 %v2640, 80
      %v5047 = vpop.permute.xlu0 %5046
      %5048 = vrot.lane.b32.xlu0 %v2641, 80
      %v5049 = vpop.permute.xlu0 %5048
      %5050 = vrot.lane.b32.xlu0 %v2642, 80
      %v5051 = vpop.permute.xlu0 %5050
      %5052 = vrot.lane.b32.xlu0 %v2643, 80
      %v5053 = vpop.permute.xlu0 %5052
      %5054 = vrot.lane.b32.xlu0 %v2644, 80
      %v5055 = vpop.permute.xlu0 %5054
      %5056 = vrot.lane.b32.xlu0 %v2645, 80
      %v5057 = vpop.permute.xlu0 %5056
      %5058 = vrot.lane.b32.xlu0 %v2646, 80
      %v5059 = vpop.permute.xlu0 %5058
      %5060 = vrot.lane.b32.xlu0 %v2647, 80
      %v5061 = vpop.permute.xlu0 %5060
      %5062 = vrot.lane.b32.xlu0 %v2648, 80
      %v5063 = vpop.permute.xlu0 %5062
      %5064 = vrot.lane.b32.xlu0 %v2649, 80
      %v5065 = vpop.permute.xlu0 %5064
      %5066 = vrot.lane.b32.xlu0 %v2650, 80
      %v5067 = vpop.permute.xlu0 %5066
      %5068 = vrot.lane.b32.xlu0 %v2651, 80
      %v5069 = vpop.permute.xlu0 %5068
      %5070 = vrot.lane.b32.xlu0 %v2652, 80
      %v5071 = vpop.permute.xlu0 %5070
      %5072 = vrot.lane.b32.xlu0 %v2653, 80
      %v5073 = vpop.permute.xlu0 %5072
      %5074 = vrot.lane.b32.xlu0 %v2654, 80
      %v5075 = vpop.permute.xlu0 %5074
      %5076 = vrot.lane.b32.xlu0 %v2655, 80
      %v5077 = vpop.permute.xlu0 %5076
      %5078 = vrot.lane.b32.xlu0 %v2674, 80
      %v5079 = vpop.permute.xlu0 %5078
      %5080 = vrot.lane.b32.xlu0 %v2675, 80
      %v5081 = vpop.permute.xlu0 %5080
      %v5083 = vshrl.u32 %v2674, 16
      %v5085 = vshll.u32 %v2674, 16
      %v5087 = vrot.slane %v5085, 1
      %v5088 = vor.u32 %v5083, %v5087
      %v5090 = vshll.u32 %v2675, 16
      %v5092 = vrot.slane %v5090, 1
      %v5093 = vsel %vm2676, %v5088, %v5092
      %v5094 = vshrl.u32 %v2675, 16
      %v5096 = vor.u32 %v5094, %v5092
      %5097 = vrot.lane.b32.xlu0 %v2702, 96
      %v5098 = vpop.permute.xlu0 %5097
      %5099 = vrot.lane.b32.xlu0 %v4700, 96
      %v5100 = vpop.permute.xlu0 %5099
      %5101 = vrot.lane.b32.xlu0 %v2716, 96
      %v5102 = vpop.permute.xlu0 %5101
      %5103 = vrot.lane.b32.xlu0 %v4701, 96
      %v5104 = vpop.permute.xlu0 %5103
      %5105 = vrot.lane.b32.xlu0 %v2730, 96
      %v5106 = vpop.permute.xlu0 %5105
      %5107 = vrot.lane.b32.xlu0 %v4702, 96
      %v5108 = vpop.permute.xlu0 %5107
      %5109 = vrot.lane.b32.xlu0 %v2744, 96
      %v5110 = vpop.permute.xlu0 %5109
      %5111 = vrot.lane.b32.xlu0 %v4703, 96
      %v5112 = vpop.permute.xlu0 %5111
      %5113 = vrot.lane.b32.xlu0 %v2758, 96
      %v5114 = vpop.permute.xlu0 %5113
      %5115 = vrot.lane.b32.xlu0 %v4704, 96
      %v5116 = vpop.permute.xlu0 %5115
      %5117 = vrot.lane.b32.xlu0 %v2772, 96
      %v5118 = vpop.permute.xlu0 %5117
      %5119 = vrot.lane.b32.xlu0 %v4705, 96
      %v5120 = vpop.permute.xlu0 %5119
      %5121 = vrot.lane.b32.xlu0 %v2786, 96
      %v5122 = vpop.permute.xlu0 %5121
      %5123 = vrot.lane.b32.xlu0 %v4706, 96
      %v5124 = vpop.permute.xlu0 %5123
      %5125 = vrot.lane.b32.xlu0 %v2800, 96
      %v5126 = vpop.permute.xlu0 %5125
      %5127 = vrot.lane.b32.xlu0 %v4707, 96
      %v5128 = vpop.permute.xlu0 %5127
      %5129 = vrot.lane.b32.xlu0 %v2814, 96
      %v5130 = vpop.permute.xlu0 %5129
      %5131 = vrot.lane.b32.xlu0 %v4708, 96
      %v5132 = vpop.permute.xlu0 %5131
      %5133 = vrot.lane.b32.xlu0 %v2828, 96
      %v5134 = vpop.permute.xlu0 %5133
      %5135 = vrot.lane.b32.xlu0 %v4709, 96
      %v5136 = vpop.permute.xlu0 %5135
      %5137 = vrot.lane.b32.xlu0 %v2842, 96
      %v5138 = vpop.permute.xlu0 %5137
      %5139 = vrot.lane.b32.xlu0 %v4710, 96
      %v5140 = vpop.permute.xlu0 %5139
      %5141 = vrot.lane.b32.xlu0 %v2856, 96
      %v5142 = vpop.permute.xlu0 %5141
      %5143 = vrot.lane.b32.xlu0 %v4711, 96
      %v5144 = vpop.permute.xlu0 %5143
      %5145 = vrot.lane.b32.xlu0 %v2870, 96
      %v5146 = vpop.permute.xlu0 %5145
      %5147 = vrot.lane.b32.xlu0 %v4712, 96
      %v5148 = vpop.permute.xlu0 %5147
      %5149 = vrot.lane.b32.xlu0 %v2884, 96
      %v5150 = vpop.permute.xlu0 %5149
      %5151 = vrot.lane.b32.xlu0 %v4713, 96
      %v5152 = vpop.permute.xlu0 %5151
      %5153 = vrot.lane.b32.xlu0 %v2898, 96
      %v5154 = vpop.permute.xlu0 %5153
      %5155 = vrot.lane.b32.xlu0 %v4714, 96
      %v5156 = vpop.permute.xlu0 %5155
      %5157 = vrot.lane.b32.xlu0 %v3187, 96
      %v5158 = vpop.permute.xlu0 %5157
      %5159 = vrot.lane.b32.xlu0 %v4715, 96
      %v5160 = vpop.permute.xlu0 %5159
      %5161 = vrot.lane.b32.xlu0 %v3398, 96
      %v5162 = vpop.permute.xlu0 %5161
      %5163 = vrot.lane.b32.xlu0 %v4863, 96
      %v5164 = vpop.permute.xlu0 %5163
      %5165 = vrot.lane.b32.xlu0 %v5093, 96
      %v5166 = vpop.permute.xlu0 %5165
      %5167 = vrot.lane.b32.xlu0 %v5096, 96
      %v5168 = vpop.permute.xlu0 %5167
      %v5169 = vrot.slane %v2674, 1
      %v5170 = vrot.slane %v2675, 1
      %v5171 = vsel %vm2997, %v5169, %v5170
      %5172 = vrot.lane.b32.xlu0 %v3003, 112
      %v5173 = vpop.permute.xlu0 %5172
      %5174 = vrot.lane.b32.xlu0 %v3002, 112
      %v5175 = vpop.permute.xlu0 %5174
      %5176 = vrot.lane.b32.xlu0 %v3006, 112
      %v5177 = vpop.permute.xlu0 %5176
      %5178 = vrot.lane.b32.xlu0 %v3005, 112
      %v5179 = vpop.permute.xlu0 %5178
      %5180 = vrot.lane.b32.xlu0 %v3009, 112
      %v5181 = vpop.permute.xlu0 %5180
      %5182 = vrot.lane.b32.xlu0 %v3008, 112
      %v5183 = vpop.permute.xlu0 %5182
      %5184 = vrot.lane.b32.xlu0 %v3012, 112
      %v5185 = vpop.permute.xlu0 %5184
      %5186 = vrot.lane.b32.xlu0 %v3011, 112
      %v5187 = vpop.permute.xlu0 %5186
      %5188 = vrot.lane.b32.xlu0 %v3015, 112
      %v5189 = vpop.permute.xlu0 %5188
      %5190 = vrot.lane.b32.xlu0 %v3014, 112
      %v5191 = vpop.permute.xlu0 %5190
      %5192 = vrot.lane.b32.xlu0 %v3018, 112
      %v5193 = vpop.permute.xlu0 %5192
      %5194 = vrot.lane.b32.xlu0 %v3017, 112
      %v5195 = vpop.permute.xlu0 %5194
      %5196 = vrot.lane.b32.xlu0 %v3021, 112
      %v5197 = vpop.permute.xlu0 %5196
      %5198 = vrot.lane.b32.xlu0 %v3020, 112
      %v5199 = vpop.permute.xlu0 %5198
      %5200 = vrot.lane.b32.xlu0 %v3024, 112
      %v5201 = vpop.permute.xlu0 %5200
      %5202 = vrot.lane.b32.xlu0 %v3023, 112
      %v5203 = vpop.permute.xlu0 %5202
      %5204 = vrot.lane.b32.xlu0 %v3027, 112
      %v5205 = vpop.permute.xlu0 %5204
      %5206 = vrot.lane.b32.xlu0 %v3026, 112
      %v5207 = vpop.permute.xlu0 %5206
      %5208 = vrot.lane.b32.xlu0 %v3030, 112
      %v5209 = vpop.permute.xlu0 %5208
      %5210 = vrot.lane.b32.xlu0 %v3029, 112
      %v5211 = vpop.permute.xlu0 %5210
      %5212 = vrot.lane.b32.xlu0 %v3033, 112
      %v5213 = vpop.permute.xlu0 %5212
      %5214 = vrot.lane.b32.xlu0 %v3032, 112
      %v5215 = vpop.permute.xlu0 %5214
      %5216 = vrot.lane.b32.xlu0 %v3036, 112
      %v5217 = vpop.permute.xlu0 %5216
      %5218 = vrot.lane.b32.xlu0 %v3035, 112
      %v5219 = vpop.permute.xlu0 %5218
      %5220 = vrot.lane.b32.xlu0 %v3039, 112
      %v5221 = vpop.permute.xlu0 %5220
      %5222 = vrot.lane.b32.xlu0 %v3038, 112
      %v5223 = vpop.permute.xlu0 %5222
      %5224 = vrot.lane.b32.xlu0 %v3042, 112
      %v5225 = vpop.permute.xlu0 %5224
      %5226 = vrot.lane.b32.xlu0 %v3041, 112
      %v5227 = vpop.permute.xlu0 %5226
      %5228 = vrot.lane.b32.xlu0 %v3045, 112
      %v5229 = vpop.permute.xlu0 %5228
      %5230 = vrot.lane.b32.xlu0 %v3044, 112
      %v5231 = vpop.permute.xlu0 %5230
      %5232 = vrot.lane.b32.xlu0 %v3256, 112
      %v5233 = vpop.permute.xlu0 %5232
      %5234 = vrot.lane.b32.xlu0 %v3255, 112
      %v5235 = vpop.permute.xlu0 %5234
      %5236 = vrot.lane.b32.xlu0 %v3467, 112
      %v5237 = vpop.permute.xlu0 %5236
      %5238 = vrot.lane.b32.xlu0 %v3466, 112
      %v5239 = vpop.permute.xlu0 %5238
      %5240 = vrot.lane.b32.xlu0 %v5171, 112
      %v5241 = vpop.permute.xlu0 %5240
      %5242 = vrot.lane.b32.xlu0 %v5170, 112
      %v5243 = vpop.permute.xlu0 %5242
      %v5246 = vsel %vm3468, %v4613, %v4695
      %v5249 = vsel %vm3468, %v4615, %v4698
      %v5252 = vsel %vm3468, %v4617, %v2688
      %v5255 = vsel %vm3468, %v4619, %v4699
      %v5258 = vsel %vm3468, %v4621, %v2702
      %v5261 = vsel %vm3468, %v4623, %v4700
      %v5264 = vsel %vm3468, %v4625, %v2716
      %v5267 = vsel %vm3468, %v4627, %v4701
      %v5270 = vsel %vm3468, %v4629, %v2730
      %v5273 = vsel %vm3468, %v4631, %v4702
      %v5276 = vsel %vm3468, %v4633, %v2744
      %v5279 = vsel %vm3468, %v4635, %v4703
      %v5282 = vsel %vm3468, %v4637, %v2758
      %v5285 = vsel %vm3468, %v4639, %v4704
      %v5288 = vsel %vm3468, %v4641, %v2772
      %v5291 = vsel %vm3468, %v4643, %v4705
      %v5294 = vsel %vm3468, %v4645, %v2786
      %v5297 = vsel %vm3468, %v4647, %v4706
      %v5300 = vsel %vm3468, %v4649, %v2800
      %v5303 = vsel %vm3468, %v4651, %v4707
      %v5306 = vsel %vm3468, %v4653, %v2814
      %v5309 = vsel %vm3468, %v4655, %v4708
      %v5312 = vsel %vm3468, %v4657, %v2828
      %v5315 = vsel %vm3468, %v4659, %v4709
      %v5318 = vsel %vm3468, %v4661, %v2842
      %v5321 = vsel %vm3468, %v4663, %v4710
      %v5324 = vsel %vm3468, %v4665, %v2856
      %v5327 = vsel %vm3468, %v4667, %v4711
      %v5330 = vsel %vm3468, %v4669, %v2870
      %v5333 = vsel %vm3468, %v4671, %v4712
      %v5336 = vsel %vm3468, %v4673, %v2884
      %v5339 = vsel %vm3468, %v4675, %v4713
      %v5342 = vsel %vm3468, %v4677, %v2898
      %v5345 = vsel %vm3468, %v4679, %v4714
      %v5348 = vsel %vm3468, %v4681, %v3187
      %v5351 = vsel %vm3468, %v4683, %v4715
      %v5353 = vsel %vm670, %v5246, %v4720
      %v5355 = vsel %vm670, %v5249, %v4722
      %v5357 = vsel %vm670, %v5252, %v4724
      %v5359 = vsel %vm670, %v5255, %v4726
      %v5361 = vsel %vm670, %v5258, %v4728
      %v5363 = vsel %vm670, %v5261, %v4730
      %v5365 = vsel %vm670, %v5264, %v4732
      %v5367 = vsel %vm670, %v5267, %v4734
      %v5369 = vsel %vm670, %v5270, %v4736
      %v5371 = vsel %vm670, %v5273, %v4738
      %v5373 = vsel %vm670, %v5276, %v4740
      %v5375 = vsel %vm670, %v5279, %v4742
      %v5377 = vsel %vm670, %v5282, %v4744
      %v5379 = vsel %vm670, %v5285, %v4746
      %v5381 = vsel %vm670, %v5288, %v4748
      %v5383 = vsel %vm670, %v5291, %v4750
      %v5385 = vsel %vm670, %v5294, %v4752
      %v5387 = vsel %vm670, %v5297, %v4754
      %v5389 = vsel %vm670, %v5300, %v4756
      %v5391 = vsel %vm670, %v5303, %v4758
      %v5393 = vsel %vm670, %v5306, %v4760
      %v5395 = vsel %vm670, %v5309, %v4762
      %v5397 = vsel %vm670, %v5312, %v4764
      %v5399 = vsel %vm670, %v5315, %v4766
      %v5401 = vsel %vm670, %v5318, %v4768
      %v5403 = vsel %vm670, %v5321, %v4770
      %v5405 = vsel %vm670, %v5324, %v4772
      %v5407 = vsel %vm670, %v5327, %v4774
      %v5409 = vsel %vm670, %v5330, %v4776
      %v5411 = vsel %vm670, %v5333, %v4778
      %v5413 = vsel %vm670, %v5336, %v4780
      %v5415 = vsel %vm670, %v5339, %v4782
      %v5417 = vsel %vm670, %v5342, %v4784
      %v5419 = vsel %vm670, %v5345, %v4786
      %v5421 = vsel %vm670, %v5348, %v4788
      %v5423 = vsel %vm670, %v5351, %v4790
      %v5425 = vsel %vm3597, %v5353, %v4792
      %v5427 = vsel %vm3597, %v5355, %v4794
      %v5429 = vsel %vm3597, %v5357, %v4796
      %v5431 = vsel %vm3597, %v5359, %v4798
      %v5433 = vsel %vm3597, %v5361, %v4800
      %v5435 = vsel %vm3597, %v5363, %v4802
      %v5437 = vsel %vm3597, %v5365, %v4804
      %v5439 = vsel %vm3597, %v5367, %v4806
      %v5441 = vsel %vm3597, %v5369, %v4808
      %v5443 = vsel %vm3597, %v5371, %v4810
      %v5445 = vsel %vm3597, %v5373, %v4812
      %v5447 = vsel %vm3597, %v5375, %v4814
      %v5449 = vsel %vm3597, %v5377, %v4816
      %v5451 = vsel %vm3597, %v5379, %v4818
      %v5453 = vsel %vm3597, %v5381, %v4820
      %v5455 = vsel %vm3597, %v5383, %v4822
      %v5457 = vsel %vm3597, %v5385, %v4824
      %v5459 = vsel %vm3597, %v5387, %v4826
      %v5461 = vsel %vm3597, %v5389, %v4828
      %v5463 = vsel %vm3597, %v5391, %v4830
      %v5465 = vsel %vm3597, %v5393, %v4832
      %v5467 = vsel %vm3597, %v5395, %v4834
      %v5469 = vsel %vm3597, %v5397, %v4836
      %v5471 = vsel %vm3597, %v5399, %v4838
      %v5473 = vsel %vm3597, %v5401, %v4840
      %v5475 = vsel %vm3597, %v5403, %v4842
      %v5477 = vsel %vm3597, %v5405, %v4844
      %v5479 = vsel %vm3597, %v5407, %v4846
      %v5481 = vsel %vm3597, %v5409, %v4848
      %v5483 = vsel %vm3597, %v5411, %v4850
      %v5485 = vsel %vm3597, %v5413, %v4852
      %v5487 = vsel %vm3597, %v5415, %v4854
      %v5489 = vsel %vm3597, %v5417, %v4856
      %v5491 = vsel %vm3597, %v5419, %v4858
      %v5493 = vsel %vm3597, %v5421, %v4860
      %v5495 = vsel %vm3597, %v5423, %v4862
      %v5497 = vsel %vm3662, %v5425, %v4865
      %v5499 = vsel %vm3662, %v5427, %v4867
      %v5501 = vsel %vm3662, %v5429, %v4869
      %v5503 = vsel %vm3662, %v5431, %v4871
      %v5505 = vsel %vm3662, %v5433, %v4873
      %v5507 = vsel %vm3662, %v5435, %v4875
      %v5509 = vsel %vm3662, %v5437, %v4877
      %v5511 = vsel %vm3662, %v5439, %v4879
      %v5513 = vsel %vm3662, %v5441, %v4881
      %v5515 = vsel %vm3662, %v5443, %v4883
      %v5517 = vsel %vm3662, %v5445, %v4885
      %v5519 = vsel %vm3662, %v5447, %v4887
      %v5521 = vsel %vm3662, %v5449, %v4889
      %v5523 = vsel %vm3662, %v5451, %v4891
      %v5525 = vsel %vm3662, %v5453, %v4893
      %v5527 = vsel %vm3662, %v5455, %v4895
      %v5529 = vsel %vm3662, %v5457, %v4897
      %v5531 = vsel %vm3662, %v5459, %v4899
      %v5533 = vsel %vm3662, %v5461, %v4901
      %v5535 = vsel %vm3662, %v5463, %v4903
      %v5537 = vsel %vm3662, %v5465, %v4905
      %v5539 = vsel %vm3662, %v5467, %v4907
      %v5541 = vsel %vm3662, %v5469, %v4909
      %v5543 = vsel %vm3662, %v5471, %v4911
      %v5545 = vsel %vm3662, %v5473, %v4913
      %v5547 = vsel %vm3662, %v5475, %v4915
      %v5549 = vsel %vm3662, %v5477, %v4917
      %v5551 = vsel %vm3662, %v5479, %v4919
      %v5553 = vsel %vm3662, %v5481, %v4921
      %v5555 = vsel %vm3662, %v5483, %v4923
      %v5557 = vsel %vm3662, %v5485, %v4925
      %v5559 = vsel %vm3662, %v5487, %v4927
      %v5561 = vsel %vm3662, %v5489, %v4929
      %v5563 = vsel %vm3662, %v5491, %v4931
      %v5565 = vsel %vm3662, %v5493, %v4933
      %v5567 = vsel %vm3662, %v5495, %v4935
      %v5569 = vsel %vm3727, %v5497, %v4937
      %v5571 = vsel %vm3727, %v5499, %v4939
      %v5573 = vsel %vm3727, %v5501, %v4941
      %v5575 = vsel %vm3727, %v5503, %v4943
      %v5577 = vsel %vm3727, %v5505, %v4945
      %v5579 = vsel %vm3727, %v5507, %v4947
      %v5581 = vsel %vm3727, %v5509, %v4949
      %v5583 = vsel %vm3727, %v5511, %v4951
      %v5585 = vsel %vm3727, %v5513, %v4953
      %v5587 = vsel %vm3727, %v5515, %v4955
      %v5589 = vsel %vm3727, %v5517, %v4957
      %v5591 = vsel %vm3727, %v5519, %v4959
      %v5593 = vsel %vm3727, %v5521, %v4961
      %v5595 = vsel %vm3727, %v5523, %v4963
      %v5597 = vsel %vm3727, %v5525, %v4965
      %v5599 = vsel %vm3727, %v5527, %v4967
      %v5601 = vsel %vm3727, %v5529, %v4969
      %v5603 = vsel %vm3727, %v5531, %v4971
      %v5605 = vsel %vm3727, %v5533, %v4973
      %v5607 = vsel %vm3727, %v5535, %v4975
      %v5609 = vsel %vm3727, %v5537, %v4977
      %v5611 = vsel %vm3727, %v5539, %v4979
      %v5613 = vsel %vm3727, %v5541, %v4981
      %v5615 = vsel %vm3727, %v5543, %v4983
      %v5617 = vsel %vm3727, %v5545, %v4985
      %v5619 = vsel %vm3727, %v5547, %v4987
      %v5621 = vsel %vm3727, %v5549, %v4989
      %v5623 = vsel %vm3727, %v5551, %v4991
      %v5625 = vsel %vm3727, %v5553, %v4993
      %v5627 = vsel %vm3727, %v5555, %v4995
      %v5629 = vsel %vm3727, %v5557, %v4997
      %v5631 = vsel %vm3727, %v5559, %v4999
      %v5633 = vsel %vm3727, %v5561, %v5001
      %v5635 = vsel %vm3727, %v5563, %v5003
      %v5637 = vsel %vm3727, %v5565, %v5005
      %v5639 = vsel %vm3727, %v5567, %v5007
      %v5641 = vsel %vm3792, %v5569, %v5011
      %v5643 = vsel %vm3792, %v5571, %v5013
      %v5645 = vsel %vm3792, %v5573, %v5015
      %v5647 = vsel %vm3792, %v5575, %v5017
      %v5649 = vsel %vm3792, %v5577, %v5019
      %v5651 = vsel %vm3792, %v5579, %v5021
      %v5653 = vsel %vm3792, %v5581, %v5023
      %v5655 = vsel %vm3792, %v5583, %v5025
      %v5657 = vsel %vm3792, %v5585, %v5027
      %v5659 = vsel %vm3792, %v5587, %v5029
      %v5661 = vsel %vm3792, %v5589, %v5031
      %v5663 = vsel %vm3792, %v5591, %v5033
      %v5665 = vsel %vm3792, %v5593, %v5035
      %v5667 = vsel %vm3792, %v5595, %v5037
      %v5669 = vsel %vm3792, %v5597, %v5039
      %v5671 = vsel %vm3792, %v5599, %v5041
      %v5673 = vsel %vm3792, %v5601, %v5043
      %v5675 = vsel %vm3792, %v5603, %v5045
      %v5677 = vsel %vm3792, %v5605, %v5047
      %v5679 = vsel %vm3792, %v5607, %v5049
      %v5681 = vsel %vm3792, %v5609, %v5051
      %v5683 = vsel %vm3792, %v5611, %v5053
      %v5685 = vsel %vm3792, %v5613, %v5055
      %v5687 = vsel %vm3792, %v5615, %v5057
      %v5689 = vsel %vm3792, %v5617, %v5059
      %v5691 = vsel %vm3792, %v5619, %v5061
      %v5693 = vsel %vm3792, %v5621, %v5063
      %v5695 = vsel %vm3792, %v5623, %v5065
      %v5697 = vsel %vm3792, %v5625, %v5067
      %v5699 = vsel %vm3792, %v5627, %v5069
      %v5701 = vsel %vm3792, %v5629, %v5071
      %v5703 = vsel %vm3792, %v5631, %v5073
      %v5705 = vsel %vm3792, %v5633, %v5075
      %v5707 = vsel %vm3792, %v5635, %v5077
      %v5709 = vsel %vm3792, %v5637, %v5079
      %v5711 = vsel %vm3792, %v5639, %v5081
      %v5713 = vsel %vm3857, %v5641, %v5098
      %v5715 = vsel %vm3857, %v5643, %v5100
      %v5717 = vsel %vm3857, %v5645, %v5102
      %v5719 = vsel %vm3857, %v5647, %v5104
      %v5721 = vsel %vm3857, %v5649, %v5106
      %v5723 = vsel %vm3857, %v5651, %v5108
      %v5725 = vsel %vm3857, %v5653, %v5110
      %v5727 = vsel %vm3857, %v5655, %v5112
      %v5729 = vsel %vm3857, %v5657, %v5114
      %v5731 = vsel %vm3857, %v5659, %v5116
      %v5733 = vsel %vm3857, %v5661, %v5118
      %v5735 = vsel %vm3857, %v5663, %v5120
      %v5737 = vsel %vm3857, %v5665, %v5122
      %v5739 = vsel %vm3857, %v5667, %v5124
      %v5741 = vsel %vm3857, %v5669, %v5126
      %v5743 = vsel %vm3857, %v5671, %v5128
      %v5745 = vsel %vm3857, %v5673, %v5130
      %v5747 = vsel %vm3857, %v5675, %v5132
      %v5749 = vsel %vm3857, %v5677, %v5134
      %v5751 = vsel %vm3857, %v5679, %v5136
      %v5753 = vsel %vm3857, %v5681, %v5138
      %v5755 = vsel %vm3857, %v5683, %v5140
      %v5757 = vsel %vm3857, %v5685, %v5142
      %v5759 = vsel %vm3857, %v5687, %v5144
      %v5761 = vsel %vm3857, %v5689, %v5146
      %v5763 = vsel %vm3857, %v5691, %v5148
      %v5765 = vsel %vm3857, %v5693, %v5150
      %v5767 = vsel %vm3857, %v5695, %v5152
      %v5769 = vsel %vm3857, %v5697, %v5154
      %v5771 = vsel %vm3857, %v5699, %v5156
      %v5773 = vsel %vm3857, %v5701, %v5158
      %v5775 = vsel %vm3857, %v5703, %v5160
      %v5777 = vsel %vm3857, %v5705, %v5162
      %v5779 = vsel %vm3857, %v5707, %v5164
      %v5781 = vsel %vm3857, %v5709, %v5166
      %v5783 = vsel %vm3857, %v5711, %v5168
      %v5820 = vcombine.low %v5713, %v5173
      %v5821 = vcombine.high %v5713, %v5173
      %v5823 = vunpack.c.l.s4 1966171168
      %v5824 = vunpack.c.0.s8 %v5823
      %v5825 = vlaneseq
      %v5826 = vshrl.u32 %v5825, 7
      %v5827 = vsub.s32 %v5824, %v5826
      %v5828 = vrot.slane %v5820, %v5827
      %v5830 = vunpack.c.l.s4 1966171168
      %v5831 = vunpack.c.0.s8 %v5830
      %v5832 = vlaneseq
      %v5833 = vshrl.u32 %v5832, 7
      %v5834 = vsub.s32 %v5831, %v5833
      %v5835 = vrot.slane %v5821, %v5834
      %v5836 = vcombine.high %v5828, %v5828
      %v5837 = vcombine.high %v5835, %v5835
      %v5839 = vunpack.c.l.s4 1966171168
      %v5840 = vunpack.c.0.s8 %v5839
      %v5841 = vlaneseq
      %v5842 = vshrl.u32 %v5841, 7
      %v5843 = vsub.s32 %v5840, %v5842
      %v5844 = vrot.slane %v5828, %v5843
      %v5846 = vunpack.c.l.s4 1966171168
      %v5847 = vunpack.c.0.s8 %v5846
      %v5848 = vlaneseq
      %v5849 = vshrl.u32 %v5848, 7
      %v5850 = vsub.s32 %v5847, %v5849
      %v5851 = vrot.slane %v5835, %v5850
      %v5853 = vunpack.c.l.s4 1966171168
      %v5854 = vunpack.c.0.s8 %v5853
      %v5855 = vlaneseq
      %v5856 = vshrl.u32 %v5855, 7
      %v5857 = vsub.s32 %v5854, %v5856
      %v5858 = vrot.slane %v5836, %v5857
      %v5860 = vunpack.c.l.s4 1966171168
      %v5861 = vunpack.c.0.s8 %v5860
      %v5862 = vlaneseq
      %v5863 = vshrl.u32 %v5862, 7
      %v5864 = vsub.s32 %v5861, %v5863
      %v5865 = vrot.slane %v5837, %v5864
      %v5866 = vcombine.high %v5844, %v5844
      %v5867 = vcombine.high %v5851, %v5851
      %v5868 = vcombine.high %v5858, %v5858
      %v5869 = vcombine.high %v5865, %v5865
      %v5870 = vcombine.low %v5715, %v5175
      %v5872 = vunpack.c.l.s4 1966171168
      %v5873 = vunpack.c.0.s8 %v5872
      %v5874 = vlaneseq
      %v5875 = vshrl.u32 %v5874, 7
      %v5876 = vsub.s32 %v5873, %v5875
      %v5877 = vrot.slane %v5870, %v5876
      %v5879 = vunpack.c.l.s4 1966171168
      %v5880 = vunpack.c.0.s8 %v5879
      %v5881 = vlaneseq
      %v5882 = vshrl.u32 %v5881, 7
      %v5883 = vsub.s32 %v5880, %v5882
      %v5884 = vrot.slane %v5877, %v5883
      %v5885 = vcombine.low %v5717, %v5177
      %v5886 = vcombine.high %v5717, %v5177
      %v5888 = vunpack.c.l.s4 1966171168
      %v5889 = vunpack.c.0.s8 %v5888
      %v5890 = vlaneseq
      %v5891 = vshrl.u32 %v5890, 7
      %v5892 = vsub.s32 %v5889, %v5891
      %v5893 = vrot.slane %v5885, %v5892
      %v5895 = vunpack.c.l.s4 1966171168
      %v5896 = vunpack.c.0.s8 %v5895
      %v5897 = vlaneseq
      %v5898 = vshrl.u32 %v5897, 7
      %v5899 = vsub.s32 %v5896, %v5898
      %v5900 = vrot.slane %v5886, %v5899
      %v5901 = vcombine.high %v5893, %v5893
      %v5902 = vcombine.high %v5900, %v5900
      %v5904 = vunpack.c.l.s4 1966171168
      %v5905 = vunpack.c.0.s8 %v5904
      %v5906 = vlaneseq
      %v5907 = vshrl.u32 %v5906, 7
      %v5908 = vsub.s32 %v5905, %v5907
      %v5909 = vrot.slane %v5893, %v5908
      %v5911 = vunpack.c.l.s4 1966171168
      %v5912 = vunpack.c.0.s8 %v5911
      %v5913 = vlaneseq
      %v5914 = vshrl.u32 %v5913, 7
      %v5915 = vsub.s32 %v5912, %v5914
      %v5916 = vrot.slane %v5900, %v5915
      %v5918 = vunpack.c.l.s4 1966171168
      %v5919 = vunpack.c.0.s8 %v5918
      %v5920 = vlaneseq
      %v5921 = vshrl.u32 %v5920, 7
      %v5922 = vsub.s32 %v5919, %v5921
      %v5923 = vrot.slane %v5901, %v5922
      %v5925 = vunpack.c.l.s4 1966171168
      %v5926 = vunpack.c.0.s8 %v5925
      %v5927 = vlaneseq
      %v5928 = vshrl.u32 %v5927, 7
      %v5929 = vsub.s32 %v5926, %v5928
      %v5930 = vrot.slane %v5902, %v5929
      %v5931 = vcombine.high %v5909, %v5909
      %v5932 = vcombine.high %v5916, %v5916
      %v5933 = vcombine.high %v5923, %v5923
      %v5934 = vcombine.high %v5930, %v5930
      %v5935 = vcombine.low %v5719, %v5179
      %v5937 = vunpack.c.l.s4 1966171168
      %v5938 = vunpack.c.0.s8 %v5937
      %v5939 = vlaneseq
      %v5940 = vshrl.u32 %v5939, 7
      %v5941 = vsub.s32 %v5938, %v5940
      %v5942 = vrot.slane %v5935, %v5941
      %v5944 = vunpack.c.l.s4 1966171168
      %v5945 = vunpack.c.0.s8 %v5944
      %v5946 = vlaneseq
      %v5947 = vshrl.u32 %v5946, 7
      %v5948 = vsub.s32 %v5945, %v5947
      %v5949 = vrot.slane %v5942, %v5948
      %v5950 = vcombine.low %v5721, %v5181
      %v5951 = vcombine.high %v5721, %v5181
      %v5953 = vunpack.c.l.s4 1966171168
      %v5954 = vunpack.c.0.s8 %v5953
      %v5955 = vlaneseq
      %v5956 = vshrl.u32 %v5955, 7
      %v5957 = vsub.s32 %v5954, %v5956
      %v5958 = vrot.slane %v5950, %v5957
      %v5960 = vunpack.c.l.s4 1966171168
      %v5961 = vunpack.c.0.s8 %v5960
      %v5962 = vlaneseq
      %v5963 = vshrl.u32 %v5962, 7
      %v5964 = vsub.s32 %v5961, %v5963
      %v5965 = vrot.slane %v5951, %v5964
      %v5966 = vcombine.high %v5958, %v5958
      %v5967 = vcombine.high %v5965, %v5965
      %v5969 = vunpack.c.l.s4 1966171168
      %v5970 = vunpack.c.0.s8 %v5969
      %v5971 = vlaneseq
      %v5972 = vshrl.u32 %v5971, 7
      %v5973 = vsub.s32 %v5970, %v5972
      %v5974 = vrot.slane %v5958, %v5973
      %v5976 = vunpack.c.l.s4 1966171168
      %v5977 = vunpack.c.0.s8 %v5976
      %v5978 = vlaneseq
      %v5979 = vshrl.u32 %v5978, 7
      %v5980 = vsub.s32 %v5977, %v5979
      %v5981 = vrot.slane %v5965, %v5980
      %v5983 = vunpack.c.l.s4 1966171168
      %v5984 = vunpack.c.0.s8 %v5983
      %v5985 = vlaneseq
      %v5986 = vshrl.u32 %v5985, 7
      %v5987 = vsub.s32 %v5984, %v5986
      %v5988 = vrot.slane %v5966, %v5987
      %v5990 = vunpack.c.l.s4 1966171168
      %v5991 = vunpack.c.0.s8 %v5990
      %v5992 = vlaneseq
      %v5993 = vshrl.u32 %v5992, 7
      %v5994 = vsub.s32 %v5991, %v5993
      %v5995 = vrot.slane %v5967, %v5994
      %v5996 = vcombine.high %v5974, %v5974
      %v5997 = vcombine.high %v5981, %v5981
      %v5998 = vcombine.high %v5988, %v5988
      %v5999 = vcombine.high %v5995, %v5995
      %v6000 = vcombine.low %v5723, %v5183
      %v6002 = vunpack.c.l.s4 1966171168
      %v6003 = vunpack.c.0.s8 %v6002
      %v6004 = vlaneseq
      %v6005 = vshrl.u32 %v6004, 7
      %v6006 = vsub.s32 %v6003, %v6005
      %v6007 = vrot.slane %v6000, %v6006
      %v6009 = vunpack.c.l.s4 1966171168
      %v6010 = vunpack.c.0.s8 %v6009
      %v6011 = vlaneseq
      %v6012 = vshrl.u32 %v6011, 7
      %v6013 = vsub.s32 %v6010, %v6012
      %v6014 = vrot.slane %v6007, %v6013
      %v6015 = vcombine.low %v5725, %v5185
      %v6016 = vcombine.high %v5725, %v5185
      %v6018 = vunpack.c.l.s4 1966171168
      %v6019 = vunpack.c.0.s8 %v6018
      %v6020 = vlaneseq
      %v6021 = vshrl.u32 %v6020, 7
      %v6022 = vsub.s32 %v6019, %v6021
      %v6023 = vrot.slane %v6015, %v6022
      %v6025 = vunpack.c.l.s4 1966171168
      %v6026 = vunpack.c.0.s8 %v6025
      %v6027 = vlaneseq
      %v6028 = vshrl.u32 %v6027, 7
      %v6029 = vsub.s32 %v6026, %v6028
      %v6030 = vrot.slane %v6016, %v6029
      %v6031 = vcombine.high %v6023, %v6023
      %v6032 = vcombine.high %v6030, %v6030
      %v6034 = vunpack.c.l.s4 1966171168
      %v6035 = vunpack.c.0.s8 %v6034
      %v6036 = vlaneseq
      %v6037 = vshrl.u32 %v6036, 7
      %v6038 = vsub.s32 %v6035, %v6037
      %v6039 = vrot.slane %v6023, %v6038
      %v6041 = vunpack.c.l.s4 1966171168
      %v6042 = vunpack.c.0.s8 %v6041
      %v6043 = vlaneseq
      %v6044 = vshrl.u32 %v6043, 7
      %v6045 = vsub.s32 %v6042, %v6044
      %v6046 = vrot.slane %v6030, %v6045
      %v6048 = vunpack.c.l.s4 1966171168
      %v6049 = vunpack.c.0.s8 %v6048
      %v6050 = vlaneseq
      %v6051 = vshrl.u32 %v6050, 7
      %v6052 = vsub.s32 %v6049, %v6051
      %v6053 = vrot.slane %v6031, %v6052
      %v6055 = vunpack.c.l.s4 1966171168
      %v6056 = vunpack.c.0.s8 %v6055
      %v6057 = vlaneseq
      %v6058 = vshrl.u32 %v6057, 7
      %v6059 = vsub.s32 %v6056, %v6058
      %v6060 = vrot.slane %v6032, %v6059
      %v6061 = vcombine.high %v6039, %v6039
      %v6062 = vcombine.high %v6046, %v6046
      %v6063 = vcombine.high %v6053, %v6053
      %v6064 = vcombine.high %v6060, %v6060
      %v6065 = vcombine.low %v5727, %v5187
      %v6067 = vunpack.c.l.s4 1966171168
      %v6068 = vunpack.c.0.s8 %v6067
      %v6069 = vlaneseq
      %v6070 = vshrl.u32 %v6069, 7
      %v6071 = vsub.s32 %v6068, %v6070
      %v6072 = vrot.slane %v6065, %v6071
      %v6074 = vunpack.c.l.s4 1966171168
      %v6075 = vunpack.c.0.s8 %v6074
      %v6076 = vlaneseq
      %v6077 = vshrl.u32 %v6076, 7
      %v6078 = vsub.s32 %v6075, %v6077
      %v6079 = vrot.slane %v6072, %v6078
      %v6080 = vcombine.low %v5729, %v5189
      %v6081 = vcombine.high %v5729, %v5189
      %v6083 = vunpack.c.l.s4 1966171168
      %v6084 = vunpack.c.0.s8 %v6083
      %v6085 = vlaneseq
      %v6086 = vshrl.u32 %v6085, 7
      %v6087 = vsub.s32 %v6084, %v6086
      %v6088 = vrot.slane %v6080, %v6087
      %v6090 = vunpack.c.l.s4 1966171168
      %v6091 = vunpack.c.0.s8 %v6090
      %v6092 = vlaneseq
      %v6093 = vshrl.u32 %v6092, 7
      %v6094 = vsub.s32 %v6091, %v6093
      %v6095 = vrot.slane %v6081, %v6094
      %v6096 = vcombine.high %v6088, %v6088
      %v6097 = vcombine.high %v6095, %v6095
      %v6099 = vunpack.c.l.s4 1966171168
      %v6100 = vunpack.c.0.s8 %v6099
      %v6101 = vlaneseq
      %v6102 = vshrl.u32 %v6101, 7
      %v6103 = vsub.s32 %v6100, %v6102
      %v6104 = vrot.slane %v6088, %v6103
      %v6106 = vunpack.c.l.s4 1966171168
      %v6107 = vunpack.c.0.s8 %v6106
      %v6108 = vlaneseq
      %v6109 = vshrl.u32 %v6108, 7
      %v6110 = vsub.s32 %v6107, %v6109
      %v6111 = vrot.slane %v6095, %v6110
      %v6113 = vunpack.c.l.s4 1966171168
      %v6114 = vunpack.c.0.s8 %v6113
      %v6115 = vlaneseq
      %v6116 = vshrl.u32 %v6115, 7
      %v6117 = vsub.s32 %v6114, %v6116
      %v6118 = vrot.slane %v6096, %v6117
      %v6120 = vunpack.c.l.s4 1966171168
      %v6121 = vunpack.c.0.s8 %v6120
      %v6122 = vlaneseq
      %v6123 = vshrl.u32 %v6122, 7
      %v6124 = vsub.s32 %v6121, %v6123
      %v6125 = vrot.slane %v6097, %v6124
      %v6126 = vcombine.high %v6104, %v6104
      %v6127 = vcombine.high %v6111, %v6111
      %v6128 = vcombine.high %v6118, %v6118
      %v6129 = vcombine.high %v6125, %v6125
      %v6130 = vcombine.low %v5731, %v5191
      %v6132 = vunpack.c.l.s4 1966171168
      %v6133 = vunpack.c.0.s8 %v6132
      %v6134 = vlaneseq
      %v6135 = vshrl.u32 %v6134, 7
      %v6136 = vsub.s32 %v6133, %v6135
      %v6137 = vrot.slane %v6130, %v6136
      %v6139 = vunpack.c.l.s4 1966171168
      %v6140 = vunpack.c.0.s8 %v6139
      %v6141 = vlaneseq
      %v6142 = vshrl.u32 %v6141, 7
      %v6143 = vsub.s32 %v6140, %v6142
      %v6144 = vrot.slane %v6137, %v6143
      %v6145 = vcombine.low %v5733, %v5193
      %v6146 = vcombine.high %v5733, %v5193
      %v6148 = vunpack.c.l.s4 1966171168
      %v6149 = vunpack.c.0.s8 %v6148
      %v6150 = vlaneseq
      %v6151 = vshrl.u32 %v6150, 7
      %v6152 = vsub.s32 %v6149, %v6151
      %v6153 = vrot.slane %v6145, %v6152
      %v6155 = vunpack.c.l.s4 1966171168
      %v6156 = vunpack.c.0.s8 %v6155
      %v6157 = vlaneseq
      %v6158 = vshrl.u32 %v6157, 7
      %v6159 = vsub.s32 %v6156, %v6158
      %v6160 = vrot.slane %v6146, %v6159
      %v6161 = vcombine.high %v6153, %v6153
      %v6162 = vcombine.high %v6160, %v6160
      %v6164 = vunpack.c.l.s4 1966171168
      %v6165 = vunpack.c.0.s8 %v6164
      %v6166 = vlaneseq
      %v6167 = vshrl.u32 %v6166, 7
      %v6168 = vsub.s32 %v6165, %v6167
      %v6169 = vrot.slane %v6153, %v6168
      %v6171 = vunpack.c.l.s4 1966171168
      %v6172 = vunpack.c.0.s8 %v6171
      %v6173 = vlaneseq
      %v6174 = vshrl.u32 %v6173, 7
      %v6175 = vsub.s32 %v6172, %v6174
      %v6176 = vrot.slane %v6160, %v6175
      %v6178 = vunpack.c.l.s4 1966171168
      %v6179 = vunpack.c.0.s8 %v6178
      %v6180 = vlaneseq
      %v6181 = vshrl.u32 %v6180, 7
      %v6182 = vsub.s32 %v6179, %v6181
      %v6183 = vrot.slane %v6161, %v6182
      %v6185 = vunpack.c.l.s4 1966171168
      %v6186 = vunpack.c.0.s8 %v6185
      %v6187 = vlaneseq
      %v6188 = vshrl.u32 %v6187, 7
      %v6189 = vsub.s32 %v6186, %v6188
      %v6190 = vrot.slane %v6162, %v6189
      %v6191 = vcombine.high %v6169, %v6169
      %v6192 = vcombine.high %v6176, %v6176
      %v6193 = vcombine.high %v6183, %v6183
      %v6194 = vcombine.high %v6190, %v6190
      %v6195 = vcombine.low %v5735, %v5195
      %v6197 = vunpack.c.l.s4 1966171168
      %v6198 = vunpack.c.0.s8 %v6197
      %v6199 = vlaneseq
      %v6200 = vshrl.u32 %v6199, 7
      %v6201 = vsub.s32 %v6198, %v6200
      %v6202 = vrot.slane %v6195, %v6201
      %v6204 = vunpack.c.l.s4 1966171168
      %v6205 = vunpack.c.0.s8 %v6204
      %v6206 = vlaneseq
      %v6207 = vshrl.u32 %v6206, 7
      %v6208 = vsub.s32 %v6205, %v6207
      %v6209 = vrot.slane %v6202, %v6208
      %v6210 = vcombine.low %v5737, %v5197
      %v6211 = vcombine.high %v5737, %v5197
      %v6213 = vunpack.c.l.s4 1966171168
      %v6214 = vunpack.c.0.s8 %v6213
      %v6215 = vlaneseq
      %v6216 = vshrl.u32 %v6215, 7
      %v6217 = vsub.s32 %v6214, %v6216
      %v6218 = vrot.slane %v6210, %v6217
      %v6220 = vunpack.c.l.s4 1966171168
      %v6221 = vunpack.c.0.s8 %v6220
      %v6222 = vlaneseq
      %v6223 = vshrl.u32 %v6222, 7
      %v6224 = vsub.s32 %v6221, %v6223
      %v6225 = vrot.slane %v6211, %v6224
      %v6226 = vcombine.high %v6218, %v6218
      %v6227 = vcombine.high %v6225, %v6225
      %v6229 = vunpack.c.l.s4 1966171168
      %v6230 = vunpack.c.0.s8 %v6229
      %v6231 = vlaneseq
      %v6232 = vshrl.u32 %v6231, 7
      %v6233 = vsub.s32 %v6230, %v6232
      %v6234 = vrot.slane %v6218, %v6233
      %v6236 = vunpack.c.l.s4 1966171168
      %v6237 = vunpack.c.0.s8 %v6236
      %v6238 = vlaneseq
      %v6239 = vshrl.u32 %v6238, 7
      %v6240 = vsub.s32 %v6237, %v6239
      %v6241 = vrot.slane %v6225, %v6240
      %v6243 = vunpack.c.l.s4 1966171168
      %v6244 = vunpack.c.0.s8 %v6243
      %v6245 = vlaneseq
      %v6246 = vshrl.u32 %v6245, 7
      %v6247 = vsub.s32 %v6244, %v6246
      %v6248 = vrot.slane %v6226, %v6247
      %v6250 = vunpack.c.l.s4 1966171168
      %v6251 = vunpack.c.0.s8 %v6250
      %v6252 = vlaneseq
      %v6253 = vshrl.u32 %v6252, 7
      %v6254 = vsub.s32 %v6251, %v6253
      %v6255 = vrot.slane %v6227, %v6254
      %v6256 = vcombine.high %v6234, %v6234
      %v6257 = vcombine.high %v6241, %v6241
      %v6258 = vcombine.high %v6248, %v6248
      %v6259 = vcombine.high %v6255, %v6255
      %v6260 = vcombine.low %v5739, %v5199
      %v6262 = vunpack.c.l.s4 1966171168
      %v6263 = vunpack.c.0.s8 %v6262
      %v6264 = vlaneseq
      %v6265 = vshrl.u32 %v6264, 7
      %v6266 = vsub.s32 %v6263, %v6265
      %v6267 = vrot.slane %v6260, %v6266
      %v6269 = vunpack.c.l.s4 1966171168
      %v6270 = vunpack.c.0.s8 %v6269
      %v6271 = vlaneseq
      %v6272 = vshrl.u32 %v6271, 7
      %v6273 = vsub.s32 %v6270, %v6272
      %v6274 = vrot.slane %v6267, %v6273
      %v6275 = vcombine.low %v5741, %v5201
      %v6276 = vcombine.high %v5741, %v5201
      %v6278 = vunpack.c.l.s4 1966171168
      %v6279 = vunpack.c.0.s8 %v6278
      %v6280 = vlaneseq
      %v6281 = vshrl.u32 %v6280, 7
      %v6282 = vsub.s32 %v6279, %v6281
      %v6283 = vrot.slane %v6275, %v6282
      %v6285 = vunpack.c.l.s4 1966171168
      %v6286 = vunpack.c.0.s8 %v6285
      %v6287 = vlaneseq
      %v6288 = vshrl.u32 %v6287, 7
      %v6289 = vsub.s32 %v6286, %v6288
      %v6290 = vrot.slane %v6276, %v6289
      %v6291 = vcombine.high %v6283, %v6283
      %v6292 = vcombine.high %v6290, %v6290
      %v6294 = vunpack.c.l.s4 1966171168
      %v6295 = vunpack.c.0.s8 %v6294
      %v6296 = vlaneseq
      %v6297 = vshrl.u32 %v6296, 7
      %v6298 = vsub.s32 %v6295, %v6297
      %v6299 = vrot.slane %v6283, %v6298
      %v6301 = vunpack.c.l.s4 1966171168
      %v6302 = vunpack.c.0.s8 %v6301
      %v6303 = vlaneseq
      %v6304 = vshrl.u32 %v6303, 7
      %v6305 = vsub.s32 %v6302, %v6304
      %v6306 = vrot.slane %v6290, %v6305
      %v6308 = vunpack.c.l.s4 1966171168
      %v6309 = vunpack.c.0.s8 %v6308
      %v6310 = vlaneseq
      %v6311 = vshrl.u32 %v6310, 7
      %v6312 = vsub.s32 %v6309, %v6311
      %v6313 = vrot.slane %v6291, %v6312
      %v6315 = vunpack.c.l.s4 1966171168
      %v6316 = vunpack.c.0.s8 %v6315
      %v6317 = vlaneseq
      %v6318 = vshrl.u32 %v6317, 7
      %v6319 = vsub.s32 %v6316, %v6318
      %v6320 = vrot.slane %v6292, %v6319
      %v6321 = vcombine.high %v6299, %v6299
      %v6322 = vcombine.high %v6306, %v6306
      %v6323 = vcombine.high %v6313, %v6313
      %v6324 = vcombine.high %v6320, %v6320
      %v6325 = vcombine.low %v5743, %v5203
      %v6327 = vunpack.c.l.s4 1966171168
      %v6328 = vunpack.c.0.s8 %v6327
      %v6329 = vlaneseq
      %v6330 = vshrl.u32 %v6329, 7
      %v6331 = vsub.s32 %v6328, %v6330
      %v6332 = vrot.slane %v6325, %v6331
      %v6334 = vunpack.c.l.s4 1966171168
      %v6335 = vunpack.c.0.s8 %v6334
      %v6336 = vlaneseq
      %v6337 = vshrl.u32 %v6336, 7
      %v6338 = vsub.s32 %v6335, %v6337
      %v6339 = vrot.slane %v6332, %v6338
      %v6340 = vcombine.low %v5745, %v5205
      %v6341 = vcombine.high %v5745, %v5205
      %v6343 = vunpack.c.l.s4 1966171168
      %v6344 = vunpack.c.0.s8 %v6343
      %v6345 = vlaneseq
      %v6346 = vshrl.u32 %v6345, 7
      %v6347 = vsub.s32 %v6344, %v6346
      %v6348 = vrot.slane %v6340, %v6347
      %v6350 = vunpack.c.l.s4 1966171168
      %v6351 = vunpack.c.0.s8 %v6350
      %v6352 = vlaneseq
      %v6353 = vshrl.u32 %v6352, 7
      %v6354 = vsub.s32 %v6351, %v6353
      %v6355 = vrot.slane %v6341, %v6354
      %v6356 = vcombine.high %v6348, %v6348
      %v6357 = vcombine.high %v6355, %v6355
      %v6359 = vunpack.c.l.s4 1966171168
      %v6360 = vunpack.c.0.s8 %v6359
      %v6361 = vlaneseq
      %v6362 = vshrl.u32 %v6361, 7
      %v6363 = vsub.s32 %v6360, %v6362
      %v6364 = vrot.slane %v6348, %v6363
      %v6366 = vunpack.c.l.s4 1966171168
      %v6367 = vunpack.c.0.s8 %v6366
      %v6368 = vlaneseq
      %v6369 = vshrl.u32 %v6368, 7
      %v6370 = vsub.s32 %v6367, %v6369
      %v6371 = vrot.slane %v6355, %v6370
      %v6373 = vunpack.c.l.s4 1966171168
      %v6374 = vunpack.c.0.s8 %v6373
      %v6375 = vlaneseq
      %v6376 = vshrl.u32 %v6375, 7
      %v6377 = vsub.s32 %v6374, %v6376
      %v6378 = vrot.slane %v6356, %v6377
      %v6380 = vunpack.c.l.s4 1966171168
      %v6381 = vunpack.c.0.s8 %v6380
      %v6382 = vlaneseq
      %v6383 = vshrl.u32 %v6382, 7
      %v6384 = vsub.s32 %v6381, %v6383
      %v6385 = vrot.slane %v6357, %v6384
      %v6386 = vcombine.high %v6364, %v6364
      %v6387 = vcombine.high %v6371, %v6371
      %v6388 = vcombine.high %v6378, %v6378
      %v6389 = vcombine.high %v6385, %v6385
      %v6390 = vcombine.low %v5747, %v5207
      %v6392 = vunpack.c.l.s4 1966171168
      %v6393 = vunpack.c.0.s8 %v6392
      %v6394 = vlaneseq
      %v6395 = vshrl.u32 %v6394, 7
      %v6396 = vsub.s32 %v6393, %v6395
      %v6397 = vrot.slane %v6390, %v6396
      %v6399 = vunpack.c.l.s4 1966171168
      %v6400 = vunpack.c.0.s8 %v6399
      %v6401 = vlaneseq
      %v6402 = vshrl.u32 %v6401, 7
      %v6403 = vsub.s32 %v6400, %v6402
      %v6404 = vrot.slane %v6397, %v6403
      %v6405 = vcombine.low %v5749, %v5209
      %v6406 = vcombine.high %v5749, %v5209
      %v6408 = vunpack.c.l.s4 1966171168
      %v6409 = vunpack.c.0.s8 %v6408
      %v6410 = vlaneseq
      %v6411 = vshrl.u32 %v6410, 7
      %v6412 = vsub.s32 %v6409, %v6411
      %v6413 = vrot.slane %v6405, %v6412
      %v6415 = vunpack.c.l.s4 1966171168
      %v6416 = vunpack.c.0.s8 %v6415
      %v6417 = vlaneseq
      %v6418 = vshrl.u32 %v6417, 7
      %v6419 = vsub.s32 %v6416, %v6418
      %v6420 = vrot.slane %v6406, %v6419
      %v6421 = vcombine.high %v6413, %v6413
      %v6422 = vcombine.high %v6420, %v6420
      %v6424 = vunpack.c.l.s4 1966171168
      %v6425 = vunpack.c.0.s8 %v6424
      %v6426 = vlaneseq
      %v6427 = vshrl.u32 %v6426, 7
      %v6428 = vsub.s32 %v6425, %v6427
      %v6429 = vrot.slane %v6413, %v6428
      %v6431 = vunpack.c.l.s4 1966171168
      %v6432 = vunpack.c.0.s8 %v6431
      %v6433 = vlaneseq
      %v6434 = vshrl.u32 %v6433, 7
      %v6435 = vsub.s32 %v6432, %v6434
      %v6436 = vrot.slane %v6420, %v6435
      %v6438 = vunpack.c.l.s4 1966171168
      %v6439 = vunpack.c.0.s8 %v6438
      %v6440 = vlaneseq
      %v6441 = vshrl.u32 %v6440, 7
      %v6442 = vsub.s32 %v6439, %v6441
      %v6443 = vrot.slane %v6421, %v6442
      %v6445 = vunpack.c.l.s4 1966171168
      %v6446 = vunpack.c.0.s8 %v6445
      %v6447 = vlaneseq
      %v6448 = vshrl.u32 %v6447, 7
      %v6449 = vsub.s32 %v6446, %v6448
      %v6450 = vrot.slane %v6422, %v6449
      %v6451 = vcombine.high %v6429, %v6429
      %v6452 = vcombine.high %v6436, %v6436
      %v6453 = vcombine.high %v6443, %v6443
      %v6454 = vcombine.high %v6450, %v6450
      %v6455 = vcombine.low %v5751, %v5211
      %v6457 = vunpack.c.l.s4 1966171168
      %v6458 = vunpack.c.0.s8 %v6457
      %v6459 = vlaneseq
      %v6460 = vshrl.u32 %v6459, 7
      %v6461 = vsub.s32 %v6458, %v6460
      %v6462 = vrot.slane %v6455, %v6461
      %v6464 = vunpack.c.l.s4 1966171168
      %v6465 = vunpack.c.0.s8 %v6464
      %v6466 = vlaneseq
      %v6467 = vshrl.u32 %v6466, 7
      %v6468 = vsub.s32 %v6465, %v6467
      %v6469 = vrot.slane %v6462, %v6468
      %v6470 = vcombine.low %v5753, %v5213
      %v6471 = vcombine.high %v5753, %v5213
      %v6473 = vunpack.c.l.s4 1966171168
      %v6474 = vunpack.c.0.s8 %v6473
      %v6475 = vlaneseq
      %v6476 = vshrl.u32 %v6475, 7
      %v6477 = vsub.s32 %v6474, %v6476
      %v6478 = vrot.slane %v6470, %v6477
      %v6480 = vunpack.c.l.s4 1966171168
      %v6481 = vunpack.c.0.s8 %v6480
      %v6482 = vlaneseq
      %v6483 = vshrl.u32 %v6482, 7
      %v6484 = vsub.s32 %v6481, %v6483
      %v6485 = vrot.slane %v6471, %v6484
      %v6486 = vcombine.high %v6478, %v6478
      %v6487 = vcombine.high %v6485, %v6485
      %v6489 = vunpack.c.l.s4 1966171168
      %v6490 = vunpack.c.0.s8 %v6489
      %v6491 = vlaneseq
      %v6492 = vshrl.u32 %v6491, 7
      %v6493 = vsub.s32 %v6490, %v6492
      %v6494 = vrot.slane %v6478, %v6493
      %v6496 = vunpack.c.l.s4 1966171168
      %v6497 = vunpack.c.0.s8 %v6496
      %v6498 = vlaneseq
      %v6499 = vshrl.u32 %v6498, 7
      %v6500 = vsub.s32 %v6497, %v6499
      %v6501 = vrot.slane %v6485, %v6500
      %v6503 = vunpack.c.l.s4 1966171168
      %v6504 = vunpack.c.0.s8 %v6503
      %v6505 = vlaneseq
      %v6506 = vshrl.u32 %v6505, 7
      %v6507 = vsub.s32 %v6504, %v6506
      %v6508 = vrot.slane %v6486, %v6507
      %v6510 = vunpack.c.l.s4 1966171168
      %v6511 = vunpack.c.0.s8 %v6510
      %v6512 = vlaneseq
      %v6513 = vshrl.u32 %v6512, 7
      %v6514 = vsub.s32 %v6511, %v6513
      %v6515 = vrot.slane %v6487, %v6514
      %v6516 = vcombine.high %v6494, %v6494
      %v6517 = vcombine.high %v6501, %v6501
      %v6518 = vcombine.high %v6508, %v6508
      %v6519 = vcombine.high %v6515, %v6515
      %v6520 = vcombine.low %v5755, %v5215
      %v6522 = vunpack.c.l.s4 1966171168
      %v6523 = vunpack.c.0.s8 %v6522
      %v6524 = vlaneseq
      %v6525 = vshrl.u32 %v6524, 7
      %v6526 = vsub.s32 %v6523, %v6525
      %v6527 = vrot.slane %v6520, %v6526
      %v6529 = vunpack.c.l.s4 1966171168
      %v6530 = vunpack.c.0.s8 %v6529
      %v6531 = vlaneseq
      %v6532 = vshrl.u32 %v6531, 7
      %v6533 = vsub.s32 %v6530, %v6532
      %v6534 = vrot.slane %v6527, %v6533
      %v6535 = vcombine.low %v5757, %v5217
      %v6536 = vcombine.high %v5757, %v5217
      %v6538 = vunpack.c.l.s4 1966171168
      %v6539 = vunpack.c.0.s8 %v6538
      %v6540 = vlaneseq
      %v6541 = vshrl.u32 %v6540, 7
      %v6542 = vsub.s32 %v6539, %v6541
      %v6543 = vrot.slane %v6535, %v6542
      %v6545 = vunpack.c.l.s4 1966171168
      %v6546 = vunpack.c.0.s8 %v6545
      %v6547 = vlaneseq
      %v6548 = vshrl.u32 %v6547, 7
      %v6549 = vsub.s32 %v6546, %v6548
      %v6550 = vrot.slane %v6536, %v6549
      %v6551 = vcombine.high %v6543, %v6543
      %v6552 = vcombine.high %v6550, %v6550
      %v6554 = vunpack.c.l.s4 1966171168
      %v6555 = vunpack.c.0.s8 %v6554
      %v6556 = vlaneseq
      %v6557 = vshrl.u32 %v6556, 7
      %v6558 = vsub.s32 %v6555, %v6557
      %v6559 = vrot.slane %v6543, %v6558
      %v6561 = vunpack.c.l.s4 1966171168
      %v6562 = vunpack.c.0.s8 %v6561
      %v6563 = vlaneseq
      %v6564 = vshrl.u32 %v6563, 7
      %v6565 = vsub.s32 %v6562, %v6564
      %v6566 = vrot.slane %v6550, %v6565
      %v6568 = vunpack.c.l.s4 1966171168
      %v6569 = vunpack.c.0.s8 %v6568
      %v6570 = vlaneseq
      %v6571 = vshrl.u32 %v6570, 7
      %v6572 = vsub.s32 %v6569, %v6571
      %v6573 = vrot.slane %v6551, %v6572
      %v6575 = vunpack.c.l.s4 1966171168
      %v6576 = vunpack.c.0.s8 %v6575
      %v6577 = vlaneseq
      %v6578 = vshrl.u32 %v6577, 7
      %v6579 = vsub.s32 %v6576, %v6578
      %v6580 = vrot.slane %v6552, %v6579
      %v6581 = vcombine.high %v6559, %v6559
      %v6582 = vcombine.high %v6566, %v6566
      %v6583 = vcombine.high %v6573, %v6573
      %v6584 = vcombine.high %v6580, %v6580
      %v6585 = vcombine.low %v5759, %v5219
      %v6587 = vunpack.c.l.s4 1966171168
      %v6588 = vunpack.c.0.s8 %v6587
      %v6589 = vlaneseq
      %v6590 = vshrl.u32 %v6589, 7
      %v6591 = vsub.s32 %v6588, %v6590
      %v6592 = vrot.slane %v6585, %v6591
      %v6594 = vunpack.c.l.s4 1966171168
      %v6595 = vunpack.c.0.s8 %v6594
      %v6596 = vlaneseq
      %v6597 = vshrl.u32 %v6596, 7
      %v6598 = vsub.s32 %v6595, %v6597
      %v6599 = vrot.slane %v6592, %v6598
      %v6600 = vcombine.low %v5761, %v5221
      %v6601 = vcombine.high %v5761, %v5221
      %v6603 = vunpack.c.l.s4 1966171168
      %v6604 = vunpack.c.0.s8 %v6603
      %v6605 = vlaneseq
      %v6606 = vshrl.u32 %v6605, 7
      %v6607 = vsub.s32 %v6604, %v6606
      %v6608 = vrot.slane %v6600, %v6607
      %v6610 = vunpack.c.l.s4 1966171168
      %v6611 = vunpack.c.0.s8 %v6610
      %v6612 = vlaneseq
      %v6613 = vshrl.u32 %v6612, 7
      %v6614 = vsub.s32 %v6611, %v6613
      %v6615 = vrot.slane %v6601, %v6614
      %v6616 = vcombine.high %v6608, %v6608
      %v6617 = vcombine.high %v6615, %v6615
      %v6619 = vunpack.c.l.s4 1966171168
      %v6620 = vunpack.c.0.s8 %v6619
      %v6621 = vlaneseq
      %v6622 = vshrl.u32 %v6621, 7
      %v6623 = vsub.s32 %v6620, %v6622
      %v6624 = vrot.slane %v6608, %v6623
      %v6626 = vunpack.c.l.s4 1966171168
      %v6627 = vunpack.c.0.s8 %v6626
      %v6628 = vlaneseq
      %v6629 = vshrl.u32 %v6628, 7
      %v6630 = vsub.s32 %v6627, %v6629
      %v6631 = vrot.slane %v6615, %v6630
      %v6633 = vunpack.c.l.s4 1966171168
      %v6634 = vunpack.c.0.s8 %v6633
      %v6635 = vlaneseq
      %v6636 = vshrl.u32 %v6635, 7
      %v6637 = vsub.s32 %v6634, %v6636
      %v6638 = vrot.slane %v6616, %v6637
      %v6640 = vunpack.c.l.s4 1966171168
      %v6641 = vunpack.c.0.s8 %v6640
      %v6642 = vlaneseq
      %v6643 = vshrl.u32 %v6642, 7
      %v6644 = vsub.s32 %v6641, %v6643
      %v6645 = vrot.slane %v6617, %v6644
      %v6646 = vcombine.high %v6624, %v6624
      %v6647 = vcombine.high %v6631, %v6631
      %v6648 = vcombine.high %v6638, %v6638
      %v6649 = vcombine.high %v6645, %v6645
      %v6650 = vcombine.low %v5763, %v5223
      %v6652 = vunpack.c.l.s4 1966171168
      %v6653 = vunpack.c.0.s8 %v6652
      %v6654 = vlaneseq
      %v6655 = vshrl.u32 %v6654, 7
      %v6656 = vsub.s32 %v6653, %v6655
      %v6657 = vrot.slane %v6650, %v6656
      %v6659 = vunpack.c.l.s4 1966171168
      %v6660 = vunpack.c.0.s8 %v6659
      %v6661 = vlaneseq
      %v6662 = vshrl.u32 %v6661, 7
      %v6663 = vsub.s32 %v6660, %v6662
      %v6664 = vrot.slane %v6657, %v6663
      %v6665 = vcombine.low %v5765, %v5225
      %v6666 = vcombine.high %v5765, %v5225
      %v6668 = vunpack.c.l.s4 1966171168
      %v6669 = vunpack.c.0.s8 %v6668
      %v6670 = vlaneseq
      %v6671 = vshrl.u32 %v6670, 7
      %v6672 = vsub.s32 %v6669, %v6671
      %v6673 = vrot.slane %v6665, %v6672
      %v6675 = vunpack.c.l.s4 1966171168
      %v6676 = vunpack.c.0.s8 %v6675
      %v6677 = vlaneseq
      %v6678 = vshrl.u32 %v6677, 7
      %v6679 = vsub.s32 %v6676, %v6678
      %v6680 = vrot.slane %v6666, %v6679
      %v6681 = vcombine.high %v6673, %v6673
      %v6682 = vcombine.high %v6680, %v6680
      %v6684 = vunpack.c.l.s4 1966171168
      %v6685 = vunpack.c.0.s8 %v6684
      %v6686 = vlaneseq
      %v6687 = vshrl.u32 %v6686, 7
      %v6688 = vsub.s32 %v6685, %v6687
      %v6689 = vrot.slane %v6673, %v6688
      %v6691 = vunpack.c.l.s4 1966171168
      %v6692 = vunpack.c.0.s8 %v6691
      %v6693 = vlaneseq
      %v6694 = vshrl.u32 %v6693, 7
      %v6695 = vsub.s32 %v6692, %v6694
      %v6696 = vrot.slane %v6680, %v6695
      %v6698 = vunpack.c.l.s4 1966171168
      %v6699 = vunpack.c.0.s8 %v6698
      %v6700 = vlaneseq
      %v6701 = vshrl.u32 %v6700, 7
      %v6702 = vsub.s32 %v6699, %v6701
      %v6703 = vrot.slane %v6681, %v6702
      %v6705 = vunpack.c.l.s4 1966171168
      %v6706 = vunpack.c.0.s8 %v6705
      %v6707 = vlaneseq
      %v6708 = vshrl.u32 %v6707, 7
      %v6709 = vsub.s32 %v6706, %v6708
      %v6710 = vrot.slane %v6682, %v6709
      %v6711 = vcombine.high %v6689, %v6689
      %v6712 = vcombine.high %v6696, %v6696
      %v6713 = vcombine.high %v6703, %v6703
      %v6714 = vcombine.high %v6710, %v6710
      %v6715 = vcombine.low %v5767, %v5227
      %v6717 = vunpack.c.l.s4 1966171168
      %v6718 = vunpack.c.0.s8 %v6717
      %v6719 = vlaneseq
      %v6720 = vshrl.u32 %v6719, 7
      %v6721 = vsub.s32 %v6718, %v6720
      %v6722 = vrot.slane %v6715, %v6721
      %v6724 = vunpack.c.l.s4 1966171168
      %v6725 = vunpack.c.0.s8 %v6724
      %v6726 = vlaneseq
      %v6727 = vshrl.u32 %v6726, 7
      %v6728 = vsub.s32 %v6725, %v6727
      %v6729 = vrot.slane %v6722, %v6728
      %v6730 = vcombine.low %v5769, %v5229
      %v6731 = vcombine.high %v5769, %v5229
      %v6733 = vunpack.c.l.s4 1966171168
      %v6734 = vunpack.c.0.s8 %v6733
      %v6735 = vlaneseq
      %v6736 = vshrl.u32 %v6735, 7
      %v6737 = vsub.s32 %v6734, %v6736
      %v6738 = vrot.slane %v6730, %v6737
      %v6740 = vunpack.c.l.s4 1966171168
      %v6741 = vunpack.c.0.s8 %v6740
      %v6742 = vlaneseq
      %v6743 = vshrl.u32 %v6742, 7
      %v6744 = vsub.s32 %v6741, %v6743
      %v6745 = vrot.slane %v6731, %v6744
      %v6746 = vcombine.high %v6738, %v6738
      %v6747 = vcombine.high %v6745, %v6745
      %v6749 = vunpack.c.l.s4 1966171168
      %v6750 = vunpack.c.0.s8 %v6749
      %v6751 = vlaneseq
      %v6752 = vshrl.u32 %v6751, 7
      %v6753 = vsub.s32 %v6750, %v6752
      %v6754 = vrot.slane %v6738, %v6753
      %v6756 = vunpack.c.l.s4 1966171168
      %v6757 = vunpack.c.0.s8 %v6756
      %v6758 = vlaneseq
      %v6759 = vshrl.u32 %v6758, 7
      %v6760 = vsub.s32 %v6757, %v6759
      %v6761 = vrot.slane %v6745, %v6760
      %v6763 = vunpack.c.l.s4 1966171168
      %v6764 = vunpack.c.0.s8 %v6763
      %v6765 = vlaneseq
      %v6766 = vshrl.u32 %v6765, 7
      %v6767 = vsub.s32 %v6764, %v6766
      %v6768 = vrot.slane %v6746, %v6767
      %v6770 = vunpack.c.l.s4 1966171168
      %v6771 = vunpack.c.0.s8 %v6770
      %v6772 = vlaneseq
      %v6773 = vshrl.u32 %v6772, 7
      %v6774 = vsub.s32 %v6771, %v6773
      %v6775 = vrot.slane %v6747, %v6774
      %v6776 = vcombine.high %v6754, %v6754
      %v6777 = vcombine.high %v6761, %v6761
      %v6778 = vcombine.high %v6768, %v6768
      %v6779 = vcombine.high %v6775, %v6775
      %v6780 = vcombine.low %v5771, %v5231
      %v6782 = vunpack.c.l.s4 1966171168
      %v6783 = vunpack.c.0.s8 %v6782
      %v6784 = vlaneseq
      %v6785 = vshrl.u32 %v6784, 7
      %v6786 = vsub.s32 %v6783, %v6785
      %v6787 = vrot.slane %v6780, %v6786
      %v6789 = vunpack.c.l.s4 1966171168
      %v6790 = vunpack.c.0.s8 %v6789
      %v6791 = vlaneseq
      %v6792 = vshrl.u32 %v6791, 7
      %v6793 = vsub.s32 %v6790, %v6792
      %v6794 = vrot.slane %v6787, %v6793
      %v6795 = vcombine.low %v5773, %v5233
      %v6796 = vcombine.high %v5773, %v5233
      %v6798 = vunpack.c.l.s4 1966171168
      %v6799 = vunpack.c.0.s8 %v6798
      %v6800 = vlaneseq
      %v6801 = vshrl.u32 %v6800, 7
      %v6802 = vsub.s32 %v6799, %v6801
      %v6803 = vrot.slane %v6795, %v6802
      %v6805 = vunpack.c.l.s4 1966171168
      %v6806 = vunpack.c.0.s8 %v6805
      %v6807 = vlaneseq
      %v6808 = vshrl.u32 %v6807, 7
      %v6809 = vsub.s32 %v6806, %v6808
      %v6810 = vrot.slane %v6796, %v6809
      %v6811 = vcombine.high %v6803, %v6803
      %v6812 = vcombine.high %v6810, %v6810
      %v6814 = vunpack.c.l.s4 1966171168
      %v6815 = vunpack.c.0.s8 %v6814
      %v6816 = vlaneseq
      %v6817 = vshrl.u32 %v6816, 7
      %v6818 = vsub.s32 %v6815, %v6817
      %v6819 = vrot.slane %v6803, %v6818
      %v6821 = vunpack.c.l.s4 1966171168
      %v6822 = vunpack.c.0.s8 %v6821
      %v6823 = vlaneseq
      %v6824 = vshrl.u32 %v6823, 7
      %v6825 = vsub.s32 %v6822, %v6824
      %v6826 = vrot.slane %v6810, %v6825
      %v6828 = vunpack.c.l.s4 1966171168
      %v6829 = vunpack.c.0.s8 %v6828
      %v6830 = vlaneseq
      %v6831 = vshrl.u32 %v6830, 7
      %v6832 = vsub.s32 %v6829, %v6831
      %v6833 = vrot.slane %v6811, %v6832
      %v6835 = vunpack.c.l.s4 1966171168
      %v6836 = vunpack.c.0.s8 %v6835
      %v6837 = vlaneseq
      %v6838 = vshrl.u32 %v6837, 7
      %v6839 = vsub.s32 %v6836, %v6838
      %v6840 = vrot.slane %v6812, %v6839
      %v6841 = vcombine.high %v6819, %v6819
      %v6842 = vcombine.high %v6826, %v6826
      %v6843 = vcombine.high %v6833, %v6833
      %v6844 = vcombine.high %v6840, %v6840
      %v6845 = vcombine.low %v5775, %v5235
      %v6847 = vunpack.c.l.s4 1966171168
      %v6848 = vunpack.c.0.s8 %v6847
      %v6849 = vlaneseq
      %v6850 = vshrl.u32 %v6849, 7
      %v6851 = vsub.s32 %v6848, %v6850
      %v6852 = vrot.slane %v6845, %v6851
      %v6854 = vunpack.c.l.s4 1966171168
      %v6855 = vunpack.c.0.s8 %v6854
      %v6856 = vlaneseq
      %v6857 = vshrl.u32 %v6856, 7
      %v6858 = vsub.s32 %v6855, %v6857
      %v6859 = vrot.slane %v6852, %v6858
      %v6860 = vcombine.low %v5777, %v5237
      %v6861 = vcombine.high %v5777, %v5237
      %v6863 = vunpack.c.l.s4 1966171168
      %v6864 = vunpack.c.0.s8 %v6863
      %v6865 = vlaneseq
      %v6866 = vshrl.u32 %v6865, 7
      %v6867 = vsub.s32 %v6864, %v6866
      %v6868 = vrot.slane %v6860, %v6867
      %v6870 = vunpack.c.l.s4 1966171168
      %v6871 = vunpack.c.0.s8 %v6870
      %v6872 = vlaneseq
      %v6873 = vshrl.u32 %v6872, 7
      %v6874 = vsub.s32 %v6871, %v6873
      %v6875 = vrot.slane %v6861, %v6874
      %v6876 = vcombine.high %v6868, %v6868
      %v6877 = vcombine.high %v6875, %v6875
      %v6879 = vunpack.c.l.s4 1966171168
      %v6880 = vunpack.c.0.s8 %v6879
      %v6881 = vlaneseq
      %v6882 = vshrl.u32 %v6881, 7
      %v6883 = vsub.s32 %v6880, %v6882
      %v6884 = vrot.slane %v6868, %v6883
      %v6886 = vunpack.c.l.s4 1966171168
      %v6887 = vunpack.c.0.s8 %v6886
      %v6888 = vlaneseq
      %v6889 = vshrl.u32 %v6888, 7
      %v6890 = vsub.s32 %v6887, %v6889
      %v6891 = vrot.slane %v6875, %v6890
      %v6893 = vunpack.c.l.s4 1966171168
      %v6894 = vunpack.c.0.s8 %v6893
      %v6895 = vlaneseq
      %v6896 = vshrl.u32 %v6895, 7
      %v6897 = vsub.s32 %v6894, %v6896
      %v6898 = vrot.slane %v6876, %v6897
      %v6900 = vunpack.c.l.s4 1966171168
      %v6901 = vunpack.c.0.s8 %v6900
      %v6902 = vlaneseq
      %v6903 = vshrl.u32 %v6902, 7
      %v6904 = vsub.s32 %v6901, %v6903
      %v6905 = vrot.slane %v6877, %v6904
      %v6906 = vcombine.high %v6884, %v6884
      %v6907 = vcombine.high %v6891, %v6891
      %v6908 = vcombine.high %v6898, %v6898
      %v6909 = vcombine.high %v6905, %v6905
      %v6910 = vcombine.low %v5779, %v5239
      %v6912 = vunpack.c.l.s4 1966171168
      %v6913 = vunpack.c.0.s8 %v6912
      %v6914 = vlaneseq
      %v6915 = vshrl.u32 %v6914, 7
      %v6916 = vsub.s32 %v6913, %v6915
      %v6917 = vrot.slane %v6910, %v6916
      %v6919 = vunpack.c.l.s4 1966171168
      %v6920 = vunpack.c.0.s8 %v6919
      %v6921 = vlaneseq
      %v6922 = vshrl.u32 %v6921, 7
      %v6923 = vsub.s32 %v6920, %v6922
      %v6924 = vrot.slane %v6917, %v6923
      %v6925 = vcombine.low %v5781, %v5241
      %v6926 = vcombine.high %v5781, %v5241
      %v6928 = vunpack.c.l.s4 1966171168
      %v6929 = vunpack.c.0.s8 %v6928
      %v6930 = vlaneseq
      %v6931 = vshrl.u32 %v6930, 7
      %v6932 = vsub.s32 %v6929, %v6931
      %v6933 = vrot.slane %v6925, %v6932
      %v6935 = vunpack.c.l.s4 1966171168
      %v6936 = vunpack.c.0.s8 %v6935
      %v6937 = vlaneseq
      %v6938 = vshrl.u32 %v6937, 7
      %v6939 = vsub.s32 %v6936, %v6938
      %v6940 = vrot.slane %v6926, %v6939
      %v6941 = vcombine.high %v6933, %v6933
      %v6942 = vcombine.high %v6940, %v6940
      %v6944 = vunpack.c.l.s4 1966171168
      %v6945 = vunpack.c.0.s8 %v6944
      %v6946 = vlaneseq
      %v6947 = vshrl.u32 %v6946, 7
      %v6948 = vsub.s32 %v6945, %v6947
      %v6949 = vrot.slane %v6933, %v6948
      %v6951 = vunpack.c.l.s4 1966171168
      %v6952 = vunpack.c.0.s8 %v6951
      %v6953 = vlaneseq
      %v6954 = vshrl.u32 %v6953, 7
      %v6955 = vsub.s32 %v6952, %v6954
      %v6956 = vrot.slane %v6940, %v6955
      %v6958 = vunpack.c.l.s4 1966171168
      %v6959 = vunpack.c.0.s8 %v6958
      %v6960 = vlaneseq
      %v6961 = vshrl.u32 %v6960, 7
      %v6962 = vsub.s32 %v6959, %v6961
      %v6963 = vrot.slane %v6941, %v6962
      %v6965 = vunpack.c.l.s4 1966171168
      %v6966 = vunpack.c.0.s8 %v6965
      %v6967 = vlaneseq
      %v6968 = vshrl.u32 %v6967, 7
      %v6969 = vsub.s32 %v6966, %v6968
      %v6970 = vrot.slane %v6942, %v6969
      %v6971 = vcombine.high %v6949, %v6949
      %v6972 = vcombine.high %v6956, %v6956
      %v6973 = vcombine.high %v6963, %v6963
      %v6974 = vcombine.high %v6970, %v6970
      %v6975 = vcombine.low %v5783, %v5243
      %v6977 = vunpack.c.l.s4 1966171168
      %v6978 = vunpack.c.0.s8 %v6977
      %v6979 = vlaneseq
      %v6980 = vshrl.u32 %v6979, 7
      %v6981 = vsub.s32 %v6978, %v6980
      %v6982 = vrot.slane %v6975, %v6981
      %v6984 = vunpack.c.l.s4 1966171168
      %v6985 = vunpack.c.0.s8 %v6984
      %v6986 = vlaneseq
      %v6987 = vshrl.u32 %v6986, 7
      %v6988 = vsub.s32 %v6985, %v6987
      %v6989 = vrot.slane %v6982, %v6988
      %v6990 = vld [vmem:[%s5] sm:$0xf]
      %v6991 = vld [vmem:[%s5 + $0x4] sm:$0xf]
      %v6992 = vld [vmem:[%s5 + $0x8] sm:$0xf]
      %v6993 = vld [vmem:[%s5 + $0xc] sm:$0xf]
      %v6994 = vld [vmem:[%s5 + $0x10] sm:$0xf]
      %v6995 = vld [vmem:[%s5 + $0x14] sm:$0xf]
      %v6996 = vld [vmem:[%s5 + $0x18] sm:$0xf]
      %v6997 = vld [vmem:[%s5 + $0x1c] sm:$0xf]
      %v6998 = vld [vmem:[%s5 + $0x20] sm:$0xf]
      %v6999 = vld [vmem:[%s5 + $0x24] sm:$0xf]
      %v7000 = vld [vmem:[%s5 + $0x28] sm:$0xf]
      %v7001 = vld [vmem:[%s5 + $0x2c] sm:$0xf]
      %v7002 = vld [vmem:[%s5 + $0x30] sm:$0xf]
      %v7003 = vld [vmem:[%s5 + $0x34] sm:$0xf]
      %v7004 = vld [vmem:[%s5 + $0x38] sm:$0xf]
      %v7005 = vld [vmem:[%s5 + $0x3c] sm:$0xf]
      %v7006 = vld [vmem:[%s5 + $0x40] sm:$0xf]
      %v7007 = vld [vmem:[%s5 + $0x44] sm:$0xf]
      %v7008 = vld [vmem:[%s6] sm:$0x1]
      %v7010 = vlaneseq
      %v7011 = vshrl.u32 %v7010, 7
      %v7012 = vsub.s32 0, %v7011
      %v7013 = vrot.slane %v7008, %v7012
      %v7015 = vcombine.low %v5844, %v5858
      %v7016 = vcombine.low %v5866, %v5868
      %v7017 = vcombine.low %v5851, %v5865
      %v7018 = vcombine.low %v5867, %v5869
      %v7020 = vunpack.c.l.s4 1966171168
      %v7021 = vunpack.c.0.s8 %v7020
      %v7022 = vlaneseq
      %v7023 = vshrl.u32 %v7022, 7
      %v7024 = vsub.s32 %v7021, %v7023
      %v7025 = vrot.slane %v7015, %v7024
      %v7027 = vunpack.c.l.s4 1966171168
      %v7028 = vunpack.c.0.s8 %v7027
      %v7029 = vlaneseq
      %v7030 = vshrl.u32 %v7029, 7
      %v7031 = vsub.s32 %v7028, %v7030
      %v7032 = vrot.slane %v7016, %v7031
      %v7034 = vunpack.c.l.s4 1966171168
      %v7035 = vunpack.c.0.s8 %v7034
      %v7036 = vlaneseq
      %v7037 = vshrl.u32 %v7036, 7
      %v7038 = vsub.s32 %v7035, %v7037
      %v7039 = vrot.slane %v7017, %v7038
      %v7041 = vunpack.c.l.s4 1966171168
      %v7042 = vunpack.c.0.s8 %v7041
      %v7043 = vlaneseq
      %v7044 = vshrl.u32 %v7043, 7
      %v7045 = vsub.s32 %v7042, %v7044
      %v7046 = vrot.slane %v7018, %v7045
      %v7047 = vcombine.low %v7025, %v7032
      %v7048 = vcombine.high %v7025, %v7032
      %v7049 = vcombine.low %v7039, %v7046
      %v7050 = vcombine.high %v7039, %v7046
      %v7052 = vunpack.c.l.s4 1966171168
      %v7053 = vunpack.c.0.s8 %v7052
      %v7054 = vlaneseq
      %v7055 = vshrl.u32 %v7054, 7
      %v7056 = vsub.s32 %v7053, %v7055
      %v7057 = vrot.slane %v7047, %v7056
      %v7059 = vunpack.c.l.s4 1966171168
      %v7060 = vunpack.c.0.s8 %v7059
      %v7061 = vlaneseq
      %v7062 = vshrl.u32 %v7061, 7
      %v7063 = vsub.s32 %v7060, %v7062
      %v7064 = vrot.slane %v7048, %v7063
      %v7066 = vunpack.c.l.s4 1966171168
      %v7067 = vunpack.c.0.s8 %v7066
      %v7068 = vlaneseq
      %v7069 = vshrl.u32 %v7068, 7
      %v7070 = vsub.s32 %v7067, %v7069
      %v7071 = vrot.slane %v7049, %v7070
      %v7073 = vunpack.c.l.s4 1966171168
      %v7074 = vunpack.c.0.s8 %v7073
      %v7075 = vlaneseq
      %v7076 = vshrl.u32 %v7075, 7
      %v7077 = vsub.s32 %v7074, %v7076
      %v7078 = vrot.slane %v7050, %v7077
      %v7079 = vcombine.low %v7057, %v7071
      %v7080 = vcombine.low %v7064, %v7078
      %v7081 = vcombine.low %v5884, %v5909
      %v7082 = vcombine.low %v5923, %v5931
      %v7083 = vcombine.low %v5933, %v5916
      %v7084 = vcombine.low %v5930, %v5932
      %v7086 = vunpack.c.l.s4 1966171168
      %v7087 = vunpack.c.0.s8 %v7086
      %v7088 = vlaneseq
      %v7089 = vshrl.u32 %v7088, 7
      %v7090 = vsub.s32 %v7087, %v7089
      %v7091 = vrot.slane %v7081, %v7090
      %v7093 = vunpack.c.l.s4 1966171168
      %v7094 = vunpack.c.0.s8 %v7093
      %v7095 = vlaneseq
      %v7096 = vshrl.u32 %v7095, 7
      %v7097 = vsub.s32 %v7094, %v7096
      %v7098 = vrot.slane %v7082, %v7097
      %v7100 = vunpack.c.l.s4 1966171168
      %v7101 = vunpack.c.0.s8 %v7100
      %v7102 = vlaneseq
      %v7103 = vshrl.u32 %v7102, 7
      %v7104 = vsub.s32 %v7101, %v7103
      %v7105 = vrot.slane %v7083, %v7104
      %v7107 = vunpack.c.l.s4 1966171168
      %v7108 = vunpack.c.0.s8 %v7107
      %v7109 = vlaneseq
      %v7110 = vshrl.u32 %v7109, 7
      %v7111 = vsub.s32 %v7108, %v7110
      %v7112 = vrot.slane %v7084, %v7111
      %v7113 = vcombine.low %v7091, %v7098
      %v7114 = vcombine.high %v7091, %v7098
      %v7115 = vcombine.low %v7105, %v7112
      %v7116 = vcombine.high %v7105, %v7112
      %v7118 = vunpack.c.l.s4 1966171168
      %v7119 = vunpack.c.0.s8 %v7118
      %v7120 = vlaneseq
      %v7121 = vshrl.u32 %v7120, 7
      %v7122 = vsub.s32 %v7119, %v7121
      %v7123 = vrot.slane %v7113, %v7122
      %v7125 = vunpack.c.l.s4 1966171168
      %v7126 = vunpack.c.0.s8 %v7125
      %v7127 = vlaneseq
      %v7128 = vshrl.u32 %v7127, 7
      %v7129 = vsub.s32 %v7126, %v7128
      %v7130 = vrot.slane %v7114, %v7129
      %v7132 = vunpack.c.l.s4 1966171168
      %v7133 = vunpack.c.0.s8 %v7132
      %v7134 = vlaneseq
      %v7135 = vshrl.u32 %v7134, 7
      %v7136 = vsub.s32 %v7133, %v7135
      %v7137 = vrot.slane %v7115, %v7136
      %v7139 = vunpack.c.l.s4 1966171168
      %v7140 = vunpack.c.0.s8 %v7139
      %v7141 = vlaneseq
      %v7142 = vshrl.u32 %v7141, 7
      %v7143 = vsub.s32 %v7140, %v7142
      %v7144 = vrot.slane %v7116, %v7143
      %v7145 = vcombine.low %v7123, %v7137
      %v7146 = vcombine.low %v7130, %v7144
      %v7147 = vcombine.low %v5934, %v5949
      %v7148 = vcombine.low %v5974, %v5988
      %v7149 = vcombine.low %v5996, %v5998
      %v7150 = vcombine.low %v5981, %v5995
      %v7152 = vunpack.c.l.s4 1966171168
      %v7153 = vunpack.c.0.s8 %v7152
      %v7154 = vlaneseq
      %v7155 = vshrl.u32 %v7154, 7
      %v7156 = vsub.s32 %v7153, %v7155
      %v7157 = vrot.slane %v7147, %v7156
      %v7159 = vunpack.c.l.s4 1966171168
      %v7160 = vunpack.c.0.s8 %v7159
      %v7161 = vlaneseq
      %v7162 = vshrl.u32 %v7161, 7
      %v7163 = vsub.s32 %v7160, %v7162
      %v7164 = vrot.slane %v7148, %v7163
      %v7166 = vunpack.c.l.s4 1966171168
      %v7167 = vunpack.c.0.s8 %v7166
      %v7168 = vlaneseq
      %v7169 = vshrl.u32 %v7168, 7
      %v7170 = vsub.s32 %v7167, %v7169
      %v7171 = vrot.slane %v7149, %v7170
      %v7173 = vunpack.c.l.s4 1966171168
      %v7174 = vunpack.c.0.s8 %v7173
      %v7175 = vlaneseq
      %v7176 = vshrl.u32 %v7175, 7
      %v7177 = vsub.s32 %v7174, %v7176
      %v7178 = vrot.slane %v7150, %v7177
      %v7179 = vcombine.low %v7157, %v7164
      %v7180 = vcombine.high %v7157, %v7164
      %v7181 = vcombine.low %v7171, %v7178
      %v7182 = vcombine.high %v7171, %v7178
      %v7184 = vunpack.c.l.s4 1966171168
      %v7185 = vunpack.c.0.s8 %v7184
      %v7186 = vlaneseq
      %v7187 = vshrl.u32 %v7186, 7
      %v7188 = vsub.s32 %v7185, %v7187
      %v7189 = vrot.slane %v7179, %v7188
      %v7191 = vunpack.c.l.s4 1966171168
      %v7192 = vunpack.c.0.s8 %v7191
      %v7193 = vlaneseq
      %v7194 = vshrl.u32 %v7193, 7
      %v7195 = vsub.s32 %v7192, %v7194
      %v7196 = vrot.slane %v7180, %v7195
      %v7198 = vunpack.c.l.s4 1966171168
      %v7199 = vunpack.c.0.s8 %v7198
      %v7200 = vlaneseq
      %v7201 = vshrl.u32 %v7200, 7
      %v7202 = vsub.s32 %v7199, %v7201
      %v7203 = vrot.slane %v7181, %v7202
      %v7205 = vunpack.c.l.s4 1966171168
      %v7206 = vunpack.c.0.s8 %v7205
      %v7207 = vlaneseq
      %v7208 = vshrl.u32 %v7207, 7
      %v7209 = vsub.s32 %v7206, %v7208
      %v7210 = vrot.slane %v7182, %v7209
      %v7211 = vcombine.low %v7189, %v7203
      %v7212 = vcombine.low %v7196, %v7210
      %v7213 = vcombine.low %v5997, %v5999
      %v7214 = vcombine.low %v6014, %v6039
      %v7215 = vcombine.low %v6053, %v6061
      %v7216 = vcombine.low %v6063, %v6046
      %v7218 = vunpack.c.l.s4 1966171168
      %v7219 = vunpack.c.0.s8 %v7218
      %v7220 = vlaneseq
      %v7221 = vshrl.u32 %v7220, 7
      %v7222 = vsub.s32 %v7219, %v7221
      %v7223 = vrot.slane %v7213, %v7222
      %v7225 = vunpack.c.l.s4 1966171168
      %v7226 = vunpack.c.0.s8 %v7225
      %v7227 = vlaneseq
      %v7228 = vshrl.u32 %v7227, 7
      %v7229 = vsub.s32 %v7226, %v7228
      %v7230 = vrot.slane %v7214, %v7229
      %v7232 = vunpack.c.l.s4 1966171168
      %v7233 = vunpack.c.0.s8 %v7232
      %v7234 = vlaneseq
      %v7235 = vshrl.u32 %v7234, 7
      %v7236 = vsub.s32 %v7233, %v7235
      %v7237 = vrot.slane %v7215, %v7236
      %v7239 = vunpack.c.l.s4 1966171168
      %v7240 = vunpack.c.0.s8 %v7239
      %v7241 = vlaneseq
      %v7242 = vshrl.u32 %v7241, 7
      %v7243 = vsub.s32 %v7240, %v7242
      %v7244 = vrot.slane %v7216, %v7243
      %v7245 = vcombine.low %v7223, %v7230
      %v7246 = vcombine.high %v7223, %v7230
      %v7247 = vcombine.low %v7237, %v7244
      %v7248 = vcombine.high %v7237, %v7244
      %v7250 = vunpack.c.l.s4 1966171168
      %v7251 = vunpack.c.0.s8 %v7250
      %v7252 = vlaneseq
      %v7253 = vshrl.u32 %v7252, 7
      %v7254 = vsub.s32 %v7251, %v7253
      %v7255 = vrot.slane %v7245, %v7254
      %v7257 = vunpack.c.l.s4 1966171168
      %v7258 = vunpack.c.0.s8 %v7257
      %v7259 = vlaneseq
      %v7260 = vshrl.u32 %v7259, 7
      %v7261 = vsub.s32 %v7258, %v7260
      %v7262 = vrot.slane %v7246, %v7261
      %v7264 = vunpack.c.l.s4 1966171168
      %v7265 = vunpack.c.0.s8 %v7264
      %v7266 = vlaneseq
      %v7267 = vshrl.u32 %v7266, 7
      %v7268 = vsub.s32 %v7265, %v7267
      %v7269 = vrot.slane %v7247, %v7268
      %v7271 = vunpack.c.l.s4 1966171168
      %v7272 = vunpack.c.0.s8 %v7271
      %v7273 = vlaneseq
      %v7274 = vshrl.u32 %v7273, 7
      %v7275 = vsub.s32 %v7272, %v7274
      %v7276 = vrot.slane %v7248, %v7275
      %v7277 = vcombine.low %v7255, %v7269
      %v7278 = vcombine.low %v7262, %v7276
      %v7279 = vcombine.low %v6060, %v6062
      %v7280 = vcombine.low %v6064, %v6079
      %v7281 = vcombine.low %v6104, %v6118
      %v7282 = vcombine.low %v6126, %v6128
      %v7284 = vunpack.c.l.s4 1966171168
      %v7285 = vunpack.c.0.s8 %v7284
      %v7286 = vlaneseq
      %v7287 = vshrl.u32 %v7286, 7
      %v7288 = vsub.s32 %v7285, %v7287
      %v7289 = vrot.slane %v7279, %v7288
      %v7291 = vunpack.c.l.s4 1966171168
      %v7292 = vunpack.c.0.s8 %v7291
      %v7293 = vlaneseq
      %v7294 = vshrl.u32 %v7293, 7
      %v7295 = vsub.s32 %v7292, %v7294
      %v7296 = vrot.slane %v7280, %v7295
      %v7298 = vunpack.c.l.s4 1966171168
      %v7299 = vunpack.c.0.s8 %v7298
      %v7300 = vlaneseq
      %v7301 = vshrl.u32 %v7300, 7
      %v7302 = vsub.s32 %v7299, %v7301
      %v7303 = vrot.slane %v7281, %v7302
      %v7305 = vunpack.c.l.s4 1966171168
      %v7306 = vunpack.c.0.s8 %v7305
      %v7307 = vlaneseq
      %v7308 = vshrl.u32 %v7307, 7
      %v7309 = vsub.s32 %v7306, %v7308
      %v7310 = vrot.slane %v7282, %v7309
      %v7311 = vcombine.low %v7289, %v7296
      %v7312 = vcombine.high %v7289, %v7296
      %v7313 = vcombine.low %v7303, %v7310
      %v7314 = vcombine.high %v7303, %v7310
      %v7316 = vunpack.c.l.s4 1966171168
      %v7317 = vunpack.c.0.s8 %v7316
      %v7318 = vlaneseq
      %v7319 = vshrl.u32 %v7318, 7
      %v7320 = vsub.s32 %v7317, %v7319
      %v7321 = vrot.slane %v7311, %v7320
      %v7323 = vunpack.c.l.s4 1966171168
      %v7324 = vunpack.c.0.s8 %v7323
      %v7325 = vlaneseq
      %v7326 = vshrl.u32 %v7325, 7
      %v7327 = vsub.s32 %v7324, %v7326
      %v7328 = vrot.slane %v7312, %v7327
      %v7330 = vunpack.c.l.s4 1966171168
      %v7331 = vunpack.c.0.s8 %v7330
      %v7332 = vlaneseq
      %v7333 = vshrl.u32 %v7332, 7
      %v7334 = vsub.s32 %v7331, %v7333
      %v7335 = vrot.slane %v7313, %v7334
      %v7337 = vunpack.c.l.s4 1966171168
      %v7338 = vunpack.c.0.s8 %v7337
      %v7339 = vlaneseq
      %v7340 = vshrl.u32 %v7339, 7
      %v7341 = vsub.s32 %v7338, %v7340
      %v7342 = vrot.slane %v7314, %v7341
      %v7343 = vcombine.low %v7321, %v7335
      %v7344 = vcombine.low %v7328, %v7342
      %v7345 = vcombine.low %v6111, %v6125
      %v7346 = vcombine.low %v6127, %v6129
      %v7347 = vcombine.low %v6144, %v6169
      %v7348 = vcombine.low %v6183, %v6191
      %v7350 = vunpack.c.l.s4 1966171168
      %v7351 = vunpack.c.0.s8 %v7350
      %v7352 = vlaneseq
      %v7353 = vshrl.u32 %v7352, 7
      %v7354 = vsub.s32 %v7351, %v7353
      %v7355 = vrot.slane %v7345, %v7354
      %v7357 = vunpack.c.l.s4 1966171168
      %v7358 = vunpack.c.0.s8 %v7357
      %v7359 = vlaneseq
      %v7360 = vshrl.u32 %v7359, 7
      %v7361 = vsub.s32 %v7358, %v7360
      %v7362 = vrot.slane %v7346, %v7361
      %v7364 = vunpack.c.l.s4 1966171168
      %v7365 = vunpack.c.0.s8 %v7364
      %v7366 = vlaneseq
      %v7367 = vshrl.u32 %v7366, 7
      %v7368 = vsub.s32 %v7365, %v7367
      %v7369 = vrot.slane %v7347, %v7368
      %v7371 = vunpack.c.l.s4 1966171168
      %v7372 = vunpack.c.0.s8 %v7371
      %v7373 = vlaneseq
      %v7374 = vshrl.u32 %v7373, 7
      %v7375 = vsub.s32 %v7372, %v7374
      %v7376 = vrot.slane %v7348, %v7375
      %v7377 = vcombine.low %v7355, %v7362
      %v7378 = vcombine.high %v7355, %v7362
      %v7379 = vcombine.low %v7369, %v7376
      %v7380 = vcombine.high %v7369, %v7376
      %v7382 = vunpack.c.l.s4 1966171168
      %v7383 = vunpack.c.0.s8 %v7382
      %v7384 = vlaneseq
      %v7385 = vshrl.u32 %v7384, 7
      %v7386 = vsub.s32 %v7383, %v7385
      %v7387 = vrot.slane %v7377, %v7386
      %v7389 = vunpack.c.l.s4 1966171168
      %v7390 = vunpack.c.0.s8 %v7389
      %v7391 = vlaneseq
      %v7392 = vshrl.u32 %v7391, 7
      %v7393 = vsub.s32 %v7390, %v7392
      %v7394 = vrot.slane %v7378, %v7393
      %v7396 = vunpack.c.l.s4 1966171168
      %v7397 = vunpack.c.0.s8 %v7396
      %v7398 = vlaneseq
      %v7399 = vshrl.u32 %v7398, 7
      %v7400 = vsub.s32 %v7397, %v7399
      %v7401 = vrot.slane %v7379, %v7400
      %v7403 = vunpack.c.l.s4 1966171168
      %v7404 = vunpack.c.0.s8 %v7403
      %v7405 = vlaneseq
      %v7406 = vshrl.u32 %v7405, 7
      %v7407 = vsub.s32 %v7404, %v7406
      %v7408 = vrot.slane %v7380, %v7407
      %v7409 = vcombine.low %v7387, %v7401
      %v7410 = vcombine.low %v7394, %v7408
      %v7411 = vcombine.low %v6193, %v6176
      %v7412 = vcombine.low %v6190, %v6192
      %v7413 = vcombine.low %v6194, %v6209
      %v7414 = vcombine.low %v6234, %v6248
      %v7416 = vunpack.c.l.s4 1966171168
      %v7417 = vunpack.c.0.s8 %v7416
      %v7418 = vlaneseq
      %v7419 = vshrl.u32 %v7418, 7
      %v7420 = vsub.s32 %v7417, %v7419
      %v7421 = vrot.slane %v7411, %v7420
      %v7423 = vunpack.c.l.s4 1966171168
      %v7424 = vunpack.c.0.s8 %v7423
      %v7425 = vlaneseq
      %v7426 = vshrl.u32 %v7425, 7
      %v7427 = vsub.s32 %v7424, %v7426
      %v7428 = vrot.slane %v7412, %v7427
      %v7430 = vunpack.c.l.s4 1966171168
      %v7431 = vunpack.c.0.s8 %v7430
      %v7432 = vlaneseq
      %v7433 = vshrl.u32 %v7432, 7
      %v7434 = vsub.s32 %v7431, %v7433
      %v7435 = vrot.slane %v7413, %v7434
      %v7437 = vunpack.c.l.s4 1966171168
      %v7438 = vunpack.c.0.s8 %v7437
      %v7439 = vlaneseq
      %v7440 = vshrl.u32 %v7439, 7
      %v7441 = vsub.s32 %v7438, %v7440
      %v7442 = vrot.slane %v7414, %v7441
      %v7443 = vcombine.low %v7421, %v7428
      %v7444 = vcombine.high %v7421, %v7428
      %v7445 = vcombine.low %v7435, %v7442
      %v7446 = vcombine.high %v7435, %v7442
      %v7448 = vunpack.c.l.s4 1966171168
      %v7449 = vunpack.c.0.s8 %v7448
      %v7450 = vlaneseq
      %v7451 = vshrl.u32 %v7450, 7
      %v7452 = vsub.s32 %v7449, %v7451
      %v7453 = vrot.slane %v7443, %v7452
      %v7455 = vunpack.c.l.s4 1966171168
      %v7456 = vunpack.c.0.s8 %v7455
      %v7457 = vlaneseq
      %v7458 = vshrl.u32 %v7457, 7
      %v7459 = vsub.s32 %v7456, %v7458
      %v7460 = vrot.slane %v7444, %v7459
      %v7462 = vunpack.c.l.s4 1966171168
      %v7463 = vunpack.c.0.s8 %v7462
      %v7464 = vlaneseq
      %v7465 = vshrl.u32 %v7464, 7
      %v7466 = vsub.s32 %v7463, %v7465
      %v7467 = vrot.slane %v7445, %v7466
      %v7469 = vunpack.c.l.s4 1966171168
      %v7470 = vunpack.c.0.s8 %v7469
      %v7471 = vlaneseq
      %v7472 = vshrl.u32 %v7471, 7
      %v7473 = vsub.s32 %v7470, %v7472
      %v7474 = vrot.slane %v7446, %v7473
      %v7475 = vcombine.low %v7453, %v7467
      %v7476 = vcombine.low %v7460, %v7474
      %v7477 = vcombine.low %v6256, %v6258
      %v7478 = vcombine.low %v6241, %v6255
      %v7479 = vcombine.low %v6257, %v6259
      %v7480 = vcombine.low %v6274, %v6299
      %v7482 = vunpack.c.l.s4 1966171168
      %v7483 = vunpack.c.0.s8 %v7482
      %v7484 = vlaneseq
      %v7485 = vshrl.u32 %v7484, 7
      %v7486 = vsub.s32 %v7483, %v7485
      %v7487 = vrot.slane %v7477, %v7486
      %v7489 = vunpack.c.l.s4 1966171168
      %v7490 = vunpack.c.0.s8 %v7489
      %v7491 = vlaneseq
      %v7492 = vshrl.u32 %v7491, 7
      %v7493 = vsub.s32 %v7490, %v7492
      %v7494 = vrot.slane %v7478, %v7493
      %v7496 = vunpack.c.l.s4 1966171168
      %v7497 = vunpack.c.0.s8 %v7496
      %v7498 = vlaneseq
      %v7499 = vshrl.u32 %v7498, 7
      %v7500 = vsub.s32 %v7497, %v7499
      %v7501 = vrot.slane %v7479, %v7500
      %v7503 = vunpack.c.l.s4 1966171168
      %v7504 = vunpack.c.0.s8 %v7503
      %v7505 = vlaneseq
      %v7506 = vshrl.u32 %v7505, 7
      %v7507 = vsub.s32 %v7504, %v7506
      %v7508 = vrot.slane %v7480, %v7507
      %v7509 = vcombine.low %v7487, %v7494
      %v7510 = vcombine.high %v7487, %v7494
      %v7511 = vcombine.low %v7501, %v7508
      %v7512 = vcombine.high %v7501, %v7508
      %v7514 = vunpack.c.l.s4 1966171168
      %v7515 = vunpack.c.0.s8 %v7514
      %v7516 = vlaneseq
      %v7517 = vshrl.u32 %v7516, 7
      %v7518 = vsub.s32 %v7515, %v7517
      %v7519 = vrot.slane %v7509, %v7518
      %v7521 = vunpack.c.l.s4 1966171168
      %v7522 = vunpack.c.0.s8 %v7521
      %v7523 = vlaneseq
      %v7524 = vshrl.u32 %v7523, 7
      %v7525 = vsub.s32 %v7522, %v7524
      %v7526 = vrot.slane %v7510, %v7525
      %v7528 = vunpack.c.l.s4 1966171168
      %v7529 = vunpack.c.0.s8 %v7528
      %v7530 = vlaneseq
      %v7531 = vshrl.u32 %v7530, 7
      %v7532 = vsub.s32 %v7529, %v7531
      %v7533 = vrot.slane %v7511, %v7532
      %v7535 = vunpack.c.l.s4 1966171168
      %v7536 = vunpack.c.0.s8 %v7535
      %v7537 = vlaneseq
      %v7538 = vshrl.u32 %v7537, 7
      %v7539 = vsub.s32 %v7536, %v7538
      %v7540 = vrot.slane %v7512, %v7539
      %v7541 = vcombine.low %v7519, %v7533
      %v7542 = vcombine.low %v7526, %v7540
      %v7543 = vcombine.low %v6313, %v6321
      %v7544 = vcombine.low %v6323, %v6306
      %v7545 = vcombine.low %v6320, %v6322
      %v7546 = vcombine.low %v6324, %v6339
      %v7548 = vunpack.c.l.s4 1966171168
      %v7549 = vunpack.c.0.s8 %v7548
      %v7550 = vlaneseq
      %v7551 = vshrl.u32 %v7550, 7
      %v7552 = vsub.s32 %v7549, %v7551
      %v7553 = vrot.slane %v7543, %v7552
      %v7555 = vunpack.c.l.s4 1966171168
      %v7556 = vunpack.c.0.s8 %v7555
      %v7557 = vlaneseq
      %v7558 = vshrl.u32 %v7557, 7
      %v7559 = vsub.s32 %v7556, %v7558
      %v7560 = vrot.slane %v7544, %v7559
      %v7562 = vunpack.c.l.s4 1966171168
      %v7563 = vunpack.c.0.s8 %v7562
      %v7564 = vlaneseq
      %v7565 = vshrl.u32 %v7564, 7
      %v7566 = vsub.s32 %v7563, %v7565
      %v7567 = vrot.slane %v7545, %v7566
      %v7569 = vunpack.c.l.s4 1966171168
      %v7570 = vunpack.c.0.s8 %v7569
      %v7571 = vlaneseq
      %v7572 = vshrl.u32 %v7571, 7
      %v7573 = vsub.s32 %v7570, %v7572
      %v7574 = vrot.slane %v7546, %v7573
      %v7575 = vcombine.low %v7553, %v7560
      %v7576 = vcombine.high %v7553, %v7560
      %v7577 = vcombine.low %v7567, %v7574
      %v7578 = vcombine.high %v7567, %v7574
      %v7580 = vunpack.c.l.s4 1966171168
      %v7581 = vunpack.c.0.s8 %v7580
      %v7582 = vlaneseq
      %v7583 = vshrl.u32 %v7582, 7
      %v7584 = vsub.s32 %v7581, %v7583
      %v7585 = vrot.slane %v7575, %v7584
      %v7587 = vunpack.c.l.s4 1966171168
      %v7588 = vunpack.c.0.s8 %v7587
      %v7589 = vlaneseq
      %v7590 = vshrl.u32 %v7589, 7
      %v7591 = vsub.s32 %v7588, %v7590
      %v7592 = vrot.slane %v7576, %v7591
      %v7594 = vunpack.c.l.s4 1966171168
      %v7595 = vunpack.c.0.s8 %v7594
      %v7596 = vlaneseq
      %v7597 = vshrl.u32 %v7596, 7
      %v7598 = vsub.s32 %v7595, %v7597
      %v7599 = vrot.slane %v7577, %v7598
      %v7601 = vunpack.c.l.s4 1966171168
      %v7602 = vunpack.c.0.s8 %v7601
      %v7603 = vlaneseq
      %v7604 = vshrl.u32 %v7603, 7
      %v7605 = vsub.s32 %v7602, %v7604
      %v7606 = vrot.slane %v7578, %v7605
      %v7607 = vcombine.low %v7585, %v7599
      %v7608 = vcombine.low %v7592, %v7606
      %v7609 = vcombine.low %v6364, %v6378
      %v7610 = vcombine.low %v6386, %v6388
      %v7611 = vcombine.low %v6371, %v6385
      %v7612 = vcombine.low %v6387, %v6389
      %v7614 = vunpack.c.l.s4 1966171168
      %v7615 = vunpack.c.0.s8 %v7614
      %v7616 = vlaneseq
      %v7617 = vshrl.u32 %v7616, 7
      %v7618 = vsub.s32 %v7615, %v7617
      %v7619 = vrot.slane %v7609, %v7618
      %v7621 = vunpack.c.l.s4 1966171168
      %v7622 = vunpack.c.0.s8 %v7621
      %v7623 = vlaneseq
      %v7624 = vshrl.u32 %v7623, 7
      %v7625 = vsub.s32 %v7622, %v7624
      %v7626 = vrot.slane %v7610, %v7625
      %v7628 = vunpack.c.l.s4 1966171168
      %v7629 = vunpack.c.0.s8 %v7628
      %v7630 = vlaneseq
      %v7631 = vshrl.u32 %v7630, 7
      %v7632 = vsub.s32 %v7629, %v7631
      %v7633 = vrot.slane %v7611, %v7632
      %v7635 = vunpack.c.l.s4 1966171168
      %v7636 = vunpack.c.0.s8 %v7635
      %v7637 = vlaneseq
      %v7638 = vshrl.u32 %v7637, 7
      %v7639 = vsub.s32 %v7636, %v7638
      %v7640 = vrot.slane %v7612, %v7639
      %v7641 = vcombine.low %v7619, %v7626
      %v7642 = vcombine.high %v7619, %v7626
      %v7643 = vcombine.low %v7633, %v7640
      %v7644 = vcombine.high %v7633, %v7640
      %v7646 = vunpack.c.l.s4 1966171168
      %v7647 = vunpack.c.0.s8 %v7646
      %v7648 = vlaneseq
      %v7649 = vshrl.u32 %v7648, 7
      %v7650 = vsub.s32 %v7647, %v7649
      %v7651 = vrot.slane %v7641, %v7650
      %v7653 = vunpack.c.l.s4 1966171168
      %v7654 = vunpack.c.0.s8 %v7653
      %v7655 = vlaneseq
      %v7656 = vshrl.u32 %v7655, 7
      %v7657 = vsub.s32 %v7654, %v7656
      %v7658 = vrot.slane %v7642, %v7657
      %v7660 = vunpack.c.l.s4 1966171168
      %v7661 = vunpack.c.0.s8 %v7660
      %v7662 = vlaneseq
      %v7663 = vshrl.u32 %v7662, 7
      %v7664 = vsub.s32 %v7661, %v7663
      %v7665 = vrot.slane %v7643, %v7664
      %v7667 = vunpack.c.l.s4 1966171168
      %v7668 = vunpack.c.0.s8 %v7667
      %v7669 = vlaneseq
      %v7670 = vshrl.u32 %v7669, 7
      %v7671 = vsub.s32 %v7668, %v7670
      %v7672 = vrot.slane %v7644, %v7671
      %v7673 = vcombine.low %v7651, %v7665
      %v7674 = vcombine.low %v7658, %v7672
      %v7675 = vcombine.low %v6404, %v6429
      %v7676 = vcombine.low %v6443, %v6451
      %v7677 = vcombine.low %v6453, %v6436
      %v7678 = vcombine.low %v6450, %v6452
      %v7680 = vunpack.c.l.s4 1966171168
      %v7681 = vunpack.c.0.s8 %v7680
      %v7682 = vlaneseq
      %v7683 = vshrl.u32 %v7682, 7
      %v7684 = vsub.s32 %v7681, %v7683
      %v7685 = vrot.slane %v7675, %v7684
      %v7687 = vunpack.c.l.s4 1966171168
      %v7688 = vunpack.c.0.s8 %v7687
      %v7689 = vlaneseq
      %v7690 = vshrl.u32 %v7689, 7
      %v7691 = vsub.s32 %v7688, %v7690
      %v7692 = vrot.slane %v7676, %v7691
      %v7694 = vunpack.c.l.s4 1966171168
      %v7695 = vunpack.c.0.s8 %v7694
      %v7696 = vlaneseq
      %v7697 = vshrl.u32 %v7696, 7
      %v7698 = vsub.s32 %v7695, %v7697
      %v7699 = vrot.slane %v7677, %v7698
      %v7701 = vunpack.c.l.s4 1966171168
      %v7702 = vunpack.c.0.s8 %v7701
      %v7703 = vlaneseq
      %v7704 = vshrl.u32 %v7703, 7
      %v7705 = vsub.s32 %v7702, %v7704
      %v7706 = vrot.slane %v7678, %v7705
      %v7707 = vcombine.low %v7685, %v7692
      %v7708 = vcombine.high %v7685, %v7692
      %v7709 = vcombine.low %v7699, %v7706
      %v7710 = vcombine.high %v7699, %v7706
      %v7712 = vunpack.c.l.s4 1966171168
      %v7713 = vunpack.c.0.s8 %v7712
      %v7714 = vlaneseq
      %v7715 = vshrl.u32 %v7714, 7
      %v7716 = vsub.s32 %v7713, %v7715
      %v7717 = vrot.slane %v7707, %v7716
      %v7719 = vunpack.c.l.s4 1966171168
      %v7720 = vunpack.c.0.s8 %v7719
      %v7721 = vlaneseq
      %v7722 = vshrl.u32 %v7721, 7
      %v7723 = vsub.s32 %v7720, %v7722
      %v7724 = vrot.slane %v7708, %v7723
      %v7726 = vunpack.c.l.s4 1966171168
      %v7727 = vunpack.c.0.s8 %v7726
      %v7728 = vlaneseq
      %v7729 = vshrl.u32 %v7728, 7
      %v7730 = vsub.s32 %v7727, %v7729
      %v7731 = vrot.slane %v7709, %v7730
      %v7733 = vunpack.c.l.s4 1966171168
      %v7734 = vunpack.c.0.s8 %v7733
      %v7735 = vlaneseq
      %v7736 = vshrl.u32 %v7735, 7
      %v7737 = vsub.s32 %v7734, %v7736
      %v7738 = vrot.slane %v7710, %v7737
      %v7739 = vcombine.low %v7717, %v7731
      %v7740 = vcombine.low %v7724, %v7738
      %v7741 = vcombine.low %v6454, %v6469
      %v7742 = vcombine.low %v6494, %v6508
      %v7743 = vcombine.low %v6516, %v6518
      %v7744 = vcombine.low %v6501, %v6515
      %v7746 = vunpack.c.l.s4 1966171168
      %v7747 = vunpack.c.0.s8 %v7746
      %v7748 = vlaneseq
      %v7749 = vshrl.u32 %v7748, 7
      %v7750 = vsub.s32 %v7747, %v7749
      %v7751 = vrot.slane %v7741, %v7750
      %v7753 = vunpack.c.l.s4 1966171168
      %v7754 = vunpack.c.0.s8 %v7753
      %v7755 = vlaneseq
      %v7756 = vshrl.u32 %v7755, 7
      %v7757 = vsub.s32 %v7754, %v7756
      %v7758 = vrot.slane %v7742, %v7757
      %v7760 = vunpack.c.l.s4 1966171168
      %v7761 = vunpack.c.0.s8 %v7760
      %v7762 = vlaneseq
      %v7763 = vshrl.u32 %v7762, 7
      %v7764 = vsub.s32 %v7761, %v7763
      %v7765 = vrot.slane %v7743, %v7764
      %v7767 = vunpack.c.l.s4 1966171168
      %v7768 = vunpack.c.0.s8 %v7767
      %v7769 = vlaneseq
      %v7770 = vshrl.u32 %v7769, 7
      %v7771 = vsub.s32 %v7768, %v7770
      %v7772 = vrot.slane %v7744, %v7771
      %v7773 = vcombine.low %v7751, %v7758
      %v7774 = vcombine.high %v7751, %v7758
      %v7775 = vcombine.low %v7765, %v7772
      %v7776 = vcombine.high %v7765, %v7772
      %v7778 = vunpack.c.l.s4 1966171168
      %v7779 = vunpack.c.0.s8 %v7778
      %v7780 = vlaneseq
      %v7781 = vshrl.u32 %v7780, 7
      %v7782 = vsub.s32 %v7779, %v7781
      %v7783 = vrot.slane %v7773, %v7782
      %v7785 = vunpack.c.l.s4 1966171168
      %v7786 = vunpack.c.0.s8 %v7785
      %v7787 = vlaneseq
      %v7788 = vshrl.u32 %v7787, 7
      %v7789 = vsub.s32 %v7786, %v7788
      %v7790 = vrot.slane %v7774, %v7789
      %v7792 = vunpack.c.l.s4 1966171168
      %v7793 = vunpack.c.0.s8 %v7792
      %v7794 = vlaneseq
      %v7795 = vshrl.u32 %v7794, 7
      %v7796 = vsub.s32 %v7793, %v7795
      %v7797 = vrot.slane %v7775, %v7796
      %v7799 = vunpack.c.l.s4 1966171168
      %v7800 = vunpack.c.0.s8 %v7799
      %v7801 = vlaneseq
      %v7802 = vshrl.u32 %v7801, 7
      %v7803 = vsub.s32 %v7800, %v7802
      %v7804 = vrot.slane %v7776, %v7803
      %v7805 = vcombine.low %v7783, %v7797
      %v7806 = vcombine.low %v7790, %v7804
      %v7807 = vcombine.low %v6517, %v6519
      %v7808 = vcombine.low %v6534, %v6559
      %v7809 = vcombine.low %v6573, %v6581
      %v7810 = vcombine.low %v6583, %v6566
      %v7812 = vunpack.c.l.s4 1966171168
      %v7813 = vunpack.c.0.s8 %v7812
      %v7814 = vlaneseq
      %v7815 = vshrl.u32 %v7814, 7
      %v7816 = vsub.s32 %v7813, %v7815
      %v7817 = vrot.slane %v7807, %v7816
      %v7819 = vunpack.c.l.s4 1966171168
      %v7820 = vunpack.c.0.s8 %v7819
      %v7821 = vlaneseq
      %v7822 = vshrl.u32 %v7821, 7
      %v7823 = vsub.s32 %v7820, %v7822
      %v7824 = vrot.slane %v7808, %v7823
      %v7826 = vunpack.c.l.s4 1966171168
      %v7827 = vunpack.c.0.s8 %v7826
      %v7828 = vlaneseq
      %v7829 = vshrl.u32 %v7828, 7
      %v7830 = vsub.s32 %v7827, %v7829
      %v7831 = vrot.slane %v7809, %v7830
      %v7833 = vunpack.c.l.s4 1966171168
      %v7834 = vunpack.c.0.s8 %v7833
      %v7835 = vlaneseq
      %v7836 = vshrl.u32 %v7835, 7
      %v7837 = vsub.s32 %v7834, %v7836
      %v7838 = vrot.slane %v7810, %v7837
      %v7839 = vcombine.low %v7817, %v7824
      %v7840 = vcombine.high %v7817, %v7824
      %v7841 = vcombine.low %v7831, %v7838
      %v7842 = vcombine.high %v7831, %v7838
      %v7844 = vunpack.c.l.s4 1966171168
      %v7845 = vunpack.c.0.s8 %v7844
      %v7846 = vlaneseq
      %v7847 = vshrl.u32 %v7846, 7
      %v7848 = vsub.s32 %v7845, %v7847
      %v7849 = vrot.slane %v7839, %v7848
      %v7851 = vunpack.c.l.s4 1966171168
      %v7852 = vunpack.c.0.s8 %v7851
      %v7853 = vlaneseq
      %v7854 = vshrl.u32 %v7853, 7
      %v7855 = vsub.s32 %v7852, %v7854
      %v7856 = vrot.slane %v7840, %v7855
      %v7858 = vunpack.c.l.s4 1966171168
      %v7859 = vunpack.c.0.s8 %v7858
      %v7860 = vlaneseq
      %v7861 = vshrl.u32 %v7860, 7
      %v7862 = vsub.s32 %v7859, %v7861
      %v7863 = vrot.slane %v7841, %v7862
      %v7865 = vunpack.c.l.s4 1966171168
      %v7866 = vunpack.c.0.s8 %v7865
      %v7867 = vlaneseq
      %v7868 = vshrl.u32 %v7867, 7
      %v7869 = vsub.s32 %v7866, %v7868
      %v7870 = vrot.slane %v7842, %v7869
      %v7871 = vcombine.low %v7849, %v7863
      %v7872 = vcombine.low %v7856, %v7870
      %v7873 = vcombine.low %v6580, %v6582
      %v7874 = vcombine.low %v6584, %v6599
      %v7875 = vcombine.low %v6624, %v6638
      %v7876 = vcombine.low %v6646, %v6648
      %v7878 = vunpack.c.l.s4 1966171168
      %v7879 = vunpack.c.0.s8 %v7878
      %v7880 = vlaneseq
      %v7881 = vshrl.u32 %v7880, 7
      %v7882 = vsub.s32 %v7879, %v7881
      %v7883 = vrot.slane %v7873, %v7882
      %v7885 = vunpack.c.l.s4 1966171168
      %v7886 = vunpack.c.0.s8 %v7885
      %v7887 = vlaneseq
      %v7888 = vshrl.u32 %v7887, 7
      %v7889 = vsub.s32 %v7886, %v7888
      %v7890 = vrot.slane %v7874, %v7889
      %v7892 = vunpack.c.l.s4 1966171168
      %v7893 = vunpack.c.0.s8 %v7892
      %v7894 = vlaneseq
      %v7895 = vshrl.u32 %v7894, 7
      %v7896 = vsub.s32 %v7893, %v7895
      %v7897 = vrot.slane %v7875, %v7896
      %v7899 = vunpack.c.l.s4 1966171168
      %v7900 = vunpack.c.0.s8 %v7899
      %v7901 = vlaneseq
      %v7902 = vshrl.u32 %v7901, 7
      %v7903 = vsub.s32 %v7900, %v7902
      %v7904 = vrot.slane %v7876, %v7903
      %v7905 = vcombine.low %v7883, %v7890
      %v7906 = vcombine.high %v7883, %v7890
      %v7907 = vcombine.low %v7897, %v7904
      %v7908 = vcombine.high %v7897, %v7904
      %v7910 = vunpack.c.l.s4 1966171168
      %v7911 = vunpack.c.0.s8 %v7910
      %v7912 = vlaneseq
      %v7913 = vshrl.u32 %v7912, 7
      %v7914 = vsub.s32 %v7911, %v7913
      %v7915 = vrot.slane %v7905, %v7914
      %v7917 = vunpack.c.l.s4 1966171168
      %v7918 = vunpack.c.0.s8 %v7917
      %v7919 = vlaneseq
      %v7920 = vshrl.u32 %v7919, 7
      %v7921 = vsub.s32 %v7918, %v7920
      %v7922 = vrot.slane %v7906, %v7921
      %v7924 = vunpack.c.l.s4 1966171168
      %v7925 = vunpack.c.0.s8 %v7924
      %v7926 = vlaneseq
      %v7927 = vshrl.u32 %v7926, 7
      %v7928 = vsub.s32 %v7925, %v7927
      %v7929 = vrot.slane %v7907, %v7928
      %v7931 = vunpack.c.l.s4 1966171168
      %v7932 = vunpack.c.0.s8 %v7931
      %v7933 = vlaneseq
      %v7934 = vshrl.u32 %v7933, 7
      %v7935 = vsub.s32 %v7932, %v7934
      %v7936 = vrot.slane %v7908, %v7935
      %v7937 = vcombine.low %v7915, %v7929
      %v7938 = vcombine.low %v7922, %v7936
      %v7939 = vcombine.low %v6631, %v6645
      %v7940 = vcombine.low %v6647, %v6649
      %v7941 = vcombine.low %v6664, %v6689
      %v7942 = vcombine.low %v6703, %v6711
      %v7944 = vunpack.c.l.s4 1966171168
      %v7945 = vunpack.c.0.s8 %v7944
      %v7946 = vlaneseq
      %v7947 = vshrl.u32 %v7946, 7
      %v7948 = vsub.s32 %v7945, %v7947
      %v7949 = vrot.slane %v7939, %v7948
      %v7951 = vunpack.c.l.s4 1966171168
      %v7952 = vunpack.c.0.s8 %v7951
      %v7953 = vlaneseq
      %v7954 = vshrl.u32 %v7953, 7
      %v7955 = vsub.s32 %v7952, %v7954
      %v7956 = vrot.slane %v7940, %v7955
      %v7958 = vunpack.c.l.s4 1966171168
      %v7959 = vunpack.c.0.s8 %v7958
      %v7960 = vlaneseq
      %v7961 = vshrl.u32 %v7960, 7
      %v7962 = vsub.s32 %v7959, %v7961
      %v7963 = vrot.slane %v7941, %v7962
      %v7965 = vunpack.c.l.s4 1966171168
      %v7966 = vunpack.c.0.s8 %v7965
      %v7967 = vlaneseq
      %v7968 = vshrl.u32 %v7967, 7
      %v7969 = vsub.s32 %v7966, %v7968
      %v7970 = vrot.slane %v7942, %v7969
      %v7971 = vcombine.low %v7949, %v7956
      %v7972 = vcombine.high %v7949, %v7956
      %v7973 = vcombine.low %v7963, %v7970
      %v7974 = vcombine.high %v7963, %v7970
      %v7976 = vunpack.c.l.s4 1966171168
      %v7977 = vunpack.c.0.s8 %v7976
      %v7978 = vlaneseq
      %v7979 = vshrl.u32 %v7978, 7
      %v7980 = vsub.s32 %v7977, %v7979
      %v7981 = vrot.slane %v7971, %v7980
      %v7983 = vunpack.c.l.s4 1966171168
      %v7984 = vunpack.c.0.s8 %v7983
      %v7985 = vlaneseq
      %v7986 = vshrl.u32 %v7985, 7
      %v7987 = vsub.s32 %v7984, %v7986
      %v7988 = vrot.slane %v7972, %v7987
      %v7990 = vunpack.c.l.s4 1966171168
      %v7991 = vunpack.c.0.s8 %v7990
      %v7992 = vlaneseq
      %v7993 = vshrl.u32 %v7992, 7
      %v7994 = vsub.s32 %v7991, %v7993
      %v7995 = vrot.slane %v7973, %v7994
      %v7997 = vunpack.c.l.s4 1966171168
      %v7998 = vunpack.c.0.s8 %v7997
      %v7999 = vlaneseq
      %v8000 = vshrl.u32 %v7999, 7
      %v8001 = vsub.s32 %v7998, %v8000
      %v8002 = vrot.slane %v7974, %v8001
      %v8003 = vcombine.low %v7981, %v7995
      %v8004 = vcombine.low %v7988, %v8002
      %v8005 = vcombine.low %v6713, %v6696
      %v8006 = vcombine.low %v6710, %v6712
      %v8007 = vcombine.low %v6714, %v6729
      %v8008 = vcombine.low %v6754, %v6768
      %v8010 = vunpack.c.l.s4 1966171168
      %v8011 = vunpack.c.0.s8 %v8010
      %v8012 = vlaneseq
      %v8013 = vshrl.u32 %v8012, 7
      %v8014 = vsub.s32 %v8011, %v8013
      %v8015 = vrot.slane %v8005, %v8014
      %v8017 = vunpack.c.l.s4 1966171168
      %v8018 = vunpack.c.0.s8 %v8017
      %v8019 = vlaneseq
      %v8020 = vshrl.u32 %v8019, 7
      %v8021 = vsub.s32 %v8018, %v8020
      %v8022 = vrot.slane %v8006, %v8021
      %v8024 = vunpack.c.l.s4 1966171168
      %v8025 = vunpack.c.0.s8 %v8024
      %v8026 = vlaneseq
      %v8027 = vshrl.u32 %v8026, 7
      %v8028 = vsub.s32 %v8025, %v8027
      %v8029 = vrot.slane %v8007, %v8028
      %v8031 = vunpack.c.l.s4 1966171168
      %v8032 = vunpack.c.0.s8 %v8031
      %v8033 = vlaneseq
      %v8034 = vshrl.u32 %v8033, 7
      %v8035 = vsub.s32 %v8032, %v8034
      %v8036 = vrot.slane %v8008, %v8035
      %v8037 = vcombine.low %v8015, %v8022
      %v8038 = vcombine.high %v8015, %v8022
      %v8039 = vcombine.low %v8029, %v8036
      %v8040 = vcombine.high %v8029, %v8036
      %v8042 = vunpack.c.l.s4 1966171168
      %v8043 = vunpack.c.0.s8 %v8042
      %v8044 = vlaneseq
      %v8045 = vshrl.u32 %v8044, 7
      %v8046 = vsub.s32 %v8043, %v8045
      %v8047 = vrot.slane %v8037, %v8046
      %v8049 = vunpack.c.l.s4 1966171168
      %v8050 = vunpack.c.0.s8 %v8049
      %v8051 = vlaneseq
      %v8052 = vshrl.u32 %v8051, 7
      %v8053 = vsub.s32 %v8050, %v8052
      %v8054 = vrot.slane %v8038, %v8053
      %v8056 = vunpack.c.l.s4 1966171168
      %v8057 = vunpack.c.0.s8 %v8056
      %v8058 = vlaneseq
      %v8059 = vshrl.u32 %v8058, 7
      %v8060 = vsub.s32 %v8057, %v8059
      %v8061 = vrot.slane %v8039, %v8060
      %v8063 = vunpack.c.l.s4 1966171168
      %v8064 = vunpack.c.0.s8 %v8063
      %v8065 = vlaneseq
      %v8066 = vshrl.u32 %v8065, 7
      %v8067 = vsub.s32 %v8064, %v8066
      %v8068 = vrot.slane %v8040, %v8067
      %v8069 = vcombine.low %v8047, %v8061
      %v8070 = vcombine.low %v8054, %v8068
      %v8071 = vcombine.low %v6776, %v6778
      %v8072 = vcombine.low %v6761, %v6775
      %v8073 = vcombine.low %v6777, %v6779
      %v8074 = vcombine.low %v6794, %v6819
      %v8076 = vunpack.c.l.s4 1966171168
      %v8077 = vunpack.c.0.s8 %v8076
      %v8078 = vlaneseq
      %v8079 = vshrl.u32 %v8078, 7
      %v8080 = vsub.s32 %v8077, %v8079
      %v8081 = vrot.slane %v8071, %v8080
      %v8083 = vunpack.c.l.s4 1966171168
      %v8084 = vunpack.c.0.s8 %v8083
      %v8085 = vlaneseq
      %v8086 = vshrl.u32 %v8085, 7
      %v8087 = vsub.s32 %v8084, %v8086
      %v8088 = vrot.slane %v8072, %v8087
      %v8090 = vunpack.c.l.s4 1966171168
      %v8091 = vunpack.c.0.s8 %v8090
      %v8092 = vlaneseq
      %v8093 = vshrl.u32 %v8092, 7
      %v8094 = vsub.s32 %v8091, %v8093
      %v8095 = vrot.slane %v8073, %v8094
      %v8097 = vunpack.c.l.s4 1966171168
      %v8098 = vunpack.c.0.s8 %v8097
      %v8099 = vlaneseq
      %v8100 = vshrl.u32 %v8099, 7
      %v8101 = vsub.s32 %v8098, %v8100
      %v8102 = vrot.slane %v8074, %v8101
      %v8103 = vcombine.low %v8081, %v8088
      %v8104 = vcombine.high %v8081, %v8088
      %v8105 = vcombine.low %v8095, %v8102
      %v8106 = vcombine.high %v8095, %v8102
      %v8108 = vunpack.c.l.s4 1966171168
      %v8109 = vunpack.c.0.s8 %v8108
      %v8110 = vlaneseq
      %v8111 = vshrl.u32 %v8110, 7
      %v8112 = vsub.s32 %v8109, %v8111
      %v8113 = vrot.slane %v8103, %v8112
      %v8115 = vunpack.c.l.s4 1966171168
      %v8116 = vunpack.c.0.s8 %v8115
      %v8117 = vlaneseq
      %v8118 = vshrl.u32 %v8117, 7
      %v8119 = vsub.s32 %v8116, %v8118
      %v8120 = vrot.slane %v8104, %v8119
      %v8122 = vunpack.c.l.s4 1966171168
      %v8123 = vunpack.c.0.s8 %v8122
      %v8124 = vlaneseq
      %v8125 = vshrl.u32 %v8124, 7
      %v8126 = vsub.s32 %v8123, %v8125
      %v8127 = vrot.slane %v8105, %v8126
      %v8129 = vunpack.c.l.s4 1966171168
      %v8130 = vunpack.c.0.s8 %v8129
      %v8131 = vlaneseq
      %v8132 = vshrl.u32 %v8131, 7
      %v8133 = vsub.s32 %v8130, %v8132
      %v8134 = vrot.slane %v8106, %v8133
      %v8135 = vcombine.low %v8113, %v8127
      %v8136 = vcombine.low %v8120, %v8134
      %v8137 = vcombine.low %v6833, %v6841
      %v8138 = vcombine.low %v6843, %v6826
      %v8139 = vcombine.low %v6840, %v6842
      %v8140 = vcombine.low %v6844, %v6859
      %v8142 = vunpack.c.l.s4 1966171168
      %v8143 = vunpack.c.0.s8 %v8142
      %v8144 = vlaneseq
      %v8145 = vshrl.u32 %v8144, 7
      %v8146 = vsub.s32 %v8143, %v8145
      %v8147 = vrot.slane %v8137, %v8146
      %v8149 = vunpack.c.l.s4 1966171168
      %v8150 = vunpack.c.0.s8 %v8149
      %v8151 = vlaneseq
      %v8152 = vshrl.u32 %v8151, 7
      %v8153 = vsub.s32 %v8150, %v8152
      %v8154 = vrot.slane %v8138, %v8153
      %v8156 = vunpack.c.l.s4 1966171168
      %v8157 = vunpack.c.0.s8 %v8156
      %v8158 = vlaneseq
      %v8159 = vshrl.u32 %v8158, 7
      %v8160 = vsub.s32 %v8157, %v8159
      %v8161 = vrot.slane %v8139, %v8160
      %v8163 = vunpack.c.l.s4 1966171168
      %v8164 = vunpack.c.0.s8 %v8163
      %v8165 = vlaneseq
      %v8166 = vshrl.u32 %v8165, 7
      %v8167 = vsub.s32 %v8164, %v8166
      %v8168 = vrot.slane %v8140, %v8167
      %v8169 = vcombine.low %v8147, %v8154
      %v8170 = vcombine.high %v8147, %v8154
      %v8171 = vcombine.low %v8161, %v8168
      %v8172 = vcombine.high %v8161, %v8168
      %v8174 = vunpack.c.l.s4 1966171168
      %v8175 = vunpack.c.0.s8 %v8174
      %v8176 = vlaneseq
      %v8177 = vshrl.u32 %v8176, 7
      %v8178 = vsub.s32 %v8175, %v8177
      %v8179 = vrot.slane %v8169, %v8178
      %v8181 = vunpack.c.l.s4 1966171168
      %v8182 = vunpack.c.0.s8 %v8181
      %v8183 = vlaneseq
      %v8184 = vshrl.u32 %v8183, 7
      %v8185 = vsub.s32 %v8182, %v8184
      %v8186 = vrot.slane %v8170, %v8185
      %v8188 = vunpack.c.l.s4 1966171168
      %v8189 = vunpack.c.0.s8 %v8188
      %v8190 = vlaneseq
      %v8191 = vshrl.u32 %v8190, 7
      %v8192 = vsub.s32 %v8189, %v8191
      %v8193 = vrot.slane %v8171, %v8192
      %v8195 = vunpack.c.l.s4 1966171168
      %v8196 = vunpack.c.0.s8 %v8195
      %v8197 = vlaneseq
      %v8198 = vshrl.u32 %v8197, 7
      %v8199 = vsub.s32 %v8196, %v8198
      %v8200 = vrot.slane %v8172, %v8199
      %v8201 = vcombine.low %v8179, %v8193
      %v8202 = vcombine.low %v8186, %v8200
      %v8203 = vcombine.low %v6884, %v6898
      %v8204 = vcombine.low %v6906, %v6908
      %v8205 = vcombine.low %v6891, %v6905
      %v8206 = vcombine.low %v6907, %v6909
      %v8208 = vunpack.c.l.s4 1966171168
      %v8209 = vunpack.c.0.s8 %v8208
      %v8210 = vlaneseq
      %v8211 = vshrl.u32 %v8210, 7
      %v8212 = vsub.s32 %v8209, %v8211
      %v8213 = vrot.slane %v8203, %v8212
      %v8215 = vunpack.c.l.s4 1966171168
      %v8216 = vunpack.c.0.s8 %v8215
      %v8217 = vlaneseq
      %v8218 = vshrl.u32 %v8217, 7
      %v8219 = vsub.s32 %v8216, %v8218
      %v8220 = vrot.slane %v8204, %v8219
      %v8222 = vunpack.c.l.s4 1966171168
      %v8223 = vunpack.c.0.s8 %v8222
      %v8224 = vlaneseq
      %v8225 = vshrl.u32 %v8224, 7
      %v8226 = vsub.s32 %v8223, %v8225
      %v8227 = vrot.slane %v8205, %v8226
      %v8229 = vunpack.c.l.s4 1966171168
      %v8230 = vunpack.c.0.s8 %v8229
      %v8231 = vlaneseq
      %v8232 = vshrl.u32 %v8231, 7
      %v8233 = vsub.s32 %v8230, %v8232
      %v8234 = vrot.slane %v8206, %v8233
      %v8235 = vcombine.low %v8213, %v8220
      %v8236 = vcombine.high %v8213, %v8220
      %v8237 = vcombine.low %v8227, %v8234
      %v8238 = vcombine.high %v8227, %v8234
      %v8240 = vunpack.c.l.s4 1966171168
      %v8241 = vunpack.c.0.s8 %v8240
      %v8242 = vlaneseq
      %v8243 = vshrl.u32 %v8242, 7
      %v8244 = vsub.s32 %v8241, %v8243
      %v8245 = vrot.slane %v8235, %v8244
      %v8247 = vunpack.c.l.s4 1966171168
      %v8248 = vunpack.c.0.s8 %v8247
      %v8249 = vlaneseq
      %v8250 = vshrl.u32 %v8249, 7
      %v8251 = vsub.s32 %v8248, %v8250
      %v8252 = vrot.slane %v8236, %v8251
      %v8254 = vunpack.c.l.s4 1966171168
      %v8255 = vunpack.c.0.s8 %v8254
      %v8256 = vlaneseq
      %v8257 = vshrl.u32 %v8256, 7
      %v8258 = vsub.s32 %v8255, %v8257
      %v8259 = vrot.slane %v8237, %v8258
      %v8261 = vunpack.c.l.s4 1966171168
      %v8262 = vunpack.c.0.s8 %v8261
      %v8263 = vlaneseq
      %v8264 = vshrl.u32 %v8263, 7
      %v8265 = vsub.s32 %v8262, %v8264
      %v8266 = vrot.slane %v8238, %v8265
      %v8267 = vcombine.low %v8245, %v8259
      %v8268 = vcombine.low %v8252, %v8266
      %v8269 = vcombine.low %v6924, %v6949
      %v8270 = vcombine.low %v6963, %v6971
      %v8271 = vcombine.low %v6973, %v6956
      %v8272 = vcombine.low %v6970, %v6972
      %v8274 = vunpack.c.l.s4 1966171168
      %v8275 = vunpack.c.0.s8 %v8274
      %v8276 = vlaneseq
      %v8277 = vshrl.u32 %v8276, 7
      %v8278 = vsub.s32 %v8275, %v8277
      %v8279 = vrot.slane %v8269, %v8278
      %v8281 = vunpack.c.l.s4 1966171168
      %v8282 = vunpack.c.0.s8 %v8281
      %v8283 = vlaneseq
      %v8284 = vshrl.u32 %v8283, 7
      %v8285 = vsub.s32 %v8282, %v8284
      %v8286 = vrot.slane %v8270, %v8285
      %v8288 = vunpack.c.l.s4 1966171168
      %v8289 = vunpack.c.0.s8 %v8288
      %v8290 = vlaneseq
      %v8291 = vshrl.u32 %v8290, 7
      %v8292 = vsub.s32 %v8289, %v8291
      %v8293 = vrot.slane %v8271, %v8292
      %v8295 = vunpack.c.l.s4 1966171168
      %v8296 = vunpack.c.0.s8 %v8295
      %v8297 = vlaneseq
      %v8298 = vshrl.u32 %v8297, 7
      %v8299 = vsub.s32 %v8296, %v8298
      %v8300 = vrot.slane %v8272, %v8299
      %v8301 = vcombine.low %v8279, %v8286
      %v8302 = vcombine.high %v8279, %v8286
      %v8303 = vcombine.low %v8293, %v8300
      %v8304 = vcombine.high %v8293, %v8300
      %v8306 = vunpack.c.l.s4 1966171168
      %v8307 = vunpack.c.0.s8 %v8306
      %v8308 = vlaneseq
      %v8309 = vshrl.u32 %v8308, 7
      %v8310 = vsub.s32 %v8307, %v8309
      %v8311 = vrot.slane %v8301, %v8310
      %v8313 = vunpack.c.l.s4 1966171168
      %v8314 = vunpack.c.0.s8 %v8313
      %v8315 = vlaneseq
      %v8316 = vshrl.u32 %v8315, 7
      %v8317 = vsub.s32 %v8314, %v8316
      %v8318 = vrot.slane %v8302, %v8317
      %v8320 = vunpack.c.l.s4 1966171168
      %v8321 = vunpack.c.0.s8 %v8320
      %v8322 = vlaneseq
      %v8323 = vshrl.u32 %v8322, 7
      %v8324 = vsub.s32 %v8321, %v8323
      %v8325 = vrot.slane %v8303, %v8324
      %v8327 = vunpack.c.l.s4 1966171168
      %v8328 = vunpack.c.0.s8 %v8327
      %v8329 = vlaneseq
      %v8330 = vshrl.u32 %v8329, 7
      %v8331 = vsub.s32 %v8328, %v8330
      %v8332 = vrot.slane %v8304, %v8331
      %v8333 = vcombine.low %v8311, %v8325
      %v8334 = vcombine.low %v8318, %v8332
      %v8335 = vcombine.low %v6974, %v6989
      %v8337 = vunpack.c.l.s4 1966171168
      %v8338 = vunpack.c.0.s8 %v8337
      %v8339 = vlaneseq
      %v8340 = vshrl.u32 %v8339, 7
      %v8341 = vsub.s32 %v8338, %v8340
      %v8342 = vrot.slane %v8335, %v8341
      %v8343 = vcombine.high %v8342, %v8342
      %v8345 = vunpack.c.l.s4 1966171168
      %v8346 = vunpack.c.0.s8 %v8345
      %v8347 = vlaneseq
      %v8348 = vshrl.u32 %v8347, 7
      %v8349 = vsub.s32 %v8346, %v8348
      %v8350 = vrot.slane %v8342, %v8349
      %v8352 = vunpack.c.l.s4 1966171168
      %v8353 = vunpack.c.0.s8 %v8352
      %v8354 = vlaneseq
      %v8355 = vshrl.u32 %v8354, 7
      %v8356 = vsub.s32 %v8353, %v8355
      %v8357 = vrot.slane %v8343, %v8356
      %v8397 = vunpack.c.l.b16 %v6990
      %v8398 = vunpack.c.l.b16 %v6991
      %v8399 = vunpack.c.l.b16 %v6992
      %v8400 = vunpack.c.l.b16 %v6993
      %v8401 = vunpack.c.l.b16 %v6994
      %v8402 = vunpack.c.l.b16 %v6995
      %v8403 = vunpack.c.l.b16 %v6996
      %v8404 = vunpack.c.l.b16 %v6997
      %v8405 = vunpack.c.l.b16 %v6998
      %v8406 = vunpack.c.l.b16 %v6999
      %v8407 = vunpack.c.l.b16 %v7000
      %v8408 = vunpack.c.l.b16 %v7001
      %v8409 = vunpack.c.l.b16 %v7002
      %v8410 = vunpack.c.l.b16 %v7003
      %v8411 = vunpack.c.l.b16 %v7004
      %v8412 = vunpack.c.l.b16 %v7005
      %v8413 = vunpack.c.l.b16 %v7006
      %v8414 = vunpack.c.l.b16 %v7007
      %v8415 = vpack.c.b16 %v8398, %v8397
      %v8416 = vpack.c.b16 %v8400, %v8399
      %v8417 = vpack.c.b16 %v8402, %v8401
      %v8418 = vpack.c.b16 %v8404, %v8403
      %v8419 = vpack.c.b16 %v8406, %v8405
      %v8420 = vpack.c.b16 %v8408, %v8407
      %v8421 = vpack.c.b16 %v8410, %v8409
      %v8422 = vpack.c.b16 %v8412, %v8411
      %v8423 = vpack.c.b16 %v8414, %v8413
      %v8434 = vsel %vm3468, %v7080, 0
      %v8437 = vsel %vm3468, %v7146, 0
      %v8440 = vsel %vm3468, %v7212, 0
      %v8443 = vsel %vm3468, %v7278, 0
      %v8446 = vsel %vm3468, %v7344, 0
      %v8449 = vsel %vm3468, %v7410, 0
      %v8452 = vsel %vm3468, %v7476, 0
      %v8455 = vsel %vm3468, %v7542, 0
      %v8458 = vsel %vm3468, %v7608, 0
      %v8461 = vsel %vm3468, %v7674, 0
      %v8464 = vsel %vm3468, %v7740, 0
      %v8467 = vsel %vm3468, %v7806, 0
      %v8470 = vsel %vm3468, %v7872, 0
      %v8473 = vsel %vm3468, %v7938, 0
      %v8476 = vsel %vm3468, %v8004, 0
      %v8479 = vsel %vm3468, %v8070, 0
      %v8482 = vsel %vm3468, %v8136, 0
      %v8485 = vsel %vm3468, %v8202, 0
      %v8488 = vsel %vm3468, %v8268, 0
      %v8491 = vsel %vm3468, %v8334, 0
      %v8494 = vsel %vm3468, %v8357, 0
      %8496 = vmatprep.subr.bf16.mxu0 0
      %8497 = vmatpush1.bf16.msra.mxu0 %v8415
      %8498 = vmatprep.subr.bf16.mxu0 0
      %8499 = vmatpush1.bf16.msra.mxu0 %v8416
      %8500 = vmatprep.subr.bf16.mxu0 0
      %8501 = vmatpush1.bf16.msra.mxu0 %v8417
      %8502 = vmatprep.subr.bf16.mxu0 0
      %8503 = vmatpush1.bf16.msra.mxu0 %v8418
      %8504 = vmatprep.subr.bf16.mxu0 0
      %8505 = vmatpush1.bf16.msra.mxu0 %v8419
      %8506 = vmatprep.subr.bf16.mxu0 0
      %8507 = vmatpush1.bf16.msra.mxu0 %v8420
      %8508 = vmatprep.subr.bf16.mxu0 0
      %8509 = vmatpush1.bf16.msra.mxu0 %v8421
      %8510 = vmatprep.subr.bf16.mxu0 0
      %8511 = vmatpush1.bf16.msra.mxu0 %v8422
      %8512 = vmatprep.subr.bf16.mxu0 0
      %8513 = vmatpush1.bf16.msra.mxu0 %v8423
      %8514 = vmatprep.subr.bf16.mxu0 0
      %8515 = vmatpush1.bf16.msra.mxu0 0
      %8516 = vmatprep.subr.bf16.mxu0 0
      %8517 = vmatpush1.bf16.msra.mxu0 0
      %8518 = vmatprep.subr.bf16.mxu0 0
      %8519 = vmatpush1.bf16.msra.mxu0 0
      %8520 = vmatprep.subr.bf16.mxu0 0
      %8521 = vmatpush1.bf16.msra.mxu0 0
      %8522 = vmatprep.subr.bf16.mxu0 0
      %8523 = vmatpush1.bf16.msra.mxu0 0
      %8524 = vmatprep.subr.bf16.mxu0 0
      %8525 = vmatpush1.bf16.msra.mxu0 0
      %8526 = vmatprep.subr.bf16.mxu0 0
      %8527 = vmatpush1.bf16.msra.mxu0 0
      %8528 = vmatprep.mubr.bf16.mxu0 %v8434
      %8529 = vmatmul.mubr.bf16.gmra.mrb[0].mxu0 %v7079
      %v8530 = vpop.f32.mrb[0].mxu0
      %v8531 = vadd.f32 %v7013, %v8530
      %v8532 = vpop.f32.mrb[0].mxu0
      %v8533 = vpop.f32.mrb[0].mxu0
      %v8534 = vadd.f32 %v7013, %v8533
      %v8535 = vpop.f32.mrb[0].mxu0
      %8536 = vmatprep.mubr.bf16.mxu0 %v8437
      %8537 = vmatmul.mubr.bf16.gmra.mrb[0].mxu0 %v7145
      %v8538 = vpop.f32.mrb[0].mxu0
      %v8539 = vadd.f32 %v7013, %v8538
      %v8540 = vpop.f32.mrb[0].mxu0
      %v8541 = vpop.f32.mrb[0].mxu0
      %v8542 = vadd.f32 %v7013, %v8541
      %v8543 = vpop.f32.mrb[0].mxu0
      %8544 = vmatprep.mubr.bf16.mxu0 %v8440
      %8545 = vmatmul.mubr.bf16.gmra.mrb[0].mxu0 %v7211
      %v8546 = vpop.f32.mrb[0].mxu0
      %v8547 = vadd.f32 %v7013, %v8546
      %v8548 = vpop.f32.mrb[0].mxu0
      %v8549 = vpop.f32.mrb[0].mxu0
      %v8550 = vadd.f32 %v7013, %v8549
      %v8551 = vpop.f32.mrb[0].mxu0
      %8552 = vmatprep.mubr.bf16.mxu0 %v8443
      %8553 = vmatmul.mubr.bf16.gmra.mrb[0].mxu0 %v7277
      %v8554 = vpop.f32.mrb[0].mxu0
      %v8555 = vadd.f32 %v7013, %v8554
      %v8556 = vpop.f32.mrb[0].mxu0
      %v8557 = vpop.f32.mrb[0].mxu0
      %v8558 = vadd.f32 %v7013, %v8557
      %v8559 = vpop.f32.mrb[0].mxu0
      %8560 = vmatprep.mubr.bf16.mxu0 %v8446
      %8561 = vmatmul.mubr.bf16.gmra.mrb[0].mxu0 %v7343
      %v8562 = vpop.f32.mrb[0].mxu0
      %v8563 = vadd.f32 %v7013, %v8562
      %v8564 = vpop.f32.mrb[0].mxu0
      %v8565 = vpop.f32.mrb[0].mxu0
      %v8566 = vadd.f32 %v7013, %v8565
      %v8567 = vpop.f32.mrb[0].mxu0
      %8568 = vmatprep.mubr.bf16.mxu0 %v8449
      %8569 = vmatmul.mubr.bf16.gmra.mrb[0].mxu0 %v7409
      %v8570 = vpop.f32.mrb[0].mxu0
      %v8571 = vadd.f32 %v7013, %v8570
      %v8572 = vpop.f32.mrb[0].mxu0
      %v8573 = vpop.f32.mrb[0].mxu0
      %v8574 = vadd.f32 %v7013, %v8573
      %v8575 = vpop.f32.mrb[0].mxu0
      %8576 = vmatprep.mubr.bf16.mxu0 %v8452
      %8577 = vmatmul.mubr.bf16.gmra.mrb[0].mxu0 %v7475
      %v8578 = vpop.f32.mrb[0].mxu0
      %v8579 = vadd.f32 %v7013, %v8578
      %v8580 = vpop.f32.mrb[0].mxu0
      %v8581 = vpop.f32.mrb[0].mxu0
      %v8582 = vadd.f32 %v7013, %v8581
      %v8583 = vpop.f32.mrb[0].mxu0
      %8584 = vmatprep.mubr.bf16.mxu0 %v8455
      %8585 = vmatmul.mubr.bf16.gmra.mrb[0].mxu0 %v7541
      %v8586 = vpop.f32.mrb[0].mxu0
      %v8587 = vadd.f32 %v7013, %v8586
      %v8588 = vpop.f32.mrb[0].mxu0
      %v8589 = vpop.f32.mrb[0].mxu0
      %v8590 = vadd.f32 %v7013, %v8589
      %v8591 = vpop.f32.mrb[0].mxu0
      %8592 = vmatprep.mubr.bf16.mxu0 %v8458
      %8593 = vmatmul.mubr.bf16.gmra.mrb[0].mxu0 %v7607
      %v8594 = vpop.f32.mrb[0].mxu0
      %v8595 = vadd.f32 %v7013, %v8594
      %v8596 = vpop.f32.mrb[0].mxu0
      %v8597 = vpop.f32.mrb[0].mxu0
      %v8598 = vadd.f32 %v7013, %v8597
      %v8599 = vpop.f32.mrb[0].mxu0
      %8600 = vmatprep.mubr.bf16.mxu0 %v8461
      %8601 = vmatmul.mubr.bf16.gmra.mrb[0].mxu0 %v7673
      %v8602 = vpop.f32.mrb[0].mxu0
      %v8603 = vadd.f32 %v7013, %v8602
      %v8604 = vpop.f32.mrb[0].mxu0
      %v8605 = vpop.f32.mrb[0].mxu0
      %v8606 = vadd.f32 %v7013, %v8605
      %v8607 = vpop.f32.mrb[0].mxu0
      %8608 = vmatprep.mubr.bf16.mxu0 %v8464
      %8609 = vmatmul.mubr.bf16.gmra.mrb[0].mxu0 %v7739
      %v8610 = vpop.f32.mrb[0].mxu0
      %v8611 = vadd.f32 %v7013, %v8610
      %v8612 = vpop.f32.mrb[0].mxu0
      %v8613 = vpop.f32.mrb[0].mxu0
      %v8614 = vadd.f32 %v7013, %v8613
      %v8615 = vpop.f32.mrb[0].mxu0
      %8616 = vmatprep.mubr.bf16.mxu0 %v8467
      %8617 = vmatmul.mubr.bf16.gmra.mrb[0].mxu0 %v7805
      %v8618 = vpop.f32.mrb[0].mxu0
      %v8619 = vadd.f32 %v7013, %v8618
      %v8620 = vpop.f32.mrb[0].mxu0
      %v8621 = vpop.f32.mrb[0].mxu0
      %v8622 = vadd.f32 %v7013, %v8621
      %v8623 = vpop.f32.mrb[0].mxu0
      %8624 = vmatprep.mubr.bf16.mxu0 %v8470
      %8625 = vmatmul.mubr.bf16.gmra.mrb[0].mxu0 %v7871
      %v8626 = vpop.f32.mrb[0].mxu0
      %v8627 = vadd.f32 %v7013, %v8626
      %v8628 = vpop.f32.mrb[0].mxu0
      %v8629 = vpop.f32.mrb[0].mxu0
      %v8630 = vadd.f32 %v7013, %v8629
      %v8631 = vpop.f32.mrb[0].mxu0
      %8632 = vmatprep.mubr.bf16.mxu0 %v8473
      %8633 = vmatmul.mubr.bf16.gmra.mrb[0].mxu0 %v7937
      %v8634 = vpop.f32.mrb[0].mxu0
      %v8635 = vadd.f32 %v7013, %v8634
      %v8636 = vpop.f32.mrb[0].mxu0
      %v8637 = vpop.f32.mrb[0].mxu0
      %v8638 = vadd.f32 %v7013, %v8637
      %v8639 = vpop.f32.mrb[0].mxu0
      %8640 = vmatprep.mubr.bf16.mxu0 %v8476
      %8641 = vmatmul.mubr.bf16.gmra.mrb[0].mxu0 %v8003
      %v8642 = vpop.f32.mrb[0].mxu0
      %v8643 = vadd.f32 %v7013, %v8642
      %v8644 = vpop.f32.mrb[0].mxu0
      %v8645 = vpop.f32.mrb[0].mxu0
      %v8646 = vadd.f32 %v7013, %v8645
      %v8647 = vpop.f32.mrb[0].mxu0
      %8648 = vmatprep.mubr.bf16.mxu0 %v8479
      %8649 = vmatmul.mubr.bf16.gmra.mrb[0].mxu0 %v8069
      %v8650 = vpop.f32.mrb[0].mxu0
      %v8651 = vadd.f32 %v7013, %v8650
      %v8652 = vpop.f32.mrb[0].mxu0
      %v8653 = vpop.f32.mrb[0].mxu0
      %v8654 = vadd.f32 %v7013, %v8653
      %v8655 = vpop.f32.mrb[0].mxu0
      %8656 = vmatprep.mubr.bf16.mxu0 %v8482
      %8657 = vmatmul.mubr.bf16.gmra.mrb[0].mxu0 %v8135
      %v8658 = vpop.f32.mrb[0].mxu0
      %v8659 = vadd.f32 %v7013, %v8658
      %v8660 = vpop.f32.mrb[0].mxu0
      %v8661 = vpop.f32.mrb[0].mxu0
      %v8662 = vadd.f32 %v7013, %v8661
      %v8663 = vpop.f32.mrb[0].mxu0
      %8664 = vmatprep.mubr.bf16.mxu0 %v8485
      %8665 = vmatmul.mubr.bf16.gmra.mrb[0].mxu0 %v8201
      %v8666 = vpop.f32.mrb[0].mxu0
      %v8667 = vadd.f32 %v7013, %v8666
      %v8668 = vpop.f32.mrb[0].mxu0
      %v8669 = vpop.f32.mrb[0].mxu0
      %v8670 = vadd.f32 %v7013, %v8669
      %v8671 = vpop.f32.mrb[0].mxu0
      %8672 = vmatprep.mubr.bf16.mxu0 %v8488
      %8673 = vmatmul.mubr.bf16.gmra.mrb[0].mxu0 %v8267
      %v8674 = vpop.f32.mrb[0].mxu0
      %v8675 = vadd.f32 %v7013, %v8674
      %v8676 = vpop.f32.mrb[0].mxu0
      %v8677 = vpop.f32.mrb[0].mxu0
      %v8678 = vadd.f32 %v7013, %v8677
      %v8679 = vpop.f32.mrb[0].mxu0
      %8680 = vmatprep.mubr.bf16.mxu0 %v8491
      %8681 = vmatmul.mubr.bf16.gmra.mrb[0].mxu0 %v8333
      %v8682 = vpop.f32.mrb[0].mxu0
      %v8683 = vadd.f32 %v7013, %v8682
      %v8684 = vpop.f32.mrb[0].mxu0
      %v8685 = vpop.f32.mrb[0].mxu0
      %v8686 = vadd.f32 %v7013, %v8685
      %v8687 = vpop.f32.mrb[0].mxu0
      %8688 = vmatprep.mubr.bf16.mxu0 %v8494
      %8689 = vmatmul.mubr.bf16.gmra.mrb[0].mxu0 %v8350
      %v8690 = vpop.f32.mrb[0].mxu0
      %v8691 = vadd.f32 %v7013, %v8690
      %v8692 = vpop.f32.mrb[0].mxu0
      %v8693 = vpop.f32.mrb[0].mxu0
      %v8694 = vpop.f32.mrb[0].mxu0
      %8695 = vdwg.mxu0
      %v8696 = vmax.f32 %v8531, 0.0
      %v8697 = vmax.f32 %v8534, 0.0
      %v8698 = vmax.f32 %v8539, 0.0
      %v8699 = vmax.f32 %v8542, 0.0
      %v8700 = vmax.f32 %v8547, 0.0
      %v8701 = vmax.f32 %v8550, 0.0
      %v8702 = vmax.f32 %v8555, 0.0
      %v8703 = vmax.f32 %v8558, 0.0
      %v8704 = vmax.f32 %v8563, 0.0
      %v8705 = vmax.f32 %v8566, 0.0
      %v8706 = vmax.f32 %v8571, 0.0
      %v8707 = vmax.f32 %v8574, 0.0
      %v8708 = vmax.f32 %v8579, 0.0
      %v8709 = vmax.f32 %v8582, 0.0
      %v8710 = vmax.f32 %v8587, 0.0
      %v8711 = vmax.f32 %v8590, 0.0
      %v8712 = vmax.f32 %v8595, 0.0
      %v8713 = vmax.f32 %v8598, 0.0
      %v8714 = vmax.f32 %v8603, 0.0
      %v8715 = vmax.f32 %v8606, 0.0
      %v8716 = vmax.f32 %v8611, 0.0
      %v8717 = vmax.f32 %v8614, 0.0
      %v8718 = vmax.f32 %v8619, 0.0
      %v8719 = vmax.f32 %v8622, 0.0
      %v8720 = vmax.f32 %v8627, 0.0
      %v8721 = vmax.f32 %v8630, 0.0
      %v8722 = vmax.f32 %v8635, 0.0
      %v8723 = vmax.f32 %v8638, 0.0
      %v8724 = vmax.f32 %v8643, 0.0
      %v8725 = vmax.f32 %v8646, 0.0
      %v8726 = vmax.f32 %v8651, 0.0
      %v8727 = vmax.f32 %v8654, 0.0
      %v8728 = vmax.f32 %v8659, 0.0
      %v8729 = vmax.f32 %v8662, 0.0
      %v8730 = vmax.f32 %v8667, 0.0
      %v8731 = vmax.f32 %v8670, 0.0
      %v8732 = vmax.f32 %v8675, 0.0
      %v8733 = vmax.f32 %v8678, 0.0
      %v8734 = vmax.f32 %v8683, 0.0
      %v8735 = vmax.f32 %v8686, 0.0
      %v8736 = vmax.f32 %v8691, 0.0
      %v8778 = vcombine.high %v8696, %v8696
      %v8780 = vunpack.c.l.s4 1983009808
      %v8781 = vunpack.c.0.s8 %v8780
      %v8782 = vlaneseq
      %v8783 = vshrl.u32 %v8782, 7
      %v8784 = vsub.s32 %v8781, %v8783
      %v8785 = vrot.slane %v8696, %v8784
      %v8787 = vunpack.c.l.s4 1983009808
      %v8788 = vunpack.c.0.s8 %v8787
      %v8789 = vlaneseq
      %v8790 = vshrl.u32 %v8789, 7
      %v8791 = vsub.s32 %v8788, %v8790
      %v8792 = vrot.slane %v8778, %v8791
      %v8793 = vcombine.high %v8785, %v8785
      %v8794 = vcombine.high %v8792, %v8792
      %v8795 = vcombine.high %v8697, %v8697
      %v8797 = vunpack.c.l.s4 1983009808
      %v8798 = vunpack.c.0.s8 %v8797
      %v8799 = vlaneseq
      %v8800 = vshrl.u32 %v8799, 7
      %v8801 = vsub.s32 %v8798, %v8800
      %v8802 = vrot.slane %v8697, %v8801
      %v8804 = vunpack.c.l.s4 1983009808
      %v8805 = vunpack.c.0.s8 %v8804
      %v8806 = vlaneseq
      %v8807 = vshrl.u32 %v8806, 7
      %v8808 = vsub.s32 %v8805, %v8807
      %v8809 = vrot.slane %v8795, %v8808
      %v8810 = vcombine.high %v8802, %v8802
      %v8811 = vcombine.high %v8809, %v8809
      %v8812 = vcombine.high %v8698, %v8698
      %v8814 = vunpack.c.l.s4 1983009808
      %v8815 = vunpack.c.0.s8 %v8814
      %v8816 = vlaneseq
      %v8817 = vshrl.u32 %v8816, 7
      %v8818 = vsub.s32 %v8815, %v8817
      %v8819 = vrot.slane %v8698, %v8818
      %v8821 = vunpack.c.l.s4 1983009808
      %v8822 = vunpack.c.0.s8 %v8821
      %v8823 = vlaneseq
      %v8824 = vshrl.u32 %v8823, 7
      %v8825 = vsub.s32 %v8822, %v8824
      %v8826 = vrot.slane %v8812, %v8825
      %v8827 = vcombine.high %v8819, %v8819
      %v8828 = vcombine.high %v8826, %v8826
      %v8829 = vcombine.high %v8699, %v8699
      %v8831 = vunpack.c.l.s4 1983009808
      %v8832 = vunpack.c.0.s8 %v8831
      %v8833 = vlaneseq
      %v8834 = vshrl.u32 %v8833, 7
      %v8835 = vsub.s32 %v8832, %v8834
      %v8836 = vrot.slane %v8699, %v8835
      %v8838 = vunpack.c.l.s4 1983009808
      %v8839 = vunpack.c.0.s8 %v8838
      %v8840 = vlaneseq
      %v8841 = vshrl.u32 %v8840, 7
      %v8842 = vsub.s32 %v8839, %v8841
      %v8843 = vrot.slane %v8829, %v8842
      %v8844 = vcombine.high %v8836, %v8836
      %v8845 = vcombine.high %v8843, %v8843
      %v8846 = vcombine.high %v8700, %v8700
      %v8848 = vunpack.c.l.s4 1983009808
      %v8849 = vunpack.c.0.s8 %v8848
      %v8850 = vlaneseq
      %v8851 = vshrl.u32 %v8850, 7
      %v8852 = vsub.s32 %v8849, %v8851
      %v8853 = vrot.slane %v8700, %v8852
      %v8855 = vunpack.c.l.s4 1983009808
      %v8856 = vunpack.c.0.s8 %v8855
      %v8857 = vlaneseq
      %v8858 = vshrl.u32 %v8857, 7
      %v8859 = vsub.s32 %v8856, %v8858
      %v8860 = vrot.slane %v8846, %v8859
      %v8861 = vcombine.high %v8853, %v8853
      %v8862 = vcombine.high %v8860, %v8860
      %v8863 = vcombine.high %v8701, %v8701
      %v8865 = vunpack.c.l.s4 1983009808
      %v8866 = vunpack.c.0.s8 %v8865
      %v8867 = vlaneseq
      %v8868 = vshrl.u32 %v8867, 7
      %v8869 = vsub.s32 %v8866, %v8868
      %v8870 = vrot.slane %v8701, %v8869
      %v8872 = vunpack.c.l.s4 1983009808
      %v8873 = vunpack.c.0.s8 %v8872
      %v8874 = vlaneseq
      %v8875 = vshrl.u32 %v8874, 7
      %v8876 = vsub.s32 %v8873, %v8875
      %v8877 = vrot.slane %v8863, %v8876
      %v8878 = vcombine.high %v8870, %v8870
      %v8879 = vcombine.high %v8877, %v8877
      %v8880 = vcombine.high %v8702, %v8702
      %v8882 = vunpack.c.l.s4 1983009808
      %v8883 = vunpack.c.0.s8 %v8882
      %v8884 = vlaneseq
      %v8885 = vshrl.u32 %v8884, 7
      %v8886 = vsub.s32 %v8883, %v8885
      %v8887 = vrot.slane %v8702, %v8886
      %v8889 = vunpack.c.l.s4 1983009808
      %v8890 = vunpack.c.0.s8 %v8889
      %v8891 = vlaneseq
      %v8892 = vshrl.u32 %v8891, 7
      %v8893 = vsub.s32 %v8890, %v8892
      %v8894 = vrot.slane %v8880, %v8893
      %v8895 = vcombine.high %v8887, %v8887
      %v8896 = vcombine.high %v8894, %v8894
      %v8897 = vcombine.high %v8703, %v8703
      %v8899 = vunpack.c.l.s4 1983009808
      %v8900 = vunpack.c.0.s8 %v8899
      %v8901 = vlaneseq
      %v8902 = vshrl.u32 %v8901, 7
      %v8903 = vsub.s32 %v8900, %v8902
      %v8904 = vrot.slane %v8703, %v8903
      %v8906 = vunpack.c.l.s4 1983009808
      %v8907 = vunpack.c.0.s8 %v8906
      %v8908 = vlaneseq
      %v8909 = vshrl.u32 %v8908, 7
      %v8910 = vsub.s32 %v8907, %v8909
      %v8911 = vrot.slane %v8897, %v8910
      %v8912 = vcombine.high %v8904, %v8904
      %v8913 = vcombine.high %v8911, %v8911
      %v8914 = vcombine.high %v8704, %v8704
      %v8916 = vunpack.c.l.s4 1983009808
      %v8917 = vunpack.c.0.s8 %v8916
      %v8918 = vlaneseq
      %v8919 = vshrl.u32 %v8918, 7
      %v8920 = vsub.s32 %v8917, %v8919
      %v8921 = vrot.slane %v8704, %v8920
      %v8923 = vunpack.c.l.s4 1983009808
      %v8924 = vunpack.c.0.s8 %v8923
      %v8925 = vlaneseq
      %v8926 = vshrl.u32 %v8925, 7
      %v8927 = vsub.s32 %v8924, %v8926
      %v8928 = vrot.slane %v8914, %v8927
      %v8929 = vcombine.high %v8921, %v8921
      %v8930 = vcombine.high %v8928, %v8928
      %v8931 = vcombine.high %v8705, %v8705
      %v8933 = vunpack.c.l.s4 1983009808
      %v8934 = vunpack.c.0.s8 %v8933
      %v8935 = vlaneseq
      %v8936 = vshrl.u32 %v8935, 7
      %v8937 = vsub.s32 %v8934, %v8936
      %v8938 = vrot.slane %v8705, %v8937
      %v8940 = vunpack.c.l.s4 1983009808
      %v8941 = vunpack.c.0.s8 %v8940
      %v8942 = vlaneseq
      %v8943 = vshrl.u32 %v8942, 7
      %v8944 = vsub.s32 %v8941, %v8943
      %v8945 = vrot.slane %v8931, %v8944
      %v8946 = vcombine.high %v8938, %v8938
      %v8947 = vcombine.high %v8945, %v8945
      %v8948 = vcombine.high %v8706, %v8706
      %v8950 = vunpack.c.l.s4 1983009808
      %v8951 = vunpack.c.0.s8 %v8950
      %v8952 = vlaneseq
      %v8953 = vshrl.u32 %v8952, 7
      %v8954 = vsub.s32 %v8951, %v8953
      %v8955 = vrot.slane %v8706, %v8954
      %v8957 = vunpack.c.l.s4 1983009808
      %v8958 = vunpack.c.0.s8 %v8957
      %v8959 = vlaneseq
      %v8960 = vshrl.u32 %v8959, 7
      %v8961 = vsub.s32 %v8958, %v8960
      %v8962 = vrot.slane %v8948, %v8961
      %v8963 = vcombine.high %v8955, %v8955
      %v8964 = vcombine.high %v8962, %v8962
      %v8965 = vcombine.high %v8707, %v8707
      %v8967 = vunpack.c.l.s4 1983009808
      %v8968 = vunpack.c.0.s8 %v8967
      %v8969 = vlaneseq
      %v8970 = vshrl.u32 %v8969, 7
      %v8971 = vsub.s32 %v8968, %v8970
      %v8972 = vrot.slane %v8707, %v8971
      %v8974 = vunpack.c.l.s4 1983009808
      %v8975 = vunpack.c.0.s8 %v8974
      %v8976 = vlaneseq
      %v8977 = vshrl.u32 %v8976, 7
      %v8978 = vsub.s32 %v8975, %v8977
      %v8979 = vrot.slane %v8965, %v8978
      %v8980 = vcombine.high %v8972, %v8972
      %v8981 = vcombine.high %v8979, %v8979
      %v8982 = vcombine.high %v8708, %v8708
      %v8984 = vunpack.c.l.s4 1983009808
      %v8985 = vunpack.c.0.s8 %v8984
      %v8986 = vlaneseq
      %v8987 = vshrl.u32 %v8986, 7
      %v8988 = vsub.s32 %v8985, %v8987
      %v8989 = vrot.slane %v8708, %v8988
      %v8991 = vunpack.c.l.s4 1983009808
      %v8992 = vunpack.c.0.s8 %v8991
      %v8993 = vlaneseq
      %v8994 = vshrl.u32 %v8993, 7
      %v8995 = vsub.s32 %v8992, %v8994
      %v8996 = vrot.slane %v8982, %v8995
      %v8997 = vcombine.high %v8989, %v8989
      %v8998 = vcombine.high %v8996, %v8996
      %v8999 = vcombine.high %v8709, %v8709
      %v9001 = vunpack.c.l.s4 1983009808
      %v9002 = vunpack.c.0.s8 %v9001
      %v9003 = vlaneseq
      %v9004 = vshrl.u32 %v9003, 7
      %v9005 = vsub.s32 %v9002, %v9004
      %v9006 = vrot.slane %v8709, %v9005
      %v9008 = vunpack.c.l.s4 1983009808
      %v9009 = vunpack.c.0.s8 %v9008
      %v9010 = vlaneseq
      %v9011 = vshrl.u32 %v9010, 7
      %v9012 = vsub.s32 %v9009, %v9011
      %v9013 = vrot.slane %v8999, %v9012
      %v9014 = vcombine.high %v9006, %v9006
      %v9015 = vcombine.high %v9013, %v9013
      %v9016 = vcombine.high %v8710, %v8710
      %v9018 = vunpack.c.l.s4 1983009808
      %v9019 = vunpack.c.0.s8 %v9018
      %v9020 = vlaneseq
      %v9021 = vshrl.u32 %v9020, 7
      %v9022 = vsub.s32 %v9019, %v9021
      %v9023 = vrot.slane %v8710, %v9022
      %v9025 = vunpack.c.l.s4 1983009808
      %v9026 = vunpack.c.0.s8 %v9025
      %v9027 = vlaneseq
      %v9028 = vshrl.u32 %v9027, 7
      %v9029 = vsub.s32 %v9026, %v9028
      %v9030 = vrot.slane %v9016, %v9029
      %v9031 = vcombine.high %v9023, %v9023
      %v9032 = vcombine.high %v9030, %v9030
      %v9033 = vcombine.high %v8711, %v8711
      %v9035 = vunpack.c.l.s4 1983009808
      %v9036 = vunpack.c.0.s8 %v9035
      %v9037 = vlaneseq
      %v9038 = vshrl.u32 %v9037, 7
      %v9039 = vsub.s32 %v9036, %v9038
      %v9040 = vrot.slane %v8711, %v9039
      %v9042 = vunpack.c.l.s4 1983009808
      %v9043 = vunpack.c.0.s8 %v9042
      %v9044 = vlaneseq
      %v9045 = vshrl.u32 %v9044, 7
      %v9046 = vsub.s32 %v9043, %v9045
      %v9047 = vrot.slane %v9033, %v9046
      %v9048 = vcombine.high %v9040, %v9040
      %v9049 = vcombine.high %v9047, %v9047
      %v9050 = vcombine.high %v8712, %v8712
      %v9052 = vunpack.c.l.s4 1983009808
      %v9053 = vunpack.c.0.s8 %v9052
      %v9054 = vlaneseq
      %v9055 = vshrl.u32 %v9054, 7
      %v9056 = vsub.s32 %v9053, %v9055
      %v9057 = vrot.slane %v8712, %v9056
      %v9059 = vunpack.c.l.s4 1983009808
      %v9060 = vunpack.c.0.s8 %v9059
      %v9061 = vlaneseq
      %v9062 = vshrl.u32 %v9061, 7
      %v9063 = vsub.s32 %v9060, %v9062
      %v9064 = vrot.slane %v9050, %v9063
      %v9065 = vcombine.high %v9057, %v9057
      %v9066 = vcombine.high %v9064, %v9064
      %v9067 = vcombine.high %v8713, %v8713
      %v9069 = vunpack.c.l.s4 1983009808
      %v9070 = vunpack.c.0.s8 %v9069
      %v9071 = vlaneseq
      %v9072 = vshrl.u32 %v9071, 7
      %v9073 = vsub.s32 %v9070, %v9072
      %v9074 = vrot.slane %v8713, %v9073
      %v9076 = vunpack.c.l.s4 1983009808
      %v9077 = vunpack.c.0.s8 %v9076
      %v9078 = vlaneseq
      %v9079 = vshrl.u32 %v9078, 7
      %v9080 = vsub.s32 %v9077, %v9079
      %v9081 = vrot.slane %v9067, %v9080
      %v9082 = vcombine.high %v9074, %v9074
      %v9083 = vcombine.high %v9081, %v9081
      %v9084 = vcombine.high %v8714, %v8714
      %v9086 = vunpack.c.l.s4 1983009808
      %v9087 = vunpack.c.0.s8 %v9086
      %v9088 = vlaneseq
      %v9089 = vshrl.u32 %v9088, 7
      %v9090 = vsub.s32 %v9087, %v9089
      %v9091 = vrot.slane %v8714, %v9090
      %v9093 = vunpack.c.l.s4 1983009808
      %v9094 = vunpack.c.0.s8 %v9093
      %v9095 = vlaneseq
      %v9096 = vshrl.u32 %v9095, 7
      %v9097 = vsub.s32 %v9094, %v9096
      %v9098 = vrot.slane %v9084, %v9097
      %v9099 = vcombine.high %v9091, %v9091
      %v9100 = vcombine.high %v9098, %v9098
      %v9101 = vcombine.high %v8715, %v8715
      %v9103 = vunpack.c.l.s4 1983009808
      %v9104 = vunpack.c.0.s8 %v9103
      %v9105 = vlaneseq
      %v9106 = vshrl.u32 %v9105, 7
      %v9107 = vsub.s32 %v9104, %v9106
      %v9108 = vrot.slane %v8715, %v9107
      %v9110 = vunpack.c.l.s4 1983009808
      %v9111 = vunpack.c.0.s8 %v9110
      %v9112 = vlaneseq
      %v9113 = vshrl.u32 %v9112, 7
      %v9114 = vsub.s32 %v9111, %v9113
      %v9115 = vrot.slane %v9101, %v9114
      %v9116 = vcombine.high %v9108, %v9108
      %v9117 = vcombine.high %v9115, %v9115
      %v9118 = vcombine.high %v8716, %v8716
      %v9120 = vunpack.c.l.s4 1983009808
      %v9121 = vunpack.c.0.s8 %v9120
      %v9122 = vlaneseq
      %v9123 = vshrl.u32 %v9122, 7
      %v9124 = vsub.s32 %v9121, %v9123
      %v9125 = vrot.slane %v8716, %v9124
      %v9127 = vunpack.c.l.s4 1983009808
      %v9128 = vunpack.c.0.s8 %v9127
      %v9129 = vlaneseq
      %v9130 = vshrl.u32 %v9129, 7
      %v9131 = vsub.s32 %v9128, %v9130
      %v9132 = vrot.slane %v9118, %v9131
      %v9133 = vcombine.high %v9125, %v9125
      %v9134 = vcombine.high %v9132, %v9132
      %v9135 = vcombine.high %v8717, %v8717
      %v9137 = vunpack.c.l.s4 1983009808
      %v9138 = vunpack.c.0.s8 %v9137
      %v9139 = vlaneseq
      %v9140 = vshrl.u32 %v9139, 7
      %v9141 = vsub.s32 %v9138, %v9140
      %v9142 = vrot.slane %v8717, %v9141
      %v9144 = vunpack.c.l.s4 1983009808
      %v9145 = vunpack.c.0.s8 %v9144
      %v9146 = vlaneseq
      %v9147 = vshrl.u32 %v9146, 7
      %v9148 = vsub.s32 %v9145, %v9147
      %v9149 = vrot.slane %v9135, %v9148
      %v9150 = vcombine.high %v9142, %v9142
      %v9151 = vcombine.high %v9149, %v9149
      %v9152 = vcombine.high %v8718, %v8718
      %v9154 = vunpack.c.l.s4 1983009808
      %v9155 = vunpack.c.0.s8 %v9154
      %v9156 = vlaneseq
      %v9157 = vshrl.u32 %v9156, 7
      %v9158 = vsub.s32 %v9155, %v9157
      %v9159 = vrot.slane %v8718, %v9158
      %v9161 = vunpack.c.l.s4 1983009808
      %v9162 = vunpack.c.0.s8 %v9161
      %v9163 = vlaneseq
      %v9164 = vshrl.u32 %v9163, 7
      %v9165 = vsub.s32 %v9162, %v9164
      %v9166 = vrot.slane %v9152, %v9165
      %v9167 = vcombine.high %v9159, %v9159
      %v9168 = vcombine.high %v9166, %v9166
      %v9169 = vcombine.high %v8719, %v8719
      %v9171 = vunpack.c.l.s4 1983009808
      %v9172 = vunpack.c.0.s8 %v9171
      %v9173 = vlaneseq
      %v9174 = vshrl.u32 %v9173, 7
      %v9175 = vsub.s32 %v9172, %v9174
      %v9176 = vrot.slane %v8719, %v9175
      %v9178 = vunpack.c.l.s4 1983009808
      %v9179 = vunpack.c.0.s8 %v9178
      %v9180 = vlaneseq
      %v9181 = vshrl.u32 %v9180, 7
      %v9182 = vsub.s32 %v9179, %v9181
      %v9183 = vrot.slane %v9169, %v9182
      %v9184 = vcombine.high %v9176, %v9176
      %v9185 = vcombine.high %v9183, %v9183
      %v9186 = vcombine.high %v8720, %v8720
      %v9188 = vunpack.c.l.s4 1983009808
      %v9189 = vunpack.c.0.s8 %v9188
      %v9190 = vlaneseq
      %v9191 = vshrl.u32 %v9190, 7
      %v9192 = vsub.s32 %v9189, %v9191
      %v9193 = vrot.slane %v8720, %v9192
      %v9195 = vunpack.c.l.s4 1983009808
      %v9196 = vunpack.c.0.s8 %v9195
      %v9197 = vlaneseq
      %v9198 = vshrl.u32 %v9197, 7
      %v9199 = vsub.s32 %v9196, %v9198
      %v9200 = vrot.slane %v9186, %v9199
      %v9201 = vcombine.high %v9193, %v9193
      %v9202 = vcombine.high %v9200, %v9200
      %v9203 = vcombine.high %v8721, %v8721
      %v9205 = vunpack.c.l.s4 1983009808
      %v9206 = vunpack.c.0.s8 %v9205
      %v9207 = vlaneseq
      %v9208 = vshrl.u32 %v9207, 7
      %v9209 = vsub.s32 %v9206, %v9208
      %v9210 = vrot.slane %v8721, %v9209
      %v9212 = vunpack.c.l.s4 1983009808
      %v9213 = vunpack.c.0.s8 %v9212
      %v9214 = vlaneseq
      %v9215 = vshrl.u32 %v9214, 7
      %v9216 = vsub.s32 %v9213, %v9215
      %v9217 = vrot.slane %v9203, %v9216
      %v9218 = vcombine.high %v9210, %v9210
      %v9219 = vcombine.high %v9217, %v9217
      %v9220 = vcombine.high %v8722, %v8722
      %v9222 = vunpack.c.l.s4 1983009808
      %v9223 = vunpack.c.0.s8 %v9222
      %v9224 = vlaneseq
      %v9225 = vshrl.u32 %v9224, 7
      %v9226 = vsub.s32 %v9223, %v9225
      %v9227 = vrot.slane %v8722, %v9226
      %v9229 = vunpack.c.l.s4 1983009808
      %v9230 = vunpack.c.0.s8 %v9229
      %v9231 = vlaneseq
      %v9232 = vshrl.u32 %v9231, 7
      %v9233 = vsub.s32 %v9230, %v9232
      %v9234 = vrot.slane %v9220, %v9233
      %v9235 = vcombine.high %v9227, %v9227
      %v9236 = vcombine.high %v9234, %v9234
      %v9237 = vcombine.high %v8723, %v8723
      %v9239 = vunpack.c.l.s4 1983009808
      %v9240 = vunpack.c.0.s8 %v9239
      %v9241 = vlaneseq
      %v9242 = vshrl.u32 %v9241, 7
      %v9243 = vsub.s32 %v9240, %v9242
      %v9244 = vrot.slane %v8723, %v9243
      %v9246 = vunpack.c.l.s4 1983009808
      %v9247 = vunpack.c.0.s8 %v9246
      %v9248 = vlaneseq
      %v9249 = vshrl.u32 %v9248, 7
      %v9250 = vsub.s32 %v9247, %v9249
      %v9251 = vrot.slane %v9237, %v9250
      %v9252 = vcombine.high %v9244, %v9244
      %v9253 = vcombine.high %v9251, %v9251
      %v9254 = vcombine.high %v8724, %v8724
      %v9256 = vunpack.c.l.s4 1983009808
      %v9257 = vunpack.c.0.s8 %v9256
      %v9258 = vlaneseq
      %v9259 = vshrl.u32 %v9258, 7
      %v9260 = vsub.s32 %v9257, %v9259
      %v9261 = vrot.slane %v8724, %v9260
      %v9263 = vunpack.c.l.s4 1983009808
      %v9264 = vunpack.c.0.s8 %v9263
      %v9265 = vlaneseq
      %v9266 = vshrl.u32 %v9265, 7
      %v9267 = vsub.s32 %v9264, %v9266
      %v9268 = vrot.slane %v9254, %v9267
      %v9269 = vcombine.high %v9261, %v9261
      %v9270 = vcombine.high %v9268, %v9268
      %v9271 = vcombine.high %v8725, %v8725
      %v9273 = vunpack.c.l.s4 1983009808
      %v9274 = vunpack.c.0.s8 %v9273
      %v9275 = vlaneseq
      %v9276 = vshrl.u32 %v9275, 7
      %v9277 = vsub.s32 %v9274, %v9276
      %v9278 = vrot.slane %v8725, %v9277
      %v9280 = vunpack.c.l.s4 1983009808
      %v9281 = vunpack.c.0.s8 %v9280
      %v9282 = vlaneseq
      %v9283 = vshrl.u32 %v9282, 7
      %v9284 = vsub.s32 %v9281, %v9283
      %v9285 = vrot.slane %v9271, %v9284
      %v9286 = vcombine.high %v9278, %v9278
      %v9287 = vcombine.high %v9285, %v9285
      %v9288 = vcombine.high %v8726, %v8726
      %v9290 = vunpack.c.l.s4 1983009808
      %v9291 = vunpack.c.0.s8 %v9290
      %v9292 = vlaneseq
      %v9293 = vshrl.u32 %v9292, 7
      %v9294 = vsub.s32 %v9291, %v9293
      %v9295 = vrot.slane %v8726, %v9294
      %v9297 = vunpack.c.l.s4 1983009808
      %v9298 = vunpack.c.0.s8 %v9297
      %v9299 = vlaneseq
      %v9300 = vshrl.u32 %v9299, 7
      %v9301 = vsub.s32 %v9298, %v9300
      %v9302 = vrot.slane %v9288, %v9301
      %v9303 = vcombine.high %v9295, %v9295
      %v9304 = vcombine.high %v9302, %v9302
      %v9305 = vcombine.high %v8727, %v8727
      %v9307 = vunpack.c.l.s4 1983009808
      %v9308 = vunpack.c.0.s8 %v9307
      %v9309 = vlaneseq
      %v9310 = vshrl.u32 %v9309, 7
      %v9311 = vsub.s32 %v9308, %v9310
      %v9312 = vrot.slane %v8727, %v9311
      %v9314 = vunpack.c.l.s4 1983009808
      %v9315 = vunpack.c.0.s8 %v9314
      %v9316 = vlaneseq
      %v9317 = vshrl.u32 %v9316, 7
      %v9318 = vsub.s32 %v9315, %v9317
      %v9319 = vrot.slane %v9305, %v9318
      %v9320 = vcombine.high %v9312, %v9312
      %v9321 = vcombine.high %v9319, %v9319
      %v9322 = vcombine.high %v8728, %v8728
      %v9324 = vunpack.c.l.s4 1983009808
      %v9325 = vunpack.c.0.s8 %v9324
      %v9326 = vlaneseq
      %v9327 = vshrl.u32 %v9326, 7
      %v9328 = vsub.s32 %v9325, %v9327
      %v9329 = vrot.slane %v8728, %v9328
      %v9331 = vunpack.c.l.s4 1983009808
      %v9332 = vunpack.c.0.s8 %v9331
      %v9333 = vlaneseq
      %v9334 = vshrl.u32 %v9333, 7
      %v9335 = vsub.s32 %v9332, %v9334
      %v9336 = vrot.slane %v9322, %v9335
      %v9337 = vcombine.high %v9329, %v9329
      %v9338 = vcombine.high %v9336, %v9336
      %v9339 = vcombine.high %v8729, %v8729
      %v9341 = vunpack.c.l.s4 1983009808
      %v9342 = vunpack.c.0.s8 %v9341
      %v9343 = vlaneseq
      %v9344 = vshrl.u32 %v9343, 7
      %v9345 = vsub.s32 %v9342, %v9344
      %v9346 = vrot.slane %v8729, %v9345
      %v9348 = vunpack.c.l.s4 1983009808
      %v9349 = vunpack.c.0.s8 %v9348
      %v9350 = vlaneseq
      %v9351 = vshrl.u32 %v9350, 7
      %v9352 = vsub.s32 %v9349, %v9351
      %v9353 = vrot.slane %v9339, %v9352
      %v9354 = vcombine.high %v9346, %v9346
      %v9355 = vcombine.high %v9353, %v9353
      %v9356 = vcombine.high %v8730, %v8730
      %v9358 = vunpack.c.l.s4 1983009808
      %v9359 = vunpack.c.0.s8 %v9358
      %v9360 = vlaneseq
      %v9361 = vshrl.u32 %v9360, 7
      %v9362 = vsub.s32 %v9359, %v9361
      %v9363 = vrot.slane %v8730, %v9362
      %v9365 = vunpack.c.l.s4 1983009808
      %v9366 = vunpack.c.0.s8 %v9365
      %v9367 = vlaneseq
      %v9368 = vshrl.u32 %v9367, 7
      %v9369 = vsub.s32 %v9366, %v9368
      %v9370 = vrot.slane %v9356, %v9369
      %v9371 = vcombine.high %v9363, %v9363
      %v9372 = vcombine.high %v9370, %v9370
      %v9373 = vcombine.high %v8731, %v8731
      %v9375 = vunpack.c.l.s4 1983009808
      %v9376 = vunpack.c.0.s8 %v9375
      %v9377 = vlaneseq
      %v9378 = vshrl.u32 %v9377, 7
      %v9379 = vsub.s32 %v9376, %v9378
      %v9380 = vrot.slane %v8731, %v9379
      %v9382 = vunpack.c.l.s4 1983009808
      %v9383 = vunpack.c.0.s8 %v9382
      %v9384 = vlaneseq
      %v9385 = vshrl.u32 %v9384, 7
      %v9386 = vsub.s32 %v9383, %v9385
      %v9387 = vrot.slane %v9373, %v9386
      %v9388 = vcombine.high %v9380, %v9380
      %v9389 = vcombine.high %v9387, %v9387
      %v9390 = vcombine.high %v8732, %v8732
      %v9392 = vunpack.c.l.s4 1983009808
      %v9393 = vunpack.c.0.s8 %v9392
      %v9394 = vlaneseq
      %v9395 = vshrl.u32 %v9394, 7
      %v9396 = vsub.s32 %v9393, %v9395
      %v9397 = vrot.slane %v8732, %v9396
      %v9399 = vunpack.c.l.s4 1983009808
      %v9400 = vunpack.c.0.s8 %v9399
      %v9401 = vlaneseq
      %v9402 = vshrl.u32 %v9401, 7
      %v9403 = vsub.s32 %v9400, %v9402
      %v9404 = vrot.slane %v9390, %v9403
      %v9405 = vcombine.high %v9397, %v9397
      %v9406 = vcombine.high %v9404, %v9404
      %v9407 = vcombine.high %v8733, %v8733
      %v9409 = vunpack.c.l.s4 1983009808
      %v9410 = vunpack.c.0.s8 %v9409
      %v9411 = vlaneseq
      %v9412 = vshrl.u32 %v9411, 7
      %v9413 = vsub.s32 %v9410, %v9412
      %v9414 = vrot.slane %v8733, %v9413
      %v9416 = vunpack.c.l.s4 1983009808
      %v9417 = vunpack.c.0.s8 %v9416
      %v9418 = vlaneseq
      %v9419 = vshrl.u32 %v9418, 7
      %v9420 = vsub.s32 %v9417, %v9419
      %v9421 = vrot.slane %v9407, %v9420
      %v9422 = vcombine.high %v9414, %v9414
      %v9423 = vcombine.high %v9421, %v9421
      %v9424 = vcombine.high %v8734, %v8734
      %v9426 = vunpack.c.l.s4 1983009808
      %v9427 = vunpack.c.0.s8 %v9426
      %v9428 = vlaneseq
      %v9429 = vshrl.u32 %v9428, 7
      %v9430 = vsub.s32 %v9427, %v9429
      %v9431 = vrot.slane %v8734, %v9430
      %v9433 = vunpack.c.l.s4 1983009808
      %v9434 = vunpack.c.0.s8 %v9433
      %v9435 = vlaneseq
      %v9436 = vshrl.u32 %v9435, 7
      %v9437 = vsub.s32 %v9434, %v9436
      %v9438 = vrot.slane %v9424, %v9437
      %v9439 = vcombine.high %v9431, %v9431
      %v9440 = vcombine.high %v9438, %v9438
      %v9441 = vcombine.high %v8735, %v8735
      %v9443 = vunpack.c.l.s4 1983009808
      %v9444 = vunpack.c.0.s8 %v9443
      %v9445 = vlaneseq
      %v9446 = vshrl.u32 %v9445, 7
      %v9447 = vsub.s32 %v9444, %v9446
      %v9448 = vrot.slane %v8735, %v9447
      %v9450 = vunpack.c.l.s4 1983009808
      %v9451 = vunpack.c.0.s8 %v9450
      %v9452 = vlaneseq
      %v9453 = vshrl.u32 %v9452, 7
      %v9454 = vsub.s32 %v9451, %v9453
      %v9455 = vrot.slane %v9441, %v9454
      %v9456 = vcombine.high %v9448, %v9448
      %v9457 = vcombine.high %v9455, %v9455
      %v9459 = vunpack.c.l.s4 1983009808
      %v9460 = vunpack.c.0.s8 %v9459
      %v9461 = vlaneseq
      %v9462 = vshrl.u32 %v9461, 7
      %v9463 = vsub.s32 %v9460, %v9462
      %v9464 = vrot.slane %v8736, %v9463
      %v9465 = vcombine.high %v9464, %v9464
      %v9628 = vsub.s32 %v1186, 1
      %v9629 = vsub.s32 %v1187, 1
      %v9630 = vsub.s32 %v1188, 1
      %v9631 = vsub.s32 %v1184, 1
      %vm9632 = vcmp.ge.s32.totalorder %v9628, 0
      %vm9633 = vcmp.ge.s32.totalorder %v9629, 0
      %vm9634 = vcmp.ge.s32.totalorder %v9630, 0
      %vm9635 = vcmp.lt.s32.totalorder %v9628, 16
      %vm9636 = vcmp.lt.s32.totalorder %v9629, 16
      %vm9637 = vcmp.lt.s32.totalorder %v9630, 16
      %vm9638 = vmand %vm9632, %vm9635
      %vm9639 = vmand %vm9633, %vm9636
      %vm9640 = vmand %vm9634, %vm9637
      %vm9641 = vcmp.ge.s32.totalorder %v9631, 0
      %vm9642 = vmand %vm9638, %vm9641
      %vm9643 = vmand %vm9639, %vm9641
      %vm9644 = vmand %vm9640, %vm9641
      %vm9645 = vcmp.lt.s32.totalorder %v9631, 16
      %vm9646 = vmand %vm9642, %vm9645
      %vm9647 = vmand %vm9643, %vm9645
      %vm9648 = vmand %vm9644, %vm9645
      %v9649 = vsel %vm9646, 1, 0
      %v9650 = vsel %vm9647, 1, 0
      %v9651 = vsel %vm9648, 1, 0
      %v9652 = vcvt.s32.f32 %v9649
      %v9653 = vcvt.s32.f32 %v9650
      %v9654 = vcvt.s32.f32 %v9651
      %v9655 = vlaneseq
      %v9656 = vshrl.u32 %v9655, 7
      %v9657 = vsub.s32 0, %v9656
      %v9658 = vrot.slane %v9652, %v9657
      %9660 = vbcast.lane.b32.xlu0 %v9658, 256
      %v9661 = vpop.permute.xlu0 %9660
      %s9663 = sor.u32 256, 8
      %9664 = vbcast.lane.b32.xlu0 %v9658, %s9663
      %v9665 = vpop.permute.xlu0 %9664
      %s9667 = sor.u32 256, 16
      %9668 = vbcast.lane.b32.xlu0 %v9658, %s9667
      %v9669 = vpop.permute.xlu0 %9668
      %v9670 = vlaneseq
      %v9671 = vshrl.u32 %v9670, 7
      %v9672 = vsub.s32 1, %v9671
      %v9673 = vrot.slane %v9652, %v9672
      %9675 = vbcast.lane.b32.xlu0 %v9673, 256
      %v9676 = vpop.permute.xlu0 %9675
      %s9678 = sor.u32 256, 8
      %9679 = vbcast.lane.b32.xlu0 %v9673, %s9678
      %v9680 = vpop.permute.xlu0 %9679
      %s9682 = sor.u32 256, 16
      %9683 = vbcast.lane.b32.xlu0 %v9673, %s9682
      %v9684 = vpop.permute.xlu0 %9683
      %v9685 = vlaneseq
      %v9686 = vshrl.u32 %v9685, 7
      %v9687 = vsub.s32 2, %v9686
      %v9688 = vrot.slane %v9652, %v9687
      %9690 = vbcast.lane.b32.xlu0 %v9688, 256
      %v9691 = vpop.permute.xlu0 %9690
      %s9693 = sor.u32 256, 8
      %9694 = vbcast.lane.b32.xlu0 %v9688, %s9693
      %v9695 = vpop.permute.xlu0 %9694
      %s9697 = sor.u32 256, 16
      %9698 = vbcast.lane.b32.xlu0 %v9688, %s9697
      %v9699 = vpop.permute.xlu0 %9698
      %v9700 = vlaneseq
      %v9701 = vshrl.u32 %v9700, 7
      %v9702 = vsub.s32 3, %v9701
      %v9703 = vrot.slane %v9652, %v9702
      %9705 = vbcast.lane.b32.xlu0 %v9703, 256
      %v9706 = vpop.permute.xlu0 %9705
      %s9708 = sor.u32 256, 8
      %9709 = vbcast.lane.b32.xlu0 %v9703, %s9708
      %v9710 = vpop.permute.xlu0 %9709
      %s9712 = sor.u32 256, 16
      %9713 = vbcast.lane.b32.xlu0 %v9703, %s9712
      %v9714 = vpop.permute.xlu0 %9713
      %v9715 = vlaneseq
      %v9716 = vshrl.u32 %v9715, 7
      %v9717 = vsub.s32 4, %v9716
      %v9718 = vrot.slane %v9652, %v9717
      %9720 = vbcast.lane.b32.xlu0 %v9718, 256
      %v9721 = vpop.permute.xlu0 %9720
      %s9723 = sor.u32 256, 8
      %9724 = vbcast.lane.b32.xlu0 %v9718, %s9723
      %v9725 = vpop.permute.xlu0 %9724
      %s9727 = sor.u32 256, 16
      %9728 = vbcast.lane.b32.xlu0 %v9718, %s9727
      %v9729 = vpop.permute.xlu0 %9728
      %v9730 = vlaneseq
      %v9731 = vshrl.u32 %v9730, 7
      %v9732 = vsub.s32 5, %v9731
      %v9733 = vrot.slane %v9652, %v9732
      %9735 = vbcast.lane.b32.xlu0 %v9733, 256
      %v9736 = vpop.permute.xlu0 %9735
      %s9738 = sor.u32 256, 8
      %9739 = vbcast.lane.b32.xlu0 %v9733, %s9738
      %v9740 = vpop.permute.xlu0 %9739
      %s9742 = sor.u32 256, 16
      %9743 = vbcast.lane.b32.xlu0 %v9733, %s9742
      %v9744 = vpop.permute.xlu0 %9743
      %v9745 = vlaneseq
      %v9746 = vshrl.u32 %v9745, 7
      %v9747 = vsub.s32 6, %v9746
      %v9748 = vrot.slane %v9652, %v9747
      %9750 = vbcast.lane.b32.xlu0 %v9748, 256
      %v9751 = vpop.permute.xlu0 %9750
      %s9753 = sor.u32 256, 8
      %9754 = vbcast.lane.b32.xlu0 %v9748, %s9753
      %v9755 = vpop.permute.xlu0 %9754
      %s9757 = sor.u32 256, 16
      %9758 = vbcast.lane.b32.xlu0 %v9748, %s9757
      %v9759 = vpop.permute.xlu0 %9758
      %v9760 = vlaneseq
      %v9761 = vshrl.u32 %v9760, 7
      %v9762 = vsub.s32 7, %v9761
      %v9763 = vrot.slane %v9652, %v9762
      %9765 = vbcast.lane.b32.xlu0 %v9763, 256
      %v9766 = vpop.permute.xlu0 %9765
      %s9768 = sor.u32 256, 8
      %9769 = vbcast.lane.b32.xlu0 %v9763, %s9768
      %v9770 = vpop.permute.xlu0 %9769
      %s9772 = sor.u32 256, 16
      %9773 = vbcast.lane.b32.xlu0 %v9763, %s9772
      %v9774 = vpop.permute.xlu0 %9773
      %v9775 = vlaneseq
      %v9776 = vshrl.u32 %v9775, 7
      %v9777 = vsub.s32 0, %v9776
      %v9778 = vrot.slane %v9653, %v9777
      %9780 = vbcast.lane.b32.xlu0 %v9778, 256
      %v9781 = vpop.permute.xlu0 %9780
      %s9783 = sor.u32 256, 8
      %9784 = vbcast.lane.b32.xlu0 %v9778, %s9783
      %v9785 = vpop.permute.xlu0 %9784
      %s9787 = sor.u32 256, 16
      %9788 = vbcast.lane.b32.xlu0 %v9778, %s9787
      %v9789 = vpop.permute.xlu0 %9788
      %v9790 = vlaneseq
      %v9791 = vshrl.u32 %v9790, 7
      %v9792 = vsub.s32 1, %v9791
      %v9793 = vrot.slane %v9653, %v9792
      %9795 = vbcast.lane.b32.xlu0 %v9793, 256
      %v9796 = vpop.permute.xlu0 %9795
      %s9798 = sor.u32 256, 8
      %9799 = vbcast.lane.b32.xlu0 %v9793, %s9798
      %v9800 = vpop.permute.xlu0 %9799
      %s9802 = sor.u32 256, 16
      %9803 = vbcast.lane.b32.xlu0 %v9793, %s9802
      %v9804 = vpop.permute.xlu0 %9803
      %v9805 = vlaneseq
      %v9806 = vshrl.u32 %v9805, 7
      %v9807 = vsub.s32 2, %v9806
      %v9808 = vrot.slane %v9653, %v9807
      %9810 = vbcast.lane.b32.xlu0 %v9808, 256
      %v9811 = vpop.permute.xlu0 %9810
      %s9813 = sor.u32 256, 8
      %9814 = vbcast.lane.b32.xlu0 %v9808, %s9813
      %v9815 = vpop.permute.xlu0 %9814
      %s9817 = sor.u32 256, 16
      %9818 = vbcast.lane.b32.xlu0 %v9808, %s9817
      %v9819 = vpop.permute.xlu0 %9818
      %v9820 = vlaneseq
      %v9821 = vshrl.u32 %v9820, 7
      %v9822 = vsub.s32 3, %v9821
      %v9823 = vrot.slane %v9653, %v9822
      %9825 = vbcast.lane.b32.xlu0 %v9823, 256
      %v9826 = vpop.permute.xlu0 %9825
      %s9828 = sor.u32 256, 8
      %9829 = vbcast.lane.b32.xlu0 %v9823, %s9828
      %v9830 = vpop.permute.xlu0 %9829
      %s9832 = sor.u32 256, 16
      %9833 = vbcast.lane.b32.xlu0 %v9823, %s9832
      %v9834 = vpop.permute.xlu0 %9833
      %v9835 = vlaneseq
      %v9836 = vshrl.u32 %v9835, 7
      %v9837 = vsub.s32 4, %v9836
      %v9838 = vrot.slane %v9653, %v9837
      %9840 = vbcast.lane.b32.xlu0 %v9838, 256
      %v9841 = vpop.permute.xlu0 %9840
      %s9843 = sor.u32 256, 8
      %9844 = vbcast.lane.b32.xlu0 %v9838, %s9843
      %v9845 = vpop.permute.xlu0 %9844
      %s9847 = sor.u32 256, 16
      %9848 = vbcast.lane.b32.xlu0 %v9838, %s9847
      %v9849 = vpop.permute.xlu0 %9848
      %v9850 = vlaneseq
      %v9851 = vshrl.u32 %v9850, 7
      %v9852 = vsub.s32 5, %v9851
      %v9853 = vrot.slane %v9653, %v9852
      %9855 = vbcast.lane.b32.xlu0 %v9853, 256
      %v9856 = vpop.permute.xlu0 %9855
      %s9858 = sor.u32 256, 8
      %9859 = vbcast.lane.b32.xlu0 %v9853, %s9858
      %v9860 = vpop.permute.xlu0 %9859
      %s9862 = sor.u32 256, 16
      %9863 = vbcast.lane.b32.xlu0 %v9853, %s9862
      %v9864 = vpop.permute.xlu0 %9863
      %v9865 = vlaneseq
      %v9866 = vshrl.u32 %v9865, 7
      %v9867 = vsub.s32 6, %v9866
      %v9868 = vrot.slane %v9653, %v9867
      %9870 = vbcast.lane.b32.xlu0 %v9868, 256
      %v9871 = vpop.permute.xlu0 %9870
      %s9873 = sor.u32 256, 8
      %9874 = vbcast.lane.b32.xlu0 %v9868, %s9873
      %v9875 = vpop.permute.xlu0 %9874
      %s9877 = sor.u32 256, 16
      %9878 = vbcast.lane.b32.xlu0 %v9868, %s9877
      %v9879 = vpop.permute.xlu0 %9878
      %v9880 = vlaneseq
      %v9881 = vshrl.u32 %v9880, 7
      %v9882 = vsub.s32 7, %v9881
      %v9883 = vrot.slane %v9653, %v9882
      %9885 = vbcast.lane.b32.xlu0 %v9883, 256
      %v9886 = vpop.permute.xlu0 %9885
      %s9888 = sor.u32 256, 8
      %9889 = vbcast.lane.b32.xlu0 %v9883, %s9888
      %v9890 = vpop.permute.xlu0 %9889
      %s9892 = sor.u32 256, 16
      %9893 = vbcast.lane.b32.xlu0 %v9883, %s9892
      %v9894 = vpop.permute.xlu0 %9893
      %v9895 = vlaneseq
      %v9896 = vshrl.u32 %v9895, 7
      %v9897 = vsub.s32 0, %v9896
      %v9898 = vrot.slane %v9654, %v9897
      %9900 = vbcast.lane.b32.xlu0 %v9898, 256
      %v9901 = vpop.permute.xlu0 %9900
      %s9903 = sor.u32 256, 8
      %9904 = vbcast.lane.b32.xlu0 %v9898, %s9903
      %v9905 = vpop.permute.xlu0 %9904
      %s9907 = sor.u32 256, 16
      %9908 = vbcast.lane.b32.xlu0 %v9898, %s9907
      %v9909 = vpop.permute.xlu0 %9908
      %v9910 = vlaneseq
      %v9911 = vshrl.u32 %v9910, 7
      %v9912 = vsub.s32 1, %v9911
      %v9913 = vrot.slane %v9654, %v9912
      %9915 = vbcast.lane.b32.xlu0 %v9913, 256
      %v9916 = vpop.permute.xlu0 %9915
      %s9918 = sor.u32 256, 8
      %9919 = vbcast.lane.b32.xlu0 %v9913, %s9918
      %v9920 = vpop.permute.xlu0 %9919
      %s9922 = sor.u32 256, 16
      %9923 = vbcast.lane.b32.xlu0 %v9913, %s9922
      %v9924 = vpop.permute.xlu0 %9923
      %v9980 = vunpack.c.l.s4 269488144
      %v9981 = vunpack.c.0.s8 %v9980
      %v9982 = vlaneseq
      %v9983 = vshrl.u32 %v9982, 7
      %v9984 = vsub.s32 %v9981, %v9983
      %v9985 = vrot.slane %v9661, %v9984
      %v9987 = vunpack.c.l.s4 842150450
      %v9988 = vunpack.c.0.s8 %v9987
      %v9989 = vlaneseq
      %v9990 = vshrl.u32 %v9989, 7
      %v9991 = vsub.s32 %v9988, %v9990
      %v9992 = vrot.slane %v9661, %v9991
      %v9994 = vunpack.c.l.s4 1414812756
      %v9995 = vunpack.c.0.s8 %v9994
      %v9996 = vlaneseq
      %v9997 = vshrl.u32 %v9996, 7
      %v9998 = vsub.s32 %v9995, %v9997
      %v9999 = vrot.slane %v9661, %v9998
      %v10001 = vunpack.c.l.s4 1987475062
      %v10002 = vunpack.c.0.s8 %v10001
      %v10003 = vlaneseq
      %v10004 = vshrl.u32 %v10003, 7
      %v10005 = vsub.s32 %v10002, %v10004
      %v10006 = vrot.slane %v9661, %v10005
      %v10008 = vunpack.c.l.s4 269488144
      %v10009 = vunpack.c.0.s8 %v10008
      %v10010 = vlaneseq
      %v10011 = vshrl.u32 %v10010, 7
      %v10012 = vsub.s32 %v10009, %v10011
      %v10013 = vrot.slane %v9665, %v10012
      %v10015 = vunpack.c.l.s4 842150450
      %v10016 = vunpack.c.0.s8 %v10015
      %v10017 = vlaneseq
      %v10018 = vshrl.u32 %v10017, 7
      %v10019 = vsub.s32 %v10016, %v10018
      %v10020 = vrot.slane %v9665, %v10019
      %v10022 = vunpack.c.l.s4 1414812756
      %v10023 = vunpack.c.0.s8 %v10022
      %v10024 = vlaneseq
      %v10025 = vshrl.u32 %v10024, 7
      %v10026 = vsub.s32 %v10023, %v10025
      %v10027 = vrot.slane %v9665, %v10026
      %v10029 = vunpack.c.l.s4 1987475062
      %v10030 = vunpack.c.0.s8 %v10029
      %v10031 = vlaneseq
      %v10032 = vshrl.u32 %v10031, 7
      %v10033 = vsub.s32 %v10030, %v10032
      %v10034 = vrot.slane %v9665, %v10033
      %v10036 = vunpack.c.l.s4 269488144
      %v10037 = vunpack.c.0.s8 %v10036
      %v10038 = vlaneseq
      %v10039 = vshrl.u32 %v10038, 7
      %v10040 = vsub.s32 %v10037, %v10039
      %v10041 = vrot.slane %v9669, %v10040
      %v10043 = vunpack.c.l.s4 269488144
      %v10044 = vunpack.c.0.s8 %v10043
      %v10045 = vlaneseq
      %v10046 = vshrl.u32 %v10045, 7
      %v10047 = vsub.s32 %v10044, %v10046
      %v10048 = vrot.slane %v9676, %v10047
      %v10050 = vunpack.c.l.s4 842150450
      %v10051 = vunpack.c.0.s8 %v10050
      %v10052 = vlaneseq
      %v10053 = vshrl.u32 %v10052, 7
      %v10054 = vsub.s32 %v10051, %v10053
      %v10055 = vrot.slane %v9676, %v10054
      %v10057 = vunpack.c.l.s4 1414812756
      %v10058 = vunpack.c.0.s8 %v10057
      %v10059 = vlaneseq
      %v10060 = vshrl.u32 %v10059, 7
      %v10061 = vsub.s32 %v10058, %v10060
      %v10062 = vrot.slane %v9676, %v10061
      %v10064 = vunpack.c.l.s4 1987475062
      %v10065 = vunpack.c.0.s8 %v10064
      %v10066 = vlaneseq
      %v10067 = vshrl.u32 %v10066, 7
      %v10068 = vsub.s32 %v10065, %v10067
      %v10069 = vrot.slane %v9676, %v10068
      %v10071 = vunpack.c.l.s4 269488144
      %v10072 = vunpack.c.0.s8 %v10071
      %v10073 = vlaneseq
      %v10074 = vshrl.u32 %v10073, 7
      %v10075 = vsub.s32 %v10072, %v10074
      %v10076 = vrot.slane %v9680, %v10075
      %v10078 = vunpack.c.l.s4 842150450
      %v10079 = vunpack.c.0.s8 %v10078
      %v10080 = vlaneseq
      %v10081 = vshrl.u32 %v10080, 7
      %v10082 = vsub.s32 %v10079, %v10081
      %v10083 = vrot.slane %v9680, %v10082
      %v10085 = vunpack.c.l.s4 1414812756
      %v10086 = vunpack.c.0.s8 %v10085
      %v10087 = vlaneseq
      %v10088 = vshrl.u32 %v10087, 7
      %v10089 = vsub.s32 %v10086, %v10088
      %v10090 = vrot.slane %v9680, %v10089
      %v10092 = vunpack.c.l.s4 1987475062
      %v10093 = vunpack.c.0.s8 %v10092
      %v10094 = vlaneseq
      %v10095 = vshrl.u32 %v10094, 7
      %v10096 = vsub.s32 %v10093, %v10095
      %v10097 = vrot.slane %v9680, %v10096
      %v10099 = vunpack.c.l.s4 269488144
      %v10100 = vunpack.c.0.s8 %v10099
      %v10101 = vlaneseq
      %v10102 = vshrl.u32 %v10101, 7
      %v10103 = vsub.s32 %v10100, %v10102
      %v10104 = vrot.slane %v9684, %v10103
      %v10106 = vunpack.c.l.s4 269488144
      %v10107 = vunpack.c.0.s8 %v10106
      %v10108 = vlaneseq
      %v10109 = vshrl.u32 %v10108, 7
      %v10110 = vsub.s32 %v10107, %v10109
      %v10111 = vrot.slane %v9691, %v10110
      %v10113 = vunpack.c.l.s4 842150450
      %v10114 = vunpack.c.0.s8 %v10113
      %v10115 = vlaneseq
      %v10116 = vshrl.u32 %v10115, 7
      %v10117 = vsub.s32 %v10114, %v10116
      %v10118 = vrot.slane %v9691, %v10117
      %v10120 = vunpack.c.l.s4 1414812756
      %v10121 = vunpack.c.0.s8 %v10120
      %v10122 = vlaneseq
      %v10123 = vshrl.u32 %v10122, 7
      %v10124 = vsub.s32 %v10121, %v10123
      %v10125 = vrot.slane %v9691, %v10124
      %v10127 = vunpack.c.l.s4 1987475062
      %v10128 = vunpack.c.0.s8 %v10127
      %v10129 = vlaneseq
      %v10130 = vshrl.u32 %v10129, 7
      %v10131 = vsub.s32 %v10128, %v10130
      %v10132 = vrot.slane %v9691, %v10131
      %v10134 = vunpack.c.l.s4 269488144
      %v10135 = vunpack.c.0.s8 %v10134
      %v10136 = vlaneseq
      %v10137 = vshrl.u32 %v10136, 7
      %v10138 = vsub.s32 %v10135, %v10137
      %v10139 = vrot.slane %v9695, %v10138
      %v10141 = vunpack.c.l.s4 842150450
      %v10142 = vunpack.c.0.s8 %v10141
      %v10143 = vlaneseq
      %v10144 = vshrl.u32 %v10143, 7
      %v10145 = vsub.s32 %v10142, %v10144
      %v10146 = vrot.slane %v9695, %v10145
      %v10148 = vunpack.c.l.s4 1414812756
      %v10149 = vunpack.c.0.s8 %v10148
      %v10150 = vlaneseq
      %v10151 = vshrl.u32 %v10150, 7
      %v10152 = vsub.s32 %v10149, %v10151
      %v10153 = vrot.slane %v9695, %v10152
      %v10155 = vunpack.c.l.s4 1987475062
      %v10156 = vunpack.c.0.s8 %v10155
      %v10157 = vlaneseq
      %v10158 = vshrl.u32 %v10157, 7
      %v10159 = vsub.s32 %v10156, %v10158
      %v10160 = vrot.slane %v9695, %v10159
      %v10162 = vunpack.c.l.s4 269488144
      %v10163 = vunpack.c.0.s8 %v10162
      %v10164 = vlaneseq
      %v10165 = vshrl.u32 %v10164, 7
      %v10166 = vsub.s32 %v10163, %v10165
      %v10167 = vrot.slane %v9699, %v10166
      %v10169 = vunpack.c.l.s4 269488144
      %v10170 = vunpack.c.0.s8 %v10169
      %v10171 = vlaneseq
      %v10172 = vshrl.u32 %v10171, 7
      %v10173 = vsub.s32 %v10170, %v10172
      %v10174 = vrot.slane %v9706, %v10173
      %v10176 = vunpack.c.l.s4 842150450
      %v10177 = vunpack.c.0.s8 %v10176
      %v10178 = vlaneseq
      %v10179 = vshrl.u32 %v10178, 7
      %v10180 = vsub.s32 %v10177, %v10179
      %v10181 = vrot.slane %v9706, %v10180
      %v10183 = vunpack.c.l.s4 1414812756
      %v10184 = vunpack.c.0.s8 %v10183
      %v10185 = vlaneseq
      %v10186 = vshrl.u32 %v10185, 7
      %v10187 = vsub.s32 %v10184, %v10186
      %v10188 = vrot.slane %v9706, %v10187
      %v10190 = vunpack.c.l.s4 1987475062
      %v10191 = vunpack.c.0.s8 %v10190
      %v10192 = vlaneseq
      %v10193 = vshrl.u32 %v10192, 7
      %v10194 = vsub.s32 %v10191, %v10193
      %v10195 = vrot.slane %v9706, %v10194
      %v10197 = vunpack.c.l.s4 269488144
      %v10198 = vunpack.c.0.s8 %v10197
      %v10199 = vlaneseq
      %v10200 = vshrl.u32 %v10199, 7
      %v10201 = vsub.s32 %v10198, %v10200
      %v10202 = vrot.slane %v9710, %v10201
      %v10204 = vunpack.c.l.s4 842150450
      %v10205 = vunpack.c.0.s8 %v10204
      %v10206 = vlaneseq
      %v10207 = vshrl.u32 %v10206, 7
      %v10208 = vsub.s32 %v10205, %v10207
      %v10209 = vrot.slane %v9710, %v10208
      %v10211 = vunpack.c.l.s4 1414812756
      %v10212 = vunpack.c.0.s8 %v10211
      %v10213 = vlaneseq
      %v10214 = vshrl.u32 %v10213, 7
      %v10215 = vsub.s32 %v10212, %v10214
      %v10216 = vrot.slane %v9710, %v10215
      %v10218 = vunpack.c.l.s4 1987475062
      %v10219 = vunpack.c.0.s8 %v10218
      %v10220 = vlaneseq
      %v10221 = vshrl.u32 %v10220, 7
      %v10222 = vsub.s32 %v10219, %v10221
      %v10223 = vrot.slane %v9710, %v10222
      %v10225 = vunpack.c.l.s4 269488144
      %v10226 = vunpack.c.0.s8 %v10225
      %v10227 = vlaneseq
      %v10228 = vshrl.u32 %v10227, 7
      %v10229 = vsub.s32 %v10226, %v10228
      %v10230 = vrot.slane %v9714, %v10229
      %v10232 = vunpack.c.l.s4 269488144
      %v10233 = vunpack.c.0.s8 %v10232
      %v10234 = vlaneseq
      %v10235 = vshrl.u32 %v10234, 7
      %v10236 = vsub.s32 %v10233, %v10235
      %v10237 = vrot.slane %v9721, %v10236
      %v10239 = vunpack.c.l.s4 842150450
      %v10240 = vunpack.c.0.s8 %v10239
      %v10241 = vlaneseq
      %v10242 = vshrl.u32 %v10241, 7
      %v10243 = vsub.s32 %v10240, %v10242
      %v10244 = vrot.slane %v9721, %v10243
      %v10246 = vunpack.c.l.s4 1414812756
      %v10247 = vunpack.c.0.s8 %v10246
      %v10248 = vlaneseq
      %v10249 = vshrl.u32 %v10248, 7
      %v10250 = vsub.s32 %v10247, %v10249
      %v10251 = vrot.slane %v9721, %v10250
      %v10253 = vunpack.c.l.s4 1987475062
      %v10254 = vunpack.c.0.s8 %v10253
      %v10255 = vlaneseq
      %v10256 = vshrl.u32 %v10255, 7
      %v10257 = vsub.s32 %v10254, %v10256
      %v10258 = vrot.slane %v9721, %v10257
      %v10260 = vunpack.c.l.s4 269488144
      %v10261 = vunpack.c.0.s8 %v10260
      %v10262 = vlaneseq
      %v10263 = vshrl.u32 %v10262, 7
      %v10264 = vsub.s32 %v10261, %v10263
      %v10265 = vrot.slane %v9725, %v10264
      %v10267 = vunpack.c.l.s4 842150450
      %v10268 = vunpack.c.0.s8 %v10267
      %v10269 = vlaneseq
      %v10270 = vshrl.u32 %v10269, 7
      %v10271 = vsub.s32 %v10268, %v10270
      %v10272 = vrot.slane %v9725, %v10271
      %v10274 = vunpack.c.l.s4 1414812756
      %v10275 = vunpack.c.0.s8 %v10274
      %v10276 = vlaneseq
      %v10277 = vshrl.u32 %v10276, 7
      %v10278 = vsub.s32 %v10275, %v10277
      %v10279 = vrot.slane %v9725, %v10278
      %v10281 = vunpack.c.l.s4 1987475062
      %v10282 = vunpack.c.0.s8 %v10281
      %v10283 = vlaneseq
      %v10284 = vshrl.u32 %v10283, 7
      %v10285 = vsub.s32 %v10282, %v10284
      %v10286 = vrot.slane %v9725, %v10285
      %v10288 = vunpack.c.l.s4 269488144
      %v10289 = vunpack.c.0.s8 %v10288
      %v10290 = vlaneseq
      %v10291 = vshrl.u32 %v10290, 7
      %v10292 = vsub.s32 %v10289, %v10291
      %v10293 = vrot.slane %v9729, %v10292
      %v10295 = vunpack.c.l.s4 269488144
      %v10296 = vunpack.c.0.s8 %v10295
      %v10297 = vlaneseq
      %v10298 = vshrl.u32 %v10297, 7
      %v10299 = vsub.s32 %v10296, %v10298
      %v10300 = vrot.slane %v9736, %v10299
      %v10302 = vunpack.c.l.s4 842150450
      %v10303 = vunpack.c.0.s8 %v10302
      %v10304 = vlaneseq
      %v10305 = vshrl.u32 %v10304, 7
      %v10306 = vsub.s32 %v10303, %v10305
      %v10307 = vrot.slane %v9736, %v10306
      %v10309 = vunpack.c.l.s4 1414812756
      %v10310 = vunpack.c.0.s8 %v10309
      %v10311 = vlaneseq
      %v10312 = vshrl.u32 %v10311, 7
      %v10313 = vsub.s32 %v10310, %v10312
      %v10314 = vrot.slane %v9736, %v10313
      %v10316 = vunpack.c.l.s4 1987475062
      %v10317 = vunpack.c.0.s8 %v10316
      %v10318 = vlaneseq
      %v10319 = vshrl.u32 %v10318, 7
      %v10320 = vsub.s32 %v10317, %v10319
      %v10321 = vrot.slane %v9736, %v10320
      %v10323 = vunpack.c.l.s4 269488144
      %v10324 = vunpack.c.0.s8 %v10323
      %v10325 = vlaneseq
      %v10326 = vshrl.u32 %v10325, 7
      %v10327 = vsub.s32 %v10324, %v10326
      %v10328 = vrot.slane %v9740, %v10327
      %v10330 = vunpack.c.l.s4 842150450
      %v10331 = vunpack.c.0.s8 %v10330
      %v10332 = vlaneseq
      %v10333 = vshrl.u32 %v10332, 7
      %v10334 = vsub.s32 %v10331, %v10333
      %v10335 = vrot.slane %v9740, %v10334
      %v10337 = vunpack.c.l.s4 1414812756
      %v10338 = vunpack.c.0.s8 %v10337
      %v10339 = vlaneseq
      %v10340 = vshrl.u32 %v10339, 7
      %v10341 = vsub.s32 %v10338, %v10340
      %v10342 = vrot.slane %v9740, %v10341
      %v10344 = vunpack.c.l.s4 1987475062
      %v10345 = vunpack.c.0.s8 %v10344
      %v10346 = vlaneseq
      %v10347 = vshrl.u32 %v10346, 7
      %v10348 = vsub.s32 %v10345, %v10347
      %v10349 = vrot.slane %v9740, %v10348
      %v10351 = vunpack.c.l.s4 269488144
      %v10352 = vunpack.c.0.s8 %v10351
      %v10353 = vlaneseq
      %v10354 = vshrl.u32 %v10353, 7
      %v10355 = vsub.s32 %v10352, %v10354
      %v10356 = vrot.slane %v9744, %v10355
      %v10358 = vunpack.c.l.s4 269488144
      %v10359 = vunpack.c.0.s8 %v10358
      %v10360 = vlaneseq
      %v10361 = vshrl.u32 %v10360, 7
      %v10362 = vsub.s32 %v10359, %v10361
      %v10363 = vrot.slane %v9751, %v10362
      %v10365 = vunpack.c.l.s4 842150450
      %v10366 = vunpack.c.0.s8 %v10365
      %v10367 = vlaneseq
      %v10368 = vshrl.u32 %v10367, 7
      %v10369 = vsub.s32 %v10366, %v10368
      %v10370 = vrot.slane %v9751, %v10369
      %v10372 = vunpack.c.l.s4 1414812756
      %v10373 = vunpack.c.0.s8 %v10372
      %v10374 = vlaneseq
      %v10375 = vshrl.u32 %v10374, 7
      %v10376 = vsub.s32 %v10373, %v10375
      %v10377 = vrot.slane %v9751, %v10376
      %v10379 = vunpack.c.l.s4 1987475062
      %v10380 = vunpack.c.0.s8 %v10379
      %v10381 = vlaneseq
      %v10382 = vshrl.u32 %v10381, 7
      %v10383 = vsub.s32 %v10380, %v10382
      %v10384 = vrot.slane %v9751, %v10383
      %v10386 = vunpack.c.l.s4 269488144
      %v10387 = vunpack.c.0.s8 %v10386
      %v10388 = vlaneseq
      %v10389 = vshrl.u32 %v10388, 7
      %v10390 = vsub.s32 %v10387, %v10389
      %v10391 = vrot.slane %v9755, %v10390
      %v10393 = vunpack.c.l.s4 842150450
      %v10394 = vunpack.c.0.s8 %v10393
      %v10395 = vlaneseq
      %v10396 = vshrl.u32 %v10395, 7
      %v10397 = vsub.s32 %v10394, %v10396
      %v10398 = vrot.slane %v9755, %v10397
      %v10400 = vunpack.c.l.s4 1414812756
      %v10401 = vunpack.c.0.s8 %v10400
      %v10402 = vlaneseq
      %v10403 = vshrl.u32 %v10402, 7
      %v10404 = vsub.s32 %v10401, %v10403
      %v10405 = vrot.slane %v9755, %v10404
      %v10407 = vunpack.c.l.s4 1987475062
      %v10408 = vunpack.c.0.s8 %v10407
      %v10409 = vlaneseq
      %v10410 = vshrl.u32 %v10409, 7
      %v10411 = vsub.s32 %v10408, %v10410
      %v10412 = vrot.slane %v9755, %v10411
      %v10414 = vunpack.c.l.s4 269488144
      %v10415 = vunpack.c.0.s8 %v10414
      %v10416 = vlaneseq
      %v10417 = vshrl.u32 %v10416, 7
      %v10418 = vsub.s32 %v10415, %v10417
      %v10419 = vrot.slane %v9759, %v10418
      %v10421 = vunpack.c.l.s4 269488144
      %v10422 = vunpack.c.0.s8 %v10421
      %v10423 = vlaneseq
      %v10424 = vshrl.u32 %v10423, 7
      %v10425 = vsub.s32 %v10422, %v10424
      %v10426 = vrot.slane %v9766, %v10425
      %v10428 = vunpack.c.l.s4 842150450
      %v10429 = vunpack.c.0.s8 %v10428
      %v10430 = vlaneseq
      %v10431 = vshrl.u32 %v10430, 7
      %v10432 = vsub.s32 %v10429, %v10431
      %v10433 = vrot.slane %v9766, %v10432
      %v10435 = vunpack.c.l.s4 1414812756
      %v10436 = vunpack.c.0.s8 %v10435
      %v10437 = vlaneseq
      %v10438 = vshrl.u32 %v10437, 7
      %v10439 = vsub.s32 %v10436, %v10438
      %v10440 = vrot.slane %v9766, %v10439
      %v10442 = vunpack.c.l.s4 1987475062
      %v10443 = vunpack.c.0.s8 %v10442
      %v10444 = vlaneseq
      %v10445 = vshrl.u32 %v10444, 7
      %v10446 = vsub.s32 %v10443, %v10445
      %v10447 = vrot.slane %v9766, %v10446
      %v10449 = vunpack.c.l.s4 269488144
      %v10450 = vunpack.c.0.s8 %v10449
      %v10451 = vlaneseq
      %v10452 = vshrl.u32 %v10451, 7
      %v10453 = vsub.s32 %v10450, %v10452
      %v10454 = vrot.slane %v9770, %v10453
      %v10456 = vunpack.c.l.s4 842150450
      %v10457 = vunpack.c.0.s8 %v10456
      %v10458 = vlaneseq
      %v10459 = vshrl.u32 %v10458, 7
      %v10460 = vsub.s32 %v10457, %v10459
      %v10461 = vrot.slane %v9770, %v10460
      %v10463 = vunpack.c.l.s4 1414812756
      %v10464 = vunpack.c.0.s8 %v10463
      %v10465 = vlaneseq
      %v10466 = vshrl.u32 %v10465, 7
      %v10467 = vsub.s32 %v10464, %v10466
      %v10468 = vrot.slane %v9770, %v10467
      %v10470 = vunpack.c.l.s4 1987475062
      %v10471 = vunpack.c.0.s8 %v10470
      %v10472 = vlaneseq
      %v10473 = vshrl.u32 %v10472, 7
      %v10474 = vsub.s32 %v10471, %v10473
      %v10475 = vrot.slane %v9770, %v10474
      %v10477 = vunpack.c.l.s4 269488144
      %v10478 = vunpack.c.0.s8 %v10477
      %v10479 = vlaneseq
      %v10480 = vshrl.u32 %v10479, 7
      %v10481 = vsub.s32 %v10478, %v10480
      %v10482 = vrot.slane %v9774, %v10481
      %v10484 = vunpack.c.l.s4 269488144
      %v10485 = vunpack.c.0.s8 %v10484
      %v10486 = vlaneseq
      %v10487 = vshrl.u32 %v10486, 7
      %v10488 = vsub.s32 %v10485, %v10487
      %v10489 = vrot.slane %v9781, %v10488
      %v10491 = vunpack.c.l.s4 842150450
      %v10492 = vunpack.c.0.s8 %v10491
      %v10493 = vlaneseq
      %v10494 = vshrl.u32 %v10493, 7
      %v10495 = vsub.s32 %v10492, %v10494
      %v10496 = vrot.slane %v9781, %v10495
      %v10498 = vunpack.c.l.s4 1414812756
      %v10499 = vunpack.c.0.s8 %v10498
      %v10500 = vlaneseq
      %v10501 = vshrl.u32 %v10500, 7
      %v10502 = vsub.s32 %v10499, %v10501
      %v10503 = vrot.slane %v9781, %v10502
      %v10505 = vunpack.c.l.s4 1987475062
      %v10506 = vunpack.c.0.s8 %v10505
      %v10507 = vlaneseq
      %v10508 = vshrl.u32 %v10507, 7
      %v10509 = vsub.s32 %v10506, %v10508
      %v10510 = vrot.slane %v9781, %v10509
      %v10512 = vunpack.c.l.s4 269488144
      %v10513 = vunpack.c.0.s8 %v10512
      %v10514 = vlaneseq
      %v10515 = vshrl.u32 %v10514, 7
      %v10516 = vsub.s32 %v10513, %v10515
      %v10517 = vrot.slane %v9785, %v10516
      %v10519 = vunpack.c.l.s4 842150450
      %v10520 = vunpack.c.0.s8 %v10519
      %v10521 = vlaneseq
      %v10522 = vshrl.u32 %v10521, 7
      %v10523 = vsub.s32 %v10520, %v10522
      %v10524 = vrot.slane %v9785, %v10523
      %v10526 = vunpack.c.l.s4 1414812756
      %v10527 = vunpack.c.0.s8 %v10526
      %v10528 = vlaneseq
      %v10529 = vshrl.u32 %v10528, 7
      %v10530 = vsub.s32 %v10527, %v10529
      %v10531 = vrot.slane %v9785, %v10530
      %v10533 = vunpack.c.l.s4 1987475062
      %v10534 = vunpack.c.0.s8 %v10533
      %v10535 = vlaneseq
      %v10536 = vshrl.u32 %v10535, 7
      %v10537 = vsub.s32 %v10534, %v10536
      %v10538 = vrot.slane %v9785, %v10537
      %v10540 = vunpack.c.l.s4 269488144
      %v10541 = vunpack.c.0.s8 %v10540
      %v10542 = vlaneseq
      %v10543 = vshrl.u32 %v10542, 7
      %v10544 = vsub.s32 %v10541, %v10543
      %v10545 = vrot.slane %v9789, %v10544
      %v10547 = vunpack.c.l.s4 269488144
      %v10548 = vunpack.c.0.s8 %v10547
      %v10549 = vlaneseq
      %v10550 = vshrl.u32 %v10549, 7
      %v10551 = vsub.s32 %v10548, %v10550
      %v10552 = vrot.slane %v9796, %v10551
      %v10554 = vunpack.c.l.s4 842150450
      %v10555 = vunpack.c.0.s8 %v10554
      %v10556 = vlaneseq
      %v10557 = vshrl.u32 %v10556, 7
      %v10558 = vsub.s32 %v10555, %v10557
      %v10559 = vrot.slane %v9796, %v10558
      %v10561 = vunpack.c.l.s4 1414812756
      %v10562 = vunpack.c.0.s8 %v10561
      %v10563 = vlaneseq
      %v10564 = vshrl.u32 %v10563, 7
      %v10565 = vsub.s32 %v10562, %v10564
      %v10566 = vrot.slane %v9796, %v10565
      %v10568 = vunpack.c.l.s4 1987475062
      %v10569 = vunpack.c.0.s8 %v10568
      %v10570 = vlaneseq
      %v10571 = vshrl.u32 %v10570, 7
      %v10572 = vsub.s32 %v10569, %v10571
      %v10573 = vrot.slane %v9796, %v10572
      %v10575 = vunpack.c.l.s4 269488144
      %v10576 = vunpack.c.0.s8 %v10575
      %v10577 = vlaneseq
      %v10578 = vshrl.u32 %v10577, 7
      %v10579 = vsub.s32 %v10576, %v10578
      %v10580 = vrot.slane %v9800, %v10579
      %v10582 = vunpack.c.l.s4 842150450
      %v10583 = vunpack.c.0.s8 %v10582
      %v10584 = vlaneseq
      %v10585 = vshrl.u32 %v10584, 7
      %v10586 = vsub.s32 %v10583, %v10585
      %v10587 = vrot.slane %v9800, %v10586
      %v10589 = vunpack.c.l.s4 1414812756
      %v10590 = vunpack.c.0.s8 %v10589
      %v10591 = vlaneseq
      %v10592 = vshrl.u32 %v10591, 7
      %v10593 = vsub.s32 %v10590, %v10592
      %v10594 = vrot.slane %v9800, %v10593
      %v10596 = vunpack.c.l.s4 1987475062
      %v10597 = vunpack.c.0.s8 %v10596
      %v10598 = vlaneseq
      %v10599 = vshrl.u32 %v10598, 7
      %v10600 = vsub.s32 %v10597, %v10599
      %v10601 = vrot.slane %v9800, %v10600
      %v10603 = vunpack.c.l.s4 269488144
      %v10604 = vunpack.c.0.s8 %v10603
      %v10605 = vlaneseq
      %v10606 = vshrl.u32 %v10605, 7
      %v10607 = vsub.s32 %v10604, %v10606
      %v10608 = vrot.slane %v9804, %v10607
      %v10610 = vunpack.c.l.s4 269488144
      %v10611 = vunpack.c.0.s8 %v10610
      %v10612 = vlaneseq
      %v10613 = vshrl.u32 %v10612, 7
      %v10614 = vsub.s32 %v10611, %v10613
      %v10615 = vrot.slane %v9811, %v10614
      %v10617 = vunpack.c.l.s4 842150450
      %v10618 = vunpack.c.0.s8 %v10617
      %v10619 = vlaneseq
      %v10620 = vshrl.u32 %v10619, 7
      %v10621 = vsub.s32 %v10618, %v10620
      %v10622 = vrot.slane %v9811, %v10621
      %v10624 = vunpack.c.l.s4 1414812756
      %v10625 = vunpack.c.0.s8 %v10624
      %v10626 = vlaneseq
      %v10627 = vshrl.u32 %v10626, 7
      %v10628 = vsub.s32 %v10625, %v10627
      %v10629 = vrot.slane %v9811, %v10628
      %v10631 = vunpack.c.l.s4 1987475062
      %v10632 = vunpack.c.0.s8 %v10631
      %v10633 = vlaneseq
      %v10634 = vshrl.u32 %v10633, 7
      %v10635 = vsub.s32 %v10632, %v10634
      %v10636 = vrot.slane %v9811, %v10635
      %v10638 = vunpack.c.l.s4 269488144
      %v10639 = vunpack.c.0.s8 %v10638
      %v10640 = vlaneseq
      %v10641 = vshrl.u32 %v10640, 7
      %v10642 = vsub.s32 %v10639, %v10641
      %v10643 = vrot.slane %v9815, %v10642
      %v10645 = vunpack.c.l.s4 842150450
      %v10646 = vunpack.c.0.s8 %v10645
      %v10647 = vlaneseq
      %v10648 = vshrl.u32 %v10647, 7
      %v10649 = vsub.s32 %v10646, %v10648
      %v10650 = vrot.slane %v9815, %v10649
      %v10652 = vunpack.c.l.s4 1414812756
      %v10653 = vunpack.c.0.s8 %v10652
      %v10654 = vlaneseq
      %v10655 = vshrl.u32 %v10654, 7
      %v10656 = vsub.s32 %v10653, %v10655
      %v10657 = vrot.slane %v9815, %v10656
      %v10659 = vunpack.c.l.s4 1987475062
      %v10660 = vunpack.c.0.s8 %v10659
      %v10661 = vlaneseq
      %v10662 = vshrl.u32 %v10661, 7
      %v10663 = vsub.s32 %v10660, %v10662
      %v10664 = vrot.slane %v9815, %v10663
      %v10666 = vunpack.c.l.s4 269488144
      %v10667 = vunpack.c.0.s8 %v10666
      %v10668 = vlaneseq
      %v10669 = vshrl.u32 %v10668, 7
      %v10670 = vsub.s32 %v10667, %v10669
      %v10671 = vrot.slane %v9819, %v10670
      %v10673 = vunpack.c.l.s4 269488144
      %v10674 = vunpack.c.0.s8 %v10673
      %v10675 = vlaneseq
      %v10676 = vshrl.u32 %v10675, 7
      %v10677 = vsub.s32 %v10674, %v10676
      %v10678 = vrot.slane %v9826, %v10677
      %v10680 = vunpack.c.l.s4 842150450
      %v10681 = vunpack.c.0.s8 %v10680
      %v10682 = vlaneseq
      %v10683 = vshrl.u32 %v10682, 7
      %v10684 = vsub.s32 %v10681, %v10683
      %v10685 = vrot.slane %v9826, %v10684
      %v10687 = vunpack.c.l.s4 1414812756
      %v10688 = vunpack.c.0.s8 %v10687
      %v10689 = vlaneseq
      %v10690 = vshrl.u32 %v10689, 7
      %v10691 = vsub.s32 %v10688, %v10690
      %v10692 = vrot.slane %v9826, %v10691
      %v10694 = vunpack.c.l.s4 1987475062
      %v10695 = vunpack.c.0.s8 %v10694
      %v10696 = vlaneseq
      %v10697 = vshrl.u32 %v10696, 7
      %v10698 = vsub.s32 %v10695, %v10697
      %v10699 = vrot.slane %v9826, %v10698
      %v10701 = vunpack.c.l.s4 269488144
      %v10702 = vunpack.c.0.s8 %v10701
      %v10703 = vlaneseq
      %v10704 = vshrl.u32 %v10703, 7
      %v10705 = vsub.s32 %v10702, %v10704
      %v10706 = vrot.slane %v9830, %v10705
      %v10708 = vunpack.c.l.s4 842150450
      %v10709 = vunpack.c.0.s8 %v10708
      %v10710 = vlaneseq
      %v10711 = vshrl.u32 %v10710, 7
      %v10712 = vsub.s32 %v10709, %v10711
      %v10713 = vrot.slane %v9830, %v10712
      %v10715 = vunpack.c.l.s4 1414812756
      %v10716 = vunpack.c.0.s8 %v10715
      %v10717 = vlaneseq
      %v10718 = vshrl.u32 %v10717, 7
      %v10719 = vsub.s32 %v10716, %v10718
      %v10720 = vrot.slane %v9830, %v10719
      %v10722 = vunpack.c.l.s4 1987475062
      %v10723 = vunpack.c.0.s8 %v10722
      %v10724 = vlaneseq
      %v10725 = vshrl.u32 %v10724, 7
      %v10726 = vsub.s32 %v10723, %v10725
      %v10727 = vrot.slane %v9830, %v10726
      %v10729 = vunpack.c.l.s4 269488144
      %v10730 = vunpack.c.0.s8 %v10729
      %v10731 = vlaneseq
      %v10732 = vshrl.u32 %v10731, 7
      %v10733 = vsub.s32 %v10730, %v10732
      %v10734 = vrot.slane %v9834, %v10733
      %v10736 = vunpack.c.l.s4 269488144
      %v10737 = vunpack.c.0.s8 %v10736
      %v10738 = vlaneseq
      %v10739 = vshrl.u32 %v10738, 7
      %v10740 = vsub.s32 %v10737, %v10739
      %v10741 = vrot.slane %v9841, %v10740
      %v10743 = vunpack.c.l.s4 842150450
      %v10744 = vunpack.c.0.s8 %v10743
      %v10745 = vlaneseq
      %v10746 = vshrl.u32 %v10745, 7
      %v10747 = vsub.s32 %v10744, %v10746
      %v10748 = vrot.slane %v9841, %v10747
      %v10750 = vunpack.c.l.s4 1414812756
      %v10751 = vunpack.c.0.s8 %v10750
      %v10752 = vlaneseq
      %v10753 = vshrl.u32 %v10752, 7
      %v10754 = vsub.s32 %v10751, %v10753
      %v10755 = vrot.slane %v9841, %v10754
      %v10757 = vunpack.c.l.s4 1987475062
      %v10758 = vunpack.c.0.s8 %v10757
      %v10759 = vlaneseq
      %v10760 = vshrl.u32 %v10759, 7
      %v10761 = vsub.s32 %v10758, %v10760
      %v10762 = vrot.slane %v9841, %v10761
      %v10764 = vunpack.c.l.s4 269488144
      %v10765 = vunpack.c.0.s8 %v10764
      %v10766 = vlaneseq
      %v10767 = vshrl.u32 %v10766, 7
      %v10768 = vsub.s32 %v10765, %v10767
      %v10769 = vrot.slane %v9845, %v10768
      %v10771 = vunpack.c.l.s4 842150450
      %v10772 = vunpack.c.0.s8 %v10771
      %v10773 = vlaneseq
      %v10774 = vshrl.u32 %v10773, 7
      %v10775 = vsub.s32 %v10772, %v10774
      %v10776 = vrot.slane %v9845, %v10775
      %v10778 = vunpack.c.l.s4 1414812756
      %v10779 = vunpack.c.0.s8 %v10778
      %v10780 = vlaneseq
      %v10781 = vshrl.u32 %v10780, 7
      %v10782 = vsub.s32 %v10779, %v10781
      %v10783 = vrot.slane %v9845, %v10782
      %v10785 = vunpack.c.l.s4 1987475062
      %v10786 = vunpack.c.0.s8 %v10785
      %v10787 = vlaneseq
      %v10788 = vshrl.u32 %v10787, 7
      %v10789 = vsub.s32 %v10786, %v10788
      %v10790 = vrot.slane %v9845, %v10789
      %v10792 = vunpack.c.l.s4 269488144
      %v10793 = vunpack.c.0.s8 %v10792
      %v10794 = vlaneseq
      %v10795 = vshrl.u32 %v10794, 7
      %v10796 = vsub.s32 %v10793, %v10795
      %v10797 = vrot.slane %v9849, %v10796
      %v10799 = vunpack.c.l.s4 269488144
      %v10800 = vunpack.c.0.s8 %v10799
      %v10801 = vlaneseq
      %v10802 = vshrl.u32 %v10801, 7
      %v10803 = vsub.s32 %v10800, %v10802
      %v10804 = vrot.slane %v9856, %v10803
      %v10806 = vunpack.c.l.s4 842150450
      %v10807 = vunpack.c.0.s8 %v10806
      %v10808 = vlaneseq
      %v10809 = vshrl.u32 %v10808, 7
      %v10810 = vsub.s32 %v10807, %v10809
      %v10811 = vrot.slane %v9856, %v10810
      %v10813 = vunpack.c.l.s4 1414812756
      %v10814 = vunpack.c.0.s8 %v10813
      %v10815 = vlaneseq
      %v10816 = vshrl.u32 %v10815, 7
      %v10817 = vsub.s32 %v10814, %v10816
      %v10818 = vrot.slane %v9856, %v10817
      %v10820 = vunpack.c.l.s4 1987475062
      %v10821 = vunpack.c.0.s8 %v10820
      %v10822 = vlaneseq
      %v10823 = vshrl.u32 %v10822, 7
      %v10824 = vsub.s32 %v10821, %v10823
      %v10825 = vrot.slane %v9856, %v10824
      %v10827 = vunpack.c.l.s4 269488144
      %v10828 = vunpack.c.0.s8 %v10827
      %v10829 = vlaneseq
      %v10830 = vshrl.u32 %v10829, 7
      %v10831 = vsub.s32 %v10828, %v10830
      %v10832 = vrot.slane %v9860, %v10831
      %v10834 = vunpack.c.l.s4 842150450
      %v10835 = vunpack.c.0.s8 %v10834
      %v10836 = vlaneseq
      %v10837 = vshrl.u32 %v10836, 7
      %v10838 = vsub.s32 %v10835, %v10837
      %v10839 = vrot.slane %v9860, %v10838
      %v10841 = vunpack.c.l.s4 1414812756
      %v10842 = vunpack.c.0.s8 %v10841
      %v10843 = vlaneseq
      %v10844 = vshrl.u32 %v10843, 7
      %v10845 = vsub.s32 %v10842, %v10844
      %v10846 = vrot.slane %v9860, %v10845
      %v10848 = vunpack.c.l.s4 1987475062
      %v10849 = vunpack.c.0.s8 %v10848
      %v10850 = vlaneseq
      %v10851 = vshrl.u32 %v10850, 7
      %v10852 = vsub.s32 %v10849, %v10851
      %v10853 = vrot.slane %v9860, %v10852
      %v10855 = vunpack.c.l.s4 269488144
      %v10856 = vunpack.c.0.s8 %v10855
      %v10857 = vlaneseq
      %v10858 = vshrl.u32 %v10857, 7
      %v10859 = vsub.s32 %v10856, %v10858
      %v10860 = vrot.slane %v9864, %v10859
      %v10862 = vunpack.c.l.s4 269488144
      %v10863 = vunpack.c.0.s8 %v10862
      %v10864 = vlaneseq
      %v10865 = vshrl.u32 %v10864, 7
      %v10866 = vsub.s32 %v10863, %v10865
      %v10867 = vrot.slane %v9871, %v10866
      %v10869 = vunpack.c.l.s4 842150450
      %v10870 = vunpack.c.0.s8 %v10869
      %v10871 = vlaneseq
      %v10872 = vshrl.u32 %v10871, 7
      %v10873 = vsub.s32 %v10870, %v10872
      %v10874 = vrot.slane %v9871, %v10873
      %v10876 = vunpack.c.l.s4 1414812756
      %v10877 = vunpack.c.0.s8 %v10876
      %v10878 = vlaneseq
      %v10879 = vshrl.u32 %v10878, 7
      %v10880 = vsub.s32 %v10877, %v10879
      %v10881 = vrot.slane %v9871, %v10880
      %v10883 = vunpack.c.l.s4 1987475062
      %v10884 = vunpack.c.0.s8 %v10883
      %v10885 = vlaneseq
      %v10886 = vshrl.u32 %v10885, 7
      %v10887 = vsub.s32 %v10884, %v10886
      %v10888 = vrot.slane %v9871, %v10887
      %v10890 = vunpack.c.l.s4 269488144
      %v10891 = vunpack.c.0.s8 %v10890
      %v10892 = vlaneseq
      %v10893 = vshrl.u32 %v10892, 7
      %v10894 = vsub.s32 %v10891, %v10893
      %v10895 = vrot.slane %v9875, %v10894
      %v10897 = vunpack.c.l.s4 842150450
      %v10898 = vunpack.c.0.s8 %v10897
      %v10899 = vlaneseq
      %v10900 = vshrl.u32 %v10899, 7
      %v10901 = vsub.s32 %v10898, %v10900
      %v10902 = vrot.slane %v9875, %v10901
      %v10904 = vunpack.c.l.s4 1414812756
      %v10905 = vunpack.c.0.s8 %v10904
      %v10906 = vlaneseq
      %v10907 = vshrl.u32 %v10906, 7
      %v10908 = vsub.s32 %v10905, %v10907
      %v10909 = vrot.slane %v9875, %v10908
      %v10911 = vunpack.c.l.s4 1987475062
      %v10912 = vunpack.c.0.s8 %v10911
      %v10913 = vlaneseq
      %v10914 = vshrl.u32 %v10913, 7
      %v10915 = vsub.s32 %v10912, %v10914
      %v10916 = vrot.slane %v9875, %v10915
      %v10918 = vunpack.c.l.s4 269488144
      %v10919 = vunpack.c.0.s8 %v10918
      %v10920 = vlaneseq
      %v10921 = vshrl.u32 %v10920, 7
      %v10922 = vsub.s32 %v10919, %v10921
      %v10923 = vrot.slane %v9879, %v10922
      %v10925 = vunpack.c.l.s4 269488144
      %v10926 = vunpack.c.0.s8 %v10925
      %v10927 = vlaneseq
      %v10928 = vshrl.u32 %v10927, 7
      %v10929 = vsub.s32 %v10926, %v10928
      %v10930 = vrot.slane %v9886, %v10929
      %v10932 = vunpack.c.l.s4 842150450
      %v10933 = vunpack.c.0.s8 %v10932
      %v10934 = vlaneseq
      %v10935 = vshrl.u32 %v10934, 7
      %v10936 = vsub.s32 %v10933, %v10935
      %v10937 = vrot.slane %v9886, %v10936
      %v10939 = vunpack.c.l.s4 1414812756
      %v10940 = vunpack.c.0.s8 %v10939
      %v10941 = vlaneseq
      %v10942 = vshrl.u32 %v10941, 7
      %v10943 = vsub.s32 %v10940, %v10942
      %v10944 = vrot.slane %v9886, %v10943
      %v10946 = vunpack.c.l.s4 1987475062
      %v10947 = vunpack.c.0.s8 %v10946
      %v10948 = vlaneseq
      %v10949 = vshrl.u32 %v10948, 7
      %v10950 = vsub.s32 %v10947, %v10949
      %v10951 = vrot.slane %v9886, %v10950
      %v10953 = vunpack.c.l.s4 269488144
      %v10954 = vunpack.c.0.s8 %v10953
      %v10955 = vlaneseq
      %v10956 = vshrl.u32 %v10955, 7
      %v10957 = vsub.s32 %v10954, %v10956
      %v10958 = vrot.slane %v9890, %v10957
      %v10960 = vunpack.c.l.s4 842150450
      %v10961 = vunpack.c.0.s8 %v10960
      %v10962 = vlaneseq
      %v10963 = vshrl.u32 %v10962, 7
      %v10964 = vsub.s32 %v10961, %v10963
      %v10965 = vrot.slane %v9890, %v10964
      %v10967 = vunpack.c.l.s4 1414812756
      %v10968 = vunpack.c.0.s8 %v10967
      %v10969 = vlaneseq
      %v10970 = vshrl.u32 %v10969, 7
      %v10971 = vsub.s32 %v10968, %v10970
      %v10972 = vrot.slane %v9890, %v10971
      %v10974 = vunpack.c.l.s4 1987475062
      %v10975 = vunpack.c.0.s8 %v10974
      %v10976 = vlaneseq
      %v10977 = vshrl.u32 %v10976, 7
      %v10978 = vsub.s32 %v10975, %v10977
      %v10979 = vrot.slane %v9890, %v10978
      %v10981 = vunpack.c.l.s4 269488144
      %v10982 = vunpack.c.0.s8 %v10981
      %v10983 = vlaneseq
      %v10984 = vshrl.u32 %v10983, 7
      %v10985 = vsub.s32 %v10982, %v10984
      %v10986 = vrot.slane %v9894, %v10985
      %v10988 = vunpack.c.l.s4 269488144
      %v10989 = vunpack.c.0.s8 %v10988
      %v10990 = vlaneseq
      %v10991 = vshrl.u32 %v10990, 7
      %v10992 = vsub.s32 %v10989, %v10991
      %v10993 = vrot.slane %v9901, %v10992
      %v10995 = vunpack.c.l.s4 842150450
      %v10996 = vunpack.c.0.s8 %v10995
      %v10997 = vlaneseq
      %v10998 = vshrl.u32 %v10997, 7
      %v10999 = vsub.s32 %v10996, %v10998
      %v11000 = vrot.slane %v9901, %v10999
      %v11002 = vunpack.c.l.s4 1414812756
      %v11003 = vunpack.c.0.s8 %v11002
      %v11004 = vlaneseq
      %v11005 = vshrl.u32 %v11004, 7
      %v11006 = vsub.s32 %v11003, %v11005
      %v11007 = vrot.slane %v9901, %v11006
      %v11009 = vunpack.c.l.s4 1987475062
      %v11010 = vunpack.c.0.s8 %v11009
      %v11011 = vlaneseq
      %v11012 = vshrl.u32 %v11011, 7
      %v11013 = vsub.s32 %v11010, %v11012
      %v11014 = vrot.slane %v9901, %v11013
      %v11016 = vunpack.c.l.s4 269488144
      %v11017 = vunpack.c.0.s8 %v11016
      %v11018 = vlaneseq
      %v11019 = vshrl.u32 %v11018, 7
      %v11020 = vsub.s32 %v11017, %v11019
      %v11021 = vrot.slane %v9905, %v11020
      %v11023 = vunpack.c.l.s4 842150450
      %v11024 = vunpack.c.0.s8 %v11023
      %v11025 = vlaneseq
      %v11026 = vshrl.u32 %v11025, 7
      %v11027 = vsub.s32 %v11024, %v11026
      %v11028 = vrot.slane %v9905, %v11027
      %v11030 = vunpack.c.l.s4 1414812756
      %v11031 = vunpack.c.0.s8 %v11030
      %v11032 = vlaneseq
      %v11033 = vshrl.u32 %v11032, 7
      %v11034 = vsub.s32 %v11031, %v11033
      %v11035 = vrot.slane %v9905, %v11034
      %v11037 = vunpack.c.l.s4 1987475062
      %v11038 = vunpack.c.0.s8 %v11037
      %v11039 = vlaneseq
      %v11040 = vshrl.u32 %v11039, 7
      %v11041 = vsub.s32 %v11038, %v11040
      %v11042 = vrot.slane %v9905, %v11041
      %v11044 = vunpack.c.l.s4 269488144
      %v11045 = vunpack.c.0.s8 %v11044
      %v11046 = vlaneseq
      %v11047 = vshrl.u32 %v11046, 7
      %v11048 = vsub.s32 %v11045, %v11047
      %v11049 = vrot.slane %v9909, %v11048
      %v11051 = vunpack.c.l.s4 269488144
      %v11052 = vunpack.c.0.s8 %v11051
      %v11053 = vlaneseq
      %v11054 = vshrl.u32 %v11053, 7
      %v11055 = vsub.s32 %v11052, %v11054
      %v11056 = vrot.slane %v9916, %v11055
      %v11058 = vunpack.c.l.s4 842150450
      %v11059 = vunpack.c.0.s8 %v11058
      %v11060 = vlaneseq
      %v11061 = vshrl.u32 %v11060, 7
      %v11062 = vsub.s32 %v11059, %v11061
      %v11063 = vrot.slane %v9916, %v11062
      %v11065 = vunpack.c.l.s4 1414812756
      %v11066 = vunpack.c.0.s8 %v11065
      %v11067 = vlaneseq
      %v11068 = vshrl.u32 %v11067, 7
      %v11069 = vsub.s32 %v11066, %v11068
      %v11070 = vrot.slane %v9916, %v11069
      %v11072 = vunpack.c.l.s4 1987475062
      %v11073 = vunpack.c.0.s8 %v11072
      %v11074 = vlaneseq
      %v11075 = vshrl.u32 %v11074, 7
      %v11076 = vsub.s32 %v11073, %v11075
      %v11077 = vrot.slane %v9916, %v11076
      %v11079 = vunpack.c.l.s4 269488144
      %v11080 = vunpack.c.0.s8 %v11079
      %v11081 = vlaneseq
      %v11082 = vshrl.u32 %v11081, 7
      %v11083 = vsub.s32 %v11080, %v11082
      %v11084 = vrot.slane %v9920, %v11083
      %v11086 = vunpack.c.l.s4 842150450
      %v11087 = vunpack.c.0.s8 %v11086
      %v11088 = vlaneseq
      %v11089 = vshrl.u32 %v11088, 7
      %v11090 = vsub.s32 %v11087, %v11089
      %v11091 = vrot.slane %v9920, %v11090
      %v11093 = vunpack.c.l.s4 1414812756
      %v11094 = vunpack.c.0.s8 %v11093
      %v11095 = vlaneseq
      %v11096 = vshrl.u32 %v11095, 7
      %v11097 = vsub.s32 %v11094, %v11096
      %v11098 = vrot.slane %v9920, %v11097
      %v11100 = vunpack.c.l.s4 1987475062
      %v11101 = vunpack.c.0.s8 %v11100
      %v11102 = vlaneseq
      %v11103 = vshrl.u32 %v11102, 7
      %v11104 = vsub.s32 %v11101, %v11103
      %v11105 = vrot.slane %v9920, %v11104
      %v11107 = vunpack.c.l.s4 269488144
      %v11108 = vunpack.c.0.s8 %v11107
      %v11109 = vlaneseq
      %v11110 = vshrl.u32 %v11109, 7
      %v11111 = vsub.s32 %v11108, %v11110
      %v11112 = vrot.slane %v9924, %v11111
      %v11275 = vmul.f32 %v8785, %v9985
      %v11276 = vmul.f32 %v8793, %v9992
      %v11277 = vmul.f32 %v8792, %v9999
      %v11278 = vmul.f32 %v8794, %v10006
      %v11279 = vmul.f32 %v8802, %v10013
      %v11280 = vmul.f32 %v8810, %v10020
      %v11281 = vmul.f32 %v8809, %v10027
      %v11282 = vmul.f32 %v8811, %v10034
      %v11283 = vmul.f32 %v8819, %v10041
      %v11284 = vmul.f32 %v8827, %v10048
      %v11285 = vmul.f32 %v8826, %v10055
      %v11286 = vmul.f32 %v8828, %v10062
      %v11287 = vmul.f32 %v8836, %v10069
      %v11288 = vmul.f32 %v8844, %v10076
      %v11289 = vmul.f32 %v8843, %v10083
      %v11290 = vmul.f32 %v8845, %v10090
      %v11291 = vmul.f32 %v8853, %v10097
      %v11292 = vmul.f32 %v8861, %v10104
      %v11293 = vmul.f32 %v8860, %v10111
      %v11294 = vmul.f32 %v8862, %v10118
      %v11295 = vmul.f32 %v8870, %v10125
      %v11296 = vmul.f32 %v8878, %v10132
      %v11297 = vmul.f32 %v8877, %v10139
      %v11298 = vmul.f32 %v8879, %v10146
      %v11299 = vmul.f32 %v8887, %v10153
      %v11300 = vmul.f32 %v8895, %v10160
      %v11301 = vmul.f32 %v8894, %v10167
      %v11302 = vmul.f32 %v8896, %v10174
      %v11303 = vmul.f32 %v8904, %v10181
      %v11304 = vmul.f32 %v8912, %v10188
      %v11305 = vmul.f32 %v8911, %v10195
      %v11306 = vmul.f32 %v8913, %v10202
      %v11307 = vmul.f32 %v8921, %v10209
      %v11308 = vmul.f32 %v8929, %v10216
      %v11309 = vmul.f32 %v8928, %v10223
      %v11310 = vmul.f32 %v8930, %v10230
      %v11311 = vmul.f32 %v8938, %v10237
      %v11312 = vmul.f32 %v8946, %v10244
      %v11313 = vmul.f32 %v8945, %v10251
      %v11314 = vmul.f32 %v8947, %v10258
      %v11315 = vmul.f32 %v8955, %v10265
      %v11316 = vmul.f32 %v8963, %v10272
      %v11317 = vmul.f32 %v8962, %v10279
      %v11318 = vmul.f32 %v8964, %v10286
      %v11319 = vmul.f32 %v8972, %v10293
      %v11320 = vmul.f32 %v8980, %v10300
      %v11321 = vmul.f32 %v8979, %v10307
      %v11322 = vmul.f32 %v8981, %v10314
      %v11323 = vmul.f32 %v8989, %v10321
      %v11324 = vmul.f32 %v8997, %v10328
      %v11325 = vmul.f32 %v8996, %v10335
      %v11326 = vmul.f32 %v8998, %v10342
      %v11327 = vmul.f32 %v9006, %v10349
      %v11328 = vmul.f32 %v9014, %v10356
      %v11329 = vmul.f32 %v9013, %v10363
      %v11330 = vmul.f32 %v9015, %v10370
      %v11331 = vmul.f32 %v9023, %v10377
      %v11332 = vmul.f32 %v9031, %v10384
      %v11333 = vmul.f32 %v9030, %v10391
      %v11334 = vmul.f32 %v9032, %v10398
      %v11335 = vmul.f32 %v9040, %v10405
      %v11336 = vmul.f32 %v9048, %v10412
      %v11337 = vmul.f32 %v9047, %v10419
      %v11338 = vmul.f32 %v9049, %v10426
      %v11339 = vmul.f32 %v9057, %v10433
      %v11340 = vmul.f32 %v9065, %v10440
      %v11341 = vmul.f32 %v9064, %v10447
      %v11342 = vmul.f32 %v9066, %v10454
      %v11343 = vmul.f32 %v9074, %v10461
      %v11344 = vmul.f32 %v9082, %v10468
      %v11345 = vmul.f32 %v9081, %v10475
      %v11346 = vmul.f32 %v9083, %v10482
      %v11347 = vmul.f32 %v9091, %v10489
      %v11348 = vmul.f32 %v9099, %v10496
      %v11349 = vmul.f32 %v9098, %v10503
      %v11350 = vmul.f32 %v9100, %v10510
      %v11351 = vmul.f32 %v9108, %v10517
      %v11352 = vmul.f32 %v9116, %v10524
      %v11353 = vmul.f32 %v9115, %v10531
      %v11354 = vmul.f32 %v9117, %v10538
      %v11355 = vmul.f32 %v9125, %v10545
      %v11356 = vmul.f32 %v9133, %v10552
      %v11357 = vmul.f32 %v9132, %v10559
      %v11358 = vmul.f32 %v9134, %v10566
      %v11359 = vmul.f32 %v9142, %v10573
      %v11360 = vmul.f32 %v9150, %v10580
      %v11361 = vmul.f32 %v9149, %v10587
      %v11362 = vmul.f32 %v9151, %v10594
      %v11363 = vmul.f32 %v9159, %v10601
      %v11364 = vmul.f32 %v9167, %v10608
      %v11365 = vmul.f32 %v9166, %v10615
      %v11366 = vmul.f32 %v9168, %v10622
      %v11367 = vmul.f32 %v9176, %v10629
      %v11368 = vmul.f32 %v9184, %v10636
      %v11369 = vmul.f32 %v9183, %v10643
      %v11370 = vmul.f32 %v9185, %v10650
      %v11371 = vmul.f32 %v9193, %v10657
      %v11372 = vmul.f32 %v9201, %v10664
      %v11373 = vmul.f32 %v9200, %v10671
      %v11374 = vmul.f32 %v9202, %v10678
      %v11375 = vmul.f32 %v9210, %v10685
      %v11376 = vmul.f32 %v9218, %v10692
      %v11377 = vmul.f32 %v9217, %v10699
      %v11378 = vmul.f32 %v9219, %v10706
      %v11379 = vmul.f32 %v9227, %v10713
      %v11380 = vmul.f32 %v9235, %v10720
      %v11381 = vmul.f32 %v9234, %v10727
      %v11382 = vmul.f32 %v9236, %v10734
      %v11383 = vmul.f32 %v9244, %v10741
      %v11384 = vmul.f32 %v9252, %v10748
      %v11385 = vmul.f32 %v9251, %v10755
      %v11386 = vmul.f32 %v9253, %v10762
      %v11387 = vmul.f32 %v9261, %v10769
      %v11388 = vmul.f32 %v9269, %v10776
      %v11389 = vmul.f32 %v9268, %v10783
      %v11390 = vmul.f32 %v9270, %v10790
      %v11391 = vmul.f32 %v9278, %v10797
      %v11392 = vmul.f32 %v9286, %v10804
      %v11393 = vmul.f32 %v9285, %v10811
      %v11394 = vmul.f32 %v9287, %v10818
      %v11395 = vmul.f32 %v9295, %v10825
      %v11396 = vmul.f32 %v9303, %v10832
      %v11397 = vmul.f32 %v9302, %v10839
      %v11398 = vmul.f32 %v9304, %v10846
      %v11399 = vmul.f32 %v9312, %v10853
      %v11400 = vmul.f32 %v9320, %v10860
      %v11401 = vmul.f32 %v9319, %v10867
      %v11402 = vmul.f32 %v9321, %v10874
      %v11403 = vmul.f32 %v9329, %v10881
      %v11404 = vmul.f32 %v9337, %v10888
      %v11405 = vmul.f32 %v9336, %v10895
      %v11406 = vmul.f32 %v9338, %v10902
      %v11407 = vmul.f32 %v9346, %v10909
      %v11408 = vmul.f32 %v9354, %v10916
      %v11409 = vmul.f32 %v9353, %v10923
      %v11410 = vmul.f32 %v9355, %v10930
      %v11411 = vmul.f32 %v9363, %v10937
      %v11412 = vmul.f32 %v9371, %v10944
      %v11413 = vmul.f32 %v9370, %v10951
      %v11414 = vmul.f32 %v9372, %v10958
      %v11415 = vmul.f32 %v9380, %v10965
      %v11416 = vmul.f32 %v9388, %v10972
      %v11417 = vmul.f32 %v9387, %v10979
      %v11418 = vmul.f32 %v9389, %v10986
      %v11419 = vmul.f32 %v9397, %v10993
      %v11420 = vmul.f32 %v9405, %v11000
      %v11421 = vmul.f32 %v9404, %v11007
      %v11422 = vmul.f32 %v9406, %v11014
      %v11423 = vmul.f32 %v9414, %v11021
      %v11424 = vmul.f32 %v9422, %v11028
      %v11425 = vmul.f32 %v9421, %v11035
      %v11426 = vmul.f32 %v9423, %v11042
      %v11427 = vmul.f32 %v9431, %v11049
      %v11428 = vmul.f32 %v9439, %v11056
      %v11429 = vmul.f32 %v9438, %v11063
      %v11430 = vmul.f32 %v9440, %v11070
      %v11431 = vmul.f32 %v9448, %v11077
      %v11432 = vmul.f32 %v9456, %v11084
      %v11433 = vmul.f32 %v9455, %v11091
      %v11434 = vmul.f32 %v9457, %v11098
      %v11435 = vmul.f32 %v9464, %v11105
      %v11436 = vmul.f32 %v9465, %v11112
      %v11599 = vcombine.low %v11275, %v11276
      %v11600 = vcombine.low %v11277, %v11278
      %v11602 = vunpack.c.l.s4 1983009808
      %v11603 = vunpack.c.0.s8 %v11602
      %v11604 = vlaneseq
      %v11605 = vshrl.u32 %v11604, 7
      %v11606 = vsub.s32 %v11603, %v11605
      %v11607 = vrot.slane %v11599, %v11606
      %v11609 = vunpack.c.l.s4 1983009808
      %v11610 = vunpack.c.0.s8 %v11609
      %v11611 = vlaneseq
      %v11612 = vshrl.u32 %v11611, 7
      %v11613 = vsub.s32 %v11610, %v11612
      %v11614 = vrot.slane %v11600, %v11613
      %v11615 = vcombine.low %v11607, %v11614
      %v11616 = vcombine.low %v11279, %v11280
      %v11617 = vcombine.low %v11281, %v11282
      %v11619 = vunpack.c.l.s4 1983009808
      %v11620 = vunpack.c.0.s8 %v11619
      %v11621 = vlaneseq
      %v11622 = vshrl.u32 %v11621, 7
      %v11623 = vsub.s32 %v11620, %v11622
      %v11624 = vrot.slane %v11616, %v11623
      %v11626 = vunpack.c.l.s4 1983009808
      %v11627 = vunpack.c.0.s8 %v11626
      %v11628 = vlaneseq
      %v11629 = vshrl.u32 %v11628, 7
      %v11630 = vsub.s32 %v11627, %v11629
      %v11631 = vrot.slane %v11617, %v11630
      %v11632 = vcombine.low %v11624, %v11631
      %v11634 = vunpack.c.l.s4 1983009808
      %v11635 = vunpack.c.0.s8 %v11634
      %v11636 = vlaneseq
      %v11637 = vshrl.u32 %v11636, 7
      %v11638 = vsub.s32 %v11635, %v11637
      %v11639 = vrot.slane %v11283, %v11638
      %v11640 = vcombine.low %v11284, %v11285
      %v11641 = vcombine.low %v11286, %v11287
      %v11643 = vunpack.c.l.s4 1983009808
      %v11644 = vunpack.c.0.s8 %v11643
      %v11645 = vlaneseq
      %v11646 = vshrl.u32 %v11645, 7
      %v11647 = vsub.s32 %v11644, %v11646
      %v11648 = vrot.slane %v11640, %v11647
      %v11650 = vunpack.c.l.s4 1983009808
      %v11651 = vunpack.c.0.s8 %v11650
      %v11652 = vlaneseq
      %v11653 = vshrl.u32 %v11652, 7
      %v11654 = vsub.s32 %v11651, %v11653
      %v11655 = vrot.slane %v11641, %v11654
      %v11656 = vcombine.low %v11648, %v11655
      %v11657 = vcombine.low %v11288, %v11289
      %v11658 = vcombine.low %v11290, %v11291
      %v11660 = vunpack.c.l.s4 1983009808
      %v11661 = vunpack.c.0.s8 %v11660
      %v11662 = vlaneseq
      %v11663 = vshrl.u32 %v11662, 7
      %v11664 = vsub.s32 %v11661, %v11663
      %v11665 = vrot.slane %v11657, %v11664
      %v11667 = vunpack.c.l.s4 1983009808
      %v11668 = vunpack.c.0.s8 %v11667
      %v11669 = vlaneseq
      %v11670 = vshrl.u32 %v11669, 7
      %v11671 = vsub.s32 %v11668, %v11670
      %v11672 = vrot.slane %v11658, %v11671
      %v11673 = vcombine.low %v11665, %v11672
      %v11675 = vunpack.c.l.s4 1983009808
      %v11676 = vunpack.c.0.s8 %v11675
      %v11677 = vlaneseq
      %v11678 = vshrl.u32 %v11677, 7
      %v11679 = vsub.s32 %v11676, %v11678
      %v11680 = vrot.slane %v11292, %v11679
      %v11681 = vcombine.low %v11293, %v11294
      %v11682 = vcombine.low %v11295, %v11296
      %v11684 = vunpack.c.l.s4 1983009808
      %v11685 = vunpack.c.0.s8 %v11684
      %v11686 = vlaneseq
      %v11687 = vshrl.u32 %v11686, 7
      %v11688 = vsub.s32 %v11685, %v11687
      %v11689 = vrot.slane %v11681, %v11688
      %v11691 = vunpack.c.l.s4 1983009808
      %v11692 = vunpack.c.0.s8 %v11691
      %v11693 = vlaneseq
      %v11694 = vshrl.u32 %v11693, 7
      %v11695 = vsub.s32 %v11692, %v11694
      %v11696 = vrot.slane %v11682, %v11695
      %v11697 = vcombine.low %v11689, %v11696
      %v11698 = vcombine.low %v11297, %v11298
      %v11699 = vcombine.low %v11299, %v11300
      %v11701 = vunpack.c.l.s4 1983009808
      %v11702 = vunpack.c.0.s8 %v11701
      %v11703 = vlaneseq
      %v11704 = vshrl.u32 %v11703, 7
      %v11705 = vsub.s32 %v11702, %v11704
      %v11706 = vrot.slane %v11698, %v11705
      %v11708 = vunpack.c.l.s4 1983009808
      %v11709 = vunpack.c.0.s8 %v11708
      %v11710 = vlaneseq
      %v11711 = vshrl.u32 %v11710, 7
      %v11712 = vsub.s32 %v11709, %v11711
      %v11713 = vrot.slane %v11699, %v11712
      %v11714 = vcombine.low %v11706, %v11713
      %v11716 = vunpack.c.l.s4 1983009808
      %v11717 = vunpack.c.0.s8 %v11716
      %v11718 = vlaneseq
      %v11719 = vshrl.u32 %v11718, 7
      %v11720 = vsub.s32 %v11717, %v11719
      %v11721 = vrot.slane %v11301, %v11720
      %v11722 = vcombine.low %v11302, %v11303
      %v11723 = vcombine.low %v11304, %v11305
      %v11725 = vunpack.c.l.s4 1983009808
      %v11726 = vunpack.c.0.s8 %v11725
      %v11727 = vlaneseq
      %v11728 = vshrl.u32 %v11727, 7
      %v11729 = vsub.s32 %v11726, %v11728
      %v11730 = vrot.slane %v11722, %v11729
      %v11732 = vunpack.c.l.s4 1983009808
      %v11733 = vunpack.c.0.s8 %v11732
      %v11734 = vlaneseq
      %v11735 = vshrl.u32 %v11734, 7
      %v11736 = vsub.s32 %v11733, %v11735
      %v11737 = vrot.slane %v11723, %v11736
      %v11738 = vcombine.low %v11730, %v11737
      %v11739 = vcombine.low %v11306, %v11307
      %v11740 = vcombine.low %v11308, %v11309
      %v11742 = vunpack.c.l.s4 1983009808
      %v11743 = vunpack.c.0.s8 %v11742
      %v11744 = vlaneseq
      %v11745 = vshrl.u32 %v11744, 7
      %v11746 = vsub.s32 %v11743, %v11745
      %v11747 = vrot.slane %v11739, %v11746
      %v11749 = vunpack.c.l.s4 1983009808
      %v11750 = vunpack.c.0.s8 %v11749
      %v11751 = vlaneseq
      %v11752 = vshrl.u32 %v11751, 7
      %v11753 = vsub.s32 %v11750, %v11752
      %v11754 = vrot.slane %v11740, %v11753
      %v11755 = vcombine.low %v11747, %v11754
      %v11757 = vunpack.c.l.s4 1983009808
      %v11758 = vunpack.c.0.s8 %v11757
      %v11759 = vlaneseq
      %v11760 = vshrl.u32 %v11759, 7
      %v11761 = vsub.s32 %v11758, %v11760
      %v11762 = vrot.slane %v11310, %v11761
      %v11763 = vcombine.low %v11311, %v11312
      %v11764 = vcombine.low %v11313, %v11314
      %v11766 = vunpack.c.l.s4 1983009808
      %v11767 = vunpack.c.0.s8 %v11766
      %v11768 = vlaneseq
      %v11769 = vshrl.u32 %v11768, 7
      %v11770 = vsub.s32 %v11767, %v11769
      %v11771 = vrot.slane %v11763, %v11770
      %v11773 = vunpack.c.l.s4 1983009808
      %v11774 = vunpack.c.0.s8 %v11773
      %v11775 = vlaneseq
      %v11776 = vshrl.u32 %v11775, 7
      %v11777 = vsub.s32 %v11774, %v11776
      %v11778 = vrot.slane %v11764, %v11777
      %v11779 = vcombine.low %v11771, %v11778
      %v11780 = vcombine.low %v11315, %v11316
      %v11781 = vcombine.low %v11317, %v11318
      %v11783 = vunpack.c.l.s4 1983009808
      %v11784 = vunpack.c.0.s8 %v11783
      %v11785 = vlaneseq
      %v11786 = vshrl.u32 %v11785, 7
      %v11787 = vsub.s32 %v11784, %v11786
      %v11788 = vrot.slane %v11780, %v11787
      %v11790 = vunpack.c.l.s4 1983009808
      %v11791 = vunpack.c.0.s8 %v11790
      %v11792 = vlaneseq
      %v11793 = vshrl.u32 %v11792, 7
      %v11794 = vsub.s32 %v11791, %v11793
      %v11795 = vrot.slane %v11781, %v11794
      %v11796 = vcombine.low %v11788, %v11795
      %v11798 = vunpack.c.l.s4 1983009808
      %v11799 = vunpack.c.0.s8 %v11798
      %v11800 = vlaneseq
      %v11801 = vshrl.u32 %v11800, 7
      %v11802 = vsub.s32 %v11799, %v11801
      %v11803 = vrot.slane %v11319, %v11802
      %v11804 = vcombine.low %v11320, %v11321
      %v11805 = vcombine.low %v11322, %v11323
      %v11807 = vunpack.c.l.s4 1983009808
      %v11808 = vunpack.c.0.s8 %v11807
      %v11809 = vlaneseq
      %v11810 = vshrl.u32 %v11809, 7
      %v11811 = vsub.s32 %v11808, %v11810
      %v11812 = vrot.slane %v11804, %v11811
      %v11814 = vunpack.c.l.s4 1983009808
      %v11815 = vunpack.c.0.s8 %v11814
      %v11816 = vlaneseq
      %v11817 = vshrl.u32 %v11816, 7
      %v11818 = vsub.s32 %v11815, %v11817
      %v11819 = vrot.slane %v11805, %v11818
      %v11820 = vcombine.low %v11812, %v11819
      %v11821 = vcombine.low %v11324, %v11325
      %v11822 = vcombine.low %v11326, %v11327
      %v11824 = vunpack.c.l.s4 1983009808
      %v11825 = vunpack.c.0.s8 %v11824
      %v11826 = vlaneseq
      %v11827 = vshrl.u32 %v11826, 7
      %v11828 = vsub.s32 %v11825, %v11827
      %v11829 = vrot.slane %v11821, %v11828
      %v11831 = vunpack.c.l.s4 1983009808
      %v11832 = vunpack.c.0.s8 %v11831
      %v11833 = vlaneseq
      %v11834 = vshrl.u32 %v11833, 7
      %v11835 = vsub.s32 %v11832, %v11834
      %v11836 = vrot.slane %v11822, %v11835
      %v11837 = vcombine.low %v11829, %v11836
      %v11839 = vunpack.c.l.s4 1983009808
      %v11840 = vunpack.c.0.s8 %v11839
      %v11841 = vlaneseq
      %v11842 = vshrl.u32 %v11841, 7
      %v11843 = vsub.s32 %v11840, %v11842
      %v11844 = vrot.slane %v11328, %v11843
      %v11845 = vcombine.low %v11329, %v11330
      %v11846 = vcombine.low %v11331, %v11332
      %v11848 = vunpack.c.l.s4 1983009808
      %v11849 = vunpack.c.0.s8 %v11848
      %v11850 = vlaneseq
      %v11851 = vshrl.u32 %v11850, 7
      %v11852 = vsub.s32 %v11849, %v11851
      %v11853 = vrot.slane %v11845, %v11852
      %v11855 = vunpack.c.l.s4 1983009808
      %v11856 = vunpack.c.0.s8 %v11855
      %v11857 = vlaneseq
      %v11858 = vshrl.u32 %v11857, 7
      %v11859 = vsub.s32 %v11856, %v11858
      %v11860 = vrot.slane %v11846, %v11859
      %v11861 = vcombine.low %v11853, %v11860
      %v11862 = vcombine.low %v11333, %v11334
      %v11863 = vcombine.low %v11335, %v11336
      %v11865 = vunpack.c.l.s4 1983009808
      %v11866 = vunpack.c.0.s8 %v11865
      %v11867 = vlaneseq
      %v11868 = vshrl.u32 %v11867, 7
      %v11869 = vsub.s32 %v11866, %v11868
      %v11870 = vrot.slane %v11862, %v11869
      %v11872 = vunpack.c.l.s4 1983009808
      %v11873 = vunpack.c.0.s8 %v11872
      %v11874 = vlaneseq
      %v11875 = vshrl.u32 %v11874, 7
      %v11876 = vsub.s32 %v11873, %v11875
      %v11877 = vrot.slane %v11863, %v11876
      %v11878 = vcombine.low %v11870, %v11877
      %v11880 = vunpack.c.l.s4 1983009808
      %v11881 = vunpack.c.0.s8 %v11880
      %v11882 = vlaneseq
      %v11883 = vshrl.u32 %v11882, 7
      %v11884 = vsub.s32 %v11881, %v11883
      %v11885 = vrot.slane %v11337, %v11884
      %v11886 = vcombine.low %v11338, %v11339
      %v11887 = vcombine.low %v11340, %v11341
      %v11889 = vunpack.c.l.s4 1983009808
      %v11890 = vunpack.c.0.s8 %v11889
      %v11891 = vlaneseq
      %v11892 = vshrl.u32 %v11891, 7
      %v11893 = vsub.s32 %v11890, %v11892
      %v11894 = vrot.slane %v11886, %v11893
      %v11896 = vunpack.c.l.s4 1983009808
      %v11897 = vunpack.c.0.s8 %v11896
      %v11898 = vlaneseq
      %v11899 = vshrl.u32 %v11898, 7
      %v11900 = vsub.s32 %v11897, %v11899
      %v11901 = vrot.slane %v11887, %v11900
      %v11902 = vcombine.low %v11894, %v11901
      %v11903 = vcombine.low %v11342, %v11343
      %v11904 = vcombine.low %v11344, %v11345
      %v11906 = vunpack.c.l.s4 1983009808
      %v11907 = vunpack.c.0.s8 %v11906
      %v11908 = vlaneseq
      %v11909 = vshrl.u32 %v11908, 7
      %v11910 = vsub.s32 %v11907, %v11909
      %v11911 = vrot.slane %v11903, %v11910
      %v11913 = vunpack.c.l.s4 1983009808
      %v11914 = vunpack.c.0.s8 %v11913
      %v11915 = vlaneseq
      %v11916 = vshrl.u32 %v11915, 7
      %v11917 = vsub.s32 %v11914, %v11916
      %v11918 = vrot.slane %v11904, %v11917
      %v11919 = vcombine.low %v11911, %v11918
      %v11921 = vunpack.c.l.s4 1983009808
      %v11922 = vunpack.c.0.s8 %v11921
      %v11923 = vlaneseq
      %v11924 = vshrl.u32 %v11923, 7
      %v11925 = vsub.s32 %v11922, %v11924
      %v11926 = vrot.slane %v11346, %v11925
      %v11927 = vcombine.low %v11347, %v11348
      %v11928 = vcombine.low %v11349, %v11350
      %v11930 = vunpack.c.l.s4 1983009808
      %v11931 = vunpack.c.0.s8 %v11930
      %v11932 = vlaneseq
      %v11933 = vshrl.u32 %v11932, 7
      %v11934 = vsub.s32 %v11931, %v11933
      %v11935 = vrot.slane %v11927, %v11934
      %v11937 = vunpack.c.l.s4 1983009808
      %v11938 = vunpack.c.0.s8 %v11937
      %v11939 = vlaneseq
      %v11940 = vshrl.u32 %v11939, 7
      %v11941 = vsub.s32 %v11938, %v11940
      %v11942 = vrot.slane %v11928, %v11941
      %v11943 = vcombine.low %v11935, %v11942
      %v11944 = vcombine.low %v11351, %v11352
      %v11945 = vcombine.low %v11353, %v11354
      %v11947 = vunpack.c.l.s4 1983009808
      %v11948 = vunpack.c.0.s8 %v11947
      %v11949 = vlaneseq
      %v11950 = vshrl.u32 %v11949, 7
      %v11951 = vsub.s32 %v11948, %v11950
      %v11952 = vrot.slane %v11944, %v11951
      %v11954 = vunpack.c.l.s4 1983009808
      %v11955 = vunpack.c.0.s8 %v11954
      %v11956 = vlaneseq
      %v11957 = vshrl.u32 %v11956, 7
      %v11958 = vsub.s32 %v11955, %v11957
      %v11959 = vrot.slane %v11945, %v11958
      %v11960 = vcombine.low %v11952, %v11959
      %v11962 = vunpack.c.l.s4 1983009808
      %v11963 = vunpack.c.0.s8 %v11962
      %v11964 = vlaneseq
      %v11965 = vshrl.u32 %v11964, 7
      %v11966 = vsub.s32 %v11963, %v11965
      %v11967 = vrot.slane %v11355, %v11966
      %v11968 = vcombine.low %v11356, %v11357
      %v11969 = vcombine.low %v11358, %v11359
      %v11971 = vunpack.c.l.s4 1983009808
      %v11972 = vunpack.c.0.s8 %v11971
      %v11973 = vlaneseq
      %v11974 = vshrl.u32 %v11973, 7
      %v11975 = vsub.s32 %v11972, %v11974
      %v11976 = vrot.slane %v11968, %v11975
      %v11978 = vunpack.c.l.s4 1983009808
      %v11979 = vunpack.c.0.s8 %v11978
      %v11980 = vlaneseq
      %v11981 = vshrl.u32 %v11980, 7
      %v11982 = vsub.s32 %v11979, %v11981
      %v11983 = vrot.slane %v11969, %v11982
      %v11984 = vcombine.low %v11976, %v11983
      %v11985 = vcombine.low %v11360, %v11361
      %v11986 = vcombine.low %v11362, %v11363
      %v11988 = vunpack.c.l.s4 1983009808
      %v11989 = vunpack.c.0.s8 %v11988
      %v11990 = vlaneseq
      %v11991 = vshrl.u32 %v11990, 7
      %v11992 = vsub.s32 %v11989, %v11991
      %v11993 = vrot.slane %v11985, %v11992
      %v11995 = vunpack.c.l.s4 1983009808
      %v11996 = vunpack.c.0.s8 %v11995
      %v11997 = vlaneseq
      %v11998 = vshrl.u32 %v11997, 7
      %v11999 = vsub.s32 %v11996, %v11998
      %v12000 = vrot.slane %v11986, %v11999
      %v12001 = vcombine.low %v11993, %v12000
      %v12003 = vunpack.c.l.s4 1983009808
      %v12004 = vunpack.c.0.s8 %v12003
      %v12005 = vlaneseq
      %v12006 = vshrl.u32 %v12005, 7
      %v12007 = vsub.s32 %v12004, %v12006
      %v12008 = vrot.slane %v11364, %v12007
      %v12009 = vcombine.low %v11365, %v11366
      %v12010 = vcombine.low %v11367, %v11368
      %v12012 = vunpack.c.l.s4 1983009808
      %v12013 = vunpack.c.0.s8 %v12012
      %v12014 = vlaneseq
      %v12015 = vshrl.u32 %v12014, 7
      %v12016 = vsub.s32 %v12013, %v12015
      %v12017 = vrot.slane %v12009, %v12016
      %v12019 = vunpack.c.l.s4 1983009808
      %v12020 = vunpack.c.0.s8 %v12019
      %v12021 = vlaneseq
      %v12022 = vshrl.u32 %v12021, 7
      %v12023 = vsub.s32 %v12020, %v12022
      %v12024 = vrot.slane %v12010, %v12023
      %v12025 = vcombine.low %v12017, %v12024
      %v12026 = vcombine.low %v11369, %v11370
      %v12027 = vcombine.low %v11371, %v11372
      %v12029 = vunpack.c.l.s4 1983009808
      %v12030 = vunpack.c.0.s8 %v12029
      %v12031 = vlaneseq
      %v12032 = vshrl.u32 %v12031, 7
      %v12033 = vsub.s32 %v12030, %v12032
      %v12034 = vrot.slane %v12026, %v12033
      %v12036 = vunpack.c.l.s4 1983009808
      %v12037 = vunpack.c.0.s8 %v12036
      %v12038 = vlaneseq
      %v12039 = vshrl.u32 %v12038, 7
      %v12040 = vsub.s32 %v12037, %v12039
      %v12041 = vrot.slane %v12027, %v12040
      %v12042 = vcombine.low %v12034, %v12041
      %v12044 = vunpack.c.l.s4 1983009808
      %v12045 = vunpack.c.0.s8 %v12044
      %v12046 = vlaneseq
      %v12047 = vshrl.u32 %v12046, 7
      %v12048 = vsub.s32 %v12045, %v12047
      %v12049 = vrot.slane %v11373, %v12048
      %v12050 = vcombine.low %v11374, %v11375
      %v12051 = vcombine.low %v11376, %v11377
      %v12053 = vunpack.c.l.s4 1983009808
      %v12054 = vunpack.c.0.s8 %v12053
      %v12055 = vlaneseq
      %v12056 = vshrl.u32 %v12055, 7
      %v12057 = vsub.s32 %v12054, %v12056
      %v12058 = vrot.slane %v12050, %v12057
      %v12060 = vunpack.c.l.s4 1983009808
      %v12061 = vunpack.c.0.s8 %v12060
      %v12062 = vlaneseq
      %v12063 = vshrl.u32 %v12062, 7
      %v12064 = vsub.s32 %v12061, %v12063
      %v12065 = vrot.slane %v12051, %v12064
      %v12066 = vcombine.low %v12058, %v12065
      %v12067 = vcombine.low %v11378, %v11379
      %v12068 = vcombine.low %v11380, %v11381
      %v12070 = vunpack.c.l.s4 1983009808
      %v12071 = vunpack.c.0.s8 %v12070
      %v12072 = vlaneseq
      %v12073 = vshrl.u32 %v12072, 7
      %v12074 = vsub.s32 %v12071, %v12073
      %v12075 = vrot.slane %v12067, %v12074
      %v12077 = vunpack.c.l.s4 1983009808
      %v12078 = vunpack.c.0.s8 %v12077
      %v12079 = vlaneseq
      %v12080 = vshrl.u32 %v12079, 7
      %v12081 = vsub.s32 %v12078, %v12080
      %v12082 = vrot.slane %v12068, %v12081
      %v12083 = vcombine.low %v12075, %v12082
      %v12085 = vunpack.c.l.s4 1983009808
      %v12086 = vunpack.c.0.s8 %v12085
      %v12087 = vlaneseq
      %v12088 = vshrl.u32 %v12087, 7
      %v12089 = vsub.s32 %v12086, %v12088
      %v12090 = vrot.slane %v11382, %v12089
      %v12091 = vcombine.low %v11383, %v11384
      %v12092 = vcombine.low %v11385, %v11386
      %v12094 = vunpack.c.l.s4 1983009808
      %v12095 = vunpack.c.0.s8 %v12094
      %v12096 = vlaneseq
      %v12097 = vshrl.u32 %v12096, 7
      %v12098 = vsub.s32 %v12095, %v12097
      %v12099 = vrot.slane %v12091, %v12098
      %v12101 = vunpack.c.l.s4 1983009808
      %v12102 = vunpack.c.0.s8 %v12101
      %v12103 = vlaneseq
      %v12104 = vshrl.u32 %v12103, 7
      %v12105 = vsub.s32 %v12102, %v12104
      %v12106 = vrot.slane %v12092, %v12105
      %v12107 = vcombine.low %v12099, %v12106
      %v12108 = vcombine.low %v11387, %v11388
      %v12109 = vcombine.low %v11389, %v11390
      %v12111 = vunpack.c.l.s4 1983009808
      %v12112 = vunpack.c.0.s8 %v12111
      %v12113 = vlaneseq
      %v12114 = vshrl.u32 %v12113, 7
      %v12115 = vsub.s32 %v12112, %v12114
      %v12116 = vrot.slane %v12108, %v12115
      %v12118 = vunpack.c.l.s4 1983009808
      %v12119 = vunpack.c.0.s8 %v12118
      %v12120 = vlaneseq
      %v12121 = vshrl.u32 %v12120, 7
      %v12122 = vsub.s32 %v12119, %v12121
      %v12123 = vrot.slane %v12109, %v12122
      %v12124 = vcombine.low %v12116, %v12123
      %v12126 = vunpack.c.l.s4 1983009808
      %v12127 = vunpack.c.0.s8 %v12126
      %v12128 = vlaneseq
      %v12129 = vshrl.u32 %v12128, 7
      %v12130 = vsub.s32 %v12127, %v12129
      %v12131 = vrot.slane %v11391, %v12130
      %v12132 = vcombine.low %v11392, %v11393
      %v12133 = vcombine.low %v11394, %v11395
      %v12135 = vunpack.c.l.s4 1983009808
      %v12136 = vunpack.c.0.s8 %v12135
      %v12137 = vlaneseq
      %v12138 = vshrl.u32 %v12137, 7
      %v12139 = vsub.s32 %v12136, %v12138
      %v12140 = vrot.slane %v12132, %v12139
      %v12142 = vunpack.c.l.s4 1983009808
      %v12143 = vunpack.c.0.s8 %v12142
      %v12144 = vlaneseq
      %v12145 = vshrl.u32 %v12144, 7
      %v12146 = vsub.s32 %v12143, %v12145
      %v12147 = vrot.slane %v12133, %v12146
      %v12148 = vcombine.low %v12140, %v12147
      %v12149 = vcombine.low %v11396, %v11397
      %v12150 = vcombine.low %v11398, %v11399
      %v12152 = vunpack.c.l.s4 1983009808
      %v12153 = vunpack.c.0.s8 %v12152
      %v12154 = vlaneseq
      %v12155 = vshrl.u32 %v12154, 7
      %v12156 = vsub.s32 %v12153, %v12155
      %v12157 = vrot.slane %v12149, %v12156
      %v12159 = vunpack.c.l.s4 1983009808
      %v12160 = vunpack.c.0.s8 %v12159
      %v12161 = vlaneseq
      %v12162 = vshrl.u32 %v12161, 7
      %v12163 = vsub.s32 %v12160, %v12162
      %v12164 = vrot.slane %v12150, %v12163
      %v12165 = vcombine.low %v12157, %v12164
      %v12167 = vunpack.c.l.s4 1983009808
      %v12168 = vunpack.c.0.s8 %v12167
      %v12169 = vlaneseq
      %v12170 = vshrl.u32 %v12169, 7
      %v12171 = vsub.s32 %v12168, %v12170
      %v12172 = vrot.slane %v11400, %v12171
      %v12173 = vcombine.low %v11401, %v11402
      %v12174 = vcombine.low %v11403, %v11404
      %v12176 = vunpack.c.l.s4 1983009808
      %v12177 = vunpack.c.0.s8 %v12176
      %v12178 = vlaneseq
      %v12179 = vshrl.u32 %v12178, 7
      %v12180 = vsub.s32 %v12177, %v12179
      %v12181 = vrot.slane %v12173, %v12180
      %v12183 = vunpack.c.l.s4 1983009808
      %v12184 = vunpack.c.0.s8 %v12183
      %v12185 = vlaneseq
      %v12186 = vshrl.u32 %v12185, 7
      %v12187 = vsub.s32 %v12184, %v12186
      %v12188 = vrot.slane %v12174, %v12187
      %v12189 = vcombine.low %v12181, %v12188
      %v12190 = vcombine.low %v11405, %v11406
      %v12191 = vcombine.low %v11407, %v11408
      %v12193 = vunpack.c.l.s4 1983009808
      %v12194 = vunpack.c.0.s8 %v12193
      %v12195 = vlaneseq
      %v12196 = vshrl.u32 %v12195, 7
      %v12197 = vsub.s32 %v12194, %v12196
      %v12198 = vrot.slane %v12190, %v12197
      %v12200 = vunpack.c.l.s4 1983009808
      %v12201 = vunpack.c.0.s8 %v12200
      %v12202 = vlaneseq
      %v12203 = vshrl.u32 %v12202, 7
      %v12204 = vsub.s32 %v12201, %v12203
      %v12205 = vrot.slane %v12191, %v12204
      %v12206 = vcombine.low %v12198, %v12205
      %v12208 = vunpack.c.l.s4 1983009808
      %v12209 = vunpack.c.0.s8 %v12208
      %v12210 = vlaneseq
      %v12211 = vshrl.u32 %v12210, 7
      %v12212 = vsub.s32 %v12209, %v12211
      %v12213 = vrot.slane %v11409, %v12212
      %v12214 = vcombine.low %v11410, %v11411
      %v12215 = vcombine.low %v11412, %v11413
      %v12217 = vunpack.c.l.s4 1983009808
      %v12218 = vunpack.c.0.s8 %v12217
      %v12219 = vlaneseq
      %v12220 = vshrl.u32 %v12219, 7
      %v12221 = vsub.s32 %v12218, %v12220
      %v12222 = vrot.slane %v12214, %v12221
      %v12224 = vunpack.c.l.s4 1983009808
      %v12225 = vunpack.c.0.s8 %v12224
      %v12226 = vlaneseq
      %v12227 = vshrl.u32 %v12226, 7
      %v12228 = vsub.s32 %v12225, %v12227
      %v12229 = vrot.slane %v12215, %v12228
      %v12230 = vcombine.low %v12222, %v12229
      %v12231 = vcombine.low %v11414, %v11415
      %v12232 = vcombine.low %v11416, %v11417
      %v12234 = vunpack.c.l.s4 1983009808
      %v12235 = vunpack.c.0.s8 %v12234
      %v12236 = vlaneseq
      %v12237 = vshrl.u32 %v12236, 7
      %v12238 = vsub.s32 %v12235, %v12237
      %v12239 = vrot.slane %v12231, %v12238
      %v12241 = vunpack.c.l.s4 1983009808
      %v12242 = vunpack.c.0.s8 %v12241
      %v12243 = vlaneseq
      %v12244 = vshrl.u32 %v12243, 7
      %v12245 = vsub.s32 %v12242, %v12244
      %v12246 = vrot.slane %v12232, %v12245
      %v12247 = vcombine.low %v12239, %v12246
      %v12249 = vunpack.c.l.s4 1983009808
      %v12250 = vunpack.c.0.s8 %v12249
      %v12251 = vlaneseq
      %v12252 = vshrl.u32 %v12251, 7
      %v12253 = vsub.s32 %v12250, %v12252
      %v12254 = vrot.slane %v11418, %v12253
      %v12255 = vcombine.low %v11419, %v11420
      %v12256 = vcombine.low %v11421, %v11422
      %v12258 = vunpack.c.l.s4 1983009808
      %v12259 = vunpack.c.0.s8 %v12258
      %v12260 = vlaneseq
      %v12261 = vshrl.u32 %v12260, 7
      %v12262 = vsub.s32 %v12259, %v12261
      %v12263 = vrot.slane %v12255, %v12262
      %v12265 = vunpack.c.l.s4 1983009808
      %v12266 = vunpack.c.0.s8 %v12265
      %v12267 = vlaneseq
      %v12268 = vshrl.u32 %v12267, 7
      %v12269 = vsub.s32 %v12266, %v12268
      %v12270 = vrot.slane %v12256, %v12269
      %v12271 = vcombine.low %v12263, %v12270
      %v12272 = vcombine.low %v11423, %v11424
      %v12273 = vcombine.low %v11425, %v11426
      %v12275 = vunpack.c.l.s4 1983009808
      %v12276 = vunpack.c.0.s8 %v12275
      %v12277 = vlaneseq
      %v12278 = vshrl.u32 %v12277, 7
      %v12279 = vsub.s32 %v12276, %v12278
      %v12280 = vrot.slane %v12272, %v12279
      %v12282 = vunpack.c.l.s4 1983009808
      %v12283 = vunpack.c.0.s8 %v12282
      %v12284 = vlaneseq
      %v12285 = vshrl.u32 %v12284, 7
      %v12286 = vsub.s32 %v12283, %v12285
      %v12287 = vrot.slane %v12273, %v12286
      %v12288 = vcombine.low %v12280, %v12287
      %v12290 = vunpack.c.l.s4 1983009808
      %v12291 = vunpack.c.0.s8 %v12290
      %v12292 = vlaneseq
      %v12293 = vshrl.u32 %v12292, 7
      %v12294 = vsub.s32 %v12291, %v12293
      %v12295 = vrot.slane %v11427, %v12294
      %v12296 = vcombine.low %v11428, %v11429
      %v12297 = vcombine.low %v11430, %v11431
      %v12299 = vunpack.c.l.s4 1983009808
      %v12300 = vunpack.c.0.s8 %v12299
      %v12301 = vlaneseq
      %v12302 = vshrl.u32 %v12301, 7
      %v12303 = vsub.s32 %v12300, %v12302
      %v12304 = vrot.slane %v12296, %v12303
      %v12306 = vunpack.c.l.s4 1983009808
      %v12307 = vunpack.c.0.s8 %v12306
      %v12308 = vlaneseq
      %v12309 = vshrl.u32 %v12308, 7
      %v12310 = vsub.s32 %v12307, %v12309
      %v12311 = vrot.slane %v12297, %v12310
      %v12312 = vcombine.low %v12304, %v12311
      %v12313 = vcombine.low %v11432, %v11433
      %v12314 = vcombine.low %v11434, %v11435
      %v12316 = vunpack.c.l.s4 1983009808
      %v12317 = vunpack.c.0.s8 %v12316
      %v12318 = vlaneseq
      %v12319 = vshrl.u32 %v12318, 7
      %v12320 = vsub.s32 %v12317, %v12319
      %v12321 = vrot.slane %v12313, %v12320
      %v12323 = vunpack.c.l.s4 1983009808
      %v12324 = vunpack.c.0.s8 %v12323
      %v12325 = vlaneseq
      %v12326 = vshrl.u32 %v12325, 7
      %v12327 = vsub.s32 %v12324, %v12326
      %v12328 = vrot.slane %v12314, %v12327
      %v12329 = vcombine.low %v12321, %v12328
      %v12331 = vunpack.c.l.s4 1983009808
      %v12332 = vunpack.c.0.s8 %v12331
      %v12333 = vlaneseq
      %v12334 = vshrl.u32 %v12333, 7
      %v12335 = vsub.s32 %v12332, %v12334
      %v12336 = vrot.slane %v11436, %v12335
      %v12391 = vpack.c.bf16 %v11632, %v11615
      %v12392 = vpack.c.bf16 %v11639, %v11639
      %v12393 = vpack.c.bf16 %v11673, %v11656
      %v12394 = vpack.c.bf16 %v11680, %v11680
      %v12395 = vpack.c.bf16 %v11714, %v11697
      %v12396 = vpack.c.bf16 %v11721, %v11721
      %v12397 = vpack.c.bf16 %v11755, %v11738
      %v12398 = vpack.c.bf16 %v11762, %v11762
      %v12399 = vpack.c.bf16 %v11796, %v11779
      %v12400 = vpack.c.bf16 %v11803, %v11803
      %v12401 = vpack.c.bf16 %v11837, %v11820
      %v12402 = vpack.c.bf16 %v11844, %v11844
      %v12403 = vpack.c.bf16 %v11878, %v11861
      %v12404 = vpack.c.bf16 %v11885, %v11885
      %v12405 = vpack.c.bf16 %v11919, %v11902
      %v12406 = vpack.c.bf16 %v11926, %v11926
      %v12407 = vpack.c.bf16 %v11960, %v11943
      %v12408 = vpack.c.bf16 %v11967, %v11967
      %v12409 = vpack.c.bf16 %v12001, %v11984
      %v12410 = vpack.c.bf16 %v12008, %v12008
      %v12411 = vpack.c.bf16 %v12042, %v12025
      %v12412 = vpack.c.bf16 %v12049, %v12049
      %v12413 = vpack.c.bf16 %v12083, %v12066
      %v12414 = vpack.c.bf16 %v12090, %v12090
      %v12415 = vpack.c.bf16 %v12124, %v12107
      %v12416 = vpack.c.bf16 %v12131, %v12131
      %v12417 = vpack.c.bf16 %v12165, %v12148
      %v12418 = vpack.c.bf16 %v12172, %v12172
      %v12419 = vpack.c.bf16 %v12206, %v12189
      %v12420 = vpack.c.bf16 %v12213, %v12213
      %v12421 = vpack.c.bf16 %v12247, %v12230
      %v12422 = vpack.c.bf16 %v12254, %v12254
      %v12423 = vpack.c.bf16 %v12288, %v12271
      %v12424 = vpack.c.bf16 %v12295, %v12295
      %v12425 = vpack.c.bf16 %v12329, %v12312
      %v12426 = vpack.c.bf16 %v12336, %v12336
      %v12428 = vshrl.u32 %v12391, 16
      %v12430 = vshll.u32 %v12391, 16
      %v12432 = vrot.slane %v12430, 1
      %v12433 = vor.u32 %v12428, %v12432
      %v12435 = vshll.u32 %v12392, 16
      %v12437 = vrot.slane %v12435, 1
      %v12438 = vsel %vm2676, %v12433, %v12437
      %v12440 = vshrl.u32 %v12393, 16
      %v12442 = vshll.u32 %v12393, 16
      %v12444 = vrot.slane %v12442, 1
      %v12445 = vor.u32 %v12440, %v12444
      %v12447 = vshll.u32 %v12394, 16
      %v12449 = vrot.slane %v12447, 1
      %v12450 = vsel %vm2676, %v12445, %v12449
      %v12452 = vshrl.u32 %v12395, 16
      %v12454 = vshll.u32 %v12395, 16
      %v12456 = vrot.slane %v12454, 1
      %v12457 = vor.u32 %v12452, %v12456
      %v12459 = vshll.u32 %v12396, 16
      %v12461 = vrot.slane %v12459, 1
      %v12462 = vsel %vm2676, %v12457, %v12461
      %v12464 = vshrl.u32 %v12397, 16
      %v12466 = vshll.u32 %v12397, 16
      %v12468 = vrot.slane %v12466, 1
      %v12469 = vor.u32 %v12464, %v12468
      %v12471 = vshll.u32 %v12398, 16
      %v12473 = vrot.slane %v12471, 1
      %v12474 = vsel %vm2676, %v12469, %v12473
      %v12476 = vshrl.u32 %v12399, 16
      %v12478 = vshll.u32 %v12399, 16
      %v12480 = vrot.slane %v12478, 1
      %v12481 = vor.u32 %v12476, %v12480
      %v12483 = vshll.u32 %v12400, 16
      %v12485 = vrot.slane %v12483, 1
      %v12486 = vsel %vm2676, %v12481, %v12485
      %v12488 = vshrl.u32 %v12401, 16
      %v12490 = vshll.u32 %v12401, 16
      %v12492 = vrot.slane %v12490, 1
      %v12493 = vor.u32 %v12488, %v12492
      %v12495 = vshll.u32 %v12402, 16
      %v12497 = vrot.slane %v12495, 1
      %v12498 = vsel %vm2676, %v12493, %v12497
      %v12500 = vshrl.u32 %v12403, 16
      %v12502 = vshll.u32 %v12403, 16
      %v12504 = vrot.slane %v12502, 1
      %v12505 = vor.u32 %v12500, %v12504
      %v12507 = vshll.u32 %v12404, 16
      %v12509 = vrot.slane %v12507, 1
      %v12510 = vsel %vm2676, %v12505, %v12509
      %v12512 = vshrl.u32 %v12405, 16
      %v12514 = vshll.u32 %v12405, 16
      %v12516 = vrot.slane %v12514, 1
      %v12517 = vor.u32 %v12512, %v12516
      %v12519 = vshll.u32 %v12406, 16
      %v12521 = vrot.slane %v12519, 1
      %v12522 = vsel %vm2676, %v12517, %v12521
      %v12524 = vshrl.u32 %v12407, 16
      %v12526 = vshll.u32 %v12407, 16
      %v12528 = vrot.slane %v12526, 1
      %v12529 = vor.u32 %v12524, %v12528
      %v12531 = vshll.u32 %v12408, 16
      %v12533 = vrot.slane %v12531, 1
      %v12534 = vsel %vm2676, %v12529, %v12533
      %v12536 = vshrl.u32 %v12409, 16
      %v12538 = vshll.u32 %v12409, 16
      %v12540 = vrot.slane %v12538, 1
      %v12541 = vor.u32 %v12536, %v12540
      %v12543 = vshll.u32 %v12410, 16
      %v12545 = vrot.slane %v12543, 1
      %v12546 = vsel %vm2676, %v12541, %v12545
      %v12548 = vshrl.u32 %v12411, 16
      %v12550 = vshll.u32 %v12411, 16
      %v12552 = vrot.slane %v12550, 1
      %v12553 = vor.u32 %v12548, %v12552
      %v12555 = vshll.u32 %v12412, 16
      %v12557 = vrot.slane %v12555, 1
      %v12558 = vsel %vm2676, %v12553, %v12557
      %v12560 = vshrl.u32 %v12413, 16
      %v12562 = vshll.u32 %v12413, 16
      %v12564 = vrot.slane %v12562, 1
      %v12565 = vor.u32 %v12560, %v12564
      %v12567 = vshll.u32 %v12414, 16
      %v12569 = vrot.slane %v12567, 1
      %v12570 = vsel %vm2676, %v12565, %v12569
      %v12572 = vshrl.u32 %v12415, 16
      %v12574 = vshll.u32 %v12415, 16
      %v12576 = vrot.slane %v12574, 1
      %v12577 = vor.u32 %v12572, %v12576
      %v12579 = vshll.u32 %v12416, 16
      %v12581 = vrot.slane %v12579, 1
      %v12582 = vsel %vm2676, %v12577, %v12581
      %v12584 = vshrl.u32 %v12417, 16
      %v12586 = vshll.u32 %v12417, 16
      %v12588 = vrot.slane %v12586, 1
      %v12589 = vor.u32 %v12584, %v12588
      %v12591 = vshll.u32 %v12418, 16
      %v12593 = vrot.slane %v12591, 1
      %v12594 = vsel %vm2676, %v12589, %v12593
      %v12596 = vshrl.u32 %v12419, 16
      %v12598 = vshll.u32 %v12419, 16
      %v12600 = vrot.slane %v12598, 1
      %v12601 = vor.u32 %v12596, %v12600
      %v12603 = vshll.u32 %v12420, 16
      %v12605 = vrot.slane %v12603, 1
      %v12606 = vsel %vm2676, %v12601, %v12605
      %v12608 = vshrl.u32 %v12421, 16
      %v12610 = vshll.u32 %v12421, 16
      %v12612 = vrot.slane %v12610, 1
      %v12613 = vor.u32 %v12608, %v12612
      %v12615 = vshll.u32 %v12422, 16
      %v12617 = vrot.slane %v12615, 1
      %v12618 = vsel %vm2676, %v12613, %v12617
      %12619 = vrot.lane.b32.xlu0 %v12438, 16
      %v12620 = vpop.permute.xlu0 %12619
      %12621 = vrot.lane.b32.xlu0 %v12450, 16
      %v12622 = vpop.permute.xlu0 %12621
      %12623 = vrot.lane.b32.xlu0 %v12462, 16
      %v12624 = vpop.permute.xlu0 %12623
      %12625 = vrot.lane.b32.xlu0 %v12474, 16
      %v12626 = vpop.permute.xlu0 %12625
      %12627 = vrot.lane.b32.xlu0 %v12486, 16
      %v12628 = vpop.permute.xlu0 %12627
      %12629 = vrot.lane.b32.xlu0 %v12498, 16
      %v12630 = vpop.permute.xlu0 %12629
      %12631 = vrot.lane.b32.xlu0 %v12510, 16
      %v12632 = vpop.permute.xlu0 %12631
      %12633 = vrot.lane.b32.xlu0 %v12522, 16
      %v12634 = vpop.permute.xlu0 %12633
      %12635 = vrot.lane.b32.xlu0 %v12534, 16
      %v12636 = vpop.permute.xlu0 %12635
      %12637 = vrot.lane.b32.xlu0 %v12546, 16
      %v12638 = vpop.permute.xlu0 %12637
      %12639 = vrot.lane.b32.xlu0 %v12558, 16
      %v12640 = vpop.permute.xlu0 %12639
      %12641 = vrot.lane.b32.xlu0 %v12570, 16
      %v12642 = vpop.permute.xlu0 %12641
      %12643 = vrot.lane.b32.xlu0 %v12582, 16
      %v12644 = vpop.permute.xlu0 %12643
      %12645 = vrot.lane.b32.xlu0 %v12594, 16
      %v12646 = vpop.permute.xlu0 %12645
      %12647 = vrot.lane.b32.xlu0 %v12606, 16
      %v12648 = vpop.permute.xlu0 %12647
      %12649 = vrot.lane.b32.xlu0 %v12618, 16
      %v12650 = vpop.permute.xlu0 %12649
      %v12683 = vrot.slane %v12391, 1
      %v12684 = vrot.slane %v12392, 1
      %v12685 = vsel %vm2997, %v12683, %v12684
      %v12686 = vrot.slane %v12393, 1
      %v12687 = vrot.slane %v12394, 1
      %v12688 = vsel %vm2997, %v12686, %v12687
      %v12689 = vrot.slane %v12395, 1
      %v12690 = vrot.slane %v12396, 1
      %v12691 = vsel %vm2997, %v12689, %v12690
      %v12692 = vrot.slane %v12397, 1
      %v12693 = vrot.slane %v12398, 1
      %v12694 = vsel %vm2997, %v12692, %v12693
      %v12695 = vrot.slane %v12399, 1
      %v12696 = vrot.slane %v12400, 1
      %v12697 = vsel %vm2997, %v12695, %v12696
      %v12698 = vrot.slane %v12401, 1
      %v12699 = vrot.slane %v12402, 1
      %v12700 = vsel %vm2997, %v12698, %v12699
      %v12701 = vrot.slane %v12403, 1
      %v12702 = vrot.slane %v12404, 1
      %v12703 = vsel %vm2997, %v12701, %v12702
      %v12704 = vrot.slane %v12405, 1
      %v12705 = vrot.slane %v12406, 1
      %v12706 = vsel %vm2997, %v12704, %v12705
      %v12707 = vrot.slane %v12407, 1
      %v12708 = vrot.slane %v12408, 1
      %v12709 = vsel %vm2997, %v12707, %v12708
      %v12710 = vrot.slane %v12409, 1
      %v12711 = vrot.slane %v12410, 1
      %v12712 = vsel %vm2997, %v12710, %v12711
      %v12713 = vrot.slane %v12411, 1
      %v12714 = vrot.slane %v12412, 1
      %v12715 = vsel %vm2997, %v12713, %v12714
      %v12716 = vrot.slane %v12413, 1
      %v12717 = vrot.slane %v12414, 1
      %v12718 = vsel %vm2997, %v12716, %v12717
      %v12719 = vrot.slane %v12415, 1
      %v12720 = vrot.slane %v12416, 1
      %v12721 = vsel %vm2997, %v12719, %v12720
      %v12722 = vrot.slane %v12417, 1
      %v12723 = vrot.slane %v12418, 1
      %v12724 = vsel %vm2997, %v12722, %v12723
      %v12725 = vrot.slane %v12419, 1
      %v12726 = vrot.slane %v12420, 1
      %v12727 = vsel %vm2997, %v12725, %v12726
      %v12728 = vrot.slane %v12421, 1
      %v12729 = vrot.slane %v12422, 1
      %v12730 = vsel %vm2997, %v12728, %v12729
      %12731 = vrot.lane.b32.xlu0 %v12685, 32
      %v12732 = vpop.permute.xlu0 %12731
      %12733 = vrot.lane.b32.xlu0 %v12688, 32
      %v12734 = vpop.permute.xlu0 %12733
      %12735 = vrot.lane.b32.xlu0 %v12691, 32
      %v12736 = vpop.permute.xlu0 %12735
      %12737 = vrot.lane.b32.xlu0 %v12694, 32
      %v12738 = vpop.permute.xlu0 %12737
      %12739 = vrot.lane.b32.xlu0 %v12697, 32
      %v12740 = vpop.permute.xlu0 %12739
      %12741 = vrot.lane.b32.xlu0 %v12700, 32
      %v12742 = vpop.permute.xlu0 %12741
      %12743 = vrot.lane.b32.xlu0 %v12703, 32
      %v12744 = vpop.permute.xlu0 %12743
      %12745 = vrot.lane.b32.xlu0 %v12706, 32
      %v12746 = vpop.permute.xlu0 %12745
      %12747 = vrot.lane.b32.xlu0 %v12709, 32
      %v12748 = vpop.permute.xlu0 %12747
      %12749 = vrot.lane.b32.xlu0 %v12712, 32
      %v12750 = vpop.permute.xlu0 %12749
      %12751 = vrot.lane.b32.xlu0 %v12715, 32
      %v12752 = vpop.permute.xlu0 %12751
      %12753 = vrot.lane.b32.xlu0 %v12718, 32
      %v12754 = vpop.permute.xlu0 %12753
      %12755 = vrot.lane.b32.xlu0 %v12721, 32
      %v12756 = vpop.permute.xlu0 %12755
      %12757 = vrot.lane.b32.xlu0 %v12724, 32
      %v12758 = vpop.permute.xlu0 %12757
      %12759 = vrot.lane.b32.xlu0 %v12727, 32
      %v12760 = vpop.permute.xlu0 %12759
      %12761 = vrot.lane.b32.xlu0 %v12730, 32
      %v12762 = vpop.permute.xlu0 %12761
      %12764 = vrot.lane.b32.xlu0 %v12393, 48
      %v12765 = vpop.permute.xlu0 %12764
      %12766 = vrot.lane.b32.xlu0 %v12395, 48
      %v12767 = vpop.permute.xlu0 %12766
      %12768 = vrot.lane.b32.xlu0 %v12397, 48
      %v12769 = vpop.permute.xlu0 %12768
      %12770 = vrot.lane.b32.xlu0 %v12399, 48
      %v12771 = vpop.permute.xlu0 %12770
      %12772 = vrot.lane.b32.xlu0 %v12401, 48
      %v12773 = vpop.permute.xlu0 %12772
      %12774 = vrot.lane.b32.xlu0 %v12403, 48
      %v12775 = vpop.permute.xlu0 %12774
      %12776 = vrot.lane.b32.xlu0 %v12405, 48
      %v12777 = vpop.permute.xlu0 %12776
      %12778 = vrot.lane.b32.xlu0 %v12407, 48
      %v12779 = vpop.permute.xlu0 %12778
      %12780 = vrot.lane.b32.xlu0 %v12409, 48
      %v12781 = vpop.permute.xlu0 %12780
      %12782 = vrot.lane.b32.xlu0 %v12411, 48
      %v12783 = vpop.permute.xlu0 %12782
      %12784 = vrot.lane.b32.xlu0 %v12413, 48
      %v12785 = vpop.permute.xlu0 %12784
      %12786 = vrot.lane.b32.xlu0 %v12415, 48
      %v12787 = vpop.permute.xlu0 %12786
      %12788 = vrot.lane.b32.xlu0 %v12417, 48
      %v12789 = vpop.permute.xlu0 %12788
      %12790 = vrot.lane.b32.xlu0 %v12419, 48
      %v12791 = vpop.permute.xlu0 %12790
      %12792 = vrot.lane.b32.xlu0 %v12421, 48
      %v12793 = vpop.permute.xlu0 %12792
      %12794 = vrot.lane.b32.xlu0 %v12423, 48
      %v12795 = vpop.permute.xlu0 %12794
      %v12797 = vshrl.u32 %v12423, 16
      %v12799 = vshll.u32 %v12423, 16
      %v12801 = vrot.slane %v12799, 1
      %v12802 = vor.u32 %v12797, %v12801
      %v12804 = vshll.u32 %v12424, 16
      %v12806 = vrot.slane %v12804, 1
      %v12807 = vsel %vm2676, %v12802, %v12806
      %12808 = vrot.lane.b32.xlu0 %v12450, 64
      %v12809 = vpop.permute.xlu0 %12808
      %12810 = vrot.lane.b32.xlu0 %v12462, 64
      %v12811 = vpop.permute.xlu0 %12810
      %12812 = vrot.lane.b32.xlu0 %v12474, 64
      %v12813 = vpop.permute.xlu0 %12812
      %12814 = vrot.lane.b32.xlu0 %v12486, 64
      %v12815 = vpop.permute.xlu0 %12814
      %12816 = vrot.lane.b32.xlu0 %v12498, 64
      %v12817 = vpop.permute.xlu0 %12816
      %12818 = vrot.lane.b32.xlu0 %v12510, 64
      %v12819 = vpop.permute.xlu0 %12818
      %12820 = vrot.lane.b32.xlu0 %v12522, 64
      %v12821 = vpop.permute.xlu0 %12820
      %12822 = vrot.lane.b32.xlu0 %v12534, 64
      %v12823 = vpop.permute.xlu0 %12822
      %12824 = vrot.lane.b32.xlu0 %v12546, 64
      %v12825 = vpop.permute.xlu0 %12824
      %12826 = vrot.lane.b32.xlu0 %v12558, 64
      %v12827 = vpop.permute.xlu0 %12826
      %12828 = vrot.lane.b32.xlu0 %v12570, 64
      %v12829 = vpop.permute.xlu0 %12828
      %12830 = vrot.lane.b32.xlu0 %v12582, 64
      %v12831 = vpop.permute.xlu0 %12830
      %12832 = vrot.lane.b32.xlu0 %v12594, 64
      %v12833 = vpop.permute.xlu0 %12832
      %12834 = vrot.lane.b32.xlu0 %v12606, 64
      %v12835 = vpop.permute.xlu0 %12834
      %12836 = vrot.lane.b32.xlu0 %v12618, 64
      %v12837 = vpop.permute.xlu0 %12836
      %12838 = vrot.lane.b32.xlu0 %v12807, 64
      %v12839 = vpop.permute.xlu0 %12838
      %v12841 = vrot.slane %v12423, 1
      %v12842 = vrot.slane %v12424, 1
      %v12843 = vsel %vm2997, %v12841, %v12842
      %12844 = vrot.lane.b32.xlu0 %v12688, 80
      %v12845 = vpop.permute.xlu0 %12844
      %12846 = vrot.lane.b32.xlu0 %v12691, 80
      %v12847 = vpop.permute.xlu0 %12846
      %12848 = vrot.lane.b32.xlu0 %v12694, 80
      %v12849 = vpop.permute.xlu0 %12848
      %12850 = vrot.lane.b32.xlu0 %v12697, 80
      %v12851 = vpop.permute.xlu0 %12850
      %12852 = vrot.lane.b32.xlu0 %v12700, 80
      %v12853 = vpop.permute.xlu0 %12852
      %12854 = vrot.lane.b32.xlu0 %v12703, 80
      %v12855 = vpop.permute.xlu0 %12854
      %12856 = vrot.lane.b32.xlu0 %v12706, 80
      %v12857 = vpop.permute.xlu0 %12856
      %12858 = vrot.lane.b32.xlu0 %v12709, 80
      %v12859 = vpop.permute.xlu0 %12858
      %12860 = vrot.lane.b32.xlu0 %v12712, 80
      %v12861 = vpop.permute.xlu0 %12860
      %12862 = vrot.lane.b32.xlu0 %v12715, 80
      %v12863 = vpop.permute.xlu0 %12862
      %12864 = vrot.lane.b32.xlu0 %v12718, 80
      %v12865 = vpop.permute.xlu0 %12864
      %12866 = vrot.lane.b32.xlu0 %v12721, 80
      %v12867 = vpop.permute.xlu0 %12866
      %12868 = vrot.lane.b32.xlu0 %v12724, 80
      %v12869 = vpop.permute.xlu0 %12868
      %12870 = vrot.lane.b32.xlu0 %v12727, 80
      %v12871 = vpop.permute.xlu0 %12870
      %12872 = vrot.lane.b32.xlu0 %v12730, 80
      %v12873 = vpop.permute.xlu0 %12872
      %12874 = vrot.lane.b32.xlu0 %v12843, 80
      %v12875 = vpop.permute.xlu0 %12874
      %12877 = vrot.lane.b32.xlu0 %v12395, 96
      %v12878 = vpop.permute.xlu0 %12877
      %12879 = vrot.lane.b32.xlu0 %v12397, 96
      %v12880 = vpop.permute.xlu0 %12879
      %12881 = vrot.lane.b32.xlu0 %v12399, 96
      %v12882 = vpop.permute.xlu0 %12881
      %12883 = vrot.lane.b32.xlu0 %v12401, 96
      %v12884 = vpop.permute.xlu0 %12883
      %12885 = vrot.lane.b32.xlu0 %v12403, 96
      %v12886 = vpop.permute.xlu0 %12885
      %12887 = vrot.lane.b32.xlu0 %v12405, 96
      %v12888 = vpop.permute.xlu0 %12887
      %12889 = vrot.lane.b32.xlu0 %v12407, 96
      %v12890 = vpop.permute.xlu0 %12889
      %12891 = vrot.lane.b32.xlu0 %v12409, 96
      %v12892 = vpop.permute.xlu0 %12891
      %12893 = vrot.lane.b32.xlu0 %v12411, 96
      %v12894 = vpop.permute.xlu0 %12893
      %12895 = vrot.lane.b32.xlu0 %v12413, 96
      %v12896 = vpop.permute.xlu0 %12895
      %12897 = vrot.lane.b32.xlu0 %v12415, 96
      %v12898 = vpop.permute.xlu0 %12897
      %12899 = vrot.lane.b32.xlu0 %v12417, 96
      %v12900 = vpop.permute.xlu0 %12899
      %12901 = vrot.lane.b32.xlu0 %v12419, 96
      %v12902 = vpop.permute.xlu0 %12901
      %12903 = vrot.lane.b32.xlu0 %v12421, 96
      %v12904 = vpop.permute.xlu0 %12903
      %12905 = vrot.lane.b32.xlu0 %v12423, 96
      %v12906 = vpop.permute.xlu0 %12905
      %12907 = vrot.lane.b32.xlu0 %v12425, 96
      %v12908 = vpop.permute.xlu0 %12907
      %v12910 = vshrl.u32 %v12425, 16
      %v12912 = vshll.u32 %v12425, 16
      %v12914 = vrot.slane %v12912, 1
      %v12915 = vor.u32 %v12910, %v12914
      %v12917 = vshll.u32 %v12426, 16
      %v12919 = vrot.slane %v12917, 1
      %v12920 = vsel %vm2676, %v12915, %v12919
      %12921 = vrot.lane.b32.xlu0 %v12462, 112
      %v12922 = vpop.permute.xlu0 %12921
      %12923 = vrot.lane.b32.xlu0 %v12474, 112
      %v12924 = vpop.permute.xlu0 %12923
      %12925 = vrot.lane.b32.xlu0 %v12486, 112
      %v12926 = vpop.permute.xlu0 %12925
      %12927 = vrot.lane.b32.xlu0 %v12498, 112
      %v12928 = vpop.permute.xlu0 %12927
      %12929 = vrot.lane.b32.xlu0 %v12510, 112
      %v12930 = vpop.permute.xlu0 %12929
      %12931 = vrot.lane.b32.xlu0 %v12522, 112
      %v12932 = vpop.permute.xlu0 %12931
      %12933 = vrot.lane.b32.xlu0 %v12534, 112
      %v12934 = vpop.permute.xlu0 %12933
      %12935 = vrot.lane.b32.xlu0 %v12546, 112
      %v12936 = vpop.permute.xlu0 %12935
      %12937 = vrot.lane.b32.xlu0 %v12558, 112
      %v12938 = vpop.permute.xlu0 %12937
      %12939 = vrot.lane.b32.xlu0 %v12570, 112
      %v12940 = vpop.permute.xlu0 %12939
      %12941 = vrot.lane.b32.xlu0 %v12582, 112
      %v12942 = vpop.permute.xlu0 %12941
      %12943 = vrot.lane.b32.xlu0 %v12594, 112
      %v12944 = vpop.permute.xlu0 %12943
      %12945 = vrot.lane.b32.xlu0 %v12606, 112
      %v12946 = vpop.permute.xlu0 %12945
      %12947 = vrot.lane.b32.xlu0 %v12618, 112
      %v12948 = vpop.permute.xlu0 %12947
      %12949 = vrot.lane.b32.xlu0 %v12807, 112
      %v12950 = vpop.permute.xlu0 %12949
      %12951 = vrot.lane.b32.xlu0 %v12920, 112
      %v12952 = vpop.permute.xlu0 %12951
      %v12954 = vrot.slane %v12425, 1
      %v12955 = vrot.slane %v12426, 1
      %v12956 = vsel %vm2997, %v12954, %v12955
      %v12958 = vsel %vm3468, %v12391, %v12620
      %v12960 = vsel %vm3468, %v12393, %v12622
      %v12962 = vsel %vm3468, %v12395, %v12624
      %v12964 = vsel %vm3468, %v12397, %v12626
      %v12966 = vsel %vm3468, %v12399, %v12628
      %v12968 = vsel %vm3468, %v12401, %v12630
      %v12970 = vsel %vm3468, %v12403, %v12632
      %v12972 = vsel %vm3468, %v12405, %v12634
      %v12974 = vsel %vm3468, %v12407, %v12636
      %v12976 = vsel %vm3468, %v12409, %v12638
      %v12978 = vsel %vm3468, %v12411, %v12640
      %v12980 = vsel %vm3468, %v12413, %v12642
      %v12982 = vsel %vm3468, %v12415, %v12644
      %v12984 = vsel %vm3468, %v12417, %v12646
      %v12986 = vsel %vm3468, %v12419, %v12648
      %v12988 = vsel %vm3468, %v12421, %v12650
      %v12990 = vsel %vm670, %v12958, %v12732
      %v12992 = vsel %vm670, %v12960, %v12734
      %v12994 = vsel %vm670, %v12962, %v12736
      %v12996 = vsel %vm670, %v12964, %v12738
      %v12998 = vsel %vm670, %v12966, %v12740
      %v13000 = vsel %vm670, %v12968, %v12742
      %v13002 = vsel %vm670, %v12970, %v12744
      %v13004 = vsel %vm670, %v12972, %v12746
      %v13006 = vsel %vm670, %v12974, %v12748
      %v13008 = vsel %vm670, %v12976, %v12750
      %v13010 = vsel %vm670, %v12978, %v12752
      %v13012 = vsel %vm670, %v12980, %v12754
      %v13014 = vsel %vm670, %v12982, %v12756
      %v13016 = vsel %vm670, %v12984, %v12758
      %v13018 = vsel %vm670, %v12986, %v12760
      %v13020 = vsel %vm670, %v12988, %v12762
      %v13022 = vsel %vm3597, %v12990, %v12765
      %v13024 = vsel %vm3597, %v12992, %v12767
      %v13026 = vsel %vm3597, %v12994, %v12769
      %v13028 = vsel %vm3597, %v12996, %v12771
      %v13030 = vsel %vm3597, %v12998, %v12773
      %v13032 = vsel %vm3597, %v13000, %v12775
      %v13034 = vsel %vm3597, %v13002, %v12777
      %v13036 = vsel %vm3597, %v13004, %v12779
      %v13038 = vsel %vm3597, %v13006, %v12781
      %v13040 = vsel %vm3597, %v13008, %v12783
      %v13042 = vsel %vm3597, %v13010, %v12785
      %v13044 = vsel %vm3597, %v13012, %v12787
      %v13046 = vsel %vm3597, %v13014, %v12789
      %v13048 = vsel %vm3597, %v13016, %v12791
      %v13050 = vsel %vm3597, %v13018, %v12793
      %v13052 = vsel %vm3597, %v13020, %v12795
      %v13054 = vsel %vm3662, %v13022, %v12809
      %v13056 = vsel %vm3662, %v13024, %v12811
      %v13058 = vsel %vm3662, %v13026, %v12813
      %v13060 = vsel %vm3662, %v13028, %v12815
      %v13062 = vsel %vm3662, %v13030, %v12817
      %v13064 = vsel %vm3662, %v13032, %v12819
      %v13066 = vsel %vm3662, %v13034, %v12821
      %v13068 = vsel %vm3662, %v13036, %v12823
      %v13070 = vsel %vm3662, %v13038, %v12825
      %v13072 = vsel %vm3662, %v13040, %v12827
      %v13074 = vsel %vm3662, %v13042, %v12829
      %v13076 = vsel %vm3662, %v13044, %v12831
      %v13078 = vsel %vm3662, %v13046, %v12833
      %v13080 = vsel %vm3662, %v13048, %v12835
      %v13082 = vsel %vm3662, %v13050, %v12837
      %v13084 = vsel %vm3662, %v13052, %v12839
      %v13086 = vsel %vm3727, %v13054, %v12845
      %v13088 = vsel %vm3727, %v13056, %v12847
      %v13090 = vsel %vm3727, %v13058, %v12849
      %v13092 = vsel %vm3727, %v13060, %v12851
      %v13094 = vsel %vm3727, %v13062, %v12853
      %v13096 = vsel %vm3727, %v13064, %v12855
      %v13098 = vsel %vm3727, %v13066, %v12857
      %v13100 = vsel %vm3727, %v13068, %v12859
      %v13102 = vsel %vm3727, %v13070, %v12861
      %v13104 = vsel %vm3727, %v13072, %v12863
      %v13106 = vsel %vm3727, %v13074, %v12865
      %v13108 = vsel %vm3727, %v13076, %v12867
      %v13110 = vsel %vm3727, %v13078, %v12869
      %v13112 = vsel %vm3727, %v13080, %v12871
      %v13114 = vsel %vm3727, %v13082, %v12873
      %v13116 = vsel %vm3727, %v13084, %v12875
      %v13118 = vsel %vm3792, %v13086, %v12878
      %v13120 = vsel %vm3792, %v13088, %v12880
      %v13122 = vsel %vm3792, %v13090, %v12882
      %v13124 = vsel %vm3792, %v13092, %v12884
      %v13126 = vsel %vm3792, %v13094, %v12886
      %v13128 = vsel %vm3792, %v13096, %v12888
      %v13130 = vsel %vm3792, %v13098, %v12890
      %v13132 = vsel %vm3792, %v13100, %v12892
      %v13134 = vsel %vm3792, %v13102, %v12894
      %v13136 = vsel %vm3792, %v13104, %v12896
      %v13138 = vsel %vm3792, %v13106, %v12898
      %v13140 = vsel %vm3792, %v13108, %v12900
      %v13142 = vsel %vm3792, %v13110, %v12902
      %v13144 = vsel %vm3792, %v13112, %v12904
      %v13146 = vsel %vm3792, %v13114, %v12906
      %v13148 = vsel %vm3792, %v13116, %v12908
      %v13150 = vsel %vm3857, %v13118, %v12922
      %v13153 = vsel %vm3857, %v13120, %v12924
      %v13156 = vsel %vm3857, %v13122, %v12926
      %v13159 = vsel %vm3857, %v13124, %v12928
      %v13162 = vsel %vm3857, %v13126, %v12930
      %v13165 = vsel %vm3857, %v13128, %v12932
      %v13168 = vsel %vm3857, %v13130, %v12934
      %v13171 = vsel %vm3857, %v13132, %v12936
      %v13174 = vsel %vm3857, %v13134, %v12938
      %v13177 = vsel %vm3857, %v13136, %v12940
      %v13180 = vsel %vm3857, %v13138, %v12942
      %v13183 = vsel %vm3857, %v13140, %v12944
      %v13186 = vsel %vm3857, %v13142, %v12946
      %v13189 = vsel %vm3857, %v13144, %v12948
      %v13192 = vsel %vm3857, %v13146, %v12950
      %v13195 = vsel %vm3857, %v13148, %v12952
      %v13197 = vld [vmem:[%s7] sm:$0xf]
      %v13198 = vld [vmem:[%s7 + $0x4] sm:$0xf]
      %v13199 = vld [vmem:[%s7 + $0x8] sm:$0xf]
      %v13200 = vld [vmem:[%s7 + $0xc] sm:$0xf]
      %v13201 = vld [vmem:[%s7 + $0x10] sm:$0xf]
      %v13202 = vld [vmem:[%s7 + $0x14] sm:$0xf]
      %v13203 = vld [vmem:[%s7 + $0x18] sm:$0xf]
      %v13204 = vld [vmem:[%s7 + $0x1c] sm:$0xf]
      %v13205 = vld [vmem:[%s7 + $0x20] sm:$0xf]
      %v13206 = vld [vmem:[%s7 + $0x24] sm:$0xf]
      %v13207 = vld [vmem:[%s7 + $0x28] sm:$0xf]
      %v13208 = vld [vmem:[%s7 + $0x2c] sm:$0xf]
      %v13209 = vld [vmem:[%s7 + $0x30] sm:$0xf]
      %v13210 = vld [vmem:[%s7 + $0x34] sm:$0xf]
      %v13211 = vld [vmem:[%s7 + $0x38] sm:$0xf]
      %v13212 = vld [vmem:[%s7 + $0x3c] sm:$0xf]
      %v13213 = vld [vmem:[%s7 + $0x40] sm:$0xf]
      %v13214 = vld [vmem:[%s7 + $0x44] sm:$0xf]
      %v13215 = vld [vmem:[%s8] sm:$0x1]
      %v13217 = vlaneseq
      %v13218 = vshrl.u32 %v13217, 7
      %v13219 = vsub.s32 0, %v13218
      %v13220 = vrot.slane %v13215, %v13219
      %v13240 = vunpack.c.l.b16 %v13197
      %v13241 = vunpack.c.l.b16 %v13198
      %v13242 = vunpack.c.l.b16 %v13199
      %v13243 = vunpack.c.l.b16 %v13200
      %v13244 = vunpack.c.l.b16 %v13201
      %v13245 = vunpack.c.l.b16 %v13202
      %v13246 = vunpack.c.l.b16 %v13203
      %v13247 = vunpack.c.l.b16 %v13204
      %v13248 = vunpack.c.l.b16 %v13205
      %v13249 = vunpack.c.l.b16 %v13206
      %v13250 = vunpack.c.l.b16 %v13207
      %v13251 = vunpack.c.l.b16 %v13208
      %v13252 = vunpack.c.l.b16 %v13209
      %v13253 = vunpack.c.l.b16 %v13210
      %v13254 = vunpack.c.l.b16 %v13211
      %v13255 = vunpack.c.l.b16 %v13212
      %v13256 = vunpack.c.l.b16 %v13213
      %v13257 = vunpack.c.l.b16 %v13214
      %v13258 = vpack.c.b16 %v13241, %v13240
      %v13259 = vpack.c.b16 %v13243, %v13242
      %v13260 = vpack.c.b16 %v13245, %v13244
      %v13261 = vpack.c.b16 %v13247, %v13246
      %v13262 = vpack.c.b16 %v13249, %v13248
      %v13263 = vpack.c.b16 %v13251, %v13250
      %v13264 = vpack.c.b16 %v13253, %v13252
      %v13265 = vpack.c.b16 %v13255, %v13254
      %v13266 = vpack.c.b16 %v13257, %v13256
      %v13277 = vsel %vm3468, %v12691, 0
      %v13280 = vsel %vm3468, %v12694, 0
      %v13283 = vsel %vm3468, %v12697, 0
      %v13286 = vsel %vm3468, %v12700, 0
      %v13289 = vsel %vm3468, %v12703, 0
      %v13292 = vsel %vm3468, %v12706, 0
      %v13295 = vsel %vm3468, %v12709, 0
      %v13298 = vsel %vm3468, %v12712, 0
      %v13301 = vsel %vm3468, %v12715, 0
      %v13304 = vsel %vm3468, %v12718, 0
      %v13307 = vsel %vm3468, %v12721, 0
      %v13310 = vsel %vm3468, %v12724, 0
      %v13313 = vsel %vm3468, %v12727, 0
      %v13316 = vsel %vm3468, %v12730, 0
      %v13319 = vsel %vm3468, %v12843, 0
      %v13322 = vsel %vm3468, %v12956, 0
      %13324 = vmatprep.subr.bf16.mxu0 0
      %13325 = vmatpush1.bf16.msra.mxu0 %v13258
      %13326 = vmatprep.subr.bf16.mxu0 0
      %13327 = vmatpush1.bf16.msra.mxu0 %v13259
      %13328 = vmatprep.subr.bf16.mxu0 0
      %13329 = vmatpush1.bf16.msra.mxu0 %v13260
      %13330 = vmatprep.subr.bf16.mxu0 0
      %13331 = vmatpush1.bf16.msra.mxu0 %v13261
      %13332 = vmatprep.subr.bf16.mxu0 0
      %13333 = vmatpush1.bf16.msra.mxu0 %v13262
      %13334 = vmatprep.subr.bf16.mxu0 0
      %13335 = vmatpush1.bf16.msra.mxu0 %v13263
      %13336 = vmatprep.subr.bf16.mxu0 0
      %13337 = vmatpush1.bf16.msra.mxu0 %v13264
      %13338 = vmatprep.subr.bf16.mxu0 0
      %13339 = vmatpush1.bf16.msra.mxu0 %v13265
      %13340 = vmatprep.subr.bf16.mxu0 0
      %13341 = vmatpush1.bf16.msra.mxu0 %v13266
      %13342 = vmatprep.subr.bf16.mxu0 0
      %13343 = vmatpush1.bf16.msra.mxu0 0
      %13344 = vmatprep.subr.bf16.mxu0 0
      %13345 = vmatpush1.bf16.msra.mxu0 0
      %13346 = vmatprep.subr.bf16.mxu0 0
      %13347 = vmatpush1.bf16.msra.mxu0 0
      %13348 = vmatprep.subr.bf16.mxu0 0
      %13349 = vmatpush1.bf16.msra.mxu0 0
      %13350 = vmatprep.subr.bf16.mxu0 0
      %13351 = vmatpush1.bf16.msra.mxu0 0
      %13352 = vmatprep.subr.bf16.mxu0 0
      %13353 = vmatpush1.bf16.msra.mxu0 0
      %13354 = vmatprep.subr.bf16.mxu0 0
      %13355 = vmatpush1.bf16.msra.mxu0 0
      %13356 = vmatprep.mubr.bf16.mxu0 %v13277
      %13357 = vmatmul.mubr.bf16.gmra.mrb[0].mxu0 %v13150
      %v13358 = vpop.f32.mrb[0].mxu0
      %v13359 = vadd.f32 %v13220, %v13358
      %v13360 = vpop.f32.mrb[0].mxu0
      %v13361 = vpop.f32.mrb[0].mxu0
      %v13362 = vadd.f32 %v13220, %v13361
      %v13363 = vpop.f32.mrb[0].mxu0
      %13364 = vmatprep.mubr.bf16.mxu0 %v13280
      %13365 = vmatmul.mubr.bf16.gmra.mrb[0].mxu0 %v13153
      %v13366 = vpop.f32.mrb[0].mxu0
      %v13367 = vadd.f32 %v13220, %v13366
      %v13368 = vpop.f32.mrb[0].mxu0
      %v13369 = vpop.f32.mrb[0].mxu0
      %v13370 = vadd.f32 %v13220, %v13369
      %v13371 = vpop.f32.mrb[0].mxu0
      %13372 = vmatprep.mubr.bf16.mxu0 %v13283
      %13373 = vmatmul.mubr.bf16.gmra.mrb[0].mxu0 %v13156
      %v13374 = vpop.f32.mrb[0].mxu0
      %v13375 = vadd.f32 %v13220, %v13374
      %v13376 = vpop.f32.mrb[0].mxu0
      %v13377 = vpop.f32.mrb[0].mxu0
      %v13378 = vadd.f32 %v13220, %v13377
      %v13379 = vpop.f32.mrb[0].mxu0
      %13380 = vmatprep.mubr.bf16.mxu0 %v13286
      %13381 = vmatmul.mubr.bf16.gmra.mrb[0].mxu0 %v13159
      %v13382 = vpop.f32.mrb[0].mxu0
      %v13383 = vadd.f32 %v13220, %v13382
      %v13384 = vpop.f32.mrb[0].mxu0
      %v13385 = vpop.f32.mrb[0].mxu0
      %v13386 = vadd.f32 %v13220, %v13385
      %v13387 = vpop.f32.mrb[0].mxu0
      %13388 = vmatprep.mubr.bf16.mxu0 %v13289
      %13389 = vmatmul.mubr.bf16.gmra.mrb[0].mxu0 %v13162
      %v13390 = vpop.f32.mrb[0].mxu0
      %v13391 = vadd.f32 %v13220, %v13390
      %v13392 = vpop.f32.mrb[0].mxu0
      %v13393 = vpop.f32.mrb[0].mxu0
      %v13394 = vadd.f32 %v13220, %v13393
      %v13395 = vpop.f32.mrb[0].mxu0
      %13396 = vmatprep.mubr.bf16.mxu0 %v13292
      %13397 = vmatmul.mubr.bf16.gmra.mrb[0].mxu0 %v13165
      %v13398 = vpop.f32.mrb[0].mxu0
      %v13399 = vadd.f32 %v13220, %v13398
      %v13400 = vpop.f32.mrb[0].mxu0
      %v13401 = vpop.f32.mrb[0].mxu0
      %v13402 = vadd.f32 %v13220, %v13401
      %v13403 = vpop.f32.mrb[0].mxu0
      %13404 = vmatprep.mubr.bf16.mxu0 %v13295
      %13405 = vmatmul.mubr.bf16.gmra.mrb[0].mxu0 %v13168
      %v13406 = vpop.f32.mrb[0].mxu0
      %v13407 = vadd.f32 %v13220, %v13406
      %v13408 = vpop.f32.mrb[0].mxu0
      %v13409 = vpop.f32.mrb[0].mxu0
      %v13410 = vadd.f32 %v13220, %v13409
      %v13411 = vpop.f32.mrb[0].mxu0
      %13412 = vmatprep.mubr.bf16.mxu0 %v13298
      %13413 = vmatmul.mubr.bf16.gmra.mrb[0].mxu0 %v13171
      %v13414 = vpop.f32.mrb[0].mxu0
      %v13415 = vadd.f32 %v13220, %v13414
      %v13416 = vpop.f32.mrb[0].mxu0
      %v13417 = vpop.f32.mrb[0].mxu0
      %v13418 = vadd.f32 %v13220, %v13417
      %v13419 = vpop.f32.mrb[0].mxu0
      %13420 = vmatprep.mubr.bf16.mxu0 %v13301
      %13421 = vmatmul.mubr.bf16.gmra.mrb[0].mxu0 %v13174
      %v13422 = vpop.f32.mrb[0].mxu0
      %v13423 = vadd.f32 %v13220, %v13422
      %v13424 = vpop.f32.mrb[0].mxu0
      %v13425 = vpop.f32.mrb[0].mxu0
      %v13426 = vadd.f32 %v13220, %v13425
      %v13427 = vpop.f32.mrb[0].mxu0
      %13428 = vmatprep.mubr.bf16.mxu0 %v13304
      %13429 = vmatmul.mubr.bf16.gmra.mrb[0].mxu0 %v13177
      %v13430 = vpop.f32.mrb[0].mxu0
      %v13431 = vadd.f32 %v13220, %v13430
      %v13432 = vpop.f32.mrb[0].mxu0
      %v13433 = vpop.f32.mrb[0].mxu0
      %v13434 = vadd.f32 %v13220, %v13433
      %v13435 = vpop.f32.mrb[0].mxu0
      %13436 = vmatprep.mubr.bf16.mxu0 %v13307
      %13437 = vmatmul.mubr.bf16.gmra.mrb[0].mxu0 %v13180
      %v13438 = vpop.f32.mrb[0].mxu0
      %v13439 = vadd.f32 %v13220, %v13438
      %v13440 = vpop.f32.mrb[0].mxu0
      %v13441 = vpop.f32.mrb[0].mxu0
      %v13442 = vadd.f32 %v13220, %v13441
      %v13443 = vpop.f32.mrb[0].mxu0
      %13444 = vmatprep.mubr.bf16.mxu0 %v13310
      %13445 = vmatmul.mubr.bf16.gmra.mrb[0].mxu0 %v13183
      %v13446 = vpop.f32.mrb[0].mxu0
      %v13447 = vadd.f32 %v13220, %v13446
      %v13448 = vpop.f32.mrb[0].mxu0
      %v13449 = vpop.f32.mrb[0].mxu0
      %v13450 = vadd.f32 %v13220, %v13449
      %v13451 = vpop.f32.mrb[0].mxu0
      %13452 = vmatprep.mubr.bf16.mxu0 %v13313
      %13453 = vmatmul.mubr.bf16.gmra.mrb[0].mxu0 %v13186
      %v13454 = vpop.f32.mrb[0].mxu0
      %v13455 = vadd.f32 %v13220, %v13454
      %v13456 = vpop.f32.mrb[0].mxu0
      %v13457 = vpop.f32.mrb[0].mxu0
      %v13458 = vadd.f32 %v13220, %v13457
      %v13459 = vpop.f32.mrb[0].mxu0
      %13460 = vmatprep.mubr.bf16.mxu0 %v13316
      %13461 = vmatmul.mubr.bf16.gmra.mrb[0].mxu0 %v13189
      %v13462 = vpop.f32.mrb[0].mxu0
      %v13463 = vadd.f32 %v13220, %v13462
      %v13464 = vpop.f32.mrb[0].mxu0
      %v13465 = vpop.f32.mrb[0].mxu0
      %v13466 = vadd.f32 %v13220, %v13465
      %v13467 = vpop.f32.mrb[0].mxu0
      %13468 = vmatprep.mubr.bf16.mxu0 %v13319
      %13469 = vmatmul.mubr.bf16.gmra.mrb[0].mxu0 %v13192
      %v13470 = vpop.f32.mrb[0].mxu0
      %v13471 = vadd.f32 %v13220, %v13470
      %v13472 = vpop.f32.mrb[0].mxu0
      %v13473 = vpop.f32.mrb[0].mxu0
      %v13474 = vadd.f32 %v13220, %v13473
      %v13475 = vpop.f32.mrb[0].mxu0
      %13476 = vmatprep.mubr.bf16.mxu0 %v13322
      %13477 = vmatmul.mubr.bf16.gmra.mrb[0].mxu0 %v13195
      %v13478 = vpop.f32.mrb[0].mxu0
      %v13479 = vadd.f32 %v13220, %v13478
      %v13480 = vpop.f32.mrb[0].mxu0
      %v13481 = vpop.f32.mrb[0].mxu0
      %v13482 = vadd.f32 %v13220, %v13481
      %v13483 = vpop.f32.mrb[0].mxu0
      %13484 = vdwg.mxu0
      %v13485 = vmax.f32 %v13359, 0.0
      %v13486 = vmax.f32 %v13362, 0.0
      %v13487 = vmax.f32 %v13367, 0.0
      %v13488 = vmax.f32 %v13370, 0.0
      %v13489 = vmax.f32 %v13375, 0.0
      %v13490 = vmax.f32 %v13378, 0.0
      %v13491 = vmax.f32 %v13383, 0.0
      %v13492 = vmax.f32 %v13386, 0.0
      %v13493 = vmax.f32 %v13391, 0.0
      %v13494 = vmax.f32 %v13394, 0.0
      %v13495 = vmax.f32 %v13399, 0.0
      %v13496 = vmax.f32 %v13402, 0.0
      %v13497 = vmax.f32 %v13407, 0.0
      %v13498 = vmax.f32 %v13410, 0.0
      %v13499 = vmax.f32 %v13415, 0.0
      %v13500 = vmax.f32 %v13418, 0.0
      %v13501 = vmax.f32 %v13423, 0.0
      %v13502 = vmax.f32 %v13426, 0.0
      %v13503 = vmax.f32 %v13431, 0.0
      %v13504 = vmax.f32 %v13434, 0.0
      %v13505 = vmax.f32 %v13439, 0.0
      %v13506 = vmax.f32 %v13442, 0.0
      %v13507 = vmax.f32 %v13447, 0.0
      %v13508 = vmax.f32 %v13450, 0.0
      %v13509 = vmax.f32 %v13455, 0.0
      %v13510 = vmax.f32 %v13458, 0.0
      %v13511 = vmax.f32 %v13463, 0.0
      %v13512 = vmax.f32 %v13466, 0.0
      %v13513 = vmax.f32 %v13471, 0.0
      %v13514 = vmax.f32 %v13474, 0.0
      %v13515 = vmax.f32 %v13479, 0.0
      %v13516 = vmax.f32 %v13482, 0.0
      %vm13549 = vcmask 1041408
      %v13550 = vrot.slane %v4578, 6
      %v13551 = vrot.slane %v4579, 6
      %v13552 = vsel %vm13549, %v13550, %v13551
      %v13553 = vrot.slane %v4580, 6
      %v13554 = vrot.slane %v4581, 6
      %v13555 = vsel %vm13549, %v13553, %v13554
      %v13556 = vrot.slane %v4582, 6
      %v13557 = vrot.slane %v4583, 6
      %v13558 = vsel %vm13549, %v13556, %v13557
      %v13559 = vrot.slane %v4584, 6
      %v13560 = vrot.slane %v4585, 6
      %v13561 = vsel %vm13549, %v13559, %v13560
      %v13562 = vrot.slane %v4586, 6
      %v13563 = vrot.slane %v4587, 6
      %v13564 = vsel %vm13549, %v13562, %v13563
      %v13565 = vrot.slane %v4588, 6
      %v13566 = vrot.slane %v4589, 6
      %v13567 = vsel %vm13549, %v13565, %v13566
      %v13568 = vrot.slane %v4590, 6
      %v13569 = vrot.slane %v4591, 6
      %v13570 = vsel %vm13549, %v13568, %v13569
      %v13571 = vrot.slane %v4592, 6
      %v13572 = vrot.slane %v4593, 6
      %v13573 = vsel %vm13549, %v13571, %v13572
      %v13574 = vrot.slane %v4594, 6
      %v13575 = vrot.slane %v4595, 6
      %v13576 = vsel %vm13549, %v13574, %v13575
      %v13577 = vrot.slane %v4596, 6
      %v13578 = vrot.slane %v4597, 6
      %v13579 = vsel %vm13549, %v13577, %v13578
      %v13580 = vrot.slane %v4598, 6
      %v13581 = vrot.slane %v4599, 6
      %v13582 = vsel %vm13549, %v13580, %v13581
      %v13583 = vrot.slane %v4600, 6
      %v13584 = vrot.slane %v4601, 6
      %v13585 = vsel %vm13549, %v13583, %v13584
      %v13586 = vrot.slane %v4602, 6
      %v13587 = vrot.slane %v4603, 6
      %v13588 = vsel %vm13549, %v13586, %v13587
      %v13589 = vrot.slane %v4604, 6
      %v13590 = vrot.slane %v4605, 6
      %v13591 = vsel %vm13549, %v13589, %v13590
      %v13592 = vrot.slane %v4606, 6
      %v13593 = vrot.slane %v4607, 6
      %v13594 = vsel %vm13549, %v13592, %v13593
      %v13595 = vrot.slane %v4608, 6
      %v13596 = vrot.slane %v4609, 6
      %v13597 = vsel %vm13549, %v13595, %v13596
      %13598 = vrot.lane.b32.xlu0 %v13550, 32
      %v13599 = vpop.permute.xlu0 %13598
      %13600 = vrot.lane.b32.xlu0 %v13552, 32
      %v13601 = vpop.permute.xlu0 %13600
      %13602 = vrot.lane.b32.xlu0 %v13551, 32
      %v13603 = vpop.permute.xlu0 %13602
      %13604 = vrot.lane.b32.xlu0 %v13553, 32
      %v13605 = vpop.permute.xlu0 %13604
      %13606 = vrot.lane.b32.xlu0 %v13555, 32
      %v13607 = vpop.permute.xlu0 %13606
      %13608 = vrot.lane.b32.xlu0 %v13554, 32
      %v13609 = vpop.permute.xlu0 %13608
      %13610 = vrot.lane.b32.xlu0 %v13556, 32
      %v13611 = vpop.permute.xlu0 %13610
      %13612 = vrot.lane.b32.xlu0 %v13558, 32
      %v13613 = vpop.permute.xlu0 %13612
      %13614 = vrot.lane.b32.xlu0 %v13557, 32
      %v13615 = vpop.permute.xlu0 %13614
      %13616 = vrot.lane.b32.xlu0 %v13559, 32
      %v13617 = vpop.permute.xlu0 %13616
      %13618 = vrot.lane.b32.xlu0 %v13561, 32
      %v13619 = vpop.permute.xlu0 %13618
      %13620 = vrot.lane.b32.xlu0 %v13560, 32
      %v13621 = vpop.permute.xlu0 %13620
      %13622 = vrot.lane.b32.xlu0 %v13562, 32
      %v13623 = vpop.permute.xlu0 %13622
      %13624 = vrot.lane.b32.xlu0 %v13564, 32
      %v13625 = vpop.permute.xlu0 %13624
      %13626 = vrot.lane.b32.xlu0 %v13563, 32
      %v13627 = vpop.permute.xlu0 %13626
      %13628 = vrot.lane.b32.xlu0 %v13565, 32
      %v13629 = vpop.permute.xlu0 %13628
      %13630 = vrot.lane.b32.xlu0 %v13567, 32
      %v13631 = vpop.permute.xlu0 %13630
      %13632 = vrot.lane.b32.xlu0 %v13566, 32
      %v13633 = vpop.permute.xlu0 %13632
      %13634 = vrot.lane.b32.xlu0 %v13568, 32
      %v13635 = vpop.permute.xlu0 %13634
      %13636 = vrot.lane.b32.xlu0 %v13570, 32
      %v13637 = vpop.permute.xlu0 %13636
      %13638 = vrot.lane.b32.xlu0 %v13569, 32
      %v13639 = vpop.permute.xlu0 %13638
      %13640 = vrot.lane.b32.xlu0 %v13571, 32
      %v13641 = vpop.permute.xlu0 %13640
      %13642 = vrot.lane.b32.xlu0 %v13573, 32
      %v13643 = vpop.permute.xlu0 %13642
      %13644 = vrot.lane.b32.xlu0 %v13572, 32
      %v13645 = vpop.permute.xlu0 %13644
      %13646 = vrot.lane.b32.xlu0 %v13574, 32
      %v13647 = vpop.permute.xlu0 %13646
      %13648 = vrot.lane.b32.xlu0 %v13576, 32
      %v13649 = vpop.permute.xlu0 %13648
      %13650 = vrot.lane.b32.xlu0 %v13575, 32
      %v13651 = vpop.permute.xlu0 %13650
      %13652 = vrot.lane.b32.xlu0 %v13577, 32
      %v13653 = vpop.permute.xlu0 %13652
      %13654 = vrot.lane.b32.xlu0 %v13579, 32
      %v13655 = vpop.permute.xlu0 %13654
      %13656 = vrot.lane.b32.xlu0 %v13578, 32
      %v13657 = vpop.permute.xlu0 %13656
      %13658 = vrot.lane.b32.xlu0 %v13580, 32
      %v13659 = vpop.permute.xlu0 %13658
      %13660 = vrot.lane.b32.xlu0 %v13582, 32
      %v13661 = vpop.permute.xlu0 %13660
      %13662 = vrot.lane.b32.xlu0 %v13581, 32
      %v13663 = vpop.permute.xlu0 %13662
      %13664 = vrot.lane.b32.xlu0 %v13583, 32
      %v13665 = vpop.permute.xlu0 %13664
      %13666 = vrot.lane.b32.xlu0 %v13585, 32
      %v13667 = vpop.permute.xlu0 %13666
      %13668 = vrot.lane.b32.xlu0 %v13584, 32
      %v13669 = vpop.permute.xlu0 %13668
      %13670 = vrot.lane.b32.xlu0 %v13586, 32
      %v13671 = vpop.permute.xlu0 %13670
      %13672 = vrot.lane.b32.xlu0 %v13588, 32
      %v13673 = vpop.permute.xlu0 %13672
      %13674 = vrot.lane.b32.xlu0 %v13587, 32
      %v13675 = vpop.permute.xlu0 %13674
      %13676 = vrot.lane.b32.xlu0 %v13589, 32
      %v13677 = vpop.permute.xlu0 %13676
      %13678 = vrot.lane.b32.xlu0 %v13591, 32
      %v13679 = vpop.permute.xlu0 %13678
      %13680 = vrot.lane.b32.xlu0 %v13590, 32
      %v13681 = vpop.permute.xlu0 %13680
      %13682 = vrot.lane.b32.xlu0 %v13592, 32
      %v13683 = vpop.permute.xlu0 %13682
      %13684 = vrot.lane.b32.xlu0 %v13594, 32
      %v13685 = vpop.permute.xlu0 %13684
      %13686 = vrot.lane.b32.xlu0 %v13593, 32
      %v13687 = vpop.permute.xlu0 %13686
      %13688 = vrot.lane.b32.xlu0 %v13595, 32
      %v13689 = vpop.permute.xlu0 %13688
      %13690 = vrot.lane.b32.xlu0 %v13597, 32
      %v13691 = vpop.permute.xlu0 %13690
      %13692 = vrot.lane.b32.xlu0 %v13596, 32
      %v13693 = vpop.permute.xlu0 %13692
      %v13774 = vrot.slane %v13485, 6
      %v13775 = vrot.slane %v13486, 6
      %v13776 = vsel %vm13549, %v13774, %v13775
      %v13777 = vrot.slane %v13487, 6
      %v13778 = vrot.slane %v13488, 6
      %v13779 = vsel %vm13549, %v13777, %v13778
      %v13780 = vrot.slane %v13489, 6
      %v13781 = vrot.slane %v13490, 6
      %v13782 = vsel %vm13549, %v13780, %v13781
      %v13783 = vrot.slane %v13491, 6
      %v13784 = vrot.slane %v13492, 6
      %v13785 = vsel %vm13549, %v13783, %v13784
      %v13786 = vrot.slane %v13493, 6
      %v13787 = vrot.slane %v13494, 6
      %v13788 = vsel %vm13549, %v13786, %v13787
      %v13789 = vrot.slane %v13495, 6
      %v13790 = vrot.slane %v13496, 6
      %v13791 = vsel %vm13549, %v13789, %v13790
      %v13792 = vrot.slane %v13497, 6
      %v13793 = vrot.slane %v13498, 6
      %v13794 = vsel %vm13549, %v13792, %v13793
      %v13795 = vrot.slane %v13499, 6
      %v13796 = vrot.slane %v13500, 6
      %v13797 = vsel %vm13549, %v13795, %v13796
      %v13798 = vrot.slane %v13501, 6
      %v13799 = vrot.slane %v13502, 6
      %v13800 = vsel %vm13549, %v13798, %v13799
      %v13801 = vrot.slane %v13503, 6
      %v13802 = vrot.slane %v13504, 6
      %v13803 = vsel %vm13549, %v13801, %v13802
      %v13804 = vrot.slane %v13505, 6
      %v13805 = vrot.slane %v13506, 6
      %v13806 = vsel %vm13549, %v13804, %v13805
      %v13807 = vrot.slane %v13507, 6
      %v13808 = vrot.slane %v13508, 6
      %v13809 = vsel %vm13549, %v13807, %v13808
      %v13810 = vrot.slane %v13509, 6
      %v13811 = vrot.slane %v13510, 6
      %v13812 = vsel %vm13549, %v13810, %v13811
      %v13813 = vrot.slane %v13511, 6
      %v13814 = vrot.slane %v13512, 6
      %v13815 = vsel %vm13549, %v13813, %v13814
      %v13816 = vrot.slane %v13513, 6
      %v13817 = vrot.slane %v13514, 6
      %v13818 = vsel %vm13549, %v13816, %v13817
      %v13819 = vrot.slane %v13515, 6
      %v13820 = vrot.slane %v13516, 6
      %v13821 = vsel %vm13549, %v13819, %v13820
      %13822 = vrot.lane.b32.xlu0 %v13774, 48
      %v13823 = vpop.permute.xlu0 %13822
      %13824 = vrot.lane.b32.xlu0 %v13776, 48
      %v13825 = vpop.permute.xlu0 %13824
      %13826 = vrot.lane.b32.xlu0 %v13775, 48
      %v13827 = vpop.permute.xlu0 %13826
      %13828 = vrot.lane.b32.xlu0 %v13777, 48
      %v13829 = vpop.permute.xlu0 %13828
      %13830 = vrot.lane.b32.xlu0 %v13779, 48
      %v13831 = vpop.permute.xlu0 %13830
      %13832 = vrot.lane.b32.xlu0 %v13778, 48
      %v13833 = vpop.permute.xlu0 %13832
      %13834 = vrot.lane.b32.xlu0 %v13780, 48
      %v13835 = vpop.permute.xlu0 %13834
      %13836 = vrot.lane.b32.xlu0 %v13782, 48
      %v13837 = vpop.permute.xlu0 %13836
      %13838 = vrot.lane.b32.xlu0 %v13781, 48
      %v13839 = vpop.permute.xlu0 %13838
      %13840 = vrot.lane.b32.xlu0 %v13783, 48
      %v13841 = vpop.permute.xlu0 %13840
      %13842 = vrot.lane.b32.xlu0 %v13785, 48
      %v13843 = vpop.permute.xlu0 %13842
      %13844 = vrot.lane.b32.xlu0 %v13784, 48
      %v13845 = vpop.permute.xlu0 %13844
      %13846 = vrot.lane.b32.xlu0 %v13786, 48
      %v13847 = vpop.permute.xlu0 %13846
      %13848 = vrot.lane.b32.xlu0 %v13788, 48
      %v13849 = vpop.permute.xlu0 %13848
      %13850 = vrot.lane.b32.xlu0 %v13787, 48
      %v13851 = vpop.permute.xlu0 %13850
      %13852 = vrot.lane.b32.xlu0 %v13789, 48
      %v13853 = vpop.permute.xlu0 %13852
      %13854 = vrot.lane.b32.xlu0 %v13791, 48
      %v13855 = vpop.permute.xlu0 %13854
      %13856 = vrot.lane.b32.xlu0 %v13790, 48
      %v13857 = vpop.permute.xlu0 %13856
      %13858 = vrot.lane.b32.xlu0 %v13792, 48
      %v13859 = vpop.permute.xlu0 %13858
      %13860 = vrot.lane.b32.xlu0 %v13794, 48
      %v13861 = vpop.permute.xlu0 %13860
      %13862 = vrot.lane.b32.xlu0 %v13793, 48
      %v13863 = vpop.permute.xlu0 %13862
      %13864 = vrot.lane.b32.xlu0 %v13795, 48
      %v13865 = vpop.permute.xlu0 %13864
      %13866 = vrot.lane.b32.xlu0 %v13797, 48
      %v13867 = vpop.permute.xlu0 %13866
      %13868 = vrot.lane.b32.xlu0 %v13796, 48
      %v13869 = vpop.permute.xlu0 %13868
      %13870 = vrot.lane.b32.xlu0 %v13798, 48
      %v13871 = vpop.permute.xlu0 %13870
      %13872 = vrot.lane.b32.xlu0 %v13800, 48
      %v13873 = vpop.permute.xlu0 %13872
      %13874 = vrot.lane.b32.xlu0 %v13799, 48
      %v13875 = vpop.permute.xlu0 %13874
      %13876 = vrot.lane.b32.xlu0 %v13801, 48
      %v13877 = vpop.permute.xlu0 %13876
      %13878 = vrot.lane.b32.xlu0 %v13803, 48
      %v13879 = vpop.permute.xlu0 %13878
      %13880 = vrot.lane.b32.xlu0 %v13802, 48
      %v13881 = vpop.permute.xlu0 %13880
      %13882 = vrot.lane.b32.xlu0 %v13804, 48
      %v13883 = vpop.permute.xlu0 %13882
      %13884 = vrot.lane.b32.xlu0 %v13806, 48
      %v13885 = vpop.permute.xlu0 %13884
      %13886 = vrot.lane.b32.xlu0 %v13805, 48
      %v13887 = vpop.permute.xlu0 %13886
      %13888 = vrot.lane.b32.xlu0 %v13807, 48
      %v13889 = vpop.permute.xlu0 %13888
      %13890 = vrot.lane.b32.xlu0 %v13809, 48
      %v13891 = vpop.permute.xlu0 %13890
      %13892 = vrot.lane.b32.xlu0 %v13808, 48
      %v13893 = vpop.permute.xlu0 %13892
      %13894 = vrot.lane.b32.xlu0 %v13810, 48
      %v13895 = vpop.permute.xlu0 %13894
      %13896 = vrot.lane.b32.xlu0 %v13812, 48
      %v13897 = vpop.permute.xlu0 %13896
      %13898 = vrot.lane.b32.xlu0 %v13811, 48
      %v13899 = vpop.permute.xlu0 %13898
      %13900 = vrot.lane.b32.xlu0 %v13813, 48
      %v13901 = vpop.permute.xlu0 %13900
      %13902 = vrot.lane.b32.xlu0 %v13815, 48
      %v13903 = vpop.permute.xlu0 %13902
      %13904 = vrot.lane.b32.xlu0 %v13814, 48
      %v13905 = vpop.permute.xlu0 %13904
      %13906 = vrot.lane.b32.xlu0 %v13816, 48
      %v13907 = vpop.permute.xlu0 %13906
      %13908 = vrot.lane.b32.xlu0 %v13818, 48
      %v13909 = vpop.permute.xlu0 %13908
      %13910 = vrot.lane.b32.xlu0 %v13817, 48
      %v13911 = vpop.permute.xlu0 %13910
      %13912 = vrot.lane.b32.xlu0 %v13819, 48
      %v13913 = vpop.permute.xlu0 %13912
      %13914 = vrot.lane.b32.xlu0 %v13821, 48
      %v13915 = vpop.permute.xlu0 %13914
      %13916 = vrot.lane.b32.xlu0 %v13820, 48
      %v13917 = vpop.permute.xlu0 %13916
      %v13966 = vsel %vm670, %v368, %v13599
      %v13967 = vsel %vm670, %v369, %v13601
      %v13968 = vsel %vm670, %v370, %v13603
      %v13969 = vsel %vm670, %v371, %v13605
      %v13970 = vsel %vm670, %v372, %v13607
      %v13971 = vsel %vm670, %v373, %v13609
      %v13972 = vsel %vm670, %v374, %v13611
      %v13973 = vsel %vm670, %v375, %v13613
      %v13974 = vsel %vm670, %v376, %v13615
      %v13975 = vsel %vm670, %v377, %v13617
      %v13976 = vsel %vm670, %v378, %v13619
      %v13977 = vsel %vm670, %v379, %v13621
      %v13978 = vsel %vm670, %v380, %v13623
      %v13979 = vsel %vm670, %v381, %v13625
      %v13980 = vsel %vm670, %v382, %v13627
      %v13981 = vsel %vm670, %v383, %v13629
      %v13982 = vsel %vm670, %v384, %v13631
      %v13983 = vsel %vm670, %v385, %v13633
      %v13984 = vsel %vm670, %v386, %v13635
      %v13985 = vsel %vm670, %v387, %v13637
      %v13986 = vsel %vm670, %v388, %v13639
      %v13987 = vsel %vm670, %v389, %v13641
      %v13988 = vsel %vm670, %v390, %v13643
      %v13989 = vsel %vm670, %v391, %v13645
      %v13990 = vsel %vm670, %v392, %v13647
      %v13991 = vsel %vm670, %v393, %v13649
      %v13992 = vsel %vm670, %v394, %v13651
      %v13993 = vsel %vm670, %v395, %v13653
      %v13994 = vsel %vm670, %v396, %v13655
      %v13995 = vsel %vm670, %v397, %v13657
      %v13996 = vsel %vm670, %v398, %v13659
      %v13997 = vsel %vm670, %v399, %v13661
      %v13998 = vsel %vm670, %v400, %v13663
      %v13999 = vsel %vm670, %v401, %v13665
      %v14000 = vsel %vm670, %v402, %v13667
      %v14001 = vsel %vm670, %v403, %v13669
      %v14002 = vsel %vm670, %v404, %v13671
      %v14003 = vsel %vm670, %v405, %v13673
      %v14004 = vsel %vm670, %v406, %v13675
      %v14005 = vsel %vm670, %v407, %v13677
      %v14006 = vsel %vm670, %v408, %v13679
      %v14007 = vsel %vm670, %v409, %v13681
      %v14008 = vsel %vm670, %v410, %v13683
      %v14009 = vsel %vm670, %v411, %v13685
      %v14010 = vsel %vm670, %v412, %v13687
      %v14011 = vsel %vm670, %v413, %v13689
      %v14012 = vsel %vm670, %v414, %v13691
      %v14013 = vsel %vm670, %v415, %v13693
      %v14014 = vsel %vm3597, %v13966, %v13823
      %v14015 = vsel %vm3597, %v13967, %v13825
      %v14016 = vsel %vm3597, %v13968, %v13827
      %v14017 = vsel %vm3597, %v13969, %v13829
      %v14018 = vsel %vm3597, %v13970, %v13831
      %v14019 = vsel %vm3597, %v13971, %v13833
      %v14020 = vsel %vm3597, %v13972, %v13835
      %v14021 = vsel %vm3597, %v13973, %v13837
      %v14022 = vsel %vm3597, %v13974, %v13839
      %v14023 = vsel %vm3597, %v13975, %v13841
      %v14024 = vsel %vm3597, %v13976, %v13843
      %v14025 = vsel %vm3597, %v13977, %v13845
      %v14026 = vsel %vm3597, %v13978, %v13847
      %v14027 = vsel %vm3597, %v13979, %v13849
      %v14028 = vsel %vm3597, %v13980, %v13851
      %v14029 = vsel %vm3597, %v13981, %v13853
      %v14030 = vsel %vm3597, %v13982, %v13855
      %v14031 = vsel %vm3597, %v13983, %v13857
      %v14032 = vsel %vm3597, %v13984, %v13859
      %v14033 = vsel %vm3597, %v13985, %v13861
      %v14034 = vsel %vm3597, %v13986, %v13863
      %v14035 = vsel %vm3597, %v13987, %v13865
      %v14036 = vsel %vm3597, %v13988, %v13867
      %v14037 = vsel %vm3597, %v13989, %v13869
      %v14038 = vsel %vm3597, %v13990, %v13871
      %v14039 = vsel %vm3597, %v13991, %v13873
      %v14040 = vsel %vm3597, %v13992, %v13875
      %v14041 = vsel %vm3597, %v13993, %v13877
      %v14042 = vsel %vm3597, %v13994, %v13879
      %v14043 = vsel %vm3597, %v13995, %v13881
      %v14044 = vsel %vm3597, %v13996, %v13883
      %v14045 = vsel %vm3597, %v13997, %v13885
      %v14046 = vsel %vm3597, %v13998, %v13887
      %v14047 = vsel %vm3597, %v13999, %v13889
      %v14048 = vsel %vm3597, %v14000, %v13891
      %v14049 = vsel %vm3597, %v14001, %v13893
      %v14050 = vsel %vm3597, %v14002, %v13895
      %v14051 = vsel %vm3597, %v14003, %v13897
      %v14052 = vsel %vm3597, %v14004, %v13899
      %v14053 = vsel %vm3597, %v14005, %v13901
      %v14054 = vsel %vm3597, %v14006, %v13903
      %v14055 = vsel %vm3597, %v14007, %v13905
      %v14056 = vsel %vm3597, %v14008, %v13907
      %v14057 = vsel %vm3597, %v14009, %v13909
      %v14058 = vsel %vm3597, %v14010, %v13911
      %v14059 = vsel %vm3597, %v14011, %v13913
      %v14060 = vsel %vm3597, %v14012, %v13915
      %v14061 = vsel %vm3597, %v14013, %v13917
      %vm14110 = vcmask 1045504
      %v14111 = vrot.slane %v14014, 2
      %v14112 = vrot.slane %v14015, 2
      %v14113 = vsel %vm14110, %v14111, %v14112
      %v14114 = vrot.slane %v14016, 2
      %v14115 = vsel %vm14110, %v14112, %v14114
      %v14116 = vrot.slane %v14017, 2
      %v14117 = vrot.slane %v14018, 2
      %v14118 = vsel %vm14110, %v14116, %v14117
      %v14119 = vrot.slane %v14019, 2
      %v14120 = vsel %vm14110, %v14117, %v14119
      %v14121 = vrot.slane %v14020, 2
      %v14122 = vrot.slane %v14021, 2
      %v14123 = vsel %vm14110, %v14121, %v14122
      %v14124 = vrot.slane %v14022, 2
      %v14125 = vsel %vm14110, %v14122, %v14124
      %v14126 = vrot.slane %v14023, 2
      %v14127 = vrot.slane %v14024, 2
      %v14128 = vsel %vm14110, %v14126, %v14127
      %v14129 = vrot.slane %v14025, 2
      %v14130 = vsel %vm14110, %v14127, %v14129
      %v14131 = vrot.slane %v14026, 2
      %v14132 = vrot.slane %v14027, 2
      %v14133 = vsel %vm14110, %v14131, %v14132
      %v14134 = vrot.slane %v14028, 2
      %v14135 = vsel %vm14110, %v14132, %v14134
      %v14136 = vrot.slane %v14029, 2
      %v14137 = vrot.slane %v14030, 2
      %v14138 = vsel %vm14110, %v14136, %v14137
      %v14139 = vrot.slane %v14031, 2
      %v14140 = vsel %vm14110, %v14137, %v14139
      %v14141 = vrot.slane %v14032, 2
      %v14142 = vrot.slane %v14033, 2
      %v14143 = vsel %vm14110, %v14141, %v14142
      %v14144 = vrot.slane %v14034, 2
      %v14145 = vsel %vm14110, %v14142, %v14144
      %v14146 = vrot.slane %v14035, 2
      %v14147 = vrot.slane %v14036, 2
      %v14148 = vsel %vm14110, %v14146, %v14147
      %v14149 = vrot.slane %v14037, 2
      %v14150 = vsel %vm14110, %v14147, %v14149
      %v14151 = vrot.slane %v14038, 2
      %v14152 = vrot.slane %v14039, 2
      %v14153 = vsel %vm14110, %v14151, %v14152
      %v14154 = vrot.slane %v14040, 2
      %v14155 = vsel %vm14110, %v14152, %v14154
      %v14156 = vrot.slane %v14041, 2
      %v14157 = vrot.slane %v14042, 2
      %v14158 = vsel %vm14110, %v14156, %v14157
      %v14159 = vrot.slane %v14043, 2
      %v14160 = vsel %vm14110, %v14157, %v14159
      %v14161 = vrot.slane %v14044, 2
      %v14162 = vrot.slane %v14045, 2
      %v14163 = vsel %vm14110, %v14161, %v14162
      %v14164 = vrot.slane %v14046, 2
      %v14165 = vsel %vm14110, %v14162, %v14164
      %v14166 = vrot.slane %v14047, 2
      %v14167 = vrot.slane %v14048, 2
      %v14168 = vsel %vm14110, %v14166, %v14167
      %v14169 = vrot.slane %v14049, 2
      %v14170 = vsel %vm14110, %v14167, %v14169
      %v14171 = vrot.slane %v14050, 2
      %v14172 = vrot.slane %v14051, 2
      %v14173 = vsel %vm14110, %v14171, %v14172
      %v14174 = vrot.slane %v14052, 2
      %v14175 = vsel %vm14110, %v14172, %v14174
      %v14176 = vrot.slane %v14053, 2
      %v14177 = vrot.slane %v14054, 2
      %v14178 = vsel %vm14110, %v14176, %v14177
      %v14179 = vrot.slane %v14055, 2
      %v14180 = vsel %vm14110, %v14177, %v14179
      %v14181 = vrot.slane %v14056, 2
      %v14182 = vrot.slane %v14057, 2
      %v14183 = vsel %vm14110, %v14181, %v14182
      %v14184 = vrot.slane %v14058, 2
      %v14185 = vsel %vm14110, %v14182, %v14184
      %v14186 = vrot.slane %v14059, 2
      %v14187 = vrot.slane %v14060, 2
      %v14188 = vsel %vm14110, %v14186, %v14187
      %v14189 = vrot.slane %v14061, 2
      %v14190 = vsel %vm14110, %v14187, %v14189
      %v14223 = vcombine.low %v14113, %v14123
      %v14224 = vcombine.high %v14113, %v14123
      %v14226 = vunpack.c.l.s4 1983009808
      %v14227 = vunpack.c.0.s8 %v14226
      %v14228 = vlaneseq
      %v14229 = vshrl.u32 %v14228, 7
      %v14230 = vsub.s32 %v14227, %v14229
      %v14231 = vrot.slane %v14223, %v14230
      %v14233 = vunpack.c.l.s4 1983009808
      %v14234 = vunpack.c.0.s8 %v14233
      %v14235 = vlaneseq
      %v14236 = vshrl.u32 %v14235, 7
      %v14237 = vsub.s32 %v14234, %v14236
      %v14238 = vrot.slane %v14224, %v14237
      %v14239 = vcombine.low %v14118, %v14128
      %v14240 = vcombine.high %v14118, %v14128
      %v14242 = vunpack.c.l.s4 1983009808
      %v14243 = vunpack.c.0.s8 %v14242
      %v14244 = vlaneseq
      %v14245 = vshrl.u32 %v14244, 7
      %v14246 = vsub.s32 %v14243, %v14245
      %v14247 = vrot.slane %v14239, %v14246
      %v14249 = vunpack.c.l.s4 1983009808
      %v14250 = vunpack.c.0.s8 %v14249
      %v14251 = vlaneseq
      %v14252 = vshrl.u32 %v14251, 7
      %v14253 = vsub.s32 %v14250, %v14252
      %v14254 = vrot.slane %v14240, %v14253
      %v14255 = vcombine.low %v14133, %v14143
      %v14256 = vcombine.high %v14133, %v14143
      %v14258 = vunpack.c.l.s4 1983009808
      %v14259 = vunpack.c.0.s8 %v14258
      %v14260 = vlaneseq
      %v14261 = vshrl.u32 %v14260, 7
      %v14262 = vsub.s32 %v14259, %v14261
      %v14263 = vrot.slane %v14255, %v14262
      %v14265 = vunpack.c.l.s4 1983009808
      %v14266 = vunpack.c.0.s8 %v14265
      %v14267 = vlaneseq
      %v14268 = vshrl.u32 %v14267, 7
      %v14269 = vsub.s32 %v14266, %v14268
      %v14270 = vrot.slane %v14256, %v14269
      %v14271 = vcombine.low %v14138, %v14148
      %v14272 = vcombine.high %v14138, %v14148
      %v14274 = vunpack.c.l.s4 1983009808
      %v14275 = vunpack.c.0.s8 %v14274
      %v14276 = vlaneseq
      %v14277 = vshrl.u32 %v14276, 7
      %v14278 = vsub.s32 %v14275, %v14277
      %v14279 = vrot.slane %v14271, %v14278
      %v14281 = vunpack.c.l.s4 1983009808
      %v14282 = vunpack.c.0.s8 %v14281
      %v14283 = vlaneseq
      %v14284 = vshrl.u32 %v14283, 7
      %v14285 = vsub.s32 %v14282, %v14284
      %v14286 = vrot.slane %v14272, %v14285
      %v14287 = vcombine.low %v14231, %v14247
      %v14288 = vcombine.high %v14231, %v14247
      %v14290 = vunpack.c.l.s4 1934713408
      %v14291 = vunpack.c.0.s8 %v14290
      %v14292 = vlaneseq
      %v14293 = vshrl.u32 %v14292, 7
      %v14294 = vsub.s32 %v14291, %v14293
      %v14295 = vrot.slane %v14287, %v14294
      %v14297 = vunpack.c.l.s4 1934713408
      %v14298 = vunpack.c.0.s8 %v14297
      %v14299 = vlaneseq
      %v14300 = vshrl.u32 %v14299, 7
      %v14301 = vsub.s32 %v14298, %v14300
      %v14302 = vrot.slane %v14288, %v14301
      %v14303 = vcombine.low %v14238, %v14254
      %v14304 = vcombine.high %v14238, %v14254
      %v14306 = vunpack.c.l.s4 1934713408
      %v14307 = vunpack.c.0.s8 %v14306
      %v14308 = vlaneseq
      %v14309 = vshrl.u32 %v14308, 7
      %v14310 = vsub.s32 %v14307, %v14309
      %v14311 = vrot.slane %v14303, %v14310
      %v14313 = vunpack.c.l.s4 1934713408
      %v14314 = vunpack.c.0.s8 %v14313
      %v14315 = vlaneseq
      %v14316 = vshrl.u32 %v14315, 7
      %v14317 = vsub.s32 %v14314, %v14316
      %v14318 = vrot.slane %v14304, %v14317
      %v14319 = vcombine.low %v14263, %v14279
      %v14320 = vcombine.high %v14263, %v14279
      %v14322 = vunpack.c.l.s4 1934713408
      %v14323 = vunpack.c.0.s8 %v14322
      %v14324 = vlaneseq
      %v14325 = vshrl.u32 %v14324, 7
      %v14326 = vsub.s32 %v14323, %v14325
      %v14327 = vrot.slane %v14319, %v14326
      %v14329 = vunpack.c.l.s4 1934713408
      %v14330 = vunpack.c.0.s8 %v14329
      %v14331 = vlaneseq
      %v14332 = vshrl.u32 %v14331, 7
      %v14333 = vsub.s32 %v14330, %v14332
      %v14334 = vrot.slane %v14320, %v14333
      %v14335 = vcombine.low %v14270, %v14286
      %v14336 = vcombine.high %v14270, %v14286
      %v14338 = vunpack.c.l.s4 1934713408
      %v14339 = vunpack.c.0.s8 %v14338
      %v14340 = vlaneseq
      %v14341 = vshrl.u32 %v14340, 7
      %v14342 = vsub.s32 %v14339, %v14341
      %v14343 = vrot.slane %v14335, %v14342
      %v14345 = vunpack.c.l.s4 1934713408
      %v14346 = vunpack.c.0.s8 %v14345
      %v14347 = vlaneseq
      %v14348 = vshrl.u32 %v14347, 7
      %v14349 = vsub.s32 %v14346, %v14348
      %v14350 = vrot.slane %v14336, %v14349
      %v14351 = vcombine.low %v14295, %v14327
      %v14352 = vcombine.high %v14295, %v14327
      %v14353 = vcombine.low %v14302, %v14334
      %v14354 = vcombine.high %v14302, %v14334
      %v14355 = vcombine.low %v14311, %v14343
      %v14356 = vcombine.high %v14311, %v14343
      %v14357 = vcombine.low %v14318, %v14350
      %v14358 = vcombine.high %v14318, %v14350
      %v14359 = vcombine.low %v14153, %v14163
      %v14360 = vcombine.high %v14153, %v14163
      %v14362 = vunpack.c.l.s4 1983009808
      %v14363 = vunpack.c.0.s8 %v14362
      %v14364 = vlaneseq
      %v14365 = vshrl.u32 %v14364, 7
      %v14366 = vsub.s32 %v14363, %v14365
      %v14367 = vrot.slane %v14359, %v14366
      %v14369 = vunpack.c.l.s4 1983009808
      %v14370 = vunpack.c.0.s8 %v14369
      %v14371 = vlaneseq
      %v14372 = vshrl.u32 %v14371, 7
      %v14373 = vsub.s32 %v14370, %v14372
      %v14374 = vrot.slane %v14360, %v14373
      %v14375 = vcombine.low %v14158, %v14168
      %v14376 = vcombine.high %v14158, %v14168
      %v14378 = vunpack.c.l.s4 1983009808
      %v14379 = vunpack.c.0.s8 %v14378
      %v14380 = vlaneseq
      %v14381 = vshrl.u32 %v14380, 7
      %v14382 = vsub.s32 %v14379, %v14381
      %v14383 = vrot.slane %v14375, %v14382
      %v14385 = vunpack.c.l.s4 1983009808
      %v14386 = vunpack.c.0.s8 %v14385
      %v14387 = vlaneseq
      %v14388 = vshrl.u32 %v14387, 7
      %v14389 = vsub.s32 %v14386, %v14388
      %v14390 = vrot.slane %v14376, %v14389
      %v14391 = vcombine.low %v14173, %v14183
      %v14392 = vcombine.high %v14173, %v14183
      %v14394 = vunpack.c.l.s4 1983009808
      %v14395 = vunpack.c.0.s8 %v14394
      %v14396 = vlaneseq
      %v14397 = vshrl.u32 %v14396, 7
      %v14398 = vsub.s32 %v14395, %v14397
      %v14399 = vrot.slane %v14391, %v14398
      %v14401 = vunpack.c.l.s4 1983009808
      %v14402 = vunpack.c.0.s8 %v14401
      %v14403 = vlaneseq
      %v14404 = vshrl.u32 %v14403, 7
      %v14405 = vsub.s32 %v14402, %v14404
      %v14406 = vrot.slane %v14392, %v14405
      %v14407 = vcombine.low %v14178, %v14188
      %v14408 = vcombine.high %v14178, %v14188
      %v14410 = vunpack.c.l.s4 1983009808
      %v14411 = vunpack.c.0.s8 %v14410
      %v14412 = vlaneseq
      %v14413 = vshrl.u32 %v14412, 7
      %v14414 = vsub.s32 %v14411, %v14413
      %v14415 = vrot.slane %v14407, %v14414
      %v14417 = vunpack.c.l.s4 1983009808
      %v14418 = vunpack.c.0.s8 %v14417
      %v14419 = vlaneseq
      %v14420 = vshrl.u32 %v14419, 7
      %v14421 = vsub.s32 %v14418, %v14420
      %v14422 = vrot.slane %v14408, %v14421
      %v14423 = vcombine.low %v14367, %v14383
      %v14424 = vcombine.high %v14367, %v14383
      %v14426 = vunpack.c.l.s4 1934713408
      %v14427 = vunpack.c.0.s8 %v14426
      %v14428 = vlaneseq
      %v14429 = vshrl.u32 %v14428, 7
      %v14430 = vsub.s32 %v14427, %v14429
      %v14431 = vrot.slane %v14423, %v14430
      %v14433 = vunpack.c.l.s4 1934713408
      %v14434 = vunpack.c.0.s8 %v14433
      %v14435 = vlaneseq
      %v14436 = vshrl.u32 %v14435, 7
      %v14437 = vsub.s32 %v14434, %v14436
      %v14438 = vrot.slane %v14424, %v14437
      %v14439 = vcombine.low %v14374, %v14390
      %v14440 = vcombine.high %v14374, %v14390
      %v14442 = vunpack.c.l.s4 1934713408
      %v14443 = vunpack.c.0.s8 %v14442
      %v14444 = vlaneseq
      %v14445 = vshrl.u32 %v14444, 7
      %v14446 = vsub.s32 %v14443, %v14445
      %v14447 = vrot.slane %v14439, %v14446
      %v14449 = vunpack.c.l.s4 1934713408
      %v14450 = vunpack.c.0.s8 %v14449
      %v14451 = vlaneseq
      %v14452 = vshrl.u32 %v14451, 7
      %v14453 = vsub.s32 %v14450, %v14452
      %v14454 = vrot.slane %v14440, %v14453
      %v14455 = vcombine.low %v14399, %v14415
      %v14456 = vcombine.high %v14399, %v14415
      %v14458 = vunpack.c.l.s4 1934713408
      %v14459 = vunpack.c.0.s8 %v14458
      %v14460 = vlaneseq
      %v14461 = vshrl.u32 %v14460, 7
      %v14462 = vsub.s32 %v14459, %v14461
      %v14463 = vrot.slane %v14455, %v14462
      %v14465 = vunpack.c.l.s4 1934713408
      %v14466 = vunpack.c.0.s8 %v14465
      %v14467 = vlaneseq
      %v14468 = vshrl.u32 %v14467, 7
      %v14469 = vsub.s32 %v14466, %v14468
      %v14470 = vrot.slane %v14456, %v14469
      %v14471 = vcombine.low %v14406, %v14422
      %v14472 = vcombine.high %v14406, %v14422
      %v14474 = vunpack.c.l.s4 1934713408
      %v14475 = vunpack.c.0.s8 %v14474
      %v14476 = vlaneseq
      %v14477 = vshrl.u32 %v14476, 7
      %v14478 = vsub.s32 %v14475, %v14477
      %v14479 = vrot.slane %v14471, %v14478
      %v14481 = vunpack.c.l.s4 1934713408
      %v14482 = vunpack.c.0.s8 %v14481
      %v14483 = vlaneseq
      %v14484 = vshrl.u32 %v14483, 7
      %v14485 = vsub.s32 %v14482, %v14484
      %v14486 = vrot.slane %v14472, %v14485
      %v14487 = vcombine.low %v14431, %v14463
      %v14488 = vcombine.high %v14431, %v14463
      %v14489 = vcombine.low %v14438, %v14470
      %v14490 = vcombine.high %v14438, %v14470
      %v14491 = vcombine.low %v14447, %v14479
      %v14492 = vcombine.high %v14447, %v14479
      %v14493 = vcombine.low %v14454, %v14486
      %v14494 = vcombine.high %v14454, %v14486
      %v14495 = vcombine.low %v14115, %v14125
      %v14496 = vcombine.high %v14115, %v14125
      %v14498 = vunpack.c.l.s4 1983009808
      %v14499 = vunpack.c.0.s8 %v14498
      %v14500 = vlaneseq
      %v14501 = vshrl.u32 %v14500, 7
      %v14502 = vsub.s32 %v14499, %v14501
      %v14503 = vrot.slane %v14495, %v14502
      %v14505 = vunpack.c.l.s4 1983009808
      %v14506 = vunpack.c.0.s8 %v14505
      %v14507 = vlaneseq
      %v14508 = vshrl.u32 %v14507, 7
      %v14509 = vsub.s32 %v14506, %v14508
      %v14510 = vrot.slane %v14496, %v14509
      %v14511 = vcombine.low %v14120, %v14130
      %v14512 = vcombine.high %v14120, %v14130
      %v14514 = vunpack.c.l.s4 1983009808
      %v14515 = vunpack.c.0.s8 %v14514
      %v14516 = vlaneseq
      %v14517 = vshrl.u32 %v14516, 7
      %v14518 = vsub.s32 %v14515, %v14517
      %v14519 = vrot.slane %v14511, %v14518
      %v14521 = vunpack.c.l.s4 1983009808
      %v14522 = vunpack.c.0.s8 %v14521
      %v14523 = vlaneseq
      %v14524 = vshrl.u32 %v14523, 7
      %v14525 = vsub.s32 %v14522, %v14524
      %v14526 = vrot.slane %v14512, %v14525
      %v14527 = vcombine.low %v14135, %v14145
      %v14528 = vcombine.high %v14135, %v14145
      %v14530 = vunpack.c.l.s4 1983009808
      %v14531 = vunpack.c.0.s8 %v14530
      %v14532 = vlaneseq
      %v14533 = vshrl.u32 %v14532, 7
      %v14534 = vsub.s32 %v14531, %v14533
      %v14535 = vrot.slane %v14527, %v14534
      %v14537 = vunpack.c.l.s4 1983009808
      %v14538 = vunpack.c.0.s8 %v14537
      %v14539 = vlaneseq
      %v14540 = vshrl.u32 %v14539, 7
      %v14541 = vsub.s32 %v14538, %v14540
      %v14542 = vrot.slane %v14528, %v14541
      %v14543 = vcombine.low %v14140, %v14150
      %v14544 = vcombine.high %v14140, %v14150
      %v14546 = vunpack.c.l.s4 1983009808
      %v14547 = vunpack.c.0.s8 %v14546
      %v14548 = vlaneseq
      %v14549 = vshrl.u32 %v14548, 7
      %v14550 = vsub.s32 %v14547, %v14549
      %v14551 = vrot.slane %v14543, %v14550
      %v14553 = vunpack.c.l.s4 1983009808
      %v14554 = vunpack.c.0.s8 %v14553
      %v14555 = vlaneseq
      %v14556 = vshrl.u32 %v14555, 7
      %v14557 = vsub.s32 %v14554, %v14556
      %v14558 = vrot.slane %v14544, %v14557
      %v14559 = vcombine.low %v14503, %v14519
      %v14560 = vcombine.high %v14503, %v14519
      %v14562 = vunpack.c.l.s4 1934713408
      %v14563 = vunpack.c.0.s8 %v14562
      %v14564 = vlaneseq
      %v14565 = vshrl.u32 %v14564, 7
      %v14566 = vsub.s32 %v14563, %v14565
      %v14567 = vrot.slane %v14559, %v14566
      %v14569 = vunpack.c.l.s4 1934713408
      %v14570 = vunpack.c.0.s8 %v14569
      %v14571 = vlaneseq
      %v14572 = vshrl.u32 %v14571, 7
      %v14573 = vsub.s32 %v14570, %v14572
      %v14574 = vrot.slane %v14560, %v14573
      %v14575 = vcombine.low %v14510, %v14526
      %v14576 = vcombine.high %v14510, %v14526
      %v14578 = vunpack.c.l.s4 1934713408
      %v14579 = vunpack.c.0.s8 %v14578
      %v14580 = vlaneseq
      %v14581 = vshrl.u32 %v14580, 7
      %v14582 = vsub.s32 %v14579, %v14581
      %v14583 = vrot.slane %v14575, %v14582
      %v14585 = vunpack.c.l.s4 1934713408
      %v14586 = vunpack.c.0.s8 %v14585
      %v14587 = vlaneseq
      %v14588 = vshrl.u32 %v14587, 7
      %v14589 = vsub.s32 %v14586, %v14588
      %v14590 = vrot.slane %v14576, %v14589
      %v14591 = vcombine.low %v14535, %v14551
      %v14592 = vcombine.high %v14535, %v14551
      %v14594 = vunpack.c.l.s4 1934713408
      %v14595 = vunpack.c.0.s8 %v14594
      %v14596 = vlaneseq
      %v14597 = vshrl.u32 %v14596, 7
      %v14598 = vsub.s32 %v14595, %v14597
      %v14599 = vrot.slane %v14591, %v14598
      %v14601 = vunpack.c.l.s4 1934713408
      %v14602 = vunpack.c.0.s8 %v14601
      %v14603 = vlaneseq
      %v14604 = vshrl.u32 %v14603, 7
      %v14605 = vsub.s32 %v14602, %v14604
      %v14606 = vrot.slane %v14592, %v14605
      %v14607 = vcombine.low %v14542, %v14558
      %v14608 = vcombine.high %v14542, %v14558
      %v14610 = vunpack.c.l.s4 1934713408
      %v14611 = vunpack.c.0.s8 %v14610
      %v14612 = vlaneseq
      %v14613 = vshrl.u32 %v14612, 7
      %v14614 = vsub.s32 %v14611, %v14613
      %v14615 = vrot.slane %v14607, %v14614
      %v14617 = vunpack.c.l.s4 1934713408
      %v14618 = vunpack.c.0.s8 %v14617
      %v14619 = vlaneseq
      %v14620 = vshrl.u32 %v14619, 7
      %v14621 = vsub.s32 %v14618, %v14620
      %v14622 = vrot.slane %v14608, %v14621
      %v14623 = vcombine.low %v14567, %v14599
      %v14624 = vcombine.high %v14567, %v14599
      %v14625 = vcombine.low %v14574, %v14606
      %v14626 = vcombine.high %v14574, %v14606
      %v14627 = vcombine.low %v14583, %v14615
      %v14628 = vcombine.high %v14583, %v14615
      %v14629 = vcombine.low %v14590, %v14622
      %v14630 = vcombine.high %v14590, %v14622
      %v14631 = vcombine.low %v14155, %v14165
      %v14632 = vcombine.high %v14155, %v14165
      %v14634 = vunpack.c.l.s4 1983009808
      %v14635 = vunpack.c.0.s8 %v14634
      %v14636 = vlaneseq
      %v14637 = vshrl.u32 %v14636, 7
      %v14638 = vsub.s32 %v14635, %v14637
      %v14639 = vrot.slane %v14631, %v14638
      %v14641 = vunpack.c.l.s4 1983009808
      %v14642 = vunpack.c.0.s8 %v14641
      %v14643 = vlaneseq
      %v14644 = vshrl.u32 %v14643, 7
      %v14645 = vsub.s32 %v14642, %v14644
      %v14646 = vrot.slane %v14632, %v14645
      %v14647 = vcombine.low %v14160, %v14170
      %v14648 = vcombine.high %v14160, %v14170
      %v14650 = vunpack.c.l.s4 1983009808
      %v14651 = vunpack.c.0.s8 %v14650
      %v14652 = vlaneseq
      %v14653 = vshrl.u32 %v14652, 7
      %v14654 = vsub.s32 %v14651, %v14653
      %v14655 = vrot.slane %v14647, %v14654
      %v14657 = vunpack.c.l.s4 1983009808
      %v14658 = vunpack.c.0.s8 %v14657
      %v14659 = vlaneseq
      %v14660 = vshrl.u32 %v14659, 7
      %v14661 = vsub.s32 %v14658, %v14660
      %v14662 = vrot.slane %v14648, %v14661
      %v14663 = vcombine.low %v14175, %v14185
      %v14664 = vcombine.high %v14175, %v14185
      %v14666 = vunpack.c.l.s4 1983009808
      %v14667 = vunpack.c.0.s8 %v14666
      %v14668 = vlaneseq
      %v14669 = vshrl.u32 %v14668, 7
      %v14670 = vsub.s32 %v14667, %v14669
      %v14671 = vrot.slane %v14663, %v14670
      %v14673 = vunpack.c.l.s4 1983009808
      %v14674 = vunpack.c.0.s8 %v14673
      %v14675 = vlaneseq
      %v14676 = vshrl.u32 %v14675, 7
      %v14677 = vsub.s32 %v14674, %v14676
      %v14678 = vrot.slane %v14664, %v14677
      %v14679 = vcombine.low %v14180, %v14190
      %v14680 = vcombine.high %v14180, %v14190
      %v14682 = vunpack.c.l.s4 1983009808
      %v14683 = vunpack.c.0.s8 %v14682
      %v14684 = vlaneseq
      %v14685 = vshrl.u32 %v14684, 7
      %v14686 = vsub.s32 %v14683, %v14685
      %v14687 = vrot.slane %v14679, %v14686
      %v14689 = vunpack.c.l.s4 1983009808
      %v14690 = vunpack.c.0.s8 %v14689
      %v14691 = vlaneseq
      %v14692 = vshrl.u32 %v14691, 7
      %v14693 = vsub.s32 %v14690, %v14692
      %v14694 = vrot.slane %v14680, %v14693
      %v14695 = vcombine.low %v14639, %v14655
      %v14696 = vcombine.high %v14639, %v14655
      %v14698 = vunpack.c.l.s4 1934713408
      %v14699 = vunpack.c.0.s8 %v14698
      %v14700 = vlaneseq
      %v14701 = vshrl.u32 %v14700, 7
      %v14702 = vsub.s32 %v14699, %v14701
      %v14703 = vrot.slane %v14695, %v14702
      %v14705 = vunpack.c.l.s4 1934713408
      %v14706 = vunpack.c.0.s8 %v14705
      %v14707 = vlaneseq
      %v14708 = vshrl.u32 %v14707, 7
      %v14709 = vsub.s32 %v14706, %v14708
      %v14710 = vrot.slane %v14696, %v14709
      %v14711 = vcombine.low %v14646, %v14662
      %v14712 = vcombine.high %v14646, %v14662
      %v14714 = vunpack.c.l.s4 1934713408
      %v14715 = vunpack.c.0.s8 %v14714
      %v14716 = vlaneseq
      %v14717 = vshrl.u32 %v14716, 7
      %v14718 = vsub.s32 %v14715, %v14717
      %v14719 = vrot.slane %v14711, %v14718
      %v14721 = vunpack.c.l.s4 1934713408
      %v14722 = vunpack.c.0.s8 %v14721
      %v14723 = vlaneseq
      %v14724 = vshrl.u32 %v14723, 7
      %v14725 = vsub.s32 %v14722, %v14724
      %v14726 = vrot.slane %v14712, %v14725
      %v14727 = vcombine.low %v14671, %v14687
      %v14728 = vcombine.high %v14671, %v14687
      %v14730 = vunpack.c.l.s4 1934713408
      %v14731 = vunpack.c.0.s8 %v14730
      %v14732 = vlaneseq
      %v14733 = vshrl.u32 %v14732, 7
      %v14734 = vsub.s32 %v14731, %v14733
      %v14735 = vrot.slane %v14727, %v14734
      %v14737 = vunpack.c.l.s4 1934713408
      %v14738 = vunpack.c.0.s8 %v14737
      %v14739 = vlaneseq
      %v14740 = vshrl.u32 %v14739, 7
      %v14741 = vsub.s32 %v14738, %v14740
      %v14742 = vrot.slane %v14728, %v14741
      %v14743 = vcombine.low %v14678, %v14694
      %v14744 = vcombine.high %v14678, %v14694
      %v14746 = vunpack.c.l.s4 1934713408
      %v14747 = vunpack.c.0.s8 %v14746
      %v14748 = vlaneseq
      %v14749 = vshrl.u32 %v14748, 7
      %v14750 = vsub.s32 %v14747, %v14749
      %v14751 = vrot.slane %v14743, %v14750
      %v14753 = vunpack.c.l.s4 1934713408
      %v14754 = vunpack.c.0.s8 %v14753
      %v14755 = vlaneseq
      %v14756 = vshrl.u32 %v14755, 7
      %v14757 = vsub.s32 %v14754, %v14756
      %v14758 = vrot.slane %v14744, %v14757
      %v14759 = vcombine.low %v14703, %v14735
      %v14760 = vcombine.high %v14703, %v14735
      %v14761 = vcombine.low %v14710, %v14742
      %v14762 = vcombine.high %v14710, %v14742
      %v14763 = vcombine.low %v14719, %v14751
      %v14764 = vcombine.high %v14719, %v14751
      %v14765 = vcombine.low %v14726, %v14758
      %v14766 = vcombine.high %v14726, %v14758
      %14769 = vrot.lane.b32.xlu0 %v14352, 64
      %v14770 = vpop.permute.xlu0 %14769
      %14771 = vrot.lane.b32.xlu0 %v14488, 64
      %v14772 = vpop.permute.xlu0 %14771
      %14777 = vrot.lane.b32.xlu0 %v14354, 64
      %v14778 = vpop.permute.xlu0 %14777
      %14779 = vrot.lane.b32.xlu0 %v14490, 64
      %v14780 = vpop.permute.xlu0 %14779
      %14785 = vrot.lane.b32.xlu0 %v14356, 64
      %v14786 = vpop.permute.xlu0 %14785
      %14787 = vrot.lane.b32.xlu0 %v14492, 64
      %v14788 = vpop.permute.xlu0 %14787
      %14793 = vrot.lane.b32.xlu0 %v14358, 64
      %v14794 = vpop.permute.xlu0 %14793
      %14795 = vrot.lane.b32.xlu0 %v14494, 64
      %v14796 = vpop.permute.xlu0 %14795
      %14801 = vrot.lane.b32.xlu0 %v14624, 64
      %v14802 = vpop.permute.xlu0 %14801
      %14803 = vrot.lane.b32.xlu0 %v14760, 64
      %v14804 = vpop.permute.xlu0 %14803
      %14809 = vrot.lane.b32.xlu0 %v14626, 64
      %v14810 = vpop.permute.xlu0 %14809
      %14811 = vrot.lane.b32.xlu0 %v14762, 64
      %v14812 = vpop.permute.xlu0 %14811
      %14817 = vrot.lane.b32.xlu0 %v14628, 64
      %v14818 = vpop.permute.xlu0 %14817
      %14819 = vrot.lane.b32.xlu0 %v14764, 64
      %v14820 = vpop.permute.xlu0 %14819
      %14825 = vrot.lane.b32.xlu0 %v14630, 64
      %v14826 = vpop.permute.xlu0 %14825
      %14827 = vrot.lane.b32.xlu0 %v14766, 64
      %v14828 = vpop.permute.xlu0 %14827
      %v14831 = vsel %vm3662, %v14351, %v14770
      %v14832 = vsel %vm3662, %v14487, %v14772
      %v14833 = vsel %vm3662, %v14353, %v14778
      %v14834 = vsel %vm3662, %v14489, %v14780
      %v14835 = vsel %vm3662, %v14355, %v14786
      %v14836 = vsel %vm3662, %v14491, %v14788
      %v14837 = vsel %vm3662, %v14357, %v14794
      %v14838 = vsel %vm3662, %v14493, %v14796
      %v14839 = vsel %vm3662, %v14623, %v14802
      %v14840 = vsel %vm3662, %v14759, %v14804
      %v14841 = vsel %vm3662, %v14625, %v14810
      %v14842 = vsel %vm3662, %v14761, %v14812
      %v14843 = vsel %vm3662, %v14627, %v14818
      %v14844 = vsel %vm3662, %v14763, %v14820
      %v14845 = vsel %vm3662, %v14629, %v14826
      %v14846 = vsel %vm3662, %v14765, %v14828
      %14847 = vst [vmem:[%s356] sm:$0xff] %v14831
      %14848 = vst [vmem:[%s356 + $0x8] sm:$0xff] %v14833
      %14849 = vst [vmem:[%s356 + $0x10] sm:$0xff] %v14835
      %14850 = vst [vmem:[%s356 + $0x18] sm:$0xff] %v14837
      %14851 = vst [vmem:[%s356 + $0x20] sm:$0xff] %v14839
      %14852 = vst [vmem:[%s356 + $0x28] sm:$0xff] %v14841
      %14853 = vst [vmem:[%s356 + $0x30] sm:$0xff] %v14843
      %14854 = vst [vmem:[%s356 + $0x38] sm:$0xff] %v14845
      %14855 = vst [vmem:[%s356 + $0x40] sm:$0xff] %v14832
      %14856 = vst [vmem:[%s356 + $0x48] sm:$0xff] %v14834
      %14857 = vst [vmem:[%s356 + $0x50] sm:$0xff] %v14836
      %14858 = vst [vmem:[%s356 + $0x58] sm:$0xff] %v14838
      %14859 = vst [vmem:[%s356 + $0x60] sm:$0xff] %v14840
      %14860 = vst [vmem:[%s356 + $0x68] sm:$0xff] %v14842
      %14861 = vst [vmem:[%s356 + $0x70] sm:$0xff] %v14844
      %14862 = vst [vmem:[%s356 + $0x78] sm:$0xff] %v14846
      %s14863 = smul.u32 2, %s25
      %p14864 = scmp.lt.s32.totalorder %s24, 1
      %s14865 = scalar_select %p14864, %s24, 1
      %p14866 = scmp.lt.s32.totalorder %s14863, 1
      %s14867 = scalar_select %p14866, %s14863, 1
      %s14868 = smul.addr %s14867, 8
      %s14869 = smul.addr %s14865, 16
      %s14870 = sadd.s32 %s14868, %s14869
      %s14871 = smul.addr %s14870, 8
      %s14872 = scalar_lea.vmem %s9, %s14871
      // Predicated region
      $region57: #{dense_block_forward.1} parent=55 // pred_check
        %p14873 = pneg %p246
      $region58: #{dense_block_forward.1} parent=55 // pred_check_branch
        %14875 = sbr.rel (%p14873) target = $region60
      $region59: #{dense_block_forward.1} parent=55 // pred_region
        %s14876 = smul.u32 2, %s25
      $region60: #{dense_block_forward.1} parent=55 // pred_fallthru
        _
    $region56: #{dense_block_forward.1} parent=5 // pred_fallthru
      _
    %p14877 = scmp.le.s32.totalorder 2, %s15
    // Predicated region
    $region61: #{dense_block_forward.1} parent=5 // pred_check
      %p14878 = pneg %p14877
    $region62: #{dense_block_forward.1} parent=5 // pred_check_branch
      %14880 = sbr.rel (%p14878) target = $region64
    $region63: #{dense_block_forward.1} parent=5 // pred_region
      %s14881 = ssub.s32 %s15, 2
      // Predicated region
      $region65: #{dense_block_forward.1} parent=63 // pred_check
        %p14882 = pneg %p252
      $region66: #{dense_block_forward.1} parent=63 // pred_check_branch
        %14884 = sbr.rel (%p14882) target = $region68
      $region67: #{dense_block_forward.1} parent=63 // pred_region
        %s14885 = smul.u32 2, %s27
        %p14886 = scmp.lt.s32.totalorder %s26, 1
        %s14887 = scalar_select %p14886, %s26, 1
        %p14888 = scmp.lt.s32.totalorder %s14885, 1
        %s14889 = scalar_select %p14888, %s14885, 1
        %s14890 = smul.addr %s14889, 8
        %s14891 = smul.addr %s14887, 16
        %s14892 = sadd.s32 %s14890, %s14891
        %s14893 = smul.addr %s14892, 8
        %s14894 = scalar_lea.vmem %s9, %s14893
      $region68: #{dense_block_forward.1} parent=63 // pred_fallthru
        _
    $region64: #{dense_block_forward.1} parent=5 // pred_fallthru
      _
  $region6: #{dense_block_forward.1} parent=0 // loop_footer
    %s19 = sadd.s32 1, %s15
  $region7: #{dense_block_forward.1} parent=0 // loop_footer_branch
    %14 = sbr.rel target = $region3
  $region8: #{dense_block_forward.1} parent=0 // loop_exit
    _

</llo_original>
